<compile_context>
chip_gen: v5e
topology: v5e:2x2
jax: 0.10.0
libtpu: 0.0.40
codegen_flags: <defaults>
</compile_context>

<pallas_src>
import warnings

import jax
import jax.numpy as jnp
from jax.experimental import pallas as pl
from jax.experimental.pallas import tpu as pltpu


# ----------------------------------------------------------------------------- kernel

def _leaky_relu(h, slope=0.2):
    return jnp.where(h > 0, h, slope * h)


def full_ot_kernel(x_ref, w1_ref, b1_ref, w2_ref, b2_ref, w3_ref, b3_ref, o_ref):
    """Fused 3-layer MLP on one batch tile.

    bf16 MXU matmuls with f32 accumulation; f32 bias-add + LeakyReLU on the VPU.
    The input tile arrives f32 and is cast to the weight dtype (bf16) in-kernel,
    so the wrapper never does a separate HBM cast/pad pass over x.
    """
    x = x_ref[...].astype(w1_ref.dtype)
    h = jnp.dot(x, w1_ref[...], preferred_element_type=jnp.float32)
    h = _leaky_relu(h + b1_ref[...])
    h = jnp.dot(h.astype(w2_ref.dtype), w2_ref[...], preferred_element_type=jnp.float32)
    h = _leaky_relu(h + b2_ref[...])
    h = jnp.dot(h.astype(w3_ref.dtype), w3_ref[...], preferred_element_type=jnp.float32)
    h = _leaky_relu(h + b3_ref[...])
    o_ref[...] = h.astype(o_ref.dtype)


# ----------------------------------------------------------------------------- helpers

def _round_up(x, m):
    return ((x + m - 1) // m) * m


def _detect_tpu_generation():
    """Best-effort TPU generation (5, 6, 7). Defaults to 6 if undetectable."""
    try:
        kind = jax.devices()[0].device_kind.lower()
    except Exception:
        return 6
    for g in (7, 6, 5, 4):
        if f"v{g}" in kind:
            return g
    return 6


def _choose_batch_tile(batch, gen):
    """MXU- and megacore-aware batch tile.

    * tiny batches: one tile rounded to 16 rows (bf16 packed-sublane granularity).
    * v5e (4x128x128 MXU): 128-row multiples are already optimal.
    * v6e/v7x (2x256x256 MXU): prefer 256/512-row tiles so the systolic array stays full.
    * v7x: the ('parallel',) batch axis is split across 2 TensorCores, so prefer >=2
      tiles and an even tile count.
    """
    if batch <= 128:
        return _round_up(batch, 16)
    if batch <= 256:
        if gen >= 7:
            # Give each of the two TensorCores one tile instead of idling one.
            return _round_up(pl.cdiv(batch, 2), 16)
        return _round_up(batch, 16)
    if gen <= 5:
        for tile in (512, 256, 128):
            if batch >= 2 * tile:
                return tile
        return 128
    # v6e / v7x: 256-aligned tiles.
    candidates = [t for t in (512, 256) if pl.cdiv(batch, t) >= 2]
    if not candidates:  # unreachable for batch > 256; kept for safety
        return 256
    if gen >= 7:
        for t in candidates:                     # largest tile with an even grid
            if pl.cdiv(batch, t) % 2 == 0:
                return t
        return candidates[-1]                    # odd grid: smaller tiles balance better
    return candidates[0]


def _vmem_limit_bytes(batch_tile, in_f, d1, d2, d3, weight_bufs):
    """Scoped-VMEM request derived from the actual working set, capped v7x-safe."""
    weights = (in_f * d1 + d1 * d2 + d2 * d3) * 2 * weight_bufs   # bf16 weights
    biases = (d1 + d2 + d3) * 4 * weight_bufs                     # f32 biases
    x_tiles = batch_tile * in_f * 4 * 2                           # f32 input, double-buffered
    out_tiles = batch_tile * d3 * 4 * 2                           # f32 output, double-buffered
    live_acts = batch_tile * (d1 + d2 + d3) * 4                   # f32 intermediates
    est = weights + biases + x_tiles + out_tiles + live_acts
    est = est * 3 // 2 + (8 << 20)                                # compiler-scratch margin
    return int(min(est, 48 << 20))                                # leave headroom on v7x (64 MiB)


_SINGLE_BUFFER_OK = None


def _single_buffer_supported():
    """Explicit capability check for pipeline_mode=pl.Buffered(1) on weight BlockSpecs."""
    global _SINGLE_BUFFER_OK
    if _SINGLE_BUFFER_OK is None:
        ok = hasattr(pl, "Buffered")
        if ok:
            try:
                pl.BlockSpec((8, 128), lambda i: (0, 0), pipeline_mode=pl.Buffered(1))
            except Exception:
                ok = False
        _SINGLE_BUFFER_OK = ok
    return _SINGLE_BUFFER_OK


# ----------------------------------------------------------------------------- wrapper

def prepare_params(params):
    """Cast weights to bf16 ONCE (reuse the result across calls); biases stay f32."""
    prep = {}
    for li in (1, 2, 3):
        prep[f"w{li}"] = jnp.asarray(params[f"w{li}"], jnp.bfloat16)
        prep[f"b{li}"] = jnp.asarray(params[f"b{li}"], jnp.float32)
    return prep


def full_ot_forward(x, prepared, *, batch_tile=None, out_dtype=jnp.float32,
                    interpret=False):
    """x: (B, in_features) float32. prepared: output of prepare_params (bf16 weights)."""
    B, in_f = x.shape
    w1, b1 = prepared["w1"], prepared["b1"]
    w2, b2 = prepared["w2"], prepared["b2"]
    w3, b3 = prepared["w3"], prepared["b3"]
    d1, d2, d3 = w1.shape[1], w2.shape[1], w3.shape[1]

    gen = _detect_tpu_generation()
    if batch_tile is None:
        batch_tile = _choose_batch_tile(B, gen)
    num_tiles = pl.cdiv(B, batch_tile)

    flops = 2 * B * (in_f * d1 + d1 * d2 + d2 * d3)
    out_bytes = jnp.dtype(out_dtype).itemsize
    bytes_accessed = (
        B * in_f * 4
        + (w1.size + w2.size + w3.size) * 2
        + (b1.size + b2.size + b3.size) * 4
        + B * d3 * out_bytes
    )
    cost = pl.CostEstimate(flops=flops, transcendentals=0, bytes_accessed=bytes_accessed)

    def build(single_buffer_weights):
        def const_spec(shape):
            # Weight/bias blocks never change across the grid; single-buffer them so
            # they don't eat 2x VMEM.
            kwargs = {}
            if single_buffer_weights:
                kwargs["pipeline_mode"] = pl.Buffered(1)
            return pl.BlockSpec(shape, lambda i: (0, 0), **kwargs)

        weight_bufs = 1 if single_buffer_weights else 2
        return pl.pallas_call(
            full_ot_kernel,
            out_shape=jax.ShapeDtypeStruct((B, d3), out_dtype),
            grid_spec=pltpu.PrefetchScalarGridSpec(
                num_scalar_prefetch=0,
                grid=(num_tiles,),
                in_specs=[
                    pl.BlockSpec((batch_tile, in_f), lambda i: (i, 0)),
                    const_spec((in_f, d1)),
                    const_spec((1, d1)),
                    const_spec((d1, d2)),
                    const_spec((1, d2)),
                    const_spec((d2, d3)),
                    const_spec((1, d3)),
                ],
                out_specs=pl.BlockSpec((batch_tile, d3), lambda i: (i, 0)),
            ),
            compiler_params=pltpu.CompilerParams(
                dimension_semantics=("parallel",),
                vmem_limit_bytes=_vmem_limit_bytes(
                    batch_tile, in_f, d1, d2, d3, weight_bufs
                ),
            ),
            cost_estimate=cost,
            interpret=interpret,
        )

    args = (x, w1, b1, w2, b2, w3, b3)

    if _single_buffer_supported():
        try:
            return build(True)(*args)
        except Exception as e:
            warnings.warn(
                "single-buffered weight BlockSpecs failed "
                f"({type(e).__name__}: {e}); falling back to double-buffered weights "
                "(2x weight VMEM footprint)."
            )
    else:
        warnings.warn(
            "pl.Buffered(1) not available in this JAX; using double-buffered weights "
            "(2x weight VMEM footprint)."
        )
    return build(False)(*args)


# ----------------------------------------------------------------------------- reference

def init_params(key, in_features, bottleneck_dim=256):
    """Deterministic init mirroring nn.Linear default: U(-1/sqrt(fan_in), 1/sqrt(fan_in))."""
    dims = [in_features, 1024, 512, bottleneck_dim]
    params = {}
    for li in range(3):
        fan_in, fan_out = dims[li], dims[li + 1]
        key, kw, kb = jax.random.split(key, 3)
        bound = 1.0 / (fan_in ** 0.5)
        params[f"w{li + 1}"] = jax.random.uniform(
            kw, (fan_in, fan_out), jnp.float32, minval=-bound, maxval=bound
        )
        params[f"b{li + 1}"] = jax.random.uniform(
            kb, (1, fan_out), jnp.float32, minval=-bound, maxval=bound
        )
    return params


def reference_forward(x, params):
    def leaky(h):
        return jnp.where(h > 0, h, 0.2 * h)

    h = leaky(x @ params["w1"] + params["b1"])
    h = leaky(h @ params["w2"] + params["b2"])
    h = leaky(h @ params["w3"] + params["b3"])
    return h


if __name__ == "__main__":
    key = jax.random.PRNGKey(0)
    batch = 10                 # not a multiple of the tile -> exercises the ragged last block
    in_features = 512          # stand-in for fc_in_features (e.g. resnet50's 2048), kept small
    bottleneck_dim = 256

    kx, kp = jax.random.split(key)
    x = jax.random.normal(kx, (batch, in_features), jnp.float32)
    params = init_params(kp, in_features, bottleneck_dim)
    prepared = prepare_params(params)   # one-time bf16 weight cast, reused across calls

    out = full_ot_forward(x, prepared)
    out = jax.block_until_ready(out)

    ref = reference_forward(x, params)  # f32 reference
    assert out.shape == (batch, bottleneck_dim)
    # bf16 matmul operands with f32 accumulation => small deviation from the f32 reference.
    assert jnp.allclose(out, ref, atol=2e-2, rtol=2e-2), "mismatch vs reference"

    print("KERNEL_OK")
</pallas_src>

<mosaic_0001>
module attributes {stable_mosaic.version = 11 : i64} {
  func.func @full_ot_kernel(%arg0: i32, %arg1: memref<16x512xf32, #tpu.memory_space<vmem>>, %arg2: memref<512x1024xbf16, #tpu.memory_space<vmem>>, %arg3: memref<1x1024xf32, #tpu.memory_space<vmem>>, %arg4: memref<1024x512xbf16, #tpu.memory_space<vmem>>, %arg5: memref<1x512xf32, #tpu.memory_space<vmem>>, %arg6: memref<512x256xbf16, #tpu.memory_space<vmem>>, %arg7: memref<1x256xf32, #tpu.memory_space<vmem>>, %arg8: memref<16x256xf32, #tpu.memory_space<vmem>>) attributes {dimension_semantics = [#tpu.dimension_semantics<parallel>], iteration_bounds = array<i64: 1>, scalar_prefetch = 0 : i64, scratch_operands = 0 : i64, tpu.core_type = #tpu.core_type<tc>, window_params = [{transform_indices = @transform_0, window_bounds = array<i64: 16, 512>}, {pipeline_mode = #tpu.pipeline_mode<synchronous>, transform_indices = @transform_1, window_bounds = array<i64: 512, 1024>}, {pipeline_mode = #tpu.pipeline_mode<synchronous>, transform_indices = @transform_2, window_bounds = array<i64: 1, 1024>}, {pipeline_mode = #tpu.pipeline_mode<synchronous>, transform_indices = @transform_3, window_bounds = array<i64: 1024, 512>}, {pipeline_mode = #tpu.pipeline_mode<synchronous>, transform_indices = @transform_4, window_bounds = array<i64: 1, 512>}, {pipeline_mode = #tpu.pipeline_mode<synchronous>, transform_indices = @transform_5, window_bounds = array<i64: 512, 256>}, {pipeline_mode = #tpu.pipeline_mode<synchronous>, transform_indices = @transform_6, window_bounds = array<i64: 1, 256>}, {transform_indices = @transform_7, window_bounds = array<i64: 16, 256>}]} {
    %c0 = arith.constant 0 : index
    %c0_0 = arith.constant 0 : index
    %0 = vector.load %arg1[%c0, %c0_0] : memref<16x512xf32, #tpu.memory_space<vmem>>, vector<16x512xf32>
    %1 = arith.truncf %0 : vector<16x512xf32> to vector<16x512xbf16>
    %c0_1 = arith.constant 0 : index
    %c0_2 = arith.constant 0 : index
    %2 = vector.load %arg2[%c0_1, %c0_2] : memref<512x1024xbf16, #tpu.memory_space<vmem>>, vector<512x1024xbf16>
    %cst = arith.constant dense<0.000000e+00> : vector<16x1024xf32>
    %3 = tpu.matmul %1, %2, %cst {dimension_numbers = #tpu.dot_dimension_numbers<[1], [0], [0], [1], [0, 0, 1, 1], [], []>} : vector<16x512xbf16>, vector<512x1024xbf16>, vector<16x1024xf32> -> vector<16x1024xf32>
    %c0_3 = arith.constant 0 : index
    %c0_4 = arith.constant 0 : index
    %4 = vector.load %arg3[%c0_3, %c0_4] : memref<1x1024xf32, #tpu.memory_space<vmem>>, vector<1x1024xf32>
    %5 = vector.broadcast %4 : vector<1x1024xf32> to vector<16x1024xf32>
    %6 = arith.addf %3, %5 : vector<16x1024xf32>
    %cst_5 = arith.constant 0.000000e+00 : f32
    %7 = vector.broadcast %cst_5 : f32 to vector<16x1024xf32>
    %8 = arith.cmpf ogt, %6, %7 : vector<16x1024xf32>
    %cst_6 = arith.constant 2.000000e-01 : f32
    %9 = vector.broadcast %cst_6 : f32 to vector<16x1024xf32>
    %10 = arith.mulf %9, %6 : vector<16x1024xf32>
    %11 = arith.select %8, %6, %10 : vector<16x1024xi1>, vector<16x1024xf32>
    %12 = arith.truncf %11 : vector<16x1024xf32> to vector<16x1024xbf16>
    %c0_7 = arith.constant 0 : index
    %c0_8 = arith.constant 0 : index
    %13 = vector.load %arg4[%c0_7, %c0_8] : memref<1024x512xbf16, #tpu.memory_space<vmem>>, vector<1024x512xbf16>
    %cst_9 = arith.constant dense<0.000000e+00> : vector<16x512xf32>
    %14 = tpu.matmul %12, %13, %cst_9 {dimension_numbers = #tpu.dot_dimension_numbers<[1], [0], [0], [1], [0, 0, 1, 1], [], []>} : vector<16x1024xbf16>, vector<1024x512xbf16>, vector<16x512xf32> -> vector<16x512xf32>
    %c0_10 = arith.constant 0 : index
    %c0_11 = arith.constant 0 : index
    %15 = vector.load %arg5[%c0_10, %c0_11] : memref<1x512xf32, #tpu.memory_space<vmem>>, vector<1x512xf32>
    %16 = vector.broadcast %15 : vector<1x512xf32> to vector<16x512xf32>
    %17 = arith.addf %14, %16 : vector<16x512xf32>
    %cst_12 = arith.constant 0.000000e+00 : f32
    %18 = vector.broadcast %cst_12 : f32 to vector<16x512xf32>
    %19 = arith.cmpf ogt, %17, %18 : vector<16x512xf32>
    %cst_13 = arith.constant 2.000000e-01 : f32
    %20 = vector.broadcast %cst_13 : f32 to vector<16x512xf32>
    %21 = arith.mulf %20, %17 : vector<16x512xf32>
    %22 = arith.select %19, %17, %21 : vector<16x512xi1>, vector<16x512xf32>
    %23 = arith.truncf %22 : vector<16x512xf32> to vector<16x512xbf16>
    %c0_14 = arith.constant 0 : index
    %c0_15 = arith.constant 0 : index
    %24 = vector.load %arg6[%c0_14, %c0_15] : memref<512x256xbf16, #tpu.memory_space<vmem>>, vector<512x256xbf16>
    %cst_16 = arith.constant dense<0.000000e+00> : vector<16x256xf32>
    %25 = tpu.matmul %23, %24, %cst_16 {dimension_numbers = #tpu.dot_dimension_numbers<[1], [0], [0], [1], [0, 0, 1, 1], [], []>} : vector<16x512xbf16>, vector<512x256xbf16>, vector<16x256xf32> -> vector<16x256xf32>
    %c0_17 = arith.constant 0 : index
    %c0_18 = arith.constant 0 : index
    %26 = vector.load %arg7[%c0_17, %c0_18] : memref<1x256xf32, #tpu.memory_space<vmem>>, vector<1x256xf32>
    %27 = vector.broadcast %26 : vector<1x256xf32> to vector<16x256xf32>
    %28 = arith.addf %25, %27 : vector<16x256xf32>
    %cst_19 = arith.constant 0.000000e+00 : f32
    %29 = vector.broadcast %cst_19 : f32 to vector<16x256xf32>
    %30 = arith.cmpf ogt, %28, %29 : vector<16x256xf32>
    %cst_20 = arith.constant 2.000000e-01 : f32
    %31 = vector.broadcast %cst_20 : f32 to vector<16x256xf32>
    %32 = arith.mulf %31, %28 : vector<16x256xf32>
    %33 = arith.select %30, %28, %32 : vector<16x256xi1>, vector<16x256xf32>
    %c0_21 = arith.constant 0 : index
    %c0_22 = arith.constant 0 : index
    %34 = vector.load %arg8[%c0_21, %c0_22] : memref<16x256xf32, #tpu.memory_space<vmem>>, vector<16x256xf32>
    tpu.vector_store %arg8[%c0_21, %c0_22], %33 {strides = array<i32>} : memref<16x256xf32, #tpu.memory_space<vmem>>, vector<16x256xf32>,
    return
  }
  func.func @transform_0(%arg0: i32) -> (i32, i32) {
    %c0_i32 = arith.constant 0 : i32
    %c0_i32_0 = arith.constant 0 : i32
    return %arg0, %c0_i32 : i32, i32
  }
  func.func @transform_1(%arg0: i32) -> (i32, i32) {
    %c0_i32 = arith.constant 0 : i32
    %c0_i32_0 = arith.constant 0 : i32
    %c0_i32_1 = arith.constant 0 : i32
    return %c0_i32, %c0_i32_0 : i32, i32
  }
  func.func @transform_2(%arg0: i32) -> (i32, i32) {
    %c0_i32 = arith.constant 0 : i32
    %c0_i32_0 = arith.constant 0 : i32
    %c0_i32_1 = arith.constant 0 : i32
    return %c0_i32, %c0_i32_0 : i32, i32
  }
  func.func @transform_3(%arg0: i32) -> (i32, i32) {
    %c0_i32 = arith.constant 0 : i32
    %c0_i32_0 = arith.constant 0 : i32
    %c0_i32_1 = arith.constant 0 : i32
    return %c0_i32, %c0_i32_0 : i32, i32
  }
  func.func @transform_4(%arg0: i32) -> (i32, i32) {
    %c0_i32 = arith.constant 0 : i32
    %c0_i32_0 = arith.constant 0 : i32
    %c0_i32_1 = arith.constant 0 : i32
    return %c0_i32, %c0_i32_0 : i32, i32
  }
  func.func @transform_5(%arg0: i32) -> (i32, i32) {
    %c0_i32 = arith.constant 0 : i32
    %c0_i32_0 = arith.constant 0 : i32
    %c0_i32_1 = arith.constant 0 : i32
    return %c0_i32, %c0_i32_0 : i32, i32
  }
  func.func @transform_6(%arg0: i32) -> (i32, i32) {
    %c0_i32 = arith.constant 0 : i32
    %c0_i32_0 = arith.constant 0 : i32
    %c0_i32_1 = arith.constant 0 : i32
    return %c0_i32, %c0_i32_0 : i32, i32
  }
  func.func @transform_7(%arg0: i32) -> (i32, i32) {
    %c0_i32 = arith.constant 0 : i32
    %c0_i32_0 = arith.constant 0 : i32
    return %arg0, %c0_i32 : i32, i32
  }
}

module attributes {stable_mosaic.version = 11 : i64} {
  func.func @full_ot_kernel(%arg0: i32, %arg1: memref<16x512xf32, #tpu.memory_space<vmem>>, %arg2: memref<512x1024xbf16, #tpu.memory_space<vmem>>, %arg3: memref<1x1024xf32, #tpu.memory_space<vmem>>, %arg4: memref<1024x512xbf16, #tpu.memory_space<vmem>>, %arg5: memref<1x512xf32, #tpu.memory_space<vmem>>, %arg6: memref<512x256xbf16, #tpu.memory_space<vmem>>, %arg7: memref<1x256xf32, #tpu.memory_space<vmem>>, %arg8: memref<16x256xf32, #tpu.memory_space<vmem>>) attributes {dimension_semantics = [#tpu.dimension_semantics<parallel>], iteration_bounds = array<i64: 1>, scalar_prefetch = 0 : i64, scratch_operands = 0 : i64, tpu.core_type = #tpu.core_type<tc>, window_params = [{transform_indices = @transform_0, window_bounds = array<i64: 16, 512>}, {pipeline_mode = #tpu.pipeline_mode<synchronous>, transform_indices = @transform_1, window_bounds = array<i64: 512, 1024>}, {pipeline_mode = #tpu.pipeline_mode<synchronous>, transform_indices = @transform_2, window_bounds = array<i64: 1, 1024>}, {pipeline_mode = #tpu.pipeline_mode<synchronous>, transform_indices = @transform_3, window_bounds = array<i64: 1024, 512>}, {pipeline_mode = #tpu.pipeline_mode<synchronous>, transform_indices = @transform_4, window_bounds = array<i64: 1, 512>}, {pipeline_mode = #tpu.pipeline_mode<synchronous>, transform_indices = @transform_5, window_bounds = array<i64: 512, 256>}, {pipeline_mode = #tpu.pipeline_mode<synchronous>, transform_indices = @transform_6, window_bounds = array<i64: 1, 256>}, {transform_indices = @transform_7, window_bounds = array<i64: 16, 256>}]} {
    %c0 = arith.constant 0 : index
    %c0_0 = arith.constant 0 : index
    %0 = vector.load %arg1[%c0, %c0_0] : memref<16x512xf32, #tpu.memory_space<vmem>>, vector<16x512xf32>
    %1 = arith.truncf %0 : vector<16x512xf32> to vector<16x512xbf16>
    %c0_1 = arith.constant 0 : index
    %c0_2 = arith.constant 0 : index
    %2 = vector.load %arg2[%c0_1, %c0_2] : memref<512x1024xbf16, #tpu.memory_space<vmem>>, vector<512x1024xbf16>
    %cst = arith.constant dense<0.000000e+00> : vector<16x1024xf32>
    %3 = tpu.matmul %1, %2, %cst {dimension_numbers = #tpu.dot_dimension_numbers<[1], [0], [0], [1], [0, 0, 1, 1], [], []>} : vector<16x512xbf16>, vector<512x1024xbf16>, vector<16x1024xf32> -> vector<16x1024xf32>
    %c0_3 = arith.constant 0 : index
    %c0_4 = arith.constant 0 : index
    %4 = vector.load %arg3[%c0_3, %c0_4] : memref<1x1024xf32, #tpu.memory_space<vmem>>, vector<1x1024xf32>
    %5 = vector.broadcast %4 : vector<1x1024xf32> to vector<16x1024xf32>
    %6 = arith.addf %3, %5 : vector<16x1024xf32>
    %cst_5 = arith.constant 0.000000e+00 : f32
    %7 = vector.broadcast %cst_5 : f32 to vector<16x1024xf32>
    %8 = arith.cmpf ogt, %6, %7 : vector<16x1024xf32>
    %cst_6 = arith.constant 2.000000e-01 : f32
    %9 = vector.broadcast %cst_6 : f32 to vector<16x1024xf32>
    %10 = arith.mulf %9, %6 : vector<16x1024xf32>
    %11 = arith.select %8, %6, %10 : vector<16x1024xi1>, vector<16x1024xf32>
    %12 = arith.truncf %11 : vector<16x1024xf32> to vector<16x1024xbf16>
    %c0_7 = arith.constant 0 : index
    %c0_8 = arith.constant 0 : index
    %13 = vector.load %arg4[%c0_7, %c0_8] : memref<1024x512xbf16, #tpu.memory_space<vmem>>, vector<1024x512xbf16>
    %cst_9 = arith.constant dense<0.000000e+00> : vector<16x512xf32>
    %14 = tpu.matmul %12, %13, %cst_9 {dimension_numbers = #tpu.dot_dimension_numbers<[1], [0], [0], [1], [0, 0, 1, 1], [], []>} : vector<16x1024xbf16>, vector<1024x512xbf16>, vector<16x512xf32> -> vector<16x512xf32>
    %c0_10 = arith.constant 0 : index
    %c0_11 = arith.constant 0 : index
    %15 = vector.load %arg5[%c0_10, %c0_11] : memref<1x512xf32, #tpu.memory_space<vmem>>, vector<1x512xf32>
    %16 = vector.broadcast %15 : vector<1x512xf32> to vector<16x512xf32>
    %17 = arith.addf %14, %16 : vector<16x512xf32>
    %cst_12 = arith.constant 0.000000e+00 : f32
    %18 = vector.broadcast %cst_12 : f32 to vector<16x512xf32>
    %19 = arith.cmpf ogt, %17, %18 : vector<16x512xf32>
    %cst_13 = arith.constant 2.000000e-01 : f32
    %20 = vector.broadcast %cst_13 : f32 to vector<16x512xf32>
    %21 = arith.mulf %20, %17 : vector<16x512xf32>
    %22 = arith.select %19, %17, %21 : vector<16x512xi1>, vector<16x512xf32>
    %23 = arith.truncf %22 : vector<16x512xf32> to vector<16x512xbf16>
    %c0_14 = arith.constant 0 : index
    %c0_15 = arith.constant 0 : index
    %24 = vector.load %arg6[%c0_14, %c0_15] : memref<512x256xbf16, #tpu.memory_space<vmem>>, vector<512x256xbf16>
    %cst_16 = arith.constant dense<0.000000e+00> : vector<16x256xf32>
    %25 = tpu.matmul %23, %24, %cst_16 {dimension_numbers = #tpu.dot_dimension_numbers<[1], [0], [0], [1], [0, 0, 1, 1], [], []>} : vector<16x512xbf16>, vector<512x256xbf16>, vector<16x256xf32> -> vector<16x256xf32>
    %c0_17 = arith.constant 0 : index
    %c0_18 = arith.constant 0 : index
    %26 = vector.load %arg7[%c0_17, %c0_18] : memref<1x256xf32, #tpu.memory_space<vmem>>, vector<1x256xf32>
    %27 = vector.broadcast %26 : vector<1x256xf32> to vector<16x256xf32>
    %28 = arith.addf %25, %27 : vector<16x256xf32>
    %cst_19 = arith.constant 0.000000e+00 : f32
    %29 = vector.broadcast %cst_19 : f32 to vector<16x256xf32>
    %30 = arith.cmpf ogt, %28, %29 : vector<16x256xf32>
    %cst_20 = arith.constant 2.000000e-01 : f32
    %31 = vector.broadcast %cst_20 : f32 to vector<16x256xf32>
    %32 = arith.mulf %31, %28 : vector<16x256xf32>
    %33 = arith.select %30, %28, %32 : vector<16x256xi1>, vector<16x256xf32>
    %c0_21 = arith.constant 0 : index
    %c0_22 = arith.constant 0 : index
    %34 = vector.load %arg8[%c0_21, %c0_22] : memref<16x256xf32, #tpu.memory_space<vmem>>, vector<16x256xf32>
    tpu.vector_store %arg8[%c0_21, %c0_22], %33 {strides = array<i32>} : memref<16x256xf32, #tpu.memory_space<vmem>>, vector<16x256xf32>,
    return
  }
  func.func @transform_0(%arg0: i32) -> (i32, i32) {
    %c0_i32 = arith.constant 0 : i32
    %c0_i32_0 = arith.constant 0 : i32
    return %arg0, %c0_i32 : i32, i32
  }
  func.func @transform_1(%arg0: i32) -> (i32, i32) {
    %c0_i32 = arith.constant 0 : i32
    %c0_i32_0 = arith.constant 0 : i32
    %c0_i32_1 = arith.constant 0 : i32
    return %c0_i32, %c0_i32_0 : i32, i32
  }
  func.func @transform_2(%arg0: i32) -> (i32, i32) {
    %c0_i32 = arith.constant 0 : i32
    %c0_i32_0 = arith.constant 0 : i32
    %c0_i32_1 = arith.constant 0 : i32
    return %c0_i32, %c0_i32_0 : i32, i32
  }
  func.func @transform_3(%arg0: i32) -> (i32, i32) {
    %c0_i32 = arith.constant 0 : i32
    %c0_i32_0 = arith.constant 0 : i32
    %c0_i32_1 = arith.constant 0 : i32
    return %c0_i32, %c0_i32_0 : i32, i32
  }
  func.func @transform_4(%arg0: i32) -> (i32, i32) {
    %c0_i32 = arith.constant 0 : i32
    %c0_i32_0 = arith.constant 0 : i32
    %c0_i32_1 = arith.constant 0 : i32
    return %c0_i32, %c0_i32_0 : i32, i32
  }
  func.func @transform_5(%arg0: i32) -> (i32, i32) {
    %c0_i32 = arith.constant 0 : i32
    %c0_i32_0 = arith.constant 0 : i32
    %c0_i32_1 = arith.constant 0 : i32
    return %c0_i32, %c0_i32_0 : i32, i32
  }
  func.func @transform_6(%arg0: i32) -> (i32, i32) {
    %c0_i32 = arith.constant 0 : i32
    %c0_i32_0 = arith.constant 0 : i32
    %c0_i32_1 = arith.constant 0 : i32
    return %c0_i32, %c0_i32_0 : i32, i32
  }
  func.func @transform_7(%arg0: i32) -> (i32, i32) {
    %c0_i32 = arith.constant 0 : i32
    %c0_i32_0 = arith.constant 0 : i32
    return %arg0, %c0_i32 : i32, i32
  }
}

</mosaic_0001>

<llo_original>
// kernel: tpu_custom_call.1
$region0: #{tpu_custom_call.1}
  #allocation0 [shape = 'u32[]', space=smem, size = 0x4, offset = 0x4, fixed_abs, tag = 'smem constant byte address 0x4 - core index']
  #allocation1 [shape = 'u32[72,128]{1,0:T(1,128)}', space=vmem, size = 0x9000, scoped, tag = 'internal scratch']
  %s0 = inlined_call_operand.hbm [shape: f32[10,512], index: 0, kind: input, shape index: {}]
  %s1 = inlined_call_operand.hbm [shape: bf16[512,1024], index: 1, kind: input, shape index: {}]
  %s2 = inlined_call_operand.hbm [shape: f32[1,1024], index: 2, kind: input, shape index: {}]
  %s3 = inlined_call_operand.hbm [shape: bf16[1024,512], index: 3, kind: input, shape index: {}]
  %s4 = inlined_call_operand.hbm [shape: f32[1,512], index: 4, kind: input, shape index: {}]
  %s5 = inlined_call_operand.hbm [shape: bf16[512,256], index: 5, kind: input, shape index: {}]
  %s6 = inlined_call_operand.vmem [shape: f32[1,256], index: 6, kind: input, shape index: {}]
  %s7 = inlined_call_operand.hbm [shape: f32[10,256], index: 7, kind: output, shape index: {}]
  %s8 = sld [smem:[#allocation0]]
  $region62: #{tpu_custom_call.1} parent=0
    _
  %s10 = ssub.s32 1, %s8
  %s11 = scalar_select 0, %s10, %s8
  $region1: #{tpu_custom_call.1} parent=0
    #allocation2 [shape = 'u8[32768]{0}', space=vmem, size = 0x8000, scoped, tag = 'input window, operand 0, single buffered']
    #allocation3 [shape = 's32[1]{0}', space=sflag, size = 0x4, scoped, tag = 'scoped memory for tpu_custom_call.1']
    #allocation4 [shape = 's32[1]{0}', space=sflag, size = 0x4, scoped, tag = 'scoped memory for tpu_custom_call.1']
    #allocation5 [shape = 'u8[1048576]{0}', space=vmem, size = 0x100000, scoped, tag = 'input window, operand 1, single buffered']
    #allocation6 [shape = 's32[1]{0}', space=sflag, size = 0x4, scoped, tag = 'scoped memory for tpu_custom_call.1']
    #allocation7 [shape = 'u8[4096]{0}', space=vmem, size = 0x1000, scoped, tag = 'input window, operand 2, single buffered']
    #allocation8 [shape = 'u8[1048576]{0}', space=vmem, size = 0x100000, scoped, tag = 'input window, operand 3, single buffered']
    #allocation9 [shape = 's32[1]{0}', space=sflag, size = 0x4, scoped, tag = 'scoped memory for tpu_custom_call.1']
    #allocation10 [shape = 'u8[2048]{0}', space=vmem, size = 0x800, scoped, tag = 'input window, operand 4, single buffered']
    #allocation11 [shape = 'u8[262144]{0}', space=vmem, size = 0x40000, scoped, tag = 'input window, operand 5, single buffered']
    #allocation12 [shape = 's32[1]{0}', space=sflag, size = 0x4, scoped, tag = 'scoped memory for tpu_custom_call.1']
    #allocation13 [shape = 'u8[16384]{0}', space=vmem, size = 0x4000, scoped, tag = 'output window, operand 0, single buffered']
    %12 = vsyncpa [#allocation3], 0
    %13 = vsyncpa [#allocation6], 0
    %14 = vsyncpa [#allocation9], 0
    %15 = vsyncpa [#allocation12], 0
    %16 = vsyncpa [#allocation4], 0
    // Predicated region
    $region2: #{tpu_custom_call.1} parent=1 // pred_check
      _
    $region3: #{tpu_custom_call.1} parent=1 // pred_check_branch
      %18 = sbr.rel (0) target = $region5
    $region4: #{tpu_custom_call.1} parent=1 // pred_region
      %20 = vsyncadd [#allocation3], 0
      %s21 = sshll.u32 %s0, 4
      %s22 = int_to_ptr.hbm [resolvable:$true] %s21
      %s23 = sshll.u32 [#allocation2], 4
      %s24 = int_to_ptr.vmem [resolvable:$true] %s23
      %29 = dma.hbm_to_vmem [thread:$0]  %s22, 1024, %s24, [#allocation3], 512, 512, 32
    $region5: #{tpu_custom_call.1} parent=1 // pred_fallthru
      _
    // Predicated region
    $region6: #{tpu_custom_call.1} parent=1 // pred_check
      _
    $region7: #{tpu_custom_call.1} parent=1 // pred_check_branch
      %31 = sbr.rel (0) target = $region9
    $region8: #{tpu_custom_call.1} parent=1 // pred_region
      %33 = vsyncadd [#allocation6], 0
      %s34 = sshll.u32 %s1, 4
      %s35 = int_to_ptr.hbm [resolvable:$true] %s34
      %s36 = sshll.u32 [#allocation5], 4
      %s37 = int_to_ptr.vmem [resolvable:$true] %s36
      %42 = dma.hbm_to_vmem [thread:$0]  %s35, 32768, %s37, [#allocation6], 512, 512, 32
    $region9: #{tpu_custom_call.1} parent=1 // pred_fallthru
      _
    // Predicated region
    $region10: #{tpu_custom_call.1} parent=1 // pred_check
      _
    $region11: #{tpu_custom_call.1} parent=1 // pred_check_branch
      %44 = sbr.rel (0) target = $region13
    $region12: #{tpu_custom_call.1} parent=1 // pred_region
      %46 = vsyncadd [#allocation6], 0
      %s48 = sshll.u32 %s2, 4
      %s49 = int_to_ptr.hbm [resolvable:$true] %s48
      %s50 = sshll.u32 [#allocation7], 4
      %s51 = int_to_ptr.vmem [resolvable:$true] %s50
      %53 = dma.hbm_to_vmem [thread:$0]  %s49, 128, %s51, [#allocation6]
    $region13: #{tpu_custom_call.1} parent=1 // pred_fallthru
      _
    // Predicated region
    $region14: #{tpu_custom_call.1} parent=1 // pred_check
      _
    $region15: #{tpu_custom_call.1} parent=1 // pred_check_branch
      %55 = sbr.rel (0) target = $region17
    $region16: #{tpu_custom_call.1} parent=1 // pred_region
      %57 = vsyncadd [#allocation9], 0
      %s58 = sshll.u32 %s3, 4
      %s59 = int_to_ptr.hbm [resolvable:$true] %s58
      %s60 = sshll.u32 [#allocation8], 4
      %s61 = int_to_ptr.vmem [resolvable:$true] %s60
      %66 = dma.hbm_to_vmem [thread:$0]  %s59, 32768, %s61, [#allocation9], 256, 256, 16
    $region17: #{tpu_custom_call.1} parent=1 // pred_fallthru
      _
    // Predicated region
    $region18: #{tpu_custom_call.1} parent=1 // pred_check
      _
    $region19: #{tpu_custom_call.1} parent=1 // pred_check_branch
      %68 = sbr.rel (0) target = $region21
    $region20: #{tpu_custom_call.1} parent=1 // pred_region
      %70 = vsyncadd [#allocation9], 0
      %s72 = sshll.u32 %s4, 4
      %s73 = int_to_ptr.hbm [resolvable:$true] %s72
      %s74 = sshll.u32 [#allocation10], 4
      %s75 = int_to_ptr.vmem [resolvable:$true] %s74
      %77 = dma.hbm_to_vmem [thread:$0]  %s73, 64, %s75, [#allocation9]
    $region21: #{tpu_custom_call.1} parent=1 // pred_fallthru
      _
    // Predicated region
    $region22: #{tpu_custom_call.1} parent=1 // pred_check
      _
    $region23: #{tpu_custom_call.1} parent=1 // pred_check_branch
      %79 = sbr.rel (0) target = $region25
    $region24: #{tpu_custom_call.1} parent=1 // pred_region
      %81 = vsyncadd [#allocation12], 0
      %s82 = sshll.u32 %s5, 4
      %s83 = int_to_ptr.hbm [resolvable:$true] %s82
      %s84 = sshll.u32 [#allocation11], 4
      %s85 = int_to_ptr.vmem [resolvable:$true] %s84
      %90 = dma.hbm_to_vmem [thread:$0]  %s83, 8192, %s85, [#allocation12], 128, 128, 8
    $region25: #{tpu_custom_call.1} parent=1 // pred_fallthru
      _
    // Predicated region
    $region26: #{tpu_custom_call.1} parent=1 // pred_check
      _
    $region27: #{tpu_custom_call.1} parent=1 // pred_check_branch
      %92 = sbr.rel (0) target = $region29
    $region28: #{tpu_custom_call.1} parent=1 // pred_region
      _
    $region29: #{tpu_custom_call.1} parent=1 // pred_fallthru
      _
    // Predicated region
    $region30: #{tpu_custom_call.1} parent=1 // pred_check
      _
    $region31: #{tpu_custom_call.1} parent=1 // pred_check_branch
      %94 = sbr.rel (0) target = $region33
    $region32: #{tpu_custom_call.1} parent=1 // pred_region
      %96 = dma.done [#allocation3], 1024
    $region33: #{tpu_custom_call.1} parent=1 // pred_fallthru
      _
    // Predicated region
    $region34: #{tpu_custom_call.1} parent=1 // pred_check
      _
    $region35: #{tpu_custom_call.1} parent=1 // pred_check_branch
      %98 = sbr.rel (0) target = $region37
    $region36: #{tpu_custom_call.1} parent=1 // pred_region
      %100 = dma.done [#allocation6], 32768
    $region37: #{tpu_custom_call.1} parent=1 // pred_fallthru
      _
    // Predicated region
    $region38: #{tpu_custom_call.1} parent=1 // pred_check
      _
    $region39: #{tpu_custom_call.1} parent=1 // pred_check_branch
      %102 = sbr.rel (0) target = $region41
    $region40: #{tpu_custom_call.1} parent=1 // pred_region
      %104 = dma.done [#allocation6], 128
    $region41: #{tpu_custom_call.1} parent=1 // pred_fallthru
      _
    // Predicated region
    $region42: #{tpu_custom_call.1} parent=1 // pred_check
      _
    $region43: #{tpu_custom_call.1} parent=1 // pred_check_branch
      %106 = sbr.rel (0) target = $region45
    $region44: #{tpu_custom_call.1} parent=1 // pred_region
      %108 = dma.done [#allocation9], 32768
    $region45: #{tpu_custom_call.1} parent=1 // pred_fallthru
      _
    // Predicated region
    $region46: #{tpu_custom_call.1} parent=1 // pred_check
      _
    $region47: #{tpu_custom_call.1} parent=1 // pred_check_branch
      %110 = sbr.rel (0) target = $region49
    $region48: #{tpu_custom_call.1} parent=1 // pred_region
      %112 = dma.done [#allocation9], 64
    $region49: #{tpu_custom_call.1} parent=1 // pred_fallthru
      _
    // Predicated region
    $region50: #{tpu_custom_call.1} parent=1 // pred_check
      _
    $region51: #{tpu_custom_call.1} parent=1 // pred_check_branch
      %114 = sbr.rel (0) target = $region53
    $region52: #{tpu_custom_call.1} parent=1 // pred_region
      %116 = dma.done [#allocation12], 8192
    $region53: #{tpu_custom_call.1} parent=1 // pred_fallthru
      _
    %v117 = vld [vmem:[#allocation2] sm:$0xff]
    %v118 = vld [vmem:[#allocation2 + $0x8] sm:$0xff]
    %v119 = vld [vmem:[#allocation2 + $0x10] sm:$0xff]
    %v120 = vld [vmem:[#allocation2 + $0x18] sm:$0xff]
    %v121 = vld [vmem:[#allocation2 + $0x20] sm:$0xff]
    %v122 = vld [vmem:[#allocation2 + $0x28] sm:$0xff]
    %v123 = vld [vmem:[#allocation2 + $0x30] sm:$0xff]
    %v124 = vld [vmem:[#allocation2 + $0x38] sm:$0xff]
    %v125 = vpack.c.bf16 %v121, %v117
    %v126 = vpack.c.bf16 %v122, %v118
    %v127 = vpack.c.bf16 %v123, %v119
    %v128 = vpack.c.bf16 %v124, %v120
    %v129 = vld [vmem:[#allocation5] sm:$0xff]
    %v130 = vld [vmem:[#allocation5 + $0x8] sm:$0xff]
    %v131 = vld [vmem:[#allocation5 + $0x10] sm:$0xff]
    %v132 = vld [vmem:[#allocation5 + $0x18] sm:$0xff]
    %v133 = vld [vmem:[#allocation5 + $0x20] sm:$0xff]
    %v134 = vld [vmem:[#allocation5 + $0x28] sm:$0xff]
    %v135 = vld [vmem:[#allocation5 + $0x30] sm:$0xff]
    %v136 = vld [vmem:[#allocation5 + $0x38] sm:$0xff]
    %v137 = vld [vmem:[#allocation5 + $0x40] sm:$0xff]
    %v138 = vld [vmem:[#allocation5 + $0x48] sm:$0xff]
    %v139 = vld [vmem:[#allocation5 + $0x50] sm:$0xff]
    %v140 = vld [vmem:[#allocation5 + $0x58] sm:$0xff]
    %v141 = vld [vmem:[#allocation5 + $0x60] sm:$0xff]
    %v142 = vld [vmem:[#allocation5 + $0x68] sm:$0xff]
    %v143 = vld [vmem:[#allocation5 + $0x70] sm:$0xff]
    %v144 = vld [vmem:[#allocation5 + $0x78] sm:$0xff]
    %v145 = vld [vmem:[#allocation5 + $0x80] sm:$0xff]
    %v146 = vld [vmem:[#allocation5 + $0x88] sm:$0xff]
    %v147 = vld [vmem:[#allocation5 + $0x90] sm:$0xff]
    %v148 = vld [vmem:[#allocation5 + $0x98] sm:$0xff]
    %v149 = vld [vmem:[#allocation5 + $0xa0] sm:$0xff]
    %v150 = vld [vmem:[#allocation5 + $0xa8] sm:$0xff]
    %v151 = vld [vmem:[#allocation5 + $0xb0] sm:$0xff]
    %v152 = vld [vmem:[#allocation5 + $0xb8] sm:$0xff]
    %v153 = vld [vmem:[#allocation5 + $0xc0] sm:$0xff]
    %v154 = vld [vmem:[#allocation5 + $0xc8] sm:$0xff]
    %v155 = vld [vmem:[#allocation5 + $0xd0] sm:$0xff]
    %v156 = vld [vmem:[#allocation5 + $0xd8] sm:$0xff]
    %v157 = vld [vmem:[#allocation5 + $0xe0] sm:$0xff]
    %v158 = vld [vmem:[#allocation5 + $0xe8] sm:$0xff]
    %v159 = vld [vmem:[#allocation5 + $0xf0] sm:$0xff]
    %v160 = vld [vmem:[#allocation5 + $0xf8] sm:$0xff]
    %v161 = vld [vmem:[#allocation5 + $0x100] sm:$0xff]
    %v162 = vld [vmem:[#allocation5 + $0x108] sm:$0xff]
    %v163 = vld [vmem:[#allocation5 + $0x110] sm:$0xff]
    %v164 = vld [vmem:[#allocation5 + $0x118] sm:$0xff]
    %v165 = vld [vmem:[#allocation5 + $0x120] sm:$0xff]
    %v166 = vld [vmem:[#allocation5 + $0x128] sm:$0xff]
    %v167 = vld [vmem:[#allocation5 + $0x130] sm:$0xff]
    %v168 = vld [vmem:[#allocation5 + $0x138] sm:$0xff]
    %v169 = vld [vmem:[#allocation5 + $0x140] sm:$0xff]
    %v170 = vld [vmem:[#allocation5 + $0x148] sm:$0xff]
    %v171 = vld [vmem:[#allocation5 + $0x150] sm:$0xff]
    %v172 = vld [vmem:[#allocation5 + $0x158] sm:$0xff]
    %v173 = vld [vmem:[#allocation5 + $0x160] sm:$0xff]
    %v174 = vld [vmem:[#allocation5 + $0x168] sm:$0xff]
    %v175 = vld [vmem:[#allocation5 + $0x170] sm:$0xff]
    %v176 = vld [vmem:[#allocation5 + $0x178] sm:$0xff]
    %v177 = vld [vmem:[#allocation5 + $0x180] sm:$0xff]
    %v178 = vld [vmem:[#allocation5 + $0x188] sm:$0xff]
    %v179 = vld [vmem:[#allocation5 + $0x190] sm:$0xff]
    %v180 = vld [vmem:[#allocation5 + $0x198] sm:$0xff]
    %v181 = vld [vmem:[#allocation5 + $0x1a0] sm:$0xff]
    %v182 = vld [vmem:[#allocation5 + $0x1a8] sm:$0xff]
    %v183 = vld [vmem:[#allocation5 + $0x1b0] sm:$0xff]
    %v184 = vld [vmem:[#allocation5 + $0x1b8] sm:$0xff]
    %v185 = vld [vmem:[#allocation5 + $0x1c0] sm:$0xff]
    %v186 = vld [vmem:[#allocation5 + $0x1c8] sm:$0xff]
    %v187 = vld [vmem:[#allocation5 + $0x1d0] sm:$0xff]
    %v188 = vld [vmem:[#allocation5 + $0x1d8] sm:$0xff]
    %v189 = vld [vmem:[#allocation5 + $0x1e0] sm:$0xff]
    %v190 = vld [vmem:[#allocation5 + $0x1e8] sm:$0xff]
    %v191 = vld [vmem:[#allocation5 + $0x1f0] sm:$0xff]
    %v192 = vld [vmem:[#allocation5 + $0x1f8] sm:$0xff]
    %v193 = vld [vmem:[#allocation5 + $0x200] sm:$0xff]
    %v194 = vld [vmem:[#allocation5 + $0x208] sm:$0xff]
    %v195 = vld [vmem:[#allocation5 + $0x210] sm:$0xff]
    %v196 = vld [vmem:[#allocation5 + $0x218] sm:$0xff]
    %v197 = vld [vmem:[#allocation5 + $0x220] sm:$0xff]
    %v198 = vld [vmem:[#allocation5 + $0x228] sm:$0xff]
    %v199 = vld [vmem:[#allocation5 + $0x230] sm:$0xff]
    %v200 = vld [vmem:[#allocation5 + $0x238] sm:$0xff]
    %v201 = vld [vmem:[#allocation5 + $0x240] sm:$0xff]
    %v202 = vld [vmem:[#allocation5 + $0x248] sm:$0xff]
    %v203 = vld [vmem:[#allocation5 + $0x250] sm:$0xff]
    %v204 = vld [vmem:[#allocation5 + $0x258] sm:$0xff]
    %v205 = vld [vmem:[#allocation5 + $0x260] sm:$0xff]
    %v206 = vld [vmem:[#allocation5 + $0x268] sm:$0xff]
    %v207 = vld [vmem:[#allocation5 + $0x270] sm:$0xff]
    %v208 = vld [vmem:[#allocation5 + $0x278] sm:$0xff]
    %v209 = vld [vmem:[#allocation5 + $0x280] sm:$0xff]
    %v210 = vld [vmem:[#allocation5 + $0x288] sm:$0xff]
    %v211 = vld [vmem:[#allocation5 + $0x290] sm:$0xff]
    %v212 = vld [vmem:[#allocation5 + $0x298] sm:$0xff]
    %v213 = vld [vmem:[#allocation5 + $0x2a0] sm:$0xff]
    %v214 = vld [vmem:[#allocation5 + $0x2a8] sm:$0xff]
    %v215 = vld [vmem:[#allocation5 + $0x2b0] sm:$0xff]
    %v216 = vld [vmem:[#allocation5 + $0x2b8] sm:$0xff]
    %v217 = vld [vmem:[#allocation5 + $0x2c0] sm:$0xff]
    %v218 = vld [vmem:[#allocation5 + $0x2c8] sm:$0xff]
    %v219 = vld [vmem:[#allocation5 + $0x2d0] sm:$0xff]
    %v220 = vld [vmem:[#allocation5 + $0x2d8] sm:$0xff]
    %v221 = vld [vmem:[#allocation5 + $0x2e0] sm:$0xff]
    %v222 = vld [vmem:[#allocation5 + $0x2e8] sm:$0xff]
    %v223 = vld [vmem:[#allocation5 + $0x2f0] sm:$0xff]
    %v224 = vld [vmem:[#allocation5 + $0x2f8] sm:$0xff]
    %v225 = vld [vmem:[#allocation5 + $0x300] sm:$0xff]
    %v226 = vld [vmem:[#allocation5 + $0x308] sm:$0xff]
    %v227 = vld [vmem:[#allocation5 + $0x310] sm:$0xff]
    %v228 = vld [vmem:[#allocation5 + $0x318] sm:$0xff]
    %v229 = vld [vmem:[#allocation5 + $0x320] sm:$0xff]
    %v230 = vld [vmem:[#allocation5 + $0x328] sm:$0xff]
    %v231 = vld [vmem:[#allocation5 + $0x330] sm:$0xff]
    %v232 = vld [vmem:[#allocation5 + $0x338] sm:$0xff]
    %v233 = vld [vmem:[#allocation5 + $0x340] sm:$0xff]
    %v234 = vld [vmem:[#allocation5 + $0x348] sm:$0xff]
    %v235 = vld [vmem:[#allocation5 + $0x350] sm:$0xff]
    %v236 = vld [vmem:[#allocation5 + $0x358] sm:$0xff]
    %v237 = vld [vmem:[#allocation5 + $0x360] sm:$0xff]
    %v238 = vld [vmem:[#allocation5 + $0x368] sm:$0xff]
    %v239 = vld [vmem:[#allocation5 + $0x370] sm:$0xff]
    %v240 = vld [vmem:[#allocation5 + $0x378] sm:$0xff]
    %v241 = vld [vmem:[#allocation5 + $0x380] sm:$0xff]
    %v242 = vld [vmem:[#allocation5 + $0x388] sm:$0xff]
    %v243 = vld [vmem:[#allocation5 + $0x390] sm:$0xff]
    %v244 = vld [vmem:[#allocation5 + $0x398] sm:$0xff]
    %v245 = vld [vmem:[#allocation5 + $0x3a0] sm:$0xff]
    %v246 = vld [vmem:[#allocation5 + $0x3a8] sm:$0xff]
    %v247 = vld [vmem:[#allocation5 + $0x3b0] sm:$0xff]
    %v248 = vld [vmem:[#allocation5 + $0x3b8] sm:$0xff]
    %v249 = vld [vmem:[#allocation5 + $0x3c0] sm:$0xff]
    %v250 = vld [vmem:[#allocation5 + $0x3c8] sm:$0xff]
    %v251 = vld [vmem:[#allocation5 + $0x3d0] sm:$0xff]
    %v252 = vld [vmem:[#allocation5 + $0x3d8] sm:$0xff]
    %v253 = vld [vmem:[#allocation5 + $0x3e0] sm:$0xff]
    %v254 = vld [vmem:[#allocation5 + $0x3e8] sm:$0xff]
    %v255 = vld [vmem:[#allocation5 + $0x3f0] sm:$0xff]
    %v256 = vld [vmem:[#allocation5 + $0x3f8] sm:$0xff]
    %v257 = vld [vmem:[#allocation5 + $0x400] sm:$0xff]
    %v258 = vld [vmem:[#allocation5 + $0x408] sm:$0xff]
    %v259 = vld [vmem:[#allocation5 + $0x410] sm:$0xff]
    %v260 = vld [vmem:[#allocation5 + $0x418] sm:$0xff]
    %v261 = vld [vmem:[#allocation5 + $0x420] sm:$0xff]
    %v262 = vld [vmem:[#allocation5 + $0x428] sm:$0xff]
    %v263 = vld [vmem:[#allocation5 + $0x430] sm:$0xff]
    %v264 = vld [vmem:[#allocation5 + $0x438] sm:$0xff]
    %v265 = vld [vmem:[#allocation5 + $0x440] sm:$0xff]
    %v266 = vld [vmem:[#allocation5 + $0x448] sm:$0xff]
    %v267 = vld [vmem:[#allocation5 + $0x450] sm:$0xff]
    %v268 = vld [vmem:[#allocation5 + $0x458] sm:$0xff]
    %v269 = vld [vmem:[#allocation5 + $0x460] sm:$0xff]
    %v270 = vld [vmem:[#allocation5 + $0x468] sm:$0xff]
    %v271 = vld [vmem:[#allocation5 + $0x470] sm:$0xff]
    %v272 = vld [vmem:[#allocation5 + $0x478] sm:$0xff]
    %v273 = vld [vmem:[#allocation5 + $0x480] sm:$0xff]
    %v274 = vld [vmem:[#allocation5 + $0x488] sm:$0xff]
    %v275 = vld [vmem:[#allocation5 + $0x490] sm:$0xff]
    %v276 = vld [vmem:[#allocation5 + $0x498] sm:$0xff]
    %v277 = vld [vmem:[#allocation5 + $0x4a0] sm:$0xff]
    %v278 = vld [vmem:[#allocation5 + $0x4a8] sm:$0xff]
    %v279 = vld [vmem:[#allocation5 + $0x4b0] sm:$0xff]
    %v280 = vld [vmem:[#allocation5 + $0x4b8] sm:$0xff]
    %v281 = vld [vmem:[#allocation5 + $0x4c0] sm:$0xff]
    %v282 = vld [vmem:[#allocation5 + $0x4c8] sm:$0xff]
    %v283 = vld [vmem:[#allocation5 + $0x4d0] sm:$0xff]
    %v284 = vld [vmem:[#allocation5 + $0x4d8] sm:$0xff]
    %v285 = vld [vmem:[#allocation5 + $0x4e0] sm:$0xff]
    %v286 = vld [vmem:[#allocation5 + $0x4e8] sm:$0xff]
    %v287 = vld [vmem:[#allocation5 + $0x4f0] sm:$0xff]
    %v288 = vld [vmem:[#allocation5 + $0x4f8] sm:$0xff]
    %v289 = vld [vmem:[#allocation5 + $0x500] sm:$0xff]
    %v290 = vld [vmem:[#allocation5 + $0x508] sm:$0xff]
    %v291 = vld [vmem:[#allocation5 + $0x510] sm:$0xff]
    %v292 = vld [vmem:[#allocation5 + $0x518] sm:$0xff]
    %v293 = vld [vmem:[#allocation5 + $0x520] sm:$0xff]
    %v294 = vld [vmem:[#allocation5 + $0x528] sm:$0xff]
    %v295 = vld [vmem:[#allocation5 + $0x530] sm:$0xff]
    %v296 = vld [vmem:[#allocation5 + $0x538] sm:$0xff]
    %v297 = vld [vmem:[#allocation5 + $0x540] sm:$0xff]
    %v298 = vld [vmem:[#allocation5 + $0x548] sm:$0xff]
    %v299 = vld [vmem:[#allocation5 + $0x550] sm:$0xff]
    %v300 = vld [vmem:[#allocation5 + $0x558] sm:$0xff]
    %v301 = vld [vmem:[#allocation5 + $0x560] sm:$0xff]
    %v302 = vld [vmem:[#allocation5 + $0x568] sm:$0xff]
    %v303 = vld [vmem:[#allocation5 + $0x570] sm:$0xff]
    %v304 = vld [vmem:[#allocation5 + $0x578] sm:$0xff]
    %v305 = vld [vmem:[#allocation5 + $0x580] sm:$0xff]
    %v306 = vld [vmem:[#allocation5 + $0x588] sm:$0xff]
    %v307 = vld [vmem:[#allocation5 + $0x590] sm:$0xff]
    %v308 = vld [vmem:[#allocation5 + $0x598] sm:$0xff]
    %v309 = vld [vmem:[#allocation5 + $0x5a0] sm:$0xff]
    %v310 = vld [vmem:[#allocation5 + $0x5a8] sm:$0xff]
    %v311 = vld [vmem:[#allocation5 + $0x5b0] sm:$0xff]
    %v312 = vld [vmem:[#allocation5 + $0x5b8] sm:$0xff]
    %v313 = vld [vmem:[#allocation5 + $0x5c0] sm:$0xff]
    %v314 = vld [vmem:[#allocation5 + $0x5c8] sm:$0xff]
    %v315 = vld [vmem:[#allocation5 + $0x5d0] sm:$0xff]
    %v316 = vld [vmem:[#allocation5 + $0x5d8] sm:$0xff]
    %v317 = vld [vmem:[#allocation5 + $0x5e0] sm:$0xff]
    %v318 = vld [vmem:[#allocation5 + $0x5e8] sm:$0xff]
    %v319 = vld [vmem:[#allocation5 + $0x5f0] sm:$0xff]
    %v320 = vld [vmem:[#allocation5 + $0x5f8] sm:$0xff]
    %v321 = vld [vmem:[#allocation5 + $0x600] sm:$0xff]
    %v322 = vld [vmem:[#allocation5 + $0x608] sm:$0xff]
    %v323 = vld [vmem:[#allocation5 + $0x610] sm:$0xff]
    %v324 = vld [vmem:[#allocation5 + $0x618] sm:$0xff]
    %v325 = vld [vmem:[#allocation5 + $0x620] sm:$0xff]
    %v326 = vld [vmem:[#allocation5 + $0x628] sm:$0xff]
    %v327 = vld [vmem:[#allocation5 + $0x630] sm:$0xff]
    %v328 = vld [vmem:[#allocation5 + $0x638] sm:$0xff]
    %v329 = vld [vmem:[#allocation5 + $0x640] sm:$0xff]
    %v330 = vld [vmem:[#allocation5 + $0x648] sm:$0xff]
    %v331 = vld [vmem:[#allocation5 + $0x650] sm:$0xff]
    %v332 = vld [vmem:[#allocation5 + $0x658] sm:$0xff]
    %v333 = vld [vmem:[#allocation5 + $0x660] sm:$0xff]
    %v334 = vld [vmem:[#allocation5 + $0x668] sm:$0xff]
    %v335 = vld [vmem:[#allocation5 + $0x670] sm:$0xff]
    %v336 = vld [vmem:[#allocation5 + $0x678] sm:$0xff]
    %v337 = vld [vmem:[#allocation5 + $0x680] sm:$0xff]
    %v338 = vld [vmem:[#allocation5 + $0x688] sm:$0xff]
    %v339 = vld [vmem:[#allocation5 + $0x690] sm:$0xff]
    %v340 = vld [vmem:[#allocation5 + $0x698] sm:$0xff]
    %v341 = vld [vmem:[#allocation5 + $0x6a0] sm:$0xff]
    %v342 = vld [vmem:[#allocation5 + $0x6a8] sm:$0xff]
    %v343 = vld [vmem:[#allocation5 + $0x6b0] sm:$0xff]
    %v344 = vld [vmem:[#allocation5 + $0x6b8] sm:$0xff]
    %v345 = vld [vmem:[#allocation5 + $0x6c0] sm:$0xff]
    %v346 = vld [vmem:[#allocation5 + $0x6c8] sm:$0xff]
    %v347 = vld [vmem:[#allocation5 + $0x6d0] sm:$0xff]
    %v348 = vld [vmem:[#allocation5 + $0x6d8] sm:$0xff]
    %v349 = vld [vmem:[#allocation5 + $0x6e0] sm:$0xff]
    %v350 = vld [vmem:[#allocation5 + $0x6e8] sm:$0xff]
    %v351 = vld [vmem:[#allocation5 + $0x6f0] sm:$0xff]
    %v352 = vld [vmem:[#allocation5 + $0x6f8] sm:$0xff]
    %v353 = vld [vmem:[#allocation5 + $0x700] sm:$0xff]
    %v354 = vld [vmem:[#allocation5 + $0x708] sm:$0xff]
    %v355 = vld [vmem:[#allocation5 + $0x710] sm:$0xff]
    %v356 = vld [vmem:[#allocation5 + $0x718] sm:$0xff]
    %v357 = vld [vmem:[#allocation5 + $0x720] sm:$0xff]
    %v358 = vld [vmem:[#allocation5 + $0x728] sm:$0xff]
    %v359 = vld [vmem:[#allocation5 + $0x730] sm:$0xff]
    %v360 = vld [vmem:[#allocation5 + $0x738] sm:$0xff]
    %v361 = vld [vmem:[#allocation5 + $0x740] sm:$0xff]
    %v362 = vld [vmem:[#allocation5 + $0x748] sm:$0xff]
    %v363 = vld [vmem:[#allocation5 + $0x750] sm:$0xff]
    %v364 = vld [vmem:[#allocation5 + $0x758] sm:$0xff]
    %v365 = vld [vmem:[#allocation5 + $0x760] sm:$0xff]
    %v366 = vld [vmem:[#allocation5 + $0x768] sm:$0xff]
    %v367 = vld [vmem:[#allocation5 + $0x770] sm:$0xff]
    %v368 = vld [vmem:[#allocation5 + $0x778] sm:$0xff]
    %v369 = vld [vmem:[#allocation5 + $0x780] sm:$0xff]
    %v370 = vld [vmem:[#allocation5 + $0x788] sm:$0xff]
    %v371 = vld [vmem:[#allocation5 + $0x790] sm:$0xff]
    %v372 = vld [vmem:[#allocation5 + $0x798] sm:$0xff]
    %v373 = vld [vmem:[#allocation5 + $0x7a0] sm:$0xff]
    %v374 = vld [vmem:[#allocation5 + $0x7a8] sm:$0xff]
    %v375 = vld [vmem:[#allocation5 + $0x7b0] sm:$0xff]
    %v376 = vld [vmem:[#allocation5 + $0x7b8] sm:$0xff]
    %v377 = vld [vmem:[#allocation5 + $0x7c0] sm:$0xff]
    %v378 = vld [vmem:[#allocation5 + $0x7c8] sm:$0xff]
    %v379 = vld [vmem:[#allocation5 + $0x7d0] sm:$0xff]
    %v380 = vld [vmem:[#allocation5 + $0x7d8] sm:$0xff]
    %v381 = vld [vmem:[#allocation5 + $0x7e0] sm:$0xff]
    %v382 = vld [vmem:[#allocation5 + $0x7e8] sm:$0xff]
    %v383 = vld [vmem:[#allocation5 + $0x7f0] sm:$0xff]
    %v384 = vld [vmem:[#allocation5 + $0x7f8] sm:$0xff]
    %v385 = vld [vmem:[#allocation7] sm:$0xff]
    %v387 = vperm.slane %v385, 0
    %v388 = vperm.slane %v385, 1
    %v389 = vperm.slane %v385, 2
    %v390 = vperm.slane %v385, 3
    %v391 = vperm.slane %v385, 4
    %v392 = vperm.slane %v385, 5
    %v393 = vperm.slane %v385, 6
    %v394 = vperm.slane %v385, 7
    %v659 = vunpack.c.l.b16 %v129
    %v660 = vunpack.c.h.b16 %v129
    %v661 = vunpack.c.l.b16 %v130
    %v662 = vunpack.c.h.b16 %v130
    %v663 = vunpack.c.l.b16 %v131
    %v664 = vunpack.c.h.b16 %v131
    %v665 = vunpack.c.l.b16 %v132
    %v666 = vunpack.c.h.b16 %v132
    %v667 = vunpack.c.l.b16 %v133
    %v668 = vunpack.c.h.b16 %v133
    %v669 = vunpack.c.l.b16 %v134
    %v670 = vunpack.c.h.b16 %v134
    %v671 = vunpack.c.l.b16 %v135
    %v672 = vunpack.c.h.b16 %v135
    %v673 = vunpack.c.l.b16 %v136
    %v674 = vunpack.c.h.b16 %v136
    %v675 = vunpack.c.l.b16 %v137
    %v676 = vunpack.c.h.b16 %v137
    %v677 = vunpack.c.l.b16 %v138
    %v678 = vunpack.c.h.b16 %v138
    %v679 = vunpack.c.l.b16 %v139
    %v680 = vunpack.c.h.b16 %v139
    %v681 = vunpack.c.l.b16 %v140
    %v682 = vunpack.c.h.b16 %v140
    %v683 = vunpack.c.l.b16 %v141
    %v684 = vunpack.c.h.b16 %v141
    %v685 = vunpack.c.l.b16 %v142
    %v686 = vunpack.c.h.b16 %v142
    %v687 = vunpack.c.l.b16 %v143
    %v688 = vunpack.c.h.b16 %v143
    %v689 = vunpack.c.l.b16 %v144
    %v690 = vunpack.c.h.b16 %v144
    %v691 = vunpack.c.l.b16 %v145
    %v692 = vunpack.c.h.b16 %v145
    %v693 = vunpack.c.l.b16 %v146
    %v694 = vunpack.c.h.b16 %v146
    %v695 = vunpack.c.l.b16 %v147
    %v696 = vunpack.c.h.b16 %v147
    %v697 = vunpack.c.l.b16 %v148
    %v698 = vunpack.c.h.b16 %v148
    %v699 = vunpack.c.l.b16 %v149
    %v700 = vunpack.c.h.b16 %v149
    %v701 = vunpack.c.l.b16 %v150
    %v702 = vunpack.c.h.b16 %v150
    %v703 = vunpack.c.l.b16 %v151
    %v704 = vunpack.c.h.b16 %v151
    %v705 = vunpack.c.l.b16 %v152
    %v706 = vunpack.c.h.b16 %v152
    %v707 = vunpack.c.l.b16 %v153
    %v708 = vunpack.c.h.b16 %v153
    %v709 = vunpack.c.l.b16 %v154
    %v710 = vunpack.c.h.b16 %v154
    %v711 = vunpack.c.l.b16 %v155
    %v712 = vunpack.c.h.b16 %v155
    %v713 = vunpack.c.l.b16 %v156
    %v714 = vunpack.c.h.b16 %v156
    %v715 = vunpack.c.l.b16 %v157
    %v716 = vunpack.c.h.b16 %v157
    %v717 = vunpack.c.l.b16 %v158
    %v718 = vunpack.c.h.b16 %v158
    %v719 = vunpack.c.l.b16 %v159
    %v720 = vunpack.c.h.b16 %v159
    %v721 = vunpack.c.l.b16 %v160
    %v722 = vunpack.c.h.b16 %v160
    %v723 = vunpack.c.l.b16 %v161
    %v724 = vunpack.c.h.b16 %v161
    %v725 = vunpack.c.l.b16 %v162
    %v726 = vunpack.c.h.b16 %v162
    %v727 = vunpack.c.l.b16 %v163
    %v728 = vunpack.c.h.b16 %v163
    %v729 = vunpack.c.l.b16 %v164
    %v730 = vunpack.c.h.b16 %v164
    %v731 = vunpack.c.l.b16 %v165
    %v732 = vunpack.c.h.b16 %v165
    %v733 = vunpack.c.l.b16 %v166
    %v734 = vunpack.c.h.b16 %v166
    %v735 = vunpack.c.l.b16 %v167
    %v736 = vunpack.c.h.b16 %v167
    %v737 = vunpack.c.l.b16 %v168
    %v738 = vunpack.c.h.b16 %v168
    %v739 = vunpack.c.l.b16 %v169
    %v740 = vunpack.c.h.b16 %v169
    %v741 = vunpack.c.l.b16 %v170
    %v742 = vunpack.c.h.b16 %v170
    %v743 = vunpack.c.l.b16 %v171
    %v744 = vunpack.c.h.b16 %v171
    %v745 = vunpack.c.l.b16 %v172
    %v746 = vunpack.c.h.b16 %v172
    %v747 = vunpack.c.l.b16 %v173
    %v748 = vunpack.c.h.b16 %v173
    %v749 = vunpack.c.l.b16 %v174
    %v750 = vunpack.c.h.b16 %v174
    %v751 = vunpack.c.l.b16 %v175
    %v752 = vunpack.c.h.b16 %v175
    %v753 = vunpack.c.l.b16 %v176
    %v754 = vunpack.c.h.b16 %v176
    %v755 = vunpack.c.l.b16 %v177
    %v756 = vunpack.c.h.b16 %v177
    %v757 = vunpack.c.l.b16 %v178
    %v758 = vunpack.c.h.b16 %v178
    %v759 = vunpack.c.l.b16 %v179
    %v760 = vunpack.c.h.b16 %v179
    %v761 = vunpack.c.l.b16 %v180
    %v762 = vunpack.c.h.b16 %v180
    %v763 = vunpack.c.l.b16 %v181
    %v764 = vunpack.c.h.b16 %v181
    %v765 = vunpack.c.l.b16 %v182
    %v766 = vunpack.c.h.b16 %v182
    %v767 = vunpack.c.l.b16 %v183
    %v768 = vunpack.c.h.b16 %v183
    %v769 = vunpack.c.l.b16 %v184
    %v770 = vunpack.c.h.b16 %v184
    %v771 = vunpack.c.l.b16 %v185
    %v772 = vunpack.c.h.b16 %v185
    %v773 = vunpack.c.l.b16 %v186
    %v774 = vunpack.c.h.b16 %v186
    %v775 = vunpack.c.l.b16 %v187
    %v776 = vunpack.c.h.b16 %v187
    %v777 = vunpack.c.l.b16 %v188
    %v778 = vunpack.c.h.b16 %v188
    %v779 = vunpack.c.l.b16 %v189
    %v780 = vunpack.c.h.b16 %v189
    %v781 = vunpack.c.l.b16 %v190
    %v782 = vunpack.c.h.b16 %v190
    %v783 = vunpack.c.l.b16 %v191
    %v784 = vunpack.c.h.b16 %v191
    %v785 = vunpack.c.l.b16 %v192
    %v786 = vunpack.c.h.b16 %v192
    %v787 = vunpack.c.l.b16 %v193
    %v788 = vunpack.c.h.b16 %v193
    %v789 = vunpack.c.l.b16 %v194
    %v790 = vunpack.c.h.b16 %v194
    %v791 = vunpack.c.l.b16 %v195
    %v792 = vunpack.c.h.b16 %v195
    %v793 = vunpack.c.l.b16 %v196
    %v794 = vunpack.c.h.b16 %v196
    %v795 = vunpack.c.l.b16 %v197
    %v796 = vunpack.c.h.b16 %v197
    %v797 = vunpack.c.l.b16 %v198
    %v798 = vunpack.c.h.b16 %v198
    %v799 = vunpack.c.l.b16 %v199
    %v800 = vunpack.c.h.b16 %v199
    %v801 = vunpack.c.l.b16 %v200
    %v802 = vunpack.c.h.b16 %v200
    %v803 = vunpack.c.l.b16 %v201
    %v804 = vunpack.c.h.b16 %v201
    %v805 = vunpack.c.l.b16 %v202
    %v806 = vunpack.c.h.b16 %v202
    %v807 = vunpack.c.l.b16 %v203
    %v808 = vunpack.c.h.b16 %v203
    %v809 = vunpack.c.l.b16 %v204
    %v810 = vunpack.c.h.b16 %v204
    %v811 = vunpack.c.l.b16 %v205
    %v812 = vunpack.c.h.b16 %v205
    %v813 = vunpack.c.l.b16 %v206
    %v814 = vunpack.c.h.b16 %v206
    %v815 = vunpack.c.l.b16 %v207
    %v816 = vunpack.c.h.b16 %v207
    %v817 = vunpack.c.l.b16 %v208
    %v818 = vunpack.c.h.b16 %v208
    %v819 = vunpack.c.l.b16 %v209
    %v820 = vunpack.c.h.b16 %v209
    %v821 = vunpack.c.l.b16 %v210
    %v822 = vunpack.c.h.b16 %v210
    %v823 = vunpack.c.l.b16 %v211
    %v824 = vunpack.c.h.b16 %v211
    %v825 = vunpack.c.l.b16 %v212
    %v826 = vunpack.c.h.b16 %v212
    %v827 = vunpack.c.l.b16 %v213
    %v828 = vunpack.c.h.b16 %v213
    %v829 = vunpack.c.l.b16 %v214
    %v830 = vunpack.c.h.b16 %v214
    %v831 = vunpack.c.l.b16 %v215
    %v832 = vunpack.c.h.b16 %v215
    %v833 = vunpack.c.l.b16 %v216
    %v834 = vunpack.c.h.b16 %v216
    %v835 = vunpack.c.l.b16 %v217
    %v836 = vunpack.c.h.b16 %v217
    %v837 = vunpack.c.l.b16 %v218
    %v838 = vunpack.c.h.b16 %v218
    %v839 = vunpack.c.l.b16 %v219
    %v840 = vunpack.c.h.b16 %v219
    %v841 = vunpack.c.l.b16 %v220
    %v842 = vunpack.c.h.b16 %v220
    %v843 = vunpack.c.l.b16 %v221
    %v844 = vunpack.c.h.b16 %v221
    %v845 = vunpack.c.l.b16 %v222
    %v846 = vunpack.c.h.b16 %v222
    %v847 = vunpack.c.l.b16 %v223
    %v848 = vunpack.c.h.b16 %v223
    %v849 = vunpack.c.l.b16 %v224
    %v850 = vunpack.c.h.b16 %v224
    %v851 = vunpack.c.l.b16 %v225
    %v852 = vunpack.c.h.b16 %v225
    %v853 = vunpack.c.l.b16 %v226
    %v854 = vunpack.c.h.b16 %v226
    %v855 = vunpack.c.l.b16 %v227
    %v856 = vunpack.c.h.b16 %v227
    %v857 = vunpack.c.l.b16 %v228
    %v858 = vunpack.c.h.b16 %v228
    %v859 = vunpack.c.l.b16 %v229
    %v860 = vunpack.c.h.b16 %v229
    %v861 = vunpack.c.l.b16 %v230
    %v862 = vunpack.c.h.b16 %v230
    %v863 = vunpack.c.l.b16 %v231
    %v864 = vunpack.c.h.b16 %v231
    %v865 = vunpack.c.l.b16 %v232
    %v866 = vunpack.c.h.b16 %v232
    %v867 = vunpack.c.l.b16 %v233
    %v868 = vunpack.c.h.b16 %v233
    %v869 = vunpack.c.l.b16 %v234
    %v870 = vunpack.c.h.b16 %v234
    %v871 = vunpack.c.l.b16 %v235
    %v872 = vunpack.c.h.b16 %v235
    %v873 = vunpack.c.l.b16 %v236
    %v874 = vunpack.c.h.b16 %v236
    %v875 = vunpack.c.l.b16 %v237
    %v876 = vunpack.c.h.b16 %v237
    %v877 = vunpack.c.l.b16 %v238
    %v878 = vunpack.c.h.b16 %v238
    %v879 = vunpack.c.l.b16 %v239
    %v880 = vunpack.c.h.b16 %v239
    %v881 = vunpack.c.l.b16 %v240
    %v882 = vunpack.c.h.b16 %v240
    %v883 = vunpack.c.l.b16 %v241
    %v884 = vunpack.c.h.b16 %v241
    %v885 = vunpack.c.l.b16 %v242
    %v886 = vunpack.c.h.b16 %v242
    %v887 = vunpack.c.l.b16 %v243
    %v888 = vunpack.c.h.b16 %v243
    %v889 = vunpack.c.l.b16 %v244
    %v890 = vunpack.c.h.b16 %v244
    %v891 = vunpack.c.l.b16 %v245
    %v892 = vunpack.c.h.b16 %v245
    %v893 = vunpack.c.l.b16 %v246
    %v894 = vunpack.c.h.b16 %v246
    %v895 = vunpack.c.l.b16 %v247
    %v896 = vunpack.c.h.b16 %v247
    %v897 = vunpack.c.l.b16 %v248
    %v898 = vunpack.c.h.b16 %v248
    %v899 = vunpack.c.l.b16 %v249
    %v900 = vunpack.c.h.b16 %v249
    %v901 = vunpack.c.l.b16 %v250
    %v902 = vunpack.c.h.b16 %v250
    %v903 = vunpack.c.l.b16 %v251
    %v904 = vunpack.c.h.b16 %v251
    %v905 = vunpack.c.l.b16 %v252
    %v906 = vunpack.c.h.b16 %v252
    %v907 = vunpack.c.l.b16 %v253
    %v908 = vunpack.c.h.b16 %v253
    %v909 = vunpack.c.l.b16 %v254
    %v910 = vunpack.c.h.b16 %v254
    %v911 = vunpack.c.l.b16 %v255
    %v912 = vunpack.c.h.b16 %v255
    %v913 = vunpack.c.l.b16 %v256
    %v914 = vunpack.c.h.b16 %v256
    %v915 = vunpack.c.l.b16 %v257
    %v916 = vunpack.c.h.b16 %v257
    %v917 = vunpack.c.l.b16 %v258
    %v918 = vunpack.c.h.b16 %v258
    %v919 = vunpack.c.l.b16 %v259
    %v920 = vunpack.c.h.b16 %v259
    %v921 = vunpack.c.l.b16 %v260
    %v922 = vunpack.c.h.b16 %v260
    %v923 = vunpack.c.l.b16 %v261
    %v924 = vunpack.c.h.b16 %v261
    %v925 = vunpack.c.l.b16 %v262
    %v926 = vunpack.c.h.b16 %v262
    %v927 = vunpack.c.l.b16 %v263
    %v928 = vunpack.c.h.b16 %v263
    %v929 = vunpack.c.l.b16 %v264
    %v930 = vunpack.c.h.b16 %v264
    %v931 = vunpack.c.l.b16 %v265
    %v932 = vunpack.c.h.b16 %v265
    %v933 = vunpack.c.l.b16 %v266
    %v934 = vunpack.c.h.b16 %v266
    %v935 = vunpack.c.l.b16 %v267
    %v936 = vunpack.c.h.b16 %v267
    %v937 = vunpack.c.l.b16 %v268
    %v938 = vunpack.c.h.b16 %v268
    %v939 = vunpack.c.l.b16 %v269
    %v940 = vunpack.c.h.b16 %v269
    %v941 = vunpack.c.l.b16 %v270
    %v942 = vunpack.c.h.b16 %v270
    %v943 = vunpack.c.l.b16 %v271
    %v944 = vunpack.c.h.b16 %v271
    %v945 = vunpack.c.l.b16 %v272
    %v946 = vunpack.c.h.b16 %v272
    %v947 = vunpack.c.l.b16 %v273
    %v948 = vunpack.c.h.b16 %v273
    %v949 = vunpack.c.l.b16 %v274
    %v950 = vunpack.c.h.b16 %v274
    %v951 = vunpack.c.l.b16 %v275
    %v952 = vunpack.c.h.b16 %v275
    %v953 = vunpack.c.l.b16 %v276
    %v954 = vunpack.c.h.b16 %v276
    %v955 = vunpack.c.l.b16 %v277
    %v956 = vunpack.c.h.b16 %v277
    %v957 = vunpack.c.l.b16 %v278
    %v958 = vunpack.c.h.b16 %v278
    %v959 = vunpack.c.l.b16 %v279
    %v960 = vunpack.c.h.b16 %v279
    %v961 = vunpack.c.l.b16 %v280
    %v962 = vunpack.c.h.b16 %v280
    %v963 = vunpack.c.l.b16 %v281
    %v964 = vunpack.c.h.b16 %v281
    %v965 = vunpack.c.l.b16 %v282
    %v966 = vunpack.c.h.b16 %v282
    %v967 = vunpack.c.l.b16 %v283
    %v968 = vunpack.c.h.b16 %v283
    %v969 = vunpack.c.l.b16 %v284
    %v970 = vunpack.c.h.b16 %v284
    %v971 = vunpack.c.l.b16 %v285
    %v972 = vunpack.c.h.b16 %v285
    %v973 = vunpack.c.l.b16 %v286
    %v974 = vunpack.c.h.b16 %v286
    %v975 = vunpack.c.l.b16 %v287
    %v976 = vunpack.c.h.b16 %v287
    %v977 = vunpack.c.l.b16 %v288
    %v978 = vunpack.c.h.b16 %v288
    %v979 = vunpack.c.l.b16 %v289
    %v980 = vunpack.c.h.b16 %v289
    %v981 = vunpack.c.l.b16 %v290
    %v982 = vunpack.c.h.b16 %v290
    %v983 = vunpack.c.l.b16 %v291
    %v984 = vunpack.c.h.b16 %v291
    %v985 = vunpack.c.l.b16 %v292
    %v986 = vunpack.c.h.b16 %v292
    %v987 = vunpack.c.l.b16 %v293
    %v988 = vunpack.c.h.b16 %v293
    %v989 = vunpack.c.l.b16 %v294
    %v990 = vunpack.c.h.b16 %v294
    %v991 = vunpack.c.l.b16 %v295
    %v992 = vunpack.c.h.b16 %v295
    %v993 = vunpack.c.l.b16 %v296
    %v994 = vunpack.c.h.b16 %v296
    %v995 = vunpack.c.l.b16 %v297
    %v996 = vunpack.c.h.b16 %v297
    %v997 = vunpack.c.l.b16 %v298
    %v998 = vunpack.c.h.b16 %v298
    %v999 = vunpack.c.l.b16 %v299
    %v1000 = vunpack.c.h.b16 %v299
    %v1001 = vunpack.c.l.b16 %v300
    %v1002 = vunpack.c.h.b16 %v300
    %v1003 = vunpack.c.l.b16 %v301
    %v1004 = vunpack.c.h.b16 %v301
    %v1005 = vunpack.c.l.b16 %v302
    %v1006 = vunpack.c.h.b16 %v302
    %v1007 = vunpack.c.l.b16 %v303
    %v1008 = vunpack.c.h.b16 %v303
    %v1009 = vunpack.c.l.b16 %v304
    %v1010 = vunpack.c.h.b16 %v304
    %v1011 = vunpack.c.l.b16 %v305
    %v1012 = vunpack.c.h.b16 %v305
    %v1013 = vunpack.c.l.b16 %v306
    %v1014 = vunpack.c.h.b16 %v306
    %v1015 = vunpack.c.l.b16 %v307
    %v1016 = vunpack.c.h.b16 %v307
    %v1017 = vunpack.c.l.b16 %v308
    %v1018 = vunpack.c.h.b16 %v308
    %v1019 = vunpack.c.l.b16 %v309
    %v1020 = vunpack.c.h.b16 %v309
    %v1021 = vunpack.c.l.b16 %v310
    %v1022 = vunpack.c.h.b16 %v310
    %v1023 = vunpack.c.l.b16 %v311
    %v1024 = vunpack.c.h.b16 %v311
    %v1025 = vunpack.c.l.b16 %v312
    %v1026 = vunpack.c.h.b16 %v312
    %v1027 = vunpack.c.l.b16 %v313
    %v1028 = vunpack.c.h.b16 %v313
    %v1029 = vunpack.c.l.b16 %v314
    %v1030 = vunpack.c.h.b16 %v314
    %v1031 = vunpack.c.l.b16 %v315
    %v1032 = vunpack.c.h.b16 %v315
    %v1033 = vunpack.c.l.b16 %v316
    %v1034 = vunpack.c.h.b16 %v316
    %v1035 = vunpack.c.l.b16 %v317
    %v1036 = vunpack.c.h.b16 %v317
    %v1037 = vunpack.c.l.b16 %v318
    %v1038 = vunpack.c.h.b16 %v318
    %v1039 = vunpack.c.l.b16 %v319
    %v1040 = vunpack.c.h.b16 %v319
    %v1041 = vunpack.c.l.b16 %v320
    %v1042 = vunpack.c.h.b16 %v320
    %v1043 = vunpack.c.l.b16 %v321
    %v1044 = vunpack.c.h.b16 %v321
    %v1045 = vunpack.c.l.b16 %v322
    %v1046 = vunpack.c.h.b16 %v322
    %v1047 = vunpack.c.l.b16 %v323
    %v1048 = vunpack.c.h.b16 %v323
    %v1049 = vunpack.c.l.b16 %v324
    %v1050 = vunpack.c.h.b16 %v324
    %v1051 = vunpack.c.l.b16 %v325
    %v1052 = vunpack.c.h.b16 %v325
    %v1053 = vunpack.c.l.b16 %v326
    %v1054 = vunpack.c.h.b16 %v326
    %v1055 = vunpack.c.l.b16 %v327
    %v1056 = vunpack.c.h.b16 %v327
    %v1057 = vunpack.c.l.b16 %v328
    %v1058 = vunpack.c.h.b16 %v328
    %v1059 = vunpack.c.l.b16 %v329
    %v1060 = vunpack.c.h.b16 %v329
    %v1061 = vunpack.c.l.b16 %v330
    %v1062 = vunpack.c.h.b16 %v330
    %v1063 = vunpack.c.l.b16 %v331
    %v1064 = vunpack.c.h.b16 %v331
    %v1065 = vunpack.c.l.b16 %v332
    %v1066 = vunpack.c.h.b16 %v332
    %v1067 = vunpack.c.l.b16 %v333
    %v1068 = vunpack.c.h.b16 %v333
    %v1069 = vunpack.c.l.b16 %v334
    %v1070 = vunpack.c.h.b16 %v334
    %v1071 = vunpack.c.l.b16 %v335
    %v1072 = vunpack.c.h.b16 %v335
    %v1073 = vunpack.c.l.b16 %v336
    %v1074 = vunpack.c.h.b16 %v336
    %v1075 = vunpack.c.l.b16 %v337
    %v1076 = vunpack.c.h.b16 %v337
    %v1077 = vunpack.c.l.b16 %v338
    %v1078 = vunpack.c.h.b16 %v338
    %v1079 = vunpack.c.l.b16 %v339
    %v1080 = vunpack.c.h.b16 %v339
    %v1081 = vunpack.c.l.b16 %v340
    %v1082 = vunpack.c.h.b16 %v340
    %v1083 = vunpack.c.l.b16 %v341
    %v1084 = vunpack.c.h.b16 %v341
    %v1085 = vunpack.c.l.b16 %v342
    %v1086 = vunpack.c.h.b16 %v342
    %v1087 = vunpack.c.l.b16 %v343
    %v1088 = vunpack.c.h.b16 %v343
    %v1089 = vunpack.c.l.b16 %v344
    %v1090 = vunpack.c.h.b16 %v344
    %v1091 = vunpack.c.l.b16 %v345
    %v1092 = vunpack.c.h.b16 %v345
    %v1093 = vunpack.c.l.b16 %v346
    %v1094 = vunpack.c.h.b16 %v346
    %v1095 = vunpack.c.l.b16 %v347
    %v1096 = vunpack.c.h.b16 %v347
    %v1097 = vunpack.c.l.b16 %v348
    %v1098 = vunpack.c.h.b16 %v348
    %v1099 = vunpack.c.l.b16 %v349
    %v1100 = vunpack.c.h.b16 %v349
    %v1101 = vunpack.c.l.b16 %v350
    %v1102 = vunpack.c.h.b16 %v350
    %v1103 = vunpack.c.l.b16 %v351
    %v1104 = vunpack.c.h.b16 %v351
    %v1105 = vunpack.c.l.b16 %v352
    %v1106 = vunpack.c.h.b16 %v352
    %v1107 = vunpack.c.l.b16 %v353
    %v1108 = vunpack.c.h.b16 %v353
    %v1109 = vunpack.c.l.b16 %v354
    %v1110 = vunpack.c.h.b16 %v354
    %v1111 = vunpack.c.l.b16 %v355
    %v1112 = vunpack.c.h.b16 %v355
    %v1113 = vunpack.c.l.b16 %v356
    %v1114 = vunpack.c.h.b16 %v356
    %v1115 = vunpack.c.l.b16 %v357
    %v1116 = vunpack.c.h.b16 %v357
    %v1117 = vunpack.c.l.b16 %v358
    %v1118 = vunpack.c.h.b16 %v358
    %v1119 = vunpack.c.l.b16 %v359
    %v1120 = vunpack.c.h.b16 %v359
    %v1121 = vunpack.c.l.b16 %v360
    %v1122 = vunpack.c.h.b16 %v360
    %v1123 = vunpack.c.l.b16 %v361
    %v1124 = vunpack.c.h.b16 %v361
    %v1125 = vunpack.c.l.b16 %v362
    %v1126 = vunpack.c.h.b16 %v362
    %v1127 = vunpack.c.l.b16 %v363
    %v1128 = vunpack.c.h.b16 %v363
    %v1129 = vunpack.c.l.b16 %v364
    %v1130 = vunpack.c.h.b16 %v364
    %v1131 = vunpack.c.l.b16 %v365
    %v1132 = vunpack.c.h.b16 %v365
    %v1133 = vunpack.c.l.b16 %v366
    %v1134 = vunpack.c.h.b16 %v366
    %v1135 = vunpack.c.l.b16 %v367
    %v1136 = vunpack.c.h.b16 %v367
    %v1137 = vunpack.c.l.b16 %v368
    %v1138 = vunpack.c.h.b16 %v368
    %v1139 = vunpack.c.l.b16 %v369
    %v1140 = vunpack.c.h.b16 %v369
    %v1141 = vunpack.c.l.b16 %v370
    %v1142 = vunpack.c.h.b16 %v370
    %v1143 = vunpack.c.l.b16 %v371
    %v1144 = vunpack.c.h.b16 %v371
    %v1145 = vunpack.c.l.b16 %v372
    %v1146 = vunpack.c.h.b16 %v372
    %v1147 = vunpack.c.l.b16 %v373
    %v1148 = vunpack.c.h.b16 %v373
    %v1149 = vunpack.c.l.b16 %v374
    %v1150 = vunpack.c.h.b16 %v374
    %v1151 = vunpack.c.l.b16 %v375
    %v1152 = vunpack.c.h.b16 %v375
    %v1153 = vunpack.c.l.b16 %v376
    %v1154 = vunpack.c.h.b16 %v376
    %v1155 = vunpack.c.l.b16 %v377
    %v1156 = vunpack.c.h.b16 %v377
    %v1157 = vunpack.c.l.b16 %v378
    %v1158 = vunpack.c.h.b16 %v378
    %v1159 = vunpack.c.l.b16 %v379
    %v1160 = vunpack.c.h.b16 %v379
    %v1161 = vunpack.c.l.b16 %v380
    %v1162 = vunpack.c.h.b16 %v380
    %v1163 = vunpack.c.l.b16 %v381
    %v1164 = vunpack.c.h.b16 %v381
    %v1165 = vunpack.c.l.b16 %v382
    %v1166 = vunpack.c.h.b16 %v382
    %v1167 = vunpack.c.l.b16 %v383
    %v1168 = vunpack.c.h.b16 %v383
    %v1169 = vunpack.c.l.b16 %v384
    %v1170 = vunpack.c.h.b16 %v384
    %v1171 = vpack.c.b16 %v667, %v659
    %v1172 = vpack.c.b16 %v668, %v660
    %v1173 = vpack.c.b16 %v669, %v661
    %v1174 = vpack.c.b16 %v670, %v662
    %v1175 = vpack.c.b16 %v671, %v663
    %v1176 = vpack.c.b16 %v672, %v664
    %v1177 = vpack.c.b16 %v673, %v665
    %v1178 = vpack.c.b16 %v674, %v666
    %v1179 = vpack.c.b16 %v683, %v675
    %v1180 = vpack.c.b16 %v684, %v676
    %v1181 = vpack.c.b16 %v685, %v677
    %v1182 = vpack.c.b16 %v686, %v678
    %v1183 = vpack.c.b16 %v687, %v679
    %v1184 = vpack.c.b16 %v688, %v680
    %v1185 = vpack.c.b16 %v689, %v681
    %v1186 = vpack.c.b16 %v690, %v682
    %v1187 = vpack.c.b16 %v699, %v691
    %v1188 = vpack.c.b16 %v700, %v692
    %v1189 = vpack.c.b16 %v701, %v693
    %v1190 = vpack.c.b16 %v702, %v694
    %v1191 = vpack.c.b16 %v703, %v695
    %v1192 = vpack.c.b16 %v704, %v696
    %v1193 = vpack.c.b16 %v705, %v697
    %v1194 = vpack.c.b16 %v706, %v698
    %v1195 = vpack.c.b16 %v715, %v707
    %v1196 = vpack.c.b16 %v716, %v708
    %v1197 = vpack.c.b16 %v717, %v709
    %v1198 = vpack.c.b16 %v718, %v710
    %v1199 = vpack.c.b16 %v719, %v711
    %v1200 = vpack.c.b16 %v720, %v712
    %v1201 = vpack.c.b16 %v721, %v713
    %v1202 = vpack.c.b16 %v722, %v714
    %v1203 = vpack.c.b16 %v731, %v723
    %v1204 = vpack.c.b16 %v732, %v724
    %v1205 = vpack.c.b16 %v733, %v725
    %v1206 = vpack.c.b16 %v734, %v726
    %v1207 = vpack.c.b16 %v735, %v727
    %v1208 = vpack.c.b16 %v736, %v728
    %v1209 = vpack.c.b16 %v737, %v729
    %v1210 = vpack.c.b16 %v738, %v730
    %v1211 = vpack.c.b16 %v747, %v739
    %v1212 = vpack.c.b16 %v748, %v740
    %v1213 = vpack.c.b16 %v749, %v741
    %v1214 = vpack.c.b16 %v750, %v742
    %v1215 = vpack.c.b16 %v751, %v743
    %v1216 = vpack.c.b16 %v752, %v744
    %v1217 = vpack.c.b16 %v753, %v745
    %v1218 = vpack.c.b16 %v754, %v746
    %v1219 = vpack.c.b16 %v763, %v755
    %v1220 = vpack.c.b16 %v764, %v756
    %v1221 = vpack.c.b16 %v765, %v757
    %v1222 = vpack.c.b16 %v766, %v758
    %v1223 = vpack.c.b16 %v767, %v759
    %v1224 = vpack.c.b16 %v768, %v760
    %v1225 = vpack.c.b16 %v769, %v761
    %v1226 = vpack.c.b16 %v770, %v762
    %v1227 = vpack.c.b16 %v779, %v771
    %v1228 = vpack.c.b16 %v780, %v772
    %v1229 = vpack.c.b16 %v781, %v773
    %v1230 = vpack.c.b16 %v782, %v774
    %v1231 = vpack.c.b16 %v783, %v775
    %v1232 = vpack.c.b16 %v784, %v776
    %v1233 = vpack.c.b16 %v785, %v777
    %v1234 = vpack.c.b16 %v786, %v778
    %v1235 = vpack.c.b16 %v795, %v787
    %v1236 = vpack.c.b16 %v796, %v788
    %v1237 = vpack.c.b16 %v797, %v789
    %v1238 = vpack.c.b16 %v798, %v790
    %v1239 = vpack.c.b16 %v799, %v791
    %v1240 = vpack.c.b16 %v800, %v792
    %v1241 = vpack.c.b16 %v801, %v793
    %v1242 = vpack.c.b16 %v802, %v794
    %v1243 = vpack.c.b16 %v811, %v803
    %v1244 = vpack.c.b16 %v812, %v804
    %v1245 = vpack.c.b16 %v813, %v805
    %v1246 = vpack.c.b16 %v814, %v806
    %v1247 = vpack.c.b16 %v815, %v807
    %v1248 = vpack.c.b16 %v816, %v808
    %v1249 = vpack.c.b16 %v817, %v809
    %v1250 = vpack.c.b16 %v818, %v810
    %v1251 = vpack.c.b16 %v827, %v819
    %v1252 = vpack.c.b16 %v828, %v820
    %v1253 = vpack.c.b16 %v829, %v821
    %v1254 = vpack.c.b16 %v830, %v822
    %v1255 = vpack.c.b16 %v831, %v823
    %v1256 = vpack.c.b16 %v832, %v824
    %v1257 = vpack.c.b16 %v833, %v825
    %v1258 = vpack.c.b16 %v834, %v826
    %v1259 = vpack.c.b16 %v843, %v835
    %v1260 = vpack.c.b16 %v844, %v836
    %v1261 = vpack.c.b16 %v845, %v837
    %v1262 = vpack.c.b16 %v846, %v838
    %v1263 = vpack.c.b16 %v847, %v839
    %v1264 = vpack.c.b16 %v848, %v840
    %v1265 = vpack.c.b16 %v849, %v841
    %v1266 = vpack.c.b16 %v850, %v842
    %v1267 = vpack.c.b16 %v859, %v851
    %v1268 = vpack.c.b16 %v860, %v852
    %v1269 = vpack.c.b16 %v861, %v853
    %v1270 = vpack.c.b16 %v862, %v854
    %v1271 = vpack.c.b16 %v863, %v855
    %v1272 = vpack.c.b16 %v864, %v856
    %v1273 = vpack.c.b16 %v865, %v857
    %v1274 = vpack.c.b16 %v866, %v858
    %v1275 = vpack.c.b16 %v875, %v867
    %v1276 = vpack.c.b16 %v876, %v868
    %v1277 = vpack.c.b16 %v877, %v869
    %v1278 = vpack.c.b16 %v878, %v870
    %v1279 = vpack.c.b16 %v879, %v871
    %v1280 = vpack.c.b16 %v880, %v872
    %v1281 = vpack.c.b16 %v881, %v873
    %v1282 = vpack.c.b16 %v882, %v874
    %v1283 = vpack.c.b16 %v891, %v883
    %v1284 = vpack.c.b16 %v892, %v884
    %v1285 = vpack.c.b16 %v893, %v885
    %v1286 = vpack.c.b16 %v894, %v886
    %v1287 = vpack.c.b16 %v895, %v887
    %v1288 = vpack.c.b16 %v896, %v888
    %v1289 = vpack.c.b16 %v897, %v889
    %v1290 = vpack.c.b16 %v898, %v890
    %v1291 = vpack.c.b16 %v907, %v899
    %v1292 = vpack.c.b16 %v908, %v900
    %v1293 = vpack.c.b16 %v909, %v901
    %v1294 = vpack.c.b16 %v910, %v902
    %v1295 = vpack.c.b16 %v911, %v903
    %v1296 = vpack.c.b16 %v912, %v904
    %v1297 = vpack.c.b16 %v913, %v905
    %v1298 = vpack.c.b16 %v914, %v906
    %v1299 = vpack.c.b16 %v923, %v915
    %v1300 = vpack.c.b16 %v924, %v916
    %v1301 = vpack.c.b16 %v925, %v917
    %v1302 = vpack.c.b16 %v926, %v918
    %v1303 = vpack.c.b16 %v927, %v919
    %v1304 = vpack.c.b16 %v928, %v920
    %v1305 = vpack.c.b16 %v929, %v921
    %v1306 = vpack.c.b16 %v930, %v922
    %v1307 = vpack.c.b16 %v939, %v931
    %v1308 = vpack.c.b16 %v940, %v932
    %v1309 = vpack.c.b16 %v941, %v933
    %v1310 = vpack.c.b16 %v942, %v934
    %v1311 = vpack.c.b16 %v943, %v935
    %v1312 = vpack.c.b16 %v944, %v936
    %v1313 = vpack.c.b16 %v945, %v937
    %v1314 = vpack.c.b16 %v946, %v938
    %v1315 = vpack.c.b16 %v955, %v947
    %v1316 = vpack.c.b16 %v956, %v948
    %v1317 = vpack.c.b16 %v957, %v949
    %v1318 = vpack.c.b16 %v958, %v950
    %v1319 = vpack.c.b16 %v959, %v951
    %v1320 = vpack.c.b16 %v960, %v952
    %v1321 = vpack.c.b16 %v961, %v953
    %v1322 = vpack.c.b16 %v962, %v954
    %v1323 = vpack.c.b16 %v971, %v963
    %v1324 = vpack.c.b16 %v972, %v964
    %v1325 = vpack.c.b16 %v973, %v965
    %v1326 = vpack.c.b16 %v974, %v966
    %v1327 = vpack.c.b16 %v975, %v967
    %v1328 = vpack.c.b16 %v976, %v968
    %v1329 = vpack.c.b16 %v977, %v969
    %v1330 = vpack.c.b16 %v978, %v970
    %v1331 = vpack.c.b16 %v987, %v979
    %v1332 = vpack.c.b16 %v988, %v980
    %v1333 = vpack.c.b16 %v989, %v981
    %v1334 = vpack.c.b16 %v990, %v982
    %v1335 = vpack.c.b16 %v991, %v983
    %v1336 = vpack.c.b16 %v992, %v984
    %v1337 = vpack.c.b16 %v993, %v985
    %v1338 = vpack.c.b16 %v994, %v986
    %v1339 = vpack.c.b16 %v1003, %v995
    %v1340 = vpack.c.b16 %v1004, %v996
    %v1341 = vpack.c.b16 %v1005, %v997
    %v1342 = vpack.c.b16 %v1006, %v998
    %v1343 = vpack.c.b16 %v1007, %v999
    %v1344 = vpack.c.b16 %v1008, %v1000
    %v1345 = vpack.c.b16 %v1009, %v1001
    %v1346 = vpack.c.b16 %v1010, %v1002
    %v1347 = vpack.c.b16 %v1019, %v1011
    %v1348 = vpack.c.b16 %v1020, %v1012
    %v1349 = vpack.c.b16 %v1021, %v1013
    %v1350 = vpack.c.b16 %v1022, %v1014
    %v1351 = vpack.c.b16 %v1023, %v1015
    %v1352 = vpack.c.b16 %v1024, %v1016
    %v1353 = vpack.c.b16 %v1025, %v1017
    %v1354 = vpack.c.b16 %v1026, %v1018
    %v1355 = vpack.c.b16 %v1035, %v1027
    %v1356 = vpack.c.b16 %v1036, %v1028
    %v1357 = vpack.c.b16 %v1037, %v1029
    %v1358 = vpack.c.b16 %v1038, %v1030
    %v1359 = vpack.c.b16 %v1039, %v1031
    %v1360 = vpack.c.b16 %v1040, %v1032
    %v1361 = vpack.c.b16 %v1041, %v1033
    %v1362 = vpack.c.b16 %v1042, %v1034
    %v1363 = vpack.c.b16 %v1051, %v1043
    %v1364 = vpack.c.b16 %v1052, %v1044
    %v1365 = vpack.c.b16 %v1053, %v1045
    %v1366 = vpack.c.b16 %v1054, %v1046
    %v1367 = vpack.c.b16 %v1055, %v1047
    %v1368 = vpack.c.b16 %v1056, %v1048
    %v1369 = vpack.c.b16 %v1057, %v1049
    %v1370 = vpack.c.b16 %v1058, %v1050
    %v1371 = vpack.c.b16 %v1067, %v1059
    %v1372 = vpack.c.b16 %v1068, %v1060
    %v1373 = vpack.c.b16 %v1069, %v1061
    %v1374 = vpack.c.b16 %v1070, %v1062
    %v1375 = vpack.c.b16 %v1071, %v1063
    %v1376 = vpack.c.b16 %v1072, %v1064
    %v1377 = vpack.c.b16 %v1073, %v1065
    %v1378 = vpack.c.b16 %v1074, %v1066
    %v1379 = vpack.c.b16 %v1083, %v1075
    %v1380 = vpack.c.b16 %v1084, %v1076
    %v1381 = vpack.c.b16 %v1085, %v1077
    %v1382 = vpack.c.b16 %v1086, %v1078
    %v1383 = vpack.c.b16 %v1087, %v1079
    %v1384 = vpack.c.b16 %v1088, %v1080
    %v1385 = vpack.c.b16 %v1089, %v1081
    %v1386 = vpack.c.b16 %v1090, %v1082
    %v1387 = vpack.c.b16 %v1099, %v1091
    %v1388 = vpack.c.b16 %v1100, %v1092
    %v1389 = vpack.c.b16 %v1101, %v1093
    %v1390 = vpack.c.b16 %v1102, %v1094
    %v1391 = vpack.c.b16 %v1103, %v1095
    %v1392 = vpack.c.b16 %v1104, %v1096
    %v1393 = vpack.c.b16 %v1105, %v1097
    %v1394 = vpack.c.b16 %v1106, %v1098
    %v1395 = vpack.c.b16 %v1115, %v1107
    %v1396 = vpack.c.b16 %v1116, %v1108
    %v1397 = vpack.c.b16 %v1117, %v1109
    %v1398 = vpack.c.b16 %v1118, %v1110
    %v1399 = vpack.c.b16 %v1119, %v1111
    %v1400 = vpack.c.b16 %v1120, %v1112
    %v1401 = vpack.c.b16 %v1121, %v1113
    %v1402 = vpack.c.b16 %v1122, %v1114
    %v1403 = vpack.c.b16 %v1131, %v1123
    %v1404 = vpack.c.b16 %v1132, %v1124
    %v1405 = vpack.c.b16 %v1133, %v1125
    %v1406 = vpack.c.b16 %v1134, %v1126
    %v1407 = vpack.c.b16 %v1135, %v1127
    %v1408 = vpack.c.b16 %v1136, %v1128
    %v1409 = vpack.c.b16 %v1137, %v1129
    %v1410 = vpack.c.b16 %v1138, %v1130
    %v1411 = vpack.c.b16 %v1147, %v1139
    %v1412 = vpack.c.b16 %v1148, %v1140
    %v1413 = vpack.c.b16 %v1149, %v1141
    %v1414 = vpack.c.b16 %v1150, %v1142
    %v1415 = vpack.c.b16 %v1151, %v1143
    %v1416 = vpack.c.b16 %v1152, %v1144
    %v1417 = vpack.c.b16 %v1153, %v1145
    %v1418 = vpack.c.b16 %v1154, %v1146
    %v1419 = vpack.c.b16 %v1163, %v1155
    %v1420 = vpack.c.b16 %v1164, %v1156
    %v1421 = vpack.c.b16 %v1165, %v1157
    %v1422 = vpack.c.b16 %v1166, %v1158
    %v1423 = vpack.c.b16 %v1167, %v1159
    %v1424 = vpack.c.b16 %v1168, %v1160
    %v1425 = vpack.c.b16 %v1169, %v1161
    %v1426 = vpack.c.b16 %v1170, %v1162
    %1683 = vmatpush.bf16.msra.mxu0 %v1227
    %1684 = vmatpush.bf16.msra.mxu0 %v1219
    %1685 = vmatpush.bf16.msra.mxu0 %v1211
    %1686 = vmatpush.bf16.msra.mxu0 %v1203
    %1687 = vmatpush.bf16.msra.mxu0 %v1195
    %1688 = vmatpush.bf16.msra.mxu0 %v1187
    %1689 = vmatpush.bf16.msra.mxu0 %v1179
    %1690 = vmatpush.bf16.msra.mxu0 %v1171
    %1691 = vmatmul.bf16.gmra.mxu0 %v125
    %v1692 = vpop.f32.mrf.mxu0
    %v1693 = vadd.f32 %v387, %v1692
    %v1694 = vpop.f32.mrf.mxu0
    %v1695 = vadd.f32 %v387, %v1694
    %1696 = vdwg.mxu0
    %1697 = vmatpush.bf16.msra.mxu0 %v1291
    %1698 = vmatpush.bf16.msra.mxu0 %v1283
    %1699 = vmatpush.bf16.msra.mxu0 %v1275
    %1700 = vmatpush.bf16.msra.mxu0 %v1267
    %1701 = vmatpush.bf16.msra.mxu0 %v1259
    %1702 = vmatpush.bf16.msra.mxu0 %v1251
    %1703 = vmatpush.bf16.msra.mxu0 %v1243
    %1704 = vmatpush.bf16.msra.mxu0 %v1235
    %1705 = vmatmul.bf16.gmra.mxu0 %v126
    %v1706 = vpop.f32.mrf.mxu0
    %v1707 = vadd.f32 %v1693, %v1706
    %v1708 = vpop.f32.mrf.mxu0
    %v1709 = vadd.f32 %v1695, %v1708
    %1710 = vdwg.mxu0
    %1711 = vmatpush.bf16.msra.mxu0 %v1355
    %1712 = vmatpush.bf16.msra.mxu0 %v1347
    %1713 = vmatpush.bf16.msra.mxu0 %v1339
    %1714 = vmatpush.bf16.msra.mxu0 %v1331
    %1715 = vmatpush.bf16.msra.mxu0 %v1323
    %1716 = vmatpush.bf16.msra.mxu0 %v1315
    %1717 = vmatpush.bf16.msra.mxu0 %v1307
    %1718 = vmatpush.bf16.msra.mxu0 %v1299
    %1719 = vmatmul.bf16.gmra.mxu0 %v127
    %v1720 = vpop.f32.mrf.mxu0
    %v1721 = vadd.f32 %v1707, %v1720
    %v1722 = vpop.f32.mrf.mxu0
    %v1723 = vadd.f32 %v1709, %v1722
    %1724 = vdwg.mxu0
    %1725 = vmatpush.bf16.msra.mxu0 %v1419
    %1726 = vmatpush.bf16.msra.mxu0 %v1411
    %1727 = vmatpush.bf16.msra.mxu0 %v1403
    %1728 = vmatpush.bf16.msra.mxu0 %v1395
    %1729 = vmatpush.bf16.msra.mxu0 %v1387
    %1730 = vmatpush.bf16.msra.mxu0 %v1379
    %1731 = vmatpush.bf16.msra.mxu0 %v1371
    %1732 = vmatpush.bf16.msra.mxu0 %v1363
    %1733 = vmatmul.bf16.gmra.mxu0 %v128
    %v1734 = vpop.f32.mrf.mxu0
    %v1735 = vadd.f32 %v1721, %v1734
    %v1736 = vpop.f32.mrf.mxu0
    %v1737 = vadd.f32 %v1723, %v1736
    %1738 = vdwg.mxu0
    %1739 = vmatpush.bf16.msra.mxu0 %v1228
    %1740 = vmatpush.bf16.msra.mxu0 %v1220
    %1741 = vmatpush.bf16.msra.mxu0 %v1212
    %1742 = vmatpush.bf16.msra.mxu0 %v1204
    %1743 = vmatpush.bf16.msra.mxu0 %v1196
    %1744 = vmatpush.bf16.msra.mxu0 %v1188
    %1745 = vmatpush.bf16.msra.mxu0 %v1180
    %1746 = vmatpush.bf16.msra.mxu0 %v1172
    %1747 = vmatmul.bf16.gmra.mxu0 %v125
    %v1748 = vpop.f32.mrf.mxu0
    %v1749 = vadd.f32 %v388, %v1748
    %v1750 = vpop.f32.mrf.mxu0
    %v1751 = vadd.f32 %v388, %v1750
    %1752 = vdwg.mxu0
    %1753 = vmatpush.bf16.msra.mxu0 %v1292
    %1754 = vmatpush.bf16.msra.mxu0 %v1284
    %1755 = vmatpush.bf16.msra.mxu0 %v1276
    %1756 = vmatpush.bf16.msra.mxu0 %v1268
    %1757 = vmatpush.bf16.msra.mxu0 %v1260
    %1758 = vmatpush.bf16.msra.mxu0 %v1252
    %1759 = vmatpush.bf16.msra.mxu0 %v1244
    %1760 = vmatpush.bf16.msra.mxu0 %v1236
    %1761 = vmatmul.bf16.gmra.mxu0 %v126
    %v1762 = vpop.f32.mrf.mxu0
    %v1763 = vadd.f32 %v1749, %v1762
    %v1764 = vpop.f32.mrf.mxu0
    %v1765 = vadd.f32 %v1751, %v1764
    %1766 = vdwg.mxu0
    %1767 = vmatpush.bf16.msra.mxu0 %v1356
    %1768 = vmatpush.bf16.msra.mxu0 %v1348
    %1769 = vmatpush.bf16.msra.mxu0 %v1340
    %1770 = vmatpush.bf16.msra.mxu0 %v1332
    %1771 = vmatpush.bf16.msra.mxu0 %v1324
    %1772 = vmatpush.bf16.msra.mxu0 %v1316
    %1773 = vmatpush.bf16.msra.mxu0 %v1308
    %1774 = vmatpush.bf16.msra.mxu0 %v1300
    %1775 = vmatmul.bf16.gmra.mxu0 %v127
    %v1776 = vpop.f32.mrf.mxu0
    %v1777 = vadd.f32 %v1763, %v1776
    %v1778 = vpop.f32.mrf.mxu0
    %v1779 = vadd.f32 %v1765, %v1778
    %1780 = vdwg.mxu0
    %1781 = vmatpush.bf16.msra.mxu0 %v1420
    %1782 = vmatpush.bf16.msra.mxu0 %v1412
    %1783 = vmatpush.bf16.msra.mxu0 %v1404
    %1784 = vmatpush.bf16.msra.mxu0 %v1396
    %1785 = vmatpush.bf16.msra.mxu0 %v1388
    %1786 = vmatpush.bf16.msra.mxu0 %v1380
    %1787 = vmatpush.bf16.msra.mxu0 %v1372
    %1788 = vmatpush.bf16.msra.mxu0 %v1364
    %1789 = vmatmul.bf16.gmra.mxu0 %v128
    %v1790 = vpop.f32.mrf.mxu0
    %v1791 = vadd.f32 %v1777, %v1790
    %v1792 = vpop.f32.mrf.mxu0
    %v1793 = vadd.f32 %v1779, %v1792
    %1794 = vdwg.mxu0
    %1795 = vmatpush.bf16.msra.mxu0 %v1229
    %1796 = vmatpush.bf16.msra.mxu0 %v1221
    %1797 = vmatpush.bf16.msra.mxu0 %v1213
    %1798 = vmatpush.bf16.msra.mxu0 %v1205
    %1799 = vmatpush.bf16.msra.mxu0 %v1197
    %1800 = vmatpush.bf16.msra.mxu0 %v1189
    %1801 = vmatpush.bf16.msra.mxu0 %v1181
    %1802 = vmatpush.bf16.msra.mxu0 %v1173
    %1803 = vmatmul.bf16.gmra.mxu0 %v125
    %v1804 = vpop.f32.mrf.mxu0
    %v1805 = vadd.f32 %v389, %v1804
    %v1806 = vpop.f32.mrf.mxu0
    %v1807 = vadd.f32 %v389, %v1806
    %1808 = vdwg.mxu0
    %1809 = vmatpush.bf16.msra.mxu0 %v1293
    %1810 = vmatpush.bf16.msra.mxu0 %v1285
    %1811 = vmatpush.bf16.msra.mxu0 %v1277
    %1812 = vmatpush.bf16.msra.mxu0 %v1269
    %1813 = vmatpush.bf16.msra.mxu0 %v1261
    %1814 = vmatpush.bf16.msra.mxu0 %v1253
    %1815 = vmatpush.bf16.msra.mxu0 %v1245
    %1816 = vmatpush.bf16.msra.mxu0 %v1237
    %1817 = vmatmul.bf16.gmra.mxu0 %v126
    %v1818 = vpop.f32.mrf.mxu0
    %v1819 = vadd.f32 %v1805, %v1818
    %v1820 = vpop.f32.mrf.mxu0
    %v1821 = vadd.f32 %v1807, %v1820
    %1822 = vdwg.mxu0
    %1823 = vmatpush.bf16.msra.mxu0 %v1357
    %1824 = vmatpush.bf16.msra.mxu0 %v1349
    %1825 = vmatpush.bf16.msra.mxu0 %v1341
    %1826 = vmatpush.bf16.msra.mxu0 %v1333
    %1827 = vmatpush.bf16.msra.mxu0 %v1325
    %1828 = vmatpush.bf16.msra.mxu0 %v1317
    %1829 = vmatpush.bf16.msra.mxu0 %v1309
    %1830 = vmatpush.bf16.msra.mxu0 %v1301
    %1831 = vmatmul.bf16.gmra.mxu0 %v127
    %v1832 = vpop.f32.mrf.mxu0
    %v1833 = vadd.f32 %v1819, %v1832
    %v1834 = vpop.f32.mrf.mxu0
    %v1835 = vadd.f32 %v1821, %v1834
    %1836 = vdwg.mxu0
    %1837 = vmatpush.bf16.msra.mxu0 %v1421
    %1838 = vmatpush.bf16.msra.mxu0 %v1413
    %1839 = vmatpush.bf16.msra.mxu0 %v1405
    %1840 = vmatpush.bf16.msra.mxu0 %v1397
    %1841 = vmatpush.bf16.msra.mxu0 %v1389
    %1842 = vmatpush.bf16.msra.mxu0 %v1381
    %1843 = vmatpush.bf16.msra.mxu0 %v1373
    %1844 = vmatpush.bf16.msra.mxu0 %v1365
    %1845 = vmatmul.bf16.gmra.mxu0 %v128
    %v1846 = vpop.f32.mrf.mxu0
    %v1847 = vadd.f32 %v1833, %v1846
    %v1848 = vpop.f32.mrf.mxu0
    %v1849 = vadd.f32 %v1835, %v1848
    %1850 = vdwg.mxu0
    %1851 = vmatpush.bf16.msra.mxu0 %v1230
    %1852 = vmatpush.bf16.msra.mxu0 %v1222
    %1853 = vmatpush.bf16.msra.mxu0 %v1214
    %1854 = vmatpush.bf16.msra.mxu0 %v1206
    %1855 = vmatpush.bf16.msra.mxu0 %v1198
    %1856 = vmatpush.bf16.msra.mxu0 %v1190
    %1857 = vmatpush.bf16.msra.mxu0 %v1182
    %1858 = vmatpush.bf16.msra.mxu0 %v1174
    %1859 = vmatmul.bf16.gmra.mxu0 %v125
    %v1860 = vpop.f32.mrf.mxu0
    %v1861 = vadd.f32 %v390, %v1860
    %v1862 = vpop.f32.mrf.mxu0
    %v1863 = vadd.f32 %v390, %v1862
    %1864 = vdwg.mxu0
    %1865 = vmatpush.bf16.msra.mxu0 %v1294
    %1866 = vmatpush.bf16.msra.mxu0 %v1286
    %1867 = vmatpush.bf16.msra.mxu0 %v1278
    %1868 = vmatpush.bf16.msra.mxu0 %v1270
    %1869 = vmatpush.bf16.msra.mxu0 %v1262
    %1870 = vmatpush.bf16.msra.mxu0 %v1254
    %1871 = vmatpush.bf16.msra.mxu0 %v1246
    %1872 = vmatpush.bf16.msra.mxu0 %v1238
    %1873 = vmatmul.bf16.gmra.mxu0 %v126
    %v1874 = vpop.f32.mrf.mxu0
    %v1875 = vadd.f32 %v1861, %v1874
    %v1876 = vpop.f32.mrf.mxu0
    %v1877 = vadd.f32 %v1863, %v1876
    %1878 = vdwg.mxu0
    %1879 = vmatpush.bf16.msra.mxu0 %v1358
    %1880 = vmatpush.bf16.msra.mxu0 %v1350
    %1881 = vmatpush.bf16.msra.mxu0 %v1342
    %1882 = vmatpush.bf16.msra.mxu0 %v1334
    %1883 = vmatpush.bf16.msra.mxu0 %v1326
    %1884 = vmatpush.bf16.msra.mxu0 %v1318
    %1885 = vmatpush.bf16.msra.mxu0 %v1310
    %1886 = vmatpush.bf16.msra.mxu0 %v1302
    %1887 = vmatmul.bf16.gmra.mxu0 %v127
    %v1888 = vpop.f32.mrf.mxu0
    %v1889 = vadd.f32 %v1875, %v1888
    %v1890 = vpop.f32.mrf.mxu0
    %v1891 = vadd.f32 %v1877, %v1890
    %1892 = vdwg.mxu0
    %1893 = vmatpush.bf16.msra.mxu0 %v1422
    %1894 = vmatpush.bf16.msra.mxu0 %v1414
    %1895 = vmatpush.bf16.msra.mxu0 %v1406
    %1896 = vmatpush.bf16.msra.mxu0 %v1398
    %1897 = vmatpush.bf16.msra.mxu0 %v1390
    %1898 = vmatpush.bf16.msra.mxu0 %v1382
    %1899 = vmatpush.bf16.msra.mxu0 %v1374
    %1900 = vmatpush.bf16.msra.mxu0 %v1366
    %1901 = vmatmul.bf16.gmra.mxu0 %v128
    %v1902 = vpop.f32.mrf.mxu0
    %v1903 = vadd.f32 %v1889, %v1902
    %v1904 = vpop.f32.mrf.mxu0
    %v1905 = vadd.f32 %v1891, %v1904
    %1906 = vdwg.mxu0
    %1907 = vmatpush.bf16.msra.mxu0 %v1231
    %1908 = vmatpush.bf16.msra.mxu0 %v1223
    %1909 = vmatpush.bf16.msra.mxu0 %v1215
    %1910 = vmatpush.bf16.msra.mxu0 %v1207
    %1911 = vmatpush.bf16.msra.mxu0 %v1199
    %1912 = vmatpush.bf16.msra.mxu0 %v1191
    %1913 = vmatpush.bf16.msra.mxu0 %v1183
    %1914 = vmatpush.bf16.msra.mxu0 %v1175
    %1915 = vmatmul.bf16.gmra.mxu0 %v125
    %v1916 = vpop.f32.mrf.mxu0
    %v1917 = vadd.f32 %v391, %v1916
    %v1918 = vpop.f32.mrf.mxu0
    %v1919 = vadd.f32 %v391, %v1918
    %1920 = vdwg.mxu0
    %1921 = vmatpush.bf16.msra.mxu0 %v1295
    %1922 = vmatpush.bf16.msra.mxu0 %v1287
    %1923 = vmatpush.bf16.msra.mxu0 %v1279
    %1924 = vmatpush.bf16.msra.mxu0 %v1271
    %1925 = vmatpush.bf16.msra.mxu0 %v1263
    %1926 = vmatpush.bf16.msra.mxu0 %v1255
    %1927 = vmatpush.bf16.msra.mxu0 %v1247
    %1928 = vmatpush.bf16.msra.mxu0 %v1239
    %1929 = vmatmul.bf16.gmra.mxu0 %v126
    %v1930 = vpop.f32.mrf.mxu0
    %v1931 = vadd.f32 %v1917, %v1930
    %v1932 = vpop.f32.mrf.mxu0
    %v1933 = vadd.f32 %v1919, %v1932
    %1934 = vdwg.mxu0
    %1935 = vmatpush.bf16.msra.mxu0 %v1359
    %1936 = vmatpush.bf16.msra.mxu0 %v1351
    %1937 = vmatpush.bf16.msra.mxu0 %v1343
    %1938 = vmatpush.bf16.msra.mxu0 %v1335
    %1939 = vmatpush.bf16.msra.mxu0 %v1327
    %1940 = vmatpush.bf16.msra.mxu0 %v1319
    %1941 = vmatpush.bf16.msra.mxu0 %v1311
    %1942 = vmatpush.bf16.msra.mxu0 %v1303
    %1943 = vmatmul.bf16.gmra.mxu0 %v127
    %v1944 = vpop.f32.mrf.mxu0
    %v1945 = vadd.f32 %v1931, %v1944
    %v1946 = vpop.f32.mrf.mxu0
    %v1947 = vadd.f32 %v1933, %v1946
    %1948 = vdwg.mxu0
    %1949 = vmatpush.bf16.msra.mxu0 %v1423
    %1950 = vmatpush.bf16.msra.mxu0 %v1415
    %1951 = vmatpush.bf16.msra.mxu0 %v1407
    %1952 = vmatpush.bf16.msra.mxu0 %v1399
    %1953 = vmatpush.bf16.msra.mxu0 %v1391
    %1954 = vmatpush.bf16.msra.mxu0 %v1383
    %1955 = vmatpush.bf16.msra.mxu0 %v1375
    %1956 = vmatpush.bf16.msra.mxu0 %v1367
    %1957 = vmatmul.bf16.gmra.mxu0 %v128
    %v1958 = vpop.f32.mrf.mxu0
    %v1959 = vadd.f32 %v1945, %v1958
    %v1960 = vpop.f32.mrf.mxu0
    %v1961 = vadd.f32 %v1947, %v1960
    %1962 = vdwg.mxu0
    %1963 = vmatpush.bf16.msra.mxu0 %v1232
    %1964 = vmatpush.bf16.msra.mxu0 %v1224
    %1965 = vmatpush.bf16.msra.mxu0 %v1216
    %1966 = vmatpush.bf16.msra.mxu0 %v1208
    %1967 = vmatpush.bf16.msra.mxu0 %v1200
    %1968 = vmatpush.bf16.msra.mxu0 %v1192
    %1969 = vmatpush.bf16.msra.mxu0 %v1184
    %1970 = vmatpush.bf16.msra.mxu0 %v1176
    %1971 = vmatmul.bf16.gmra.mxu0 %v125
    %v1972 = vpop.f32.mrf.mxu0
    %v1973 = vadd.f32 %v392, %v1972
    %v1974 = vpop.f32.mrf.mxu0
    %v1975 = vadd.f32 %v392, %v1974
    %1976 = vdwg.mxu0
    %1977 = vmatpush.bf16.msra.mxu0 %v1296
    %1978 = vmatpush.bf16.msra.mxu0 %v1288
    %1979 = vmatpush.bf16.msra.mxu0 %v1280
    %1980 = vmatpush.bf16.msra.mxu0 %v1272
    %1981 = vmatpush.bf16.msra.mxu0 %v1264
    %1982 = vmatpush.bf16.msra.mxu0 %v1256
    %1983 = vmatpush.bf16.msra.mxu0 %v1248
    %1984 = vmatpush.bf16.msra.mxu0 %v1240
    %1985 = vmatmul.bf16.gmra.mxu0 %v126
    %v1986 = vpop.f32.mrf.mxu0
    %v1987 = vadd.f32 %v1973, %v1986
    %v1988 = vpop.f32.mrf.mxu0
    %v1989 = vadd.f32 %v1975, %v1988
    %1990 = vdwg.mxu0
    %1991 = vmatpush.bf16.msra.mxu0 %v1360
    %1992 = vmatpush.bf16.msra.mxu0 %v1352
    %1993 = vmatpush.bf16.msra.mxu0 %v1344
    %1994 = vmatpush.bf16.msra.mxu0 %v1336
    %1995 = vmatpush.bf16.msra.mxu0 %v1328
    %1996 = vmatpush.bf16.msra.mxu0 %v1320
    %1997 = vmatpush.bf16.msra.mxu0 %v1312
    %1998 = vmatpush.bf16.msra.mxu0 %v1304
    %1999 = vmatmul.bf16.gmra.mxu0 %v127
    %v2000 = vpop.f32.mrf.mxu0
    %v2001 = vadd.f32 %v1987, %v2000
    %v2002 = vpop.f32.mrf.mxu0
    %v2003 = vadd.f32 %v1989, %v2002
    %2004 = vdwg.mxu0
    %2005 = vmatpush.bf16.msra.mxu0 %v1424
    %2006 = vmatpush.bf16.msra.mxu0 %v1416
    %2007 = vmatpush.bf16.msra.mxu0 %v1408
    %2008 = vmatpush.bf16.msra.mxu0 %v1400
    %2009 = vmatpush.bf16.msra.mxu0 %v1392
    %2010 = vmatpush.bf16.msra.mxu0 %v1384
    %2011 = vmatpush.bf16.msra.mxu0 %v1376
    %2012 = vmatpush.bf16.msra.mxu0 %v1368
    %2013 = vmatmul.bf16.gmra.mxu0 %v128
    %v2014 = vpop.f32.mrf.mxu0
    %v2015 = vadd.f32 %v2001, %v2014
    %v2016 = vpop.f32.mrf.mxu0
    %v2017 = vadd.f32 %v2003, %v2016
    %2018 = vdwg.mxu0
    %2019 = vmatpush.bf16.msra.mxu0 %v1233
    %2020 = vmatpush.bf16.msra.mxu0 %v1225
    %2021 = vmatpush.bf16.msra.mxu0 %v1217
    %2022 = vmatpush.bf16.msra.mxu0 %v1209
    %2023 = vmatpush.bf16.msra.mxu0 %v1201
    %2024 = vmatpush.bf16.msra.mxu0 %v1193
    %2025 = vmatpush.bf16.msra.mxu0 %v1185
    %2026 = vmatpush.bf16.msra.mxu0 %v1177
    %2027 = vmatmul.bf16.gmra.mxu0 %v125
    %v2028 = vpop.f32.mrf.mxu0
    %v2029 = vadd.f32 %v393, %v2028
    %v2030 = vpop.f32.mrf.mxu0
    %v2031 = vadd.f32 %v393, %v2030
    %2032 = vdwg.mxu0
    %2033 = vmatpush.bf16.msra.mxu0 %v1297
    %2034 = vmatpush.bf16.msra.mxu0 %v1289
    %2035 = vmatpush.bf16.msra.mxu0 %v1281
    %2036 = vmatpush.bf16.msra.mxu0 %v1273
    %2037 = vmatpush.bf16.msra.mxu0 %v1265
    %2038 = vmatpush.bf16.msra.mxu0 %v1257
    %2039 = vmatpush.bf16.msra.mxu0 %v1249
    %2040 = vmatpush.bf16.msra.mxu0 %v1241
    %2041 = vmatmul.bf16.gmra.mxu0 %v126
    %v2042 = vpop.f32.mrf.mxu0
    %v2043 = vadd.f32 %v2029, %v2042
    %v2044 = vpop.f32.mrf.mxu0
    %v2045 = vadd.f32 %v2031, %v2044
    %2046 = vdwg.mxu0
    %2047 = vmatpush.bf16.msra.mxu0 %v1361
    %2048 = vmatpush.bf16.msra.mxu0 %v1353
    %2049 = vmatpush.bf16.msra.mxu0 %v1345
    %2050 = vmatpush.bf16.msra.mxu0 %v1337
    %2051 = vmatpush.bf16.msra.mxu0 %v1329
    %2052 = vmatpush.bf16.msra.mxu0 %v1321
    %2053 = vmatpush.bf16.msra.mxu0 %v1313
    %2054 = vmatpush.bf16.msra.mxu0 %v1305
    %2055 = vmatmul.bf16.gmra.mxu0 %v127
    %v2056 = vpop.f32.mrf.mxu0
    %v2057 = vadd.f32 %v2043, %v2056
    %v2058 = vpop.f32.mrf.mxu0
    %v2059 = vadd.f32 %v2045, %v2058
    %2060 = vdwg.mxu0
    %2061 = vmatpush.bf16.msra.mxu0 %v1425
    %2062 = vmatpush.bf16.msra.mxu0 %v1417
    %2063 = vmatpush.bf16.msra.mxu0 %v1409
    %2064 = vmatpush.bf16.msra.mxu0 %v1401
    %2065 = vmatpush.bf16.msra.mxu0 %v1393
    %2066 = vmatpush.bf16.msra.mxu0 %v1385
    %2067 = vmatpush.bf16.msra.mxu0 %v1377
    %2068 = vmatpush.bf16.msra.mxu0 %v1369
    %2069 = vmatmul.bf16.gmra.mxu0 %v128
    %v2070 = vpop.f32.mrf.mxu0
    %v2071 = vadd.f32 %v2057, %v2070
    %v2072 = vpop.f32.mrf.mxu0
    %v2073 = vadd.f32 %v2059, %v2072
    %2074 = vdwg.mxu0
    %2075 = vmatpush.bf16.msra.mxu0 %v1234
    %2076 = vmatpush.bf16.msra.mxu0 %v1226
    %2077 = vmatpush.bf16.msra.mxu0 %v1218
    %2078 = vmatpush.bf16.msra.mxu0 %v1210
    %2079 = vmatpush.bf16.msra.mxu0 %v1202
    %2080 = vmatpush.bf16.msra.mxu0 %v1194
    %2081 = vmatpush.bf16.msra.mxu0 %v1186
    %2082 = vmatpush.bf16.msra.mxu0 %v1178
    %2083 = vmatmul.bf16.gmra.mxu0 %v125
    %v2084 = vpop.f32.mrf.mxu0
    %v2085 = vadd.f32 %v394, %v2084
    %v2086 = vpop.f32.mrf.mxu0
    %v2087 = vadd.f32 %v394, %v2086
    %2088 = vdwg.mxu0
    %2089 = vmatpush.bf16.msra.mxu0 %v1298
    %2090 = vmatpush.bf16.msra.mxu0 %v1290
    %2091 = vmatpush.bf16.msra.mxu0 %v1282
    %2092 = vmatpush.bf16.msra.mxu0 %v1274
    %2093 = vmatpush.bf16.msra.mxu0 %v1266
    %2094 = vmatpush.bf16.msra.mxu0 %v1258
    %2095 = vmatpush.bf16.msra.mxu0 %v1250
    %2096 = vmatpush.bf16.msra.mxu0 %v1242
    %2097 = vmatmul.bf16.gmra.mxu0 %v126
    %v2098 = vpop.f32.mrf.mxu0
    %v2099 = vadd.f32 %v2085, %v2098
    %v2100 = vpop.f32.mrf.mxu0
    %v2101 = vadd.f32 %v2087, %v2100
    %2102 = vdwg.mxu0
    %2103 = vmatpush.bf16.msra.mxu0 %v1362
    %2104 = vmatpush.bf16.msra.mxu0 %v1354
    %2105 = vmatpush.bf16.msra.mxu0 %v1346
    %2106 = vmatpush.bf16.msra.mxu0 %v1338
    %2107 = vmatpush.bf16.msra.mxu0 %v1330
    %2108 = vmatpush.bf16.msra.mxu0 %v1322
    %2109 = vmatpush.bf16.msra.mxu0 %v1314
    %2110 = vmatpush.bf16.msra.mxu0 %v1306
    %2111 = vmatmul.bf16.gmra.mxu0 %v127
    %v2112 = vpop.f32.mrf.mxu0
    %v2113 = vadd.f32 %v2099, %v2112
    %v2114 = vpop.f32.mrf.mxu0
    %v2115 = vadd.f32 %v2101, %v2114
    %2116 = vdwg.mxu0
    %2117 = vmatpush.bf16.msra.mxu0 %v1426
    %2118 = vmatpush.bf16.msra.mxu0 %v1418
    %2119 = vmatpush.bf16.msra.mxu0 %v1410
    %2120 = vmatpush.bf16.msra.mxu0 %v1402
    %2121 = vmatpush.bf16.msra.mxu0 %v1394
    %2122 = vmatpush.bf16.msra.mxu0 %v1386
    %2123 = vmatpush.bf16.msra.mxu0 %v1378
    %2124 = vmatpush.bf16.msra.mxu0 %v1370
    %2125 = vmatmul.bf16.gmra.mxu0 %v128
    %v2126 = vpop.f32.mrf.mxu0
    %v2127 = vadd.f32 %v2113, %v2126
    %v2128 = vpop.f32.mrf.mxu0
    %v2129 = vadd.f32 %v2115, %v2128
    %2130 = vdwg.mxu0
    %vm2131 = vcmp.gt.f32.partialorder %v1735, 0.0
    %vm2132 = vcmp.gt.f32.partialorder %v1791, 0.0
    %vm2133 = vcmp.gt.f32.partialorder %v1847, 0.0
    %vm2134 = vcmp.gt.f32.partialorder %v1903, 0.0
    %vm2135 = vcmp.gt.f32.partialorder %v1959, 0.0
    %vm2136 = vcmp.gt.f32.partialorder %v2015, 0.0
    %vm2137 = vcmp.gt.f32.partialorder %v2071, 0.0
    %vm2138 = vcmp.gt.f32.partialorder %v2127, 0.0
    %vm2139 = vcmp.gt.f32.partialorder %v1737, 0.0
    %vm2140 = vcmp.gt.f32.partialorder %v1793, 0.0
    %vm2141 = vcmp.gt.f32.partialorder %v1849, 0.0
    %vm2142 = vcmp.gt.f32.partialorder %v1905, 0.0
    %vm2143 = vcmp.gt.f32.partialorder %v1961, 0.0
    %vm2144 = vcmp.gt.f32.partialorder %v2017, 0.0
    %vm2145 = vcmp.gt.f32.partialorder %v2073, 0.0
    %vm2146 = vcmp.gt.f32.partialorder %v2129, 0.0
    %v2147 = vmul.f32 %v1735, 0.2
    %v2148 = vmul.f32 %v1791, 0.2
    %v2149 = vmul.f32 %v1847, 0.2
    %v2150 = vmul.f32 %v1903, 0.2
    %v2151 = vmul.f32 %v1959, 0.2
    %v2152 = vmul.f32 %v2015, 0.2
    %v2153 = vmul.f32 %v2071, 0.2
    %v2154 = vmul.f32 %v2127, 0.2
    %v2155 = vmul.f32 %v1737, 0.2
    %v2156 = vmul.f32 %v1793, 0.2
    %v2157 = vmul.f32 %v1849, 0.2
    %v2158 = vmul.f32 %v1905, 0.2
    %v2159 = vmul.f32 %v1961, 0.2
    %v2160 = vmul.f32 %v2017, 0.2
    %v2161 = vmul.f32 %v2073, 0.2
    %v2162 = vmul.f32 %v2129, 0.2
    %v2163 = vsel %vm2131, %v1735, %v2147
    %v2164 = vsel %vm2132, %v1791, %v2148
    %v2165 = vsel %vm2133, %v1847, %v2149
    %v2166 = vsel %vm2134, %v1903, %v2150
    %v2167 = vsel %vm2135, %v1959, %v2151
    %v2168 = vsel %vm2136, %v2015, %v2152
    %v2169 = vsel %vm2137, %v2071, %v2153
    %v2170 = vsel %vm2138, %v2127, %v2154
    %v2171 = vsel %vm2139, %v1737, %v2155
    %v2172 = vsel %vm2140, %v1793, %v2156
    %v2173 = vsel %vm2141, %v1849, %v2157
    %v2174 = vsel %vm2142, %v1905, %v2158
    %v2175 = vsel %vm2143, %v1961, %v2159
    %v2176 = vsel %vm2144, %v2017, %v2160
    %v2177 = vsel %vm2145, %v2073, %v2161
    %v2178 = vsel %vm2146, %v2129, %v2162
    %v2179 = vpack.c.bf16 %v2171, %v2163
    %v2180 = vpack.c.bf16 %v2172, %v2164
    %v2181 = vpack.c.bf16 %v2173, %v2165
    %v2182 = vpack.c.bf16 %v2174, %v2166
    %v2183 = vpack.c.bf16 %v2175, %v2167
    %v2184 = vpack.c.bf16 %v2176, %v2168
    %v2185 = vpack.c.bf16 %v2177, %v2169
    %v2186 = vpack.c.bf16 %v2178, %v2170
    %v2187 = vld [vmem:[#allocation8] sm:$0xff]
    %v2188 = vld [vmem:[#allocation8 + $0x8] sm:$0xff]
    %v2189 = vld [vmem:[#allocation8 + $0x10] sm:$0xff]
    %v2190 = vld [vmem:[#allocation8 + $0x18] sm:$0xff]
    %v2191 = vld [vmem:[#allocation8 + $0x20] sm:$0xff]
    %v2192 = vld [vmem:[#allocation8 + $0x28] sm:$0xff]
    %v2193 = vld [vmem:[#allocation8 + $0x30] sm:$0xff]
    %v2194 = vld [vmem:[#allocation8 + $0x38] sm:$0xff]
    %v2195 = vld [vmem:[#allocation8 + $0x40] sm:$0xff]
    %v2196 = vld [vmem:[#allocation8 + $0x48] sm:$0xff]
    %v2197 = vld [vmem:[#allocation8 + $0x50] sm:$0xff]
    %v2198 = vld [vmem:[#allocation8 + $0x58] sm:$0xff]
    %v2199 = vld [vmem:[#allocation8 + $0x60] sm:$0xff]
    %v2200 = vld [vmem:[#allocation8 + $0x68] sm:$0xff]
    %v2201 = vld [vmem:[#allocation8 + $0x70] sm:$0xff]
    %v2202 = vld [vmem:[#allocation8 + $0x78] sm:$0xff]
    %v2203 = vld [vmem:[#allocation8 + $0x80] sm:$0xff]
    %v2204 = vld [vmem:[#allocation8 + $0x88] sm:$0xff]
    %v2205 = vld [vmem:[#allocation8 + $0x90] sm:$0xff]
    %v2206 = vld [vmem:[#allocation8 + $0x98] sm:$0xff]
    %v2207 = vld [vmem:[#allocation8 + $0xa0] sm:$0xff]
    %v2208 = vld [vmem:[#allocation8 + $0xa8] sm:$0xff]
    %v2209 = vld [vmem:[#allocation8 + $0xb0] sm:$0xff]
    %v2210 = vld [vmem:[#allocation8 + $0xb8] sm:$0xff]
    %v2211 = vld [vmem:[#allocation8 + $0xc0] sm:$0xff]
    %v2212 = vld [vmem:[#allocation8 + $0xc8] sm:$0xff]
    %v2213 = vld [vmem:[#allocation8 + $0xd0] sm:$0xff]
    %v2214 = vld [vmem:[#allocation8 + $0xd8] sm:$0xff]
    %v2215 = vld [vmem:[#allocation8 + $0xe0] sm:$0xff]
    %v2216 = vld [vmem:[#allocation8 + $0xe8] sm:$0xff]
    %v2217 = vld [vmem:[#allocation8 + $0xf0] sm:$0xff]
    %v2218 = vld [vmem:[#allocation8 + $0xf8] sm:$0xff]
    %v2219 = vld [vmem:[#allocation8 + $0x100] sm:$0xff]
    %v2220 = vld [vmem:[#allocation8 + $0x108] sm:$0xff]
    %v2221 = vld [vmem:[#allocation8 + $0x110] sm:$0xff]
    %v2222 = vld [vmem:[#allocation8 + $0x118] sm:$0xff]
    %v2223 = vld [vmem:[#allocation8 + $0x120] sm:$0xff]
    %v2224 = vld [vmem:[#allocation8 + $0x128] sm:$0xff]
    %v2225 = vld [vmem:[#allocation8 + $0x130] sm:$0xff]
    %v2226 = vld [vmem:[#allocation8 + $0x138] sm:$0xff]
    %v2227 = vld [vmem:[#allocation8 + $0x140] sm:$0xff]
    %v2228 = vld [vmem:[#allocation8 + $0x148] sm:$0xff]
    %v2229 = vld [vmem:[#allocation8 + $0x150] sm:$0xff]
    %v2230 = vld [vmem:[#allocation8 + $0x158] sm:$0xff]
    %v2231 = vld [vmem:[#allocation8 + $0x160] sm:$0xff]
    %v2232 = vld [vmem:[#allocation8 + $0x168] sm:$0xff]
    %v2233 = vld [vmem:[#allocation8 + $0x170] sm:$0xff]
    %v2234 = vld [vmem:[#allocation8 + $0x178] sm:$0xff]
    %v2235 = vld [vmem:[#allocation8 + $0x180] sm:$0xff]
    %v2236 = vld [vmem:[#allocation8 + $0x188] sm:$0xff]
    %v2237 = vld [vmem:[#allocation8 + $0x190] sm:$0xff]
    %v2238 = vld [vmem:[#allocation8 + $0x198] sm:$0xff]
    %v2239 = vld [vmem:[#allocation8 + $0x1a0] sm:$0xff]
    %v2240 = vld [vmem:[#allocation8 + $0x1a8] sm:$0xff]
    %v2241 = vld [vmem:[#allocation8 + $0x1b0] sm:$0xff]
    %v2242 = vld [vmem:[#allocation8 + $0x1b8] sm:$0xff]
    %v2243 = vld [vmem:[#allocation8 + $0x1c0] sm:$0xff]
    %v2244 = vld [vmem:[#allocation8 + $0x1c8] sm:$0xff]
    %v2245 = vld [vmem:[#allocation8 + $0x1d0] sm:$0xff]
    %v2246 = vld [vmem:[#allocation8 + $0x1d8] sm:$0xff]
    %v2247 = vld [vmem:[#allocation8 + $0x1e0] sm:$0xff]
    %v2248 = vld [vmem:[#allocation8 + $0x1e8] sm:$0xff]
    %v2249 = vld [vmem:[#allocation8 + $0x1f0] sm:$0xff]
    %v2250 = vld [vmem:[#allocation8 + $0x1f8] sm:$0xff]
    %v2251 = vld [vmem:[#allocation8 + $0x200] sm:$0xff]
    %v2252 = vld [vmem:[#allocation8 + $0x208] sm:$0xff]
    %v2253 = vld [vmem:[#allocation8 + $0x210] sm:$0xff]
    %v2254 = vld [vmem:[#allocation8 + $0x218] sm:$0xff]
    %v2255 = vld [vmem:[#allocation8 + $0x220] sm:$0xff]
    %v2256 = vld [vmem:[#allocation8 + $0x228] sm:$0xff]
    %v2257 = vld [vmem:[#allocation8 + $0x230] sm:$0xff]
    %v2258 = vld [vmem:[#allocation8 + $0x238] sm:$0xff]
    %v2259 = vld [vmem:[#allocation8 + $0x240] sm:$0xff]
    %v2260 = vld [vmem:[#allocation8 + $0x248] sm:$0xff]
    %v2261 = vld [vmem:[#allocation8 + $0x250] sm:$0xff]
    %v2262 = vld [vmem:[#allocation8 + $0x258] sm:$0xff]
    %v2263 = vld [vmem:[#allocation8 + $0x260] sm:$0xff]
    %v2264 = vld [vmem:[#allocation8 + $0x268] sm:$0xff]
    %v2265 = vld [vmem:[#allocation8 + $0x270] sm:$0xff]
    %v2266 = vld [vmem:[#allocation8 + $0x278] sm:$0xff]
    %v2267 = vld [vmem:[#allocation8 + $0x280] sm:$0xff]
    %v2268 = vld [vmem:[#allocation8 + $0x288] sm:$0xff]
    %v2269 = vld [vmem:[#allocation8 + $0x290] sm:$0xff]
    %v2270 = vld [vmem:[#allocation8 + $0x298] sm:$0xff]
    %v2271 = vld [vmem:[#allocation8 + $0x2a0] sm:$0xff]
    %v2272 = vld [vmem:[#allocation8 + $0x2a8] sm:$0xff]
    %v2273 = vld [vmem:[#allocation8 + $0x2b0] sm:$0xff]
    %v2274 = vld [vmem:[#allocation8 + $0x2b8] sm:$0xff]
    %v2275 = vld [vmem:[#allocation8 + $0x2c0] sm:$0xff]
    %v2276 = vld [vmem:[#allocation8 + $0x2c8] sm:$0xff]
    %v2277 = vld [vmem:[#allocation8 + $0x2d0] sm:$0xff]
    %v2278 = vld [vmem:[#allocation8 + $0x2d8] sm:$0xff]
    %v2279 = vld [vmem:[#allocation8 + $0x2e0] sm:$0xff]
    %v2280 = vld [vmem:[#allocation8 + $0x2e8] sm:$0xff]
    %v2281 = vld [vmem:[#allocation8 + $0x2f0] sm:$0xff]
    %v2282 = vld [vmem:[#allocation8 + $0x2f8] sm:$0xff]
    %v2283 = vld [vmem:[#allocation8 + $0x300] sm:$0xff]
    %v2284 = vld [vmem:[#allocation8 + $0x308] sm:$0xff]
    %v2285 = vld [vmem:[#allocation8 + $0x310] sm:$0xff]
    %v2286 = vld [vmem:[#allocation8 + $0x318] sm:$0xff]
    %v2287 = vld [vmem:[#allocation8 + $0x320] sm:$0xff]
    %v2288 = vld [vmem:[#allocation8 + $0x328] sm:$0xff]
    %v2289 = vld [vmem:[#allocation8 + $0x330] sm:$0xff]
    %v2290 = vld [vmem:[#allocation8 + $0x338] sm:$0xff]
    %v2291 = vld [vmem:[#allocation8 + $0x340] sm:$0xff]
    %v2292 = vld [vmem:[#allocation8 + $0x348] sm:$0xff]
    %v2293 = vld [vmem:[#allocation8 + $0x350] sm:$0xff]
    %v2294 = vld [vmem:[#allocation8 + $0x358] sm:$0xff]
    %v2295 = vld [vmem:[#allocation8 + $0x360] sm:$0xff]
    %v2296 = vld [vmem:[#allocation8 + $0x368] sm:$0xff]
    %v2297 = vld [vmem:[#allocation8 + $0x370] sm:$0xff]
    %v2298 = vld [vmem:[#allocation8 + $0x378] sm:$0xff]
    %v2299 = vld [vmem:[#allocation8 + $0x380] sm:$0xff]
    %v2300 = vld [vmem:[#allocation8 + $0x388] sm:$0xff]
    %v2301 = vld [vmem:[#allocation8 + $0x390] sm:$0xff]
    %v2302 = vld [vmem:[#allocation8 + $0x398] sm:$0xff]
    %v2303 = vld [vmem:[#allocation8 + $0x3a0] sm:$0xff]
    %v2304 = vld [vmem:[#allocation8 + $0x3a8] sm:$0xff]
    %v2305 = vld [vmem:[#allocation8 + $0x3b0] sm:$0xff]
    %v2306 = vld [vmem:[#allocation8 + $0x3b8] sm:$0xff]
    %v2307 = vld [vmem:[#allocation8 + $0x3c0] sm:$0xff]
    %v2308 = vld [vmem:[#allocation8 + $0x3c8] sm:$0xff]
    %v2309 = vld [vmem:[#allocation8 + $0x3d0] sm:$0xff]
    %v2310 = vld [vmem:[#allocation8 + $0x3d8] sm:$0xff]
    %v2311 = vld [vmem:[#allocation8 + $0x3e0] sm:$0xff]
    %v2312 = vld [vmem:[#allocation8 + $0x3e8] sm:$0xff]
    %v2313 = vld [vmem:[#allocation8 + $0x3f0] sm:$0xff]
    %v2314 = vld [vmem:[#allocation8 + $0x3f8] sm:$0xff]
    %v2315 = vld [vmem:[#allocation8 + $0x400] sm:$0xff]
    %v2316 = vld [vmem:[#allocation8 + $0x408] sm:$0xff]
    %v2317 = vld [vmem:[#allocation8 + $0x410] sm:$0xff]
    %v2318 = vld [vmem:[#allocation8 + $0x418] sm:$0xff]
    %v2319 = vld [vmem:[#allocation8 + $0x420] sm:$0xff]
    %v2320 = vld [vmem:[#allocation8 + $0x428] sm:$0xff]
    %v2321 = vld [vmem:[#allocation8 + $0x430] sm:$0xff]
    %v2322 = vld [vmem:[#allocation8 + $0x438] sm:$0xff]
    %v2323 = vld [vmem:[#allocation8 + $0x440] sm:$0xff]
    %v2324 = vld [vmem:[#allocation8 + $0x448] sm:$0xff]
    %v2325 = vld [vmem:[#allocation8 + $0x450] sm:$0xff]
    %v2326 = vld [vmem:[#allocation8 + $0x458] sm:$0xff]
    %v2327 = vld [vmem:[#allocation8 + $0x460] sm:$0xff]
    %v2328 = vld [vmem:[#allocation8 + $0x468] sm:$0xff]
    %v2329 = vld [vmem:[#allocation8 + $0x470] sm:$0xff]
    %v2330 = vld [vmem:[#allocation8 + $0x478] sm:$0xff]
    %v2331 = vld [vmem:[#allocation8 + $0x480] sm:$0xff]
    %v2332 = vld [vmem:[#allocation8 + $0x488] sm:$0xff]
    %v2333 = vld [vmem:[#allocation8 + $0x490] sm:$0xff]
    %v2334 = vld [vmem:[#allocation8 + $0x498] sm:$0xff]
    %v2335 = vld [vmem:[#allocation8 + $0x4a0] sm:$0xff]
    %v2336 = vld [vmem:[#allocation8 + $0x4a8] sm:$0xff]
    %v2337 = vld [vmem:[#allocation8 + $0x4b0] sm:$0xff]
    %v2338 = vld [vmem:[#allocation8 + $0x4b8] sm:$0xff]
    %v2339 = vld [vmem:[#allocation8 + $0x4c0] sm:$0xff]
    %v2340 = vld [vmem:[#allocation8 + $0x4c8] sm:$0xff]
    %v2341 = vld [vmem:[#allocation8 + $0x4d0] sm:$0xff]
    %v2342 = vld [vmem:[#allocation8 + $0x4d8] sm:$0xff]
    %v2343 = vld [vmem:[#allocation8 + $0x4e0] sm:$0xff]
    %v2344 = vld [vmem:[#allocation8 + $0x4e8] sm:$0xff]
    %v2345 = vld [vmem:[#allocation8 + $0x4f0] sm:$0xff]
    %v2346 = vld [vmem:[#allocation8 + $0x4f8] sm:$0xff]
    %v2347 = vld [vmem:[#allocation8 + $0x500] sm:$0xff]
    %v2348 = vld [vmem:[#allocation8 + $0x508] sm:$0xff]
    %v2349 = vld [vmem:[#allocation8 + $0x510] sm:$0xff]
    %v2350 = vld [vmem:[#allocation8 + $0x518] sm:$0xff]
    %v2351 = vld [vmem:[#allocation8 + $0x520] sm:$0xff]
    %v2352 = vld [vmem:[#allocation8 + $0x528] sm:$0xff]
    %v2353 = vld [vmem:[#allocation8 + $0x530] sm:$0xff]
    %v2354 = vld [vmem:[#allocation8 + $0x538] sm:$0xff]
    %v2355 = vld [vmem:[#allocation8 + $0x540] sm:$0xff]
    %v2356 = vld [vmem:[#allocation8 + $0x548] sm:$0xff]
    %v2357 = vld [vmem:[#allocation8 + $0x550] sm:$0xff]
    %v2358 = vld [vmem:[#allocation8 + $0x558] sm:$0xff]
    %v2359 = vld [vmem:[#allocation8 + $0x560] sm:$0xff]
    %v2360 = vld [vmem:[#allocation8 + $0x568] sm:$0xff]
    %v2361 = vld [vmem:[#allocation8 + $0x570] sm:$0xff]
    %v2362 = vld [vmem:[#allocation8 + $0x578] sm:$0xff]
    %v2363 = vld [vmem:[#allocation8 + $0x580] sm:$0xff]
    %v2364 = vld [vmem:[#allocation8 + $0x588] sm:$0xff]
    %v2365 = vld [vmem:[#allocation8 + $0x590] sm:$0xff]
    %v2366 = vld [vmem:[#allocation8 + $0x598] sm:$0xff]
    %v2367 = vld [vmem:[#allocation8 + $0x5a0] sm:$0xff]
    %v2368 = vld [vmem:[#allocation8 + $0x5a8] sm:$0xff]
    %v2369 = vld [vmem:[#allocation8 + $0x5b0] sm:$0xff]
    %v2370 = vld [vmem:[#allocation8 + $0x5b8] sm:$0xff]
    %v2371 = vld [vmem:[#allocation8 + $0x5c0] sm:$0xff]
    %v2372 = vld [vmem:[#allocation8 + $0x5c8] sm:$0xff]
    %v2373 = vld [vmem:[#allocation8 + $0x5d0] sm:$0xff]
    %v2374 = vld [vmem:[#allocation8 + $0x5d8] sm:$0xff]
    %v2375 = vld [vmem:[#allocation8 + $0x5e0] sm:$0xff]
    %v2376 = vld [vmem:[#allocation8 + $0x5e8] sm:$0xff]
    %v2377 = vld [vmem:[#allocation8 + $0x5f0] sm:$0xff]
    %v2378 = vld [vmem:[#allocation8 + $0x5f8] sm:$0xff]
    %v2379 = vld [vmem:[#allocation8 + $0x600] sm:$0xff]
    %v2380 = vld [vmem:[#allocation8 + $0x608] sm:$0xff]
    %v2381 = vld [vmem:[#allocation8 + $0x610] sm:$0xff]
    %v2382 = vld [vmem:[#allocation8 + $0x618] sm:$0xff]
    %v2383 = vld [vmem:[#allocation8 + $0x620] sm:$0xff]
    %v2384 = vld [vmem:[#allocation8 + $0x628] sm:$0xff]
    %v2385 = vld [vmem:[#allocation8 + $0x630] sm:$0xff]
    %v2386 = vld [vmem:[#allocation8 + $0x638] sm:$0xff]
    %v2387 = vld [vmem:[#allocation8 + $0x640] sm:$0xff]
    %v2388 = vld [vmem:[#allocation8 + $0x648] sm:$0xff]
    %v2389 = vld [vmem:[#allocation8 + $0x650] sm:$0xff]
    %v2390 = vld [vmem:[#allocation8 + $0x658] sm:$0xff]
    %v2391 = vld [vmem:[#allocation8 + $0x660] sm:$0xff]
    %v2392 = vld [vmem:[#allocation8 + $0x668] sm:$0xff]
    %v2393 = vld [vmem:[#allocation8 + $0x670] sm:$0xff]
    %v2394 = vld [vmem:[#allocation8 + $0x678] sm:$0xff]
    %v2395 = vld [vmem:[#allocation8 + $0x680] sm:$0xff]
    %v2396 = vld [vmem:[#allocation8 + $0x688] sm:$0xff]
    %v2397 = vld [vmem:[#allocation8 + $0x690] sm:$0xff]
    %v2398 = vld [vmem:[#allocation8 + $0x698] sm:$0xff]
    %v2399 = vld [vmem:[#allocation8 + $0x6a0] sm:$0xff]
    %v2400 = vld [vmem:[#allocation8 + $0x6a8] sm:$0xff]
    %v2401 = vld [vmem:[#allocation8 + $0x6b0] sm:$0xff]
    %v2402 = vld [vmem:[#allocation8 + $0x6b8] sm:$0xff]
    %v2403 = vld [vmem:[#allocation8 + $0x6c0] sm:$0xff]
    %v2404 = vld [vmem:[#allocation8 + $0x6c8] sm:$0xff]
    %v2405 = vld [vmem:[#allocation8 + $0x6d0] sm:$0xff]
    %v2406 = vld [vmem:[#allocation8 + $0x6d8] sm:$0xff]
    %v2407 = vld [vmem:[#allocation8 + $0x6e0] sm:$0xff]
    %v2408 = vld [vmem:[#allocation8 + $0x6e8] sm:$0xff]
    %v2409 = vld [vmem:[#allocation8 + $0x6f0] sm:$0xff]
    %v2410 = vld [vmem:[#allocation8 + $0x6f8] sm:$0xff]
    %v2411 = vld [vmem:[#allocation8 + $0x700] sm:$0xff]
    %v2412 = vld [vmem:[#allocation8 + $0x708] sm:$0xff]
    %v2413 = vld [vmem:[#allocation8 + $0x710] sm:$0xff]
    %v2414 = vld [vmem:[#allocation8 + $0x718] sm:$0xff]
    %v2415 = vld [vmem:[#allocation8 + $0x720] sm:$0xff]
    %v2416 = vld [vmem:[#allocation8 + $0x728] sm:$0xff]
    %v2417 = vld [vmem:[#allocation8 + $0x730] sm:$0xff]
    %v2418 = vld [vmem:[#allocation8 + $0x738] sm:$0xff]
    %v2419 = vld [vmem:[#allocation8 + $0x740] sm:$0xff]
    %v2420 = vld [vmem:[#allocation8 + $0x748] sm:$0xff]
    %v2421 = vld [vmem:[#allocation8 + $0x750] sm:$0xff]
    %v2422 = vld [vmem:[#allocation8 + $0x758] sm:$0xff]
    %v2423 = vld [vmem:[#allocation8 + $0x760] sm:$0xff]
    %v2424 = vld [vmem:[#allocation8 + $0x768] sm:$0xff]
    %v2425 = vld [vmem:[#allocation8 + $0x770] sm:$0xff]
    %v2426 = vld [vmem:[#allocation8 + $0x778] sm:$0xff]
    %v2427 = vld [vmem:[#allocation8 + $0x780] sm:$0xff]
    %v2428 = vld [vmem:[#allocation8 + $0x788] sm:$0xff]
    %v2429 = vld [vmem:[#allocation8 + $0x790] sm:$0xff]
    %v2430 = vld [vmem:[#allocation8 + $0x798] sm:$0xff]
    %v2431 = vld [vmem:[#allocation8 + $0x7a0] sm:$0xff]
    %v2432 = vld [vmem:[#allocation8 + $0x7a8] sm:$0xff]
    %v2433 = vld [vmem:[#allocation8 + $0x7b0] sm:$0xff]
    %v2434 = vld [vmem:[#allocation8 + $0x7b8] sm:$0xff]
    %v2435 = vld [vmem:[#allocation8 + $0x7c0] sm:$0xff]
    %v2436 = vld [vmem:[#allocation8 + $0x7c8] sm:$0xff]
    %v2437 = vld [vmem:[#allocation8 + $0x7d0] sm:$0xff]
    %v2438 = vld [vmem:[#allocation8 + $0x7d8] sm:$0xff]
    %v2439 = vld [vmem:[#allocation8 + $0x7e0] sm:$0xff]
    %v2440 = vld [vmem:[#allocation8 + $0x7e8] sm:$0xff]
    %v2441 = vld [vmem:[#allocation8 + $0x7f0] sm:$0xff]
    %v2442 = vld [vmem:[#allocation8 + $0x7f8] sm:$0xff]
    %v2443 = vld [vmem:[#allocation10] sm:$0xf]
    %v2445 = vperm.slane %v2443, 0
    %v2446 = vperm.slane %v2443, 1
    %v2447 = vperm.slane %v2443, 2
    %v2448 = vperm.slane %v2443, 3
    %v2709 = vunpack.c.l.b16 %v2187
    %v2710 = vunpack.c.h.b16 %v2187
    %v2711 = vunpack.c.l.b16 %v2188
    %v2712 = vunpack.c.h.b16 %v2188
    %v2713 = vunpack.c.l.b16 %v2189
    %v2714 = vunpack.c.h.b16 %v2189
    %v2715 = vunpack.c.l.b16 %v2190
    %v2716 = vunpack.c.h.b16 %v2190
    %v2717 = vunpack.c.l.b16 %v2191
    %v2718 = vunpack.c.h.b16 %v2191
    %v2719 = vunpack.c.l.b16 %v2192
    %v2720 = vunpack.c.h.b16 %v2192
    %v2721 = vunpack.c.l.b16 %v2193
    %v2722 = vunpack.c.h.b16 %v2193
    %v2723 = vunpack.c.l.b16 %v2194
    %v2724 = vunpack.c.h.b16 %v2194
    %v2725 = vunpack.c.l.b16 %v2195
    %v2726 = vunpack.c.h.b16 %v2195
    %v2727 = vunpack.c.l.b16 %v2196
    %v2728 = vunpack.c.h.b16 %v2196
    %v2729 = vunpack.c.l.b16 %v2197
    %v2730 = vunpack.c.h.b16 %v2197
    %v2731 = vunpack.c.l.b16 %v2198
    %v2732 = vunpack.c.h.b16 %v2198
    %v2733 = vunpack.c.l.b16 %v2199
    %v2734 = vunpack.c.h.b16 %v2199
    %v2735 = vunpack.c.l.b16 %v2200
    %v2736 = vunpack.c.h.b16 %v2200
    %v2737 = vunpack.c.l.b16 %v2201
    %v2738 = vunpack.c.h.b16 %v2201
    %v2739 = vunpack.c.l.b16 %v2202
    %v2740 = vunpack.c.h.b16 %v2202
    %v2741 = vunpack.c.l.b16 %v2203
    %v2742 = vunpack.c.h.b16 %v2203
    %v2743 = vunpack.c.l.b16 %v2204
    %v2744 = vunpack.c.h.b16 %v2204
    %v2745 = vunpack.c.l.b16 %v2205
    %v2746 = vunpack.c.h.b16 %v2205
    %v2747 = vunpack.c.l.b16 %v2206
    %v2748 = vunpack.c.h.b16 %v2206
    %v2749 = vunpack.c.l.b16 %v2207
    %v2750 = vunpack.c.h.b16 %v2207
    %v2751 = vunpack.c.l.b16 %v2208
    %v2752 = vunpack.c.h.b16 %v2208
    %v2753 = vunpack.c.l.b16 %v2209
    %v2754 = vunpack.c.h.b16 %v2209
    %v2755 = vunpack.c.l.b16 %v2210
    %v2756 = vunpack.c.h.b16 %v2210
    %v2757 = vunpack.c.l.b16 %v2211
    %v2758 = vunpack.c.h.b16 %v2211
    %v2759 = vunpack.c.l.b16 %v2212
    %v2760 = vunpack.c.h.b16 %v2212
    %v2761 = vunpack.c.l.b16 %v2213
    %v2762 = vunpack.c.h.b16 %v2213
    %v2763 = vunpack.c.l.b16 %v2214
    %v2764 = vunpack.c.h.b16 %v2214
    %v2765 = vunpack.c.l.b16 %v2215
    %v2766 = vunpack.c.h.b16 %v2215
    %v2767 = vunpack.c.l.b16 %v2216
    %v2768 = vunpack.c.h.b16 %v2216
    %v2769 = vunpack.c.l.b16 %v2217
    %v2770 = vunpack.c.h.b16 %v2217
    %v2771 = vunpack.c.l.b16 %v2218
    %v2772 = vunpack.c.h.b16 %v2218
    %v2773 = vunpack.c.l.b16 %v2219
    %v2774 = vunpack.c.h.b16 %v2219
    %v2775 = vunpack.c.l.b16 %v2220
    %v2776 = vunpack.c.h.b16 %v2220
    %v2777 = vunpack.c.l.b16 %v2221
    %v2778 = vunpack.c.h.b16 %v2221
    %v2779 = vunpack.c.l.b16 %v2222
    %v2780 = vunpack.c.h.b16 %v2222
    %v2781 = vunpack.c.l.b16 %v2223
    %v2782 = vunpack.c.h.b16 %v2223
    %v2783 = vunpack.c.l.b16 %v2224
    %v2784 = vunpack.c.h.b16 %v2224
    %v2785 = vunpack.c.l.b16 %v2225
    %v2786 = vunpack.c.h.b16 %v2225
    %v2787 = vunpack.c.l.b16 %v2226
    %v2788 = vunpack.c.h.b16 %v2226
    %v2789 = vunpack.c.l.b16 %v2227
    %v2790 = vunpack.c.h.b16 %v2227
    %v2791 = vunpack.c.l.b16 %v2228
    %v2792 = vunpack.c.h.b16 %v2228
    %v2793 = vunpack.c.l.b16 %v2229
    %v2794 = vunpack.c.h.b16 %v2229
    %v2795 = vunpack.c.l.b16 %v2230
    %v2796 = vunpack.c.h.b16 %v2230
    %v2797 = vunpack.c.l.b16 %v2231
    %v2798 = vunpack.c.h.b16 %v2231
    %v2799 = vunpack.c.l.b16 %v2232
    %v2800 = vunpack.c.h.b16 %v2232
    %v2801 = vunpack.c.l.b16 %v2233
    %v2802 = vunpack.c.h.b16 %v2233
    %v2803 = vunpack.c.l.b16 %v2234
    %v2804 = vunpack.c.h.b16 %v2234
    %v2805 = vunpack.c.l.b16 %v2235
    %v2806 = vunpack.c.h.b16 %v2235
    %v2807 = vunpack.c.l.b16 %v2236
    %v2808 = vunpack.c.h.b16 %v2236
    %v2809 = vunpack.c.l.b16 %v2237
    %v2810 = vunpack.c.h.b16 %v2237
    %v2811 = vunpack.c.l.b16 %v2238
    %v2812 = vunpack.c.h.b16 %v2238
    %v2813 = vunpack.c.l.b16 %v2239
    %v2814 = vunpack.c.h.b16 %v2239
    %v2815 = vunpack.c.l.b16 %v2240
    %v2816 = vunpack.c.h.b16 %v2240
    %v2817 = vunpack.c.l.b16 %v2241
    %v2818 = vunpack.c.h.b16 %v2241
    %v2819 = vunpack.c.l.b16 %v2242
    %v2820 = vunpack.c.h.b16 %v2242
    %v2821 = vunpack.c.l.b16 %v2243
    %v2822 = vunpack.c.h.b16 %v2243
    %v2823 = vunpack.c.l.b16 %v2244
    %v2824 = vunpack.c.h.b16 %v2244
    %v2825 = vunpack.c.l.b16 %v2245
    %v2826 = vunpack.c.h.b16 %v2245
    %v2827 = vunpack.c.l.b16 %v2246
    %v2828 = vunpack.c.h.b16 %v2246
    %v2829 = vunpack.c.l.b16 %v2247
    %v2830 = vunpack.c.h.b16 %v2247
    %v2831 = vunpack.c.l.b16 %v2248
    %v2832 = vunpack.c.h.b16 %v2248
    %v2833 = vunpack.c.l.b16 %v2249
    %v2834 = vunpack.c.h.b16 %v2249
    %v2835 = vunpack.c.l.b16 %v2250
    %v2836 = vunpack.c.h.b16 %v2250
    %v2837 = vunpack.c.l.b16 %v2251
    %v2838 = vunpack.c.h.b16 %v2251
    %v2839 = vunpack.c.l.b16 %v2252
    %v2840 = vunpack.c.h.b16 %v2252
    %v2841 = vunpack.c.l.b16 %v2253
    %v2842 = vunpack.c.h.b16 %v2253
    %v2843 = vunpack.c.l.b16 %v2254
    %v2844 = vunpack.c.h.b16 %v2254
    %v2845 = vunpack.c.l.b16 %v2255
    %v2846 = vunpack.c.h.b16 %v2255
    %v2847 = vunpack.c.l.b16 %v2256
    %v2848 = vunpack.c.h.b16 %v2256
    %v2849 = vunpack.c.l.b16 %v2257
    %v2850 = vunpack.c.h.b16 %v2257
    %v2851 = vunpack.c.l.b16 %v2258
    %v2852 = vunpack.c.h.b16 %v2258
    %v2853 = vunpack.c.l.b16 %v2259
    %v2854 = vunpack.c.h.b16 %v2259
    %v2855 = vunpack.c.l.b16 %v2260
    %v2856 = vunpack.c.h.b16 %v2260
    %v2857 = vunpack.c.l.b16 %v2261
    %v2858 = vunpack.c.h.b16 %v2261
    %v2859 = vunpack.c.l.b16 %v2262
    %v2860 = vunpack.c.h.b16 %v2262
    %v2861 = vunpack.c.l.b16 %v2263
    %v2862 = vunpack.c.h.b16 %v2263
    %v2863 = vunpack.c.l.b16 %v2264
    %v2864 = vunpack.c.h.b16 %v2264
    %v2865 = vunpack.c.l.b16 %v2265
    %v2866 = vunpack.c.h.b16 %v2265
    %v2867 = vunpack.c.l.b16 %v2266
    %v2868 = vunpack.c.h.b16 %v2266
    %v2869 = vunpack.c.l.b16 %v2267
    %v2870 = vunpack.c.h.b16 %v2267
    %v2871 = vunpack.c.l.b16 %v2268
    %v2872 = vunpack.c.h.b16 %v2268
    %v2873 = vunpack.c.l.b16 %v2269
    %v2874 = vunpack.c.h.b16 %v2269
    %v2875 = vunpack.c.l.b16 %v2270
    %v2876 = vunpack.c.h.b16 %v2270
    %v2877 = vunpack.c.l.b16 %v2271
    %v2878 = vunpack.c.h.b16 %v2271
    %v2879 = vunpack.c.l.b16 %v2272
    %v2880 = vunpack.c.h.b16 %v2272
    %v2881 = vunpack.c.l.b16 %v2273
    %v2882 = vunpack.c.h.b16 %v2273
    %v2883 = vunpack.c.l.b16 %v2274
    %v2884 = vunpack.c.h.b16 %v2274
    %v2885 = vunpack.c.l.b16 %v2275
    %v2886 = vunpack.c.h.b16 %v2275
    %v2887 = vunpack.c.l.b16 %v2276
    %v2888 = vunpack.c.h.b16 %v2276
    %v2889 = vunpack.c.l.b16 %v2277
    %v2890 = vunpack.c.h.b16 %v2277
    %v2891 = vunpack.c.l.b16 %v2278
    %v2892 = vunpack.c.h.b16 %v2278
    %v2893 = vunpack.c.l.b16 %v2279
    %v2894 = vunpack.c.h.b16 %v2279
    %v2895 = vunpack.c.l.b16 %v2280
    %v2896 = vunpack.c.h.b16 %v2280
    %v2897 = vunpack.c.l.b16 %v2281
    %v2898 = vunpack.c.h.b16 %v2281
    %v2899 = vunpack.c.l.b16 %v2282
    %v2900 = vunpack.c.h.b16 %v2282
    %v2901 = vunpack.c.l.b16 %v2283
    %v2902 = vunpack.c.h.b16 %v2283
    %v2903 = vunpack.c.l.b16 %v2284
    %v2904 = vunpack.c.h.b16 %v2284
    %v2905 = vunpack.c.l.b16 %v2285
    %v2906 = vunpack.c.h.b16 %v2285
    %v2907 = vunpack.c.l.b16 %v2286
    %v2908 = vunpack.c.h.b16 %v2286
    %v2909 = vunpack.c.l.b16 %v2287
    %v2910 = vunpack.c.h.b16 %v2287
    %v2911 = vunpack.c.l.b16 %v2288
    %v2912 = vunpack.c.h.b16 %v2288
    %v2913 = vunpack.c.l.b16 %v2289
    %v2914 = vunpack.c.h.b16 %v2289
    %v2915 = vunpack.c.l.b16 %v2290
    %v2916 = vunpack.c.h.b16 %v2290
    %v2917 = vunpack.c.l.b16 %v2291
    %v2918 = vunpack.c.h.b16 %v2291
    %v2919 = vunpack.c.l.b16 %v2292
    %v2920 = vunpack.c.h.b16 %v2292
    %v2921 = vunpack.c.l.b16 %v2293
    %v2922 = vunpack.c.h.b16 %v2293
    %v2923 = vunpack.c.l.b16 %v2294
    %v2924 = vunpack.c.h.b16 %v2294
    %v2925 = vunpack.c.l.b16 %v2295
    %v2926 = vunpack.c.h.b16 %v2295
    %v2927 = vunpack.c.l.b16 %v2296
    %v2928 = vunpack.c.h.b16 %v2296
    %v2929 = vunpack.c.l.b16 %v2297
    %v2930 = vunpack.c.h.b16 %v2297
    %v2931 = vunpack.c.l.b16 %v2298
    %v2932 = vunpack.c.h.b16 %v2298
    %v2933 = vunpack.c.l.b16 %v2299
    %v2934 = vunpack.c.h.b16 %v2299
    %v2935 = vunpack.c.l.b16 %v2300
    %v2936 = vunpack.c.h.b16 %v2300
    %v2937 = vunpack.c.l.b16 %v2301
    %v2938 = vunpack.c.h.b16 %v2301
    %v2939 = vunpack.c.l.b16 %v2302
    %v2940 = vunpack.c.h.b16 %v2302
    %v2941 = vunpack.c.l.b16 %v2303
    %v2942 = vunpack.c.h.b16 %v2303
    %v2943 = vunpack.c.l.b16 %v2304
    %v2944 = vunpack.c.h.b16 %v2304
    %v2945 = vunpack.c.l.b16 %v2305
    %v2946 = vunpack.c.h.b16 %v2305
    %v2947 = vunpack.c.l.b16 %v2306
    %v2948 = vunpack.c.h.b16 %v2306
    %v2949 = vunpack.c.l.b16 %v2307
    %v2950 = vunpack.c.h.b16 %v2307
    %v2951 = vunpack.c.l.b16 %v2308
    %v2952 = vunpack.c.h.b16 %v2308
    %v2953 = vunpack.c.l.b16 %v2309
    %v2954 = vunpack.c.h.b16 %v2309
    %v2955 = vunpack.c.l.b16 %v2310
    %v2956 = vunpack.c.h.b16 %v2310
    %v2957 = vunpack.c.l.b16 %v2311
    %v2958 = vunpack.c.h.b16 %v2311
    %v2959 = vunpack.c.l.b16 %v2312
    %v2960 = vunpack.c.h.b16 %v2312
    %v2961 = vunpack.c.l.b16 %v2313
    %v2962 = vunpack.c.h.b16 %v2313
    %v2963 = vunpack.c.l.b16 %v2314
    %v2964 = vunpack.c.h.b16 %v2314
    %v2965 = vunpack.c.l.b16 %v2315
    %v2966 = vunpack.c.h.b16 %v2315
    %v2967 = vunpack.c.l.b16 %v2316
    %v2968 = vunpack.c.h.b16 %v2316
    %v2969 = vunpack.c.l.b16 %v2317
    %v2970 = vunpack.c.h.b16 %v2317
    %v2971 = vunpack.c.l.b16 %v2318
    %v2972 = vunpack.c.h.b16 %v2318
    %v2973 = vunpack.c.l.b16 %v2319
    %v2974 = vunpack.c.h.b16 %v2319
    %v2975 = vunpack.c.l.b16 %v2320
    %v2976 = vunpack.c.h.b16 %v2320
    %v2977 = vunpack.c.l.b16 %v2321
    %v2978 = vunpack.c.h.b16 %v2321
    %v2979 = vunpack.c.l.b16 %v2322
    %v2980 = vunpack.c.h.b16 %v2322
    %v2981 = vunpack.c.l.b16 %v2323
    %v2982 = vunpack.c.h.b16 %v2323
    %v2983 = vunpack.c.l.b16 %v2324
    %v2984 = vunpack.c.h.b16 %v2324
    %v2985 = vunpack.c.l.b16 %v2325
    %v2986 = vunpack.c.h.b16 %v2325
    %v2987 = vunpack.c.l.b16 %v2326
    %v2988 = vunpack.c.h.b16 %v2326
    %v2989 = vunpack.c.l.b16 %v2327
    %v2990 = vunpack.c.h.b16 %v2327
    %v2991 = vunpack.c.l.b16 %v2328
    %v2992 = vunpack.c.h.b16 %v2328
    %v2993 = vunpack.c.l.b16 %v2329
    %v2994 = vunpack.c.h.b16 %v2329
    %v2995 = vunpack.c.l.b16 %v2330
    %v2996 = vunpack.c.h.b16 %v2330
    %v2997 = vunpack.c.l.b16 %v2331
    %v2998 = vunpack.c.h.b16 %v2331
    %v2999 = vunpack.c.l.b16 %v2332
    %v3000 = vunpack.c.h.b16 %v2332
    %v3001 = vunpack.c.l.b16 %v2333
    %v3002 = vunpack.c.h.b16 %v2333
    %v3003 = vunpack.c.l.b16 %v2334
    %v3004 = vunpack.c.h.b16 %v2334
    %v3005 = vunpack.c.l.b16 %v2335
    %v3006 = vunpack.c.h.b16 %v2335
    %v3007 = vunpack.c.l.b16 %v2336
    %v3008 = vunpack.c.h.b16 %v2336
    %v3009 = vunpack.c.l.b16 %v2337
    %v3010 = vunpack.c.h.b16 %v2337
    %v3011 = vunpack.c.l.b16 %v2338
    %v3012 = vunpack.c.h.b16 %v2338
    %v3013 = vunpack.c.l.b16 %v2339
    %v3014 = vunpack.c.h.b16 %v2339
    %v3015 = vunpack.c.l.b16 %v2340
    %v3016 = vunpack.c.h.b16 %v2340
    %v3017 = vunpack.c.l.b16 %v2341
    %v3018 = vunpack.c.h.b16 %v2341
    %v3019 = vunpack.c.l.b16 %v2342
    %v3020 = vunpack.c.h.b16 %v2342
    %v3021 = vunpack.c.l.b16 %v2343
    %v3022 = vunpack.c.h.b16 %v2343
    %v3023 = vunpack.c.l.b16 %v2344
    %v3024 = vunpack.c.h.b16 %v2344
    %v3025 = vunpack.c.l.b16 %v2345
    %v3026 = vunpack.c.h.b16 %v2345
    %v3027 = vunpack.c.l.b16 %v2346
    %v3028 = vunpack.c.h.b16 %v2346
    %v3029 = vunpack.c.l.b16 %v2347
    %v3030 = vunpack.c.h.b16 %v2347
    %v3031 = vunpack.c.l.b16 %v2348
    %v3032 = vunpack.c.h.b16 %v2348
    %v3033 = vunpack.c.l.b16 %v2349
    %v3034 = vunpack.c.h.b16 %v2349
    %v3035 = vunpack.c.l.b16 %v2350
    %v3036 = vunpack.c.h.b16 %v2350
    %v3037 = vunpack.c.l.b16 %v2351
    %v3038 = vunpack.c.h.b16 %v2351
    %v3039 = vunpack.c.l.b16 %v2352
    %v3040 = vunpack.c.h.b16 %v2352
    %v3041 = vunpack.c.l.b16 %v2353
    %v3042 = vunpack.c.h.b16 %v2353
    %v3043 = vunpack.c.l.b16 %v2354
    %v3044 = vunpack.c.h.b16 %v2354
    %v3045 = vunpack.c.l.b16 %v2355
    %v3046 = vunpack.c.h.b16 %v2355
    %v3047 = vunpack.c.l.b16 %v2356
    %v3048 = vunpack.c.h.b16 %v2356
    %v3049 = vunpack.c.l.b16 %v2357
    %v3050 = vunpack.c.h.b16 %v2357
    %v3051 = vunpack.c.l.b16 %v2358
    %v3052 = vunpack.c.h.b16 %v2358
    %v3053 = vunpack.c.l.b16 %v2359
    %v3054 = vunpack.c.h.b16 %v2359
    %v3055 = vunpack.c.l.b16 %v2360
    %v3056 = vunpack.c.h.b16 %v2360
    %v3057 = vunpack.c.l.b16 %v2361
    %v3058 = vunpack.c.h.b16 %v2361
    %v3059 = vunpack.c.l.b16 %v2362
    %v3060 = vunpack.c.h.b16 %v2362
    %v3061 = vunpack.c.l.b16 %v2363
    %v3062 = vunpack.c.h.b16 %v2363
    %v3063 = vunpack.c.l.b16 %v2364
    %v3064 = vunpack.c.h.b16 %v2364
    %v3065 = vunpack.c.l.b16 %v2365
    %v3066 = vunpack.c.h.b16 %v2365
    %v3067 = vunpack.c.l.b16 %v2366
    %v3068 = vunpack.c.h.b16 %v2366
    %v3069 = vunpack.c.l.b16 %v2367
    %v3070 = vunpack.c.h.b16 %v2367
    %v3071 = vunpack.c.l.b16 %v2368
    %v3072 = vunpack.c.h.b16 %v2368
    %v3073 = vunpack.c.l.b16 %v2369
    %v3074 = vunpack.c.h.b16 %v2369
    %v3075 = vunpack.c.l.b16 %v2370
    %v3076 = vunpack.c.h.b16 %v2370
    %v3077 = vunpack.c.l.b16 %v2371
    %v3078 = vunpack.c.h.b16 %v2371
    %v3079 = vunpack.c.l.b16 %v2372
    %v3080 = vunpack.c.h.b16 %v2372
    %v3081 = vunpack.c.l.b16 %v2373
    %v3082 = vunpack.c.h.b16 %v2373
    %v3083 = vunpack.c.l.b16 %v2374
    %v3084 = vunpack.c.h.b16 %v2374
    %v3085 = vunpack.c.l.b16 %v2375
    %v3086 = vunpack.c.h.b16 %v2375
    %v3087 = vunpack.c.l.b16 %v2376
    %v3088 = vunpack.c.h.b16 %v2376
    %v3089 = vunpack.c.l.b16 %v2377
    %v3090 = vunpack.c.h.b16 %v2377
    %v3091 = vunpack.c.l.b16 %v2378
    %v3092 = vunpack.c.h.b16 %v2378
    %v3093 = vunpack.c.l.b16 %v2379
    %v3094 = vunpack.c.h.b16 %v2379
    %v3095 = vunpack.c.l.b16 %v2380
    %v3096 = vunpack.c.h.b16 %v2380
    %v3097 = vunpack.c.l.b16 %v2381
    %v3098 = vunpack.c.h.b16 %v2381
    %v3099 = vunpack.c.l.b16 %v2382
    %v3100 = vunpack.c.h.b16 %v2382
    %v3101 = vunpack.c.l.b16 %v2383
    %v3102 = vunpack.c.h.b16 %v2383
    %v3103 = vunpack.c.l.b16 %v2384
    %v3104 = vunpack.c.h.b16 %v2384
    %v3105 = vunpack.c.l.b16 %v2385
    %v3106 = vunpack.c.h.b16 %v2385
    %v3107 = vunpack.c.l.b16 %v2386
    %v3108 = vunpack.c.h.b16 %v2386
    %v3109 = vunpack.c.l.b16 %v2387
    %v3110 = vunpack.c.h.b16 %v2387
    %v3111 = vunpack.c.l.b16 %v2388
    %v3112 = vunpack.c.h.b16 %v2388
    %v3113 = vunpack.c.l.b16 %v2389
    %v3114 = vunpack.c.h.b16 %v2389
    %v3115 = vunpack.c.l.b16 %v2390
    %v3116 = vunpack.c.h.b16 %v2390
    %v3117 = vunpack.c.l.b16 %v2391
    %v3118 = vunpack.c.h.b16 %v2391
    %v3119 = vunpack.c.l.b16 %v2392
    %v3120 = vunpack.c.h.b16 %v2392
    %v3121 = vunpack.c.l.b16 %v2393
    %v3122 = vunpack.c.h.b16 %v2393
    %v3123 = vunpack.c.l.b16 %v2394
    %v3124 = vunpack.c.h.b16 %v2394
    %v3125 = vunpack.c.l.b16 %v2395
    %v3126 = vunpack.c.h.b16 %v2395
    %v3127 = vunpack.c.l.b16 %v2396
    %v3128 = vunpack.c.h.b16 %v2396
    %v3129 = vunpack.c.l.b16 %v2397
    %v3130 = vunpack.c.h.b16 %v2397
    %v3131 = vunpack.c.l.b16 %v2398
    %v3132 = vunpack.c.h.b16 %v2398
    %v3133 = vunpack.c.l.b16 %v2399
    %v3134 = vunpack.c.h.b16 %v2399
    %v3135 = vunpack.c.l.b16 %v2400
    %v3136 = vunpack.c.h.b16 %v2400
    %v3137 = vunpack.c.l.b16 %v2401
    %v3138 = vunpack.c.h.b16 %v2401
    %v3139 = vunpack.c.l.b16 %v2402
    %v3140 = vunpack.c.h.b16 %v2402
    %v3141 = vunpack.c.l.b16 %v2403
    %v3142 = vunpack.c.h.b16 %v2403
    %v3143 = vunpack.c.l.b16 %v2404
    %v3144 = vunpack.c.h.b16 %v2404
    %v3145 = vunpack.c.l.b16 %v2405
    %v3146 = vunpack.c.h.b16 %v2405
    %v3147 = vunpack.c.l.b16 %v2406
    %v3148 = vunpack.c.h.b16 %v2406
    %v3149 = vunpack.c.l.b16 %v2407
    %v3150 = vunpack.c.h.b16 %v2407
    %v3151 = vunpack.c.l.b16 %v2408
    %v3152 = vunpack.c.h.b16 %v2408
    %v3153 = vunpack.c.l.b16 %v2409
    %v3154 = vunpack.c.h.b16 %v2409
    %v3155 = vunpack.c.l.b16 %v2410
    %v3156 = vunpack.c.h.b16 %v2410
    %v3157 = vunpack.c.l.b16 %v2411
    %v3158 = vunpack.c.h.b16 %v2411
    %v3159 = vunpack.c.l.b16 %v2412
    %v3160 = vunpack.c.h.b16 %v2412
    %v3161 = vunpack.c.l.b16 %v2413
    %v3162 = vunpack.c.h.b16 %v2413
    %v3163 = vunpack.c.l.b16 %v2414
    %v3164 = vunpack.c.h.b16 %v2414
    %v3165 = vunpack.c.l.b16 %v2415
    %v3166 = vunpack.c.h.b16 %v2415
    %v3167 = vunpack.c.l.b16 %v2416
    %v3168 = vunpack.c.h.b16 %v2416
    %v3169 = vunpack.c.l.b16 %v2417
    %v3170 = vunpack.c.h.b16 %v2417
    %v3171 = vunpack.c.l.b16 %v2418
    %v3172 = vunpack.c.h.b16 %v2418
    %v3173 = vunpack.c.l.b16 %v2419
    %v3174 = vunpack.c.h.b16 %v2419
    %v3175 = vunpack.c.l.b16 %v2420
    %v3176 = vunpack.c.h.b16 %v2420
    %v3177 = vunpack.c.l.b16 %v2421
    %v3178 = vunpack.c.h.b16 %v2421
    %v3179 = vunpack.c.l.b16 %v2422
    %v3180 = vunpack.c.h.b16 %v2422
    %v3181 = vunpack.c.l.b16 %v2423
    %v3182 = vunpack.c.h.b16 %v2423
    %v3183 = vunpack.c.l.b16 %v2424
    %v3184 = vunpack.c.h.b16 %v2424
    %v3185 = vunpack.c.l.b16 %v2425
    %v3186 = vunpack.c.h.b16 %v2425
    %v3187 = vunpack.c.l.b16 %v2426
    %v3188 = vunpack.c.h.b16 %v2426
    %v3189 = vunpack.c.l.b16 %v2427
    %v3190 = vunpack.c.h.b16 %v2427
    %v3191 = vunpack.c.l.b16 %v2428
    %v3192 = vunpack.c.h.b16 %v2428
    %v3193 = vunpack.c.l.b16 %v2429
    %v3194 = vunpack.c.h.b16 %v2429
    %v3195 = vunpack.c.l.b16 %v2430
    %v3196 = vunpack.c.h.b16 %v2430
    %v3197 = vunpack.c.l.b16 %v2431
    %v3198 = vunpack.c.h.b16 %v2431
    %v3199 = vunpack.c.l.b16 %v2432
    %v3200 = vunpack.c.h.b16 %v2432
    %v3201 = vunpack.c.l.b16 %v2433
    %v3202 = vunpack.c.h.b16 %v2433
    %v3203 = vunpack.c.l.b16 %v2434
    %v3204 = vunpack.c.h.b16 %v2434
    %v3205 = vunpack.c.l.b16 %v2435
    %v3206 = vunpack.c.h.b16 %v2435
    %v3207 = vunpack.c.l.b16 %v2436
    %v3208 = vunpack.c.h.b16 %v2436
    %v3209 = vunpack.c.l.b16 %v2437
    %v3210 = vunpack.c.h.b16 %v2437
    %v3211 = vunpack.c.l.b16 %v2438
    %v3212 = vunpack.c.h.b16 %v2438
    %v3213 = vunpack.c.l.b16 %v2439
    %v3214 = vunpack.c.h.b16 %v2439
    %v3215 = vunpack.c.l.b16 %v2440
    %v3216 = vunpack.c.h.b16 %v2440
    %v3217 = vunpack.c.l.b16 %v2441
    %v3218 = vunpack.c.h.b16 %v2441
    %v3219 = vunpack.c.l.b16 %v2442
    %v3220 = vunpack.c.h.b16 %v2442
    %v3221 = vpack.c.b16 %v2713, %v2709
    %v3222 = vpack.c.b16 %v2714, %v2710
    %v3223 = vpack.c.b16 %v2715, %v2711
    %v3224 = vpack.c.b16 %v2716, %v2712
    %v3225 = vpack.c.b16 %v2721, %v2717
    %v3226 = vpack.c.b16 %v2722, %v2718
    %v3227 = vpack.c.b16 %v2723, %v2719
    %v3228 = vpack.c.b16 %v2724, %v2720
    %v3229 = vpack.c.b16 %v2729, %v2725
    %v3230 = vpack.c.b16 %v2730, %v2726
    %v3231 = vpack.c.b16 %v2731, %v2727
    %v3232 = vpack.c.b16 %v2732, %v2728
    %v3233 = vpack.c.b16 %v2737, %v2733
    %v3234 = vpack.c.b16 %v2738, %v2734
    %v3235 = vpack.c.b16 %v2739, %v2735
    %v3236 = vpack.c.b16 %v2740, %v2736
    %v3237 = vpack.c.b16 %v2745, %v2741
    %v3238 = vpack.c.b16 %v2746, %v2742
    %v3239 = vpack.c.b16 %v2747, %v2743
    %v3240 = vpack.c.b16 %v2748, %v2744
    %v3241 = vpack.c.b16 %v2753, %v2749
    %v3242 = vpack.c.b16 %v2754, %v2750
    %v3243 = vpack.c.b16 %v2755, %v2751
    %v3244 = vpack.c.b16 %v2756, %v2752
    %v3245 = vpack.c.b16 %v2761, %v2757
    %v3246 = vpack.c.b16 %v2762, %v2758
    %v3247 = vpack.c.b16 %v2763, %v2759
    %v3248 = vpack.c.b16 %v2764, %v2760
    %v3249 = vpack.c.b16 %v2769, %v2765
    %v3250 = vpack.c.b16 %v2770, %v2766
    %v3251 = vpack.c.b16 %v2771, %v2767
    %v3252 = vpack.c.b16 %v2772, %v2768
    %v3253 = vpack.c.b16 %v2777, %v2773
    %v3254 = vpack.c.b16 %v2778, %v2774
    %v3255 = vpack.c.b16 %v2779, %v2775
    %v3256 = vpack.c.b16 %v2780, %v2776
    %v3257 = vpack.c.b16 %v2785, %v2781
    %v3258 = vpack.c.b16 %v2786, %v2782
    %v3259 = vpack.c.b16 %v2787, %v2783
    %v3260 = vpack.c.b16 %v2788, %v2784
    %v3261 = vpack.c.b16 %v2793, %v2789
    %v3262 = vpack.c.b16 %v2794, %v2790
    %v3263 = vpack.c.b16 %v2795, %v2791
    %v3264 = vpack.c.b16 %v2796, %v2792
    %v3265 = vpack.c.b16 %v2801, %v2797
    %v3266 = vpack.c.b16 %v2802, %v2798
    %v3267 = vpack.c.b16 %v2803, %v2799
    %v3268 = vpack.c.b16 %v2804, %v2800
    %v3269 = vpack.c.b16 %v2809, %v2805
    %v3270 = vpack.c.b16 %v2810, %v2806
    %v3271 = vpack.c.b16 %v2811, %v2807
    %v3272 = vpack.c.b16 %v2812, %v2808
    %v3273 = vpack.c.b16 %v2817, %v2813
    %v3274 = vpack.c.b16 %v2818, %v2814
    %v3275 = vpack.c.b16 %v2819, %v2815
    %v3276 = vpack.c.b16 %v2820, %v2816
    %v3277 = vpack.c.b16 %v2825, %v2821
    %v3278 = vpack.c.b16 %v2826, %v2822
    %v3279 = vpack.c.b16 %v2827, %v2823
    %v3280 = vpack.c.b16 %v2828, %v2824
    %v3281 = vpack.c.b16 %v2833, %v2829
    %v3282 = vpack.c.b16 %v2834, %v2830
    %v3283 = vpack.c.b16 %v2835, %v2831
    %v3284 = vpack.c.b16 %v2836, %v2832
    %v3285 = vpack.c.b16 %v2841, %v2837
    %v3286 = vpack.c.b16 %v2842, %v2838
    %v3287 = vpack.c.b16 %v2843, %v2839
    %v3288 = vpack.c.b16 %v2844, %v2840
    %v3289 = vpack.c.b16 %v2849, %v2845
    %v3290 = vpack.c.b16 %v2850, %v2846
    %v3291 = vpack.c.b16 %v2851, %v2847
    %v3292 = vpack.c.b16 %v2852, %v2848
    %v3293 = vpack.c.b16 %v2857, %v2853
    %v3294 = vpack.c.b16 %v2858, %v2854
    %v3295 = vpack.c.b16 %v2859, %v2855
    %v3296 = vpack.c.b16 %v2860, %v2856
    %v3297 = vpack.c.b16 %v2865, %v2861
    %v3298 = vpack.c.b16 %v2866, %v2862
    %v3299 = vpack.c.b16 %v2867, %v2863
    %v3300 = vpack.c.b16 %v2868, %v2864
    %v3301 = vpack.c.b16 %v2873, %v2869
    %v3302 = vpack.c.b16 %v2874, %v2870
    %v3303 = vpack.c.b16 %v2875, %v2871
    %v3304 = vpack.c.b16 %v2876, %v2872
    %v3305 = vpack.c.b16 %v2881, %v2877
    %v3306 = vpack.c.b16 %v2882, %v2878
    %v3307 = vpack.c.b16 %v2883, %v2879
    %v3308 = vpack.c.b16 %v2884, %v2880
    %v3309 = vpack.c.b16 %v2889, %v2885
    %v3310 = vpack.c.b16 %v2890, %v2886
    %v3311 = vpack.c.b16 %v2891, %v2887
    %v3312 = vpack.c.b16 %v2892, %v2888
    %v3313 = vpack.c.b16 %v2897, %v2893
    %v3314 = vpack.c.b16 %v2898, %v2894
    %v3315 = vpack.c.b16 %v2899, %v2895
    %v3316 = vpack.c.b16 %v2900, %v2896
    %v3317 = vpack.c.b16 %v2905, %v2901
    %v3318 = vpack.c.b16 %v2906, %v2902
    %v3319 = vpack.c.b16 %v2907, %v2903
    %v3320 = vpack.c.b16 %v2908, %v2904
    %v3321 = vpack.c.b16 %v2913, %v2909
    %v3322 = vpack.c.b16 %v2914, %v2910
    %v3323 = vpack.c.b16 %v2915, %v2911
    %v3324 = vpack.c.b16 %v2916, %v2912
    %v3325 = vpack.c.b16 %v2921, %v2917
    %v3326 = vpack.c.b16 %v2922, %v2918
    %v3327 = vpack.c.b16 %v2923, %v2919
    %v3328 = vpack.c.b16 %v2924, %v2920
    %v3329 = vpack.c.b16 %v2929, %v2925
    %v3330 = vpack.c.b16 %v2930, %v2926
    %v3331 = vpack.c.b16 %v2931, %v2927
    %v3332 = vpack.c.b16 %v2932, %v2928
    %v3333 = vpack.c.b16 %v2937, %v2933
    %v3334 = vpack.c.b16 %v2938, %v2934
    %v3335 = vpack.c.b16 %v2939, %v2935
    %v3336 = vpack.c.b16 %v2940, %v2936
    %v3337 = vpack.c.b16 %v2945, %v2941
    %v3338 = vpack.c.b16 %v2946, %v2942
    %v3339 = vpack.c.b16 %v2947, %v2943
    %v3340 = vpack.c.b16 %v2948, %v2944
    %v3341 = vpack.c.b16 %v2953, %v2949
    %v3342 = vpack.c.b16 %v2954, %v2950
    %v3343 = vpack.c.b16 %v2955, %v2951
    %v3344 = vpack.c.b16 %v2956, %v2952
    %v3345 = vpack.c.b16 %v2961, %v2957
    %v3346 = vpack.c.b16 %v2962, %v2958
    %v3347 = vpack.c.b16 %v2963, %v2959
    %v3348 = vpack.c.b16 %v2964, %v2960
    %v3349 = vpack.c.b16 %v2969, %v2965
    %v3350 = vpack.c.b16 %v2970, %v2966
    %v3351 = vpack.c.b16 %v2971, %v2967
    %v3352 = vpack.c.b16 %v2972, %v2968
    %v3353 = vpack.c.b16 %v2977, %v2973
    %v3354 = vpack.c.b16 %v2978, %v2974
    %v3355 = vpack.c.b16 %v2979, %v2975
    %v3356 = vpack.c.b16 %v2980, %v2976
    %v3357 = vpack.c.b16 %v2985, %v2981
    %v3358 = vpack.c.b16 %v2986, %v2982
    %v3359 = vpack.c.b16 %v2987, %v2983
    %v3360 = vpack.c.b16 %v2988, %v2984
    %v3361 = vpack.c.b16 %v2993, %v2989
    %v3362 = vpack.c.b16 %v2994, %v2990
    %v3363 = vpack.c.b16 %v2995, %v2991
    %v3364 = vpack.c.b16 %v2996, %v2992
    %v3365 = vpack.c.b16 %v3001, %v2997
    %v3366 = vpack.c.b16 %v3002, %v2998
    %v3367 = vpack.c.b16 %v3003, %v2999
    %v3368 = vpack.c.b16 %v3004, %v3000
    %v3369 = vpack.c.b16 %v3009, %v3005
    %v3370 = vpack.c.b16 %v3010, %v3006
    %v3371 = vpack.c.b16 %v3011, %v3007
    %v3372 = vpack.c.b16 %v3012, %v3008
    %v3373 = vpack.c.b16 %v3017, %v3013
    %v3374 = vpack.c.b16 %v3018, %v3014
    %v3375 = vpack.c.b16 %v3019, %v3015
    %v3376 = vpack.c.b16 %v3020, %v3016
    %v3377 = vpack.c.b16 %v3025, %v3021
    %v3378 = vpack.c.b16 %v3026, %v3022
    %v3379 = vpack.c.b16 %v3027, %v3023
    %v3380 = vpack.c.b16 %v3028, %v3024
    %v3381 = vpack.c.b16 %v3033, %v3029
    %v3382 = vpack.c.b16 %v3034, %v3030
    %v3383 = vpack.c.b16 %v3035, %v3031
    %v3384 = vpack.c.b16 %v3036, %v3032
    %v3385 = vpack.c.b16 %v3041, %v3037
    %v3386 = vpack.c.b16 %v3042, %v3038
    %v3387 = vpack.c.b16 %v3043, %v3039
    %v3388 = vpack.c.b16 %v3044, %v3040
    %v3389 = vpack.c.b16 %v3049, %v3045
    %v3390 = vpack.c.b16 %v3050, %v3046
    %v3391 = vpack.c.b16 %v3051, %v3047
    %v3392 = vpack.c.b16 %v3052, %v3048
    %v3393 = vpack.c.b16 %v3057, %v3053
    %v3394 = vpack.c.b16 %v3058, %v3054
    %v3395 = vpack.c.b16 %v3059, %v3055
    %v3396 = vpack.c.b16 %v3060, %v3056
    %v3397 = vpack.c.b16 %v3065, %v3061
    %v3398 = vpack.c.b16 %v3066, %v3062
    %v3399 = vpack.c.b16 %v3067, %v3063
    %v3400 = vpack.c.b16 %v3068, %v3064
    %v3401 = vpack.c.b16 %v3073, %v3069
    %v3402 = vpack.c.b16 %v3074, %v3070
    %v3403 = vpack.c.b16 %v3075, %v3071
    %v3404 = vpack.c.b16 %v3076, %v3072
    %v3405 = vpack.c.b16 %v3081, %v3077
    %v3406 = vpack.c.b16 %v3082, %v3078
    %v3407 = vpack.c.b16 %v3083, %v3079
    %v3408 = vpack.c.b16 %v3084, %v3080
    %v3409 = vpack.c.b16 %v3089, %v3085
    %v3410 = vpack.c.b16 %v3090, %v3086
    %v3411 = vpack.c.b16 %v3091, %v3087
    %v3412 = vpack.c.b16 %v3092, %v3088
    %v3413 = vpack.c.b16 %v3097, %v3093
    %v3414 = vpack.c.b16 %v3098, %v3094
    %v3415 = vpack.c.b16 %v3099, %v3095
    %v3416 = vpack.c.b16 %v3100, %v3096
    %v3417 = vpack.c.b16 %v3105, %v3101
    %v3418 = vpack.c.b16 %v3106, %v3102
    %v3419 = vpack.c.b16 %v3107, %v3103
    %v3420 = vpack.c.b16 %v3108, %v3104
    %v3421 = vpack.c.b16 %v3113, %v3109
    %v3422 = vpack.c.b16 %v3114, %v3110
    %v3423 = vpack.c.b16 %v3115, %v3111
    %v3424 = vpack.c.b16 %v3116, %v3112
    %v3425 = vpack.c.b16 %v3121, %v3117
    %v3426 = vpack.c.b16 %v3122, %v3118
    %v3427 = vpack.c.b16 %v3123, %v3119
    %v3428 = vpack.c.b16 %v3124, %v3120
    %v3429 = vpack.c.b16 %v3129, %v3125
    %v3430 = vpack.c.b16 %v3130, %v3126
    %v3431 = vpack.c.b16 %v3131, %v3127
    %v3432 = vpack.c.b16 %v3132, %v3128
    %v3433 = vpack.c.b16 %v3137, %v3133
    %v3434 = vpack.c.b16 %v3138, %v3134
    %v3435 = vpack.c.b16 %v3139, %v3135
    %v3436 = vpack.c.b16 %v3140, %v3136
    %v3437 = vpack.c.b16 %v3145, %v3141
    %v3438 = vpack.c.b16 %v3146, %v3142
    %v3439 = vpack.c.b16 %v3147, %v3143
    %v3440 = vpack.c.b16 %v3148, %v3144
    %v3441 = vpack.c.b16 %v3153, %v3149
    %v3442 = vpack.c.b16 %v3154, %v3150
    %v3443 = vpack.c.b16 %v3155, %v3151
    %v3444 = vpack.c.b16 %v3156, %v3152
    %v3445 = vpack.c.b16 %v3161, %v3157
    %v3446 = vpack.c.b16 %v3162, %v3158
    %v3447 = vpack.c.b16 %v3163, %v3159
    %v3448 = vpack.c.b16 %v3164, %v3160
    %v3449 = vpack.c.b16 %v3169, %v3165
    %v3450 = vpack.c.b16 %v3170, %v3166
    %v3451 = vpack.c.b16 %v3171, %v3167
    %v3452 = vpack.c.b16 %v3172, %v3168
    %v3453 = vpack.c.b16 %v3177, %v3173
    %v3454 = vpack.c.b16 %v3178, %v3174
    %v3455 = vpack.c.b16 %v3179, %v3175
    %v3456 = vpack.c.b16 %v3180, %v3176
    %v3457 = vpack.c.b16 %v3185, %v3181
    %v3458 = vpack.c.b16 %v3186, %v3182
    %v3459 = vpack.c.b16 %v3187, %v3183
    %v3460 = vpack.c.b16 %v3188, %v3184
    %v3461 = vpack.c.b16 %v3193, %v3189
    %v3462 = vpack.c.b16 %v3194, %v3190
    %v3463 = vpack.c.b16 %v3195, %v3191
    %v3464 = vpack.c.b16 %v3196, %v3192
    %v3465 = vpack.c.b16 %v3201, %v3197
    %v3466 = vpack.c.b16 %v3202, %v3198
    %v3467 = vpack.c.b16 %v3203, %v3199
    %v3468 = vpack.c.b16 %v3204, %v3200
    %v3469 = vpack.c.b16 %v3209, %v3205
    %v3470 = vpack.c.b16 %v3210, %v3206
    %v3471 = vpack.c.b16 %v3211, %v3207
    %v3472 = vpack.c.b16 %v3212, %v3208
    %v3473 = vpack.c.b16 %v3217, %v3213
    %v3474 = vpack.c.b16 %v3218, %v3214
    %v3475 = vpack.c.b16 %v3219, %v3215
    %v3476 = vpack.c.b16 %v3220, %v3216
    %3733 = vmatpush.bf16.msra.mxu0 %v3249
    %3734 = vmatpush.bf16.msra.mxu0 %v3245
    %3735 = vmatpush.bf16.msra.mxu0 %v3241
    %3736 = vmatpush.bf16.msra.mxu0 %v3237
    %3737 = vmatpush.bf16.msra.mxu0 %v3233
    %3738 = vmatpush.bf16.msra.mxu0 %v3229
    %3739 = vmatpush.bf16.msra.mxu0 %v3225
    %3740 = vmatpush.bf16.msra.mxu0 %v3221
    %3741 = vmatmul.bf16.gmra.mxu0 %v2179
    %v3742 = vpop.f32.mrf.mxu0
    %v3743 = vadd.f32 %v2445, %v3742
    %v3744 = vpop.f32.mrf.mxu0
    %v3745 = vadd.f32 %v2445, %v3744
    %3746 = vdwg.mxu0
    %3747 = vmatpush.bf16.msra.mxu0 %v3281
    %3748 = vmatpush.bf16.msra.mxu0 %v3277
    %3749 = vmatpush.bf16.msra.mxu0 %v3273
    %3750 = vmatpush.bf16.msra.mxu0 %v3269
    %3751 = vmatpush.bf16.msra.mxu0 %v3265
    %3752 = vmatpush.bf16.msra.mxu0 %v3261
    %3753 = vmatpush.bf16.msra.mxu0 %v3257
    %3754 = vmatpush.bf16.msra.mxu0 %v3253
    %3755 = vmatmul.bf16.gmra.mxu0 %v2180
    %v3756 = vpop.f32.mrf.mxu0
    %v3757 = vadd.f32 %v3743, %v3756
    %v3758 = vpop.f32.mrf.mxu0
    %v3759 = vadd.f32 %v3745, %v3758
    %3760 = vdwg.mxu0
    %3761 = vmatpush.bf16.msra.mxu0 %v3313
    %3762 = vmatpush.bf16.msra.mxu0 %v3309
    %3763 = vmatpush.bf16.msra.mxu0 %v3305
    %3764 = vmatpush.bf16.msra.mxu0 %v3301
    %3765 = vmatpush.bf16.msra.mxu0 %v3297
    %3766 = vmatpush.bf16.msra.mxu0 %v3293
    %3767 = vmatpush.bf16.msra.mxu0 %v3289
    %3768 = vmatpush.bf16.msra.mxu0 %v3285
    %3769 = vmatmul.bf16.gmra.mxu0 %v2181
    %v3770 = vpop.f32.mrf.mxu0
    %v3771 = vadd.f32 %v3757, %v3770
    %v3772 = vpop.f32.mrf.mxu0
    %v3773 = vadd.f32 %v3759, %v3772
    %3774 = vdwg.mxu0
    %3775 = vmatpush.bf16.msra.mxu0 %v3345
    %3776 = vmatpush.bf16.msra.mxu0 %v3341
    %3777 = vmatpush.bf16.msra.mxu0 %v3337
    %3778 = vmatpush.bf16.msra.mxu0 %v3333
    %3779 = vmatpush.bf16.msra.mxu0 %v3329
    %3780 = vmatpush.bf16.msra.mxu0 %v3325
    %3781 = vmatpush.bf16.msra.mxu0 %v3321
    %3782 = vmatpush.bf16.msra.mxu0 %v3317
    %3783 = vmatmul.bf16.gmra.mxu0 %v2182
    %v3784 = vpop.f32.mrf.mxu0
    %v3785 = vadd.f32 %v3771, %v3784
    %v3786 = vpop.f32.mrf.mxu0
    %v3787 = vadd.f32 %v3773, %v3786
    %3788 = vdwg.mxu0
    %3789 = vmatpush.bf16.msra.mxu0 %v3377
    %3790 = vmatpush.bf16.msra.mxu0 %v3373
    %3791 = vmatpush.bf16.msra.mxu0 %v3369
    %3792 = vmatpush.bf16.msra.mxu0 %v3365
    %3793 = vmatpush.bf16.msra.mxu0 %v3361
    %3794 = vmatpush.bf16.msra.mxu0 %v3357
    %3795 = vmatpush.bf16.msra.mxu0 %v3353
    %3796 = vmatpush.bf16.msra.mxu0 %v3349
    %3797 = vmatmul.bf16.gmra.mxu0 %v2183
    %v3798 = vpop.f32.mrf.mxu0
    %v3799 = vadd.f32 %v3785, %v3798
    %v3800 = vpop.f32.mrf.mxu0
    %v3801 = vadd.f32 %v3787, %v3800
    %3802 = vdwg.mxu0
    %3803 = vmatpush.bf16.msra.mxu0 %v3409
    %3804 = vmatpush.bf16.msra.mxu0 %v3405
    %3805 = vmatpush.bf16.msra.mxu0 %v3401
    %3806 = vmatpush.bf16.msra.mxu0 %v3397
    %3807 = vmatpush.bf16.msra.mxu0 %v3393
    %3808 = vmatpush.bf16.msra.mxu0 %v3389
    %3809 = vmatpush.bf16.msra.mxu0 %v3385
    %3810 = vmatpush.bf16.msra.mxu0 %v3381
    %3811 = vmatmul.bf16.gmra.mxu0 %v2184
    %v3812 = vpop.f32.mrf.mxu0
    %v3813 = vadd.f32 %v3799, %v3812
    %v3814 = vpop.f32.mrf.mxu0
    %v3815 = vadd.f32 %v3801, %v3814
    %3816 = vdwg.mxu0
    %3817 = vmatpush.bf16.msra.mxu0 %v3441
    %3818 = vmatpush.bf16.msra.mxu0 %v3437
    %3819 = vmatpush.bf16.msra.mxu0 %v3433
    %3820 = vmatpush.bf16.msra.mxu0 %v3429
    %3821 = vmatpush.bf16.msra.mxu0 %v3425
    %3822 = vmatpush.bf16.msra.mxu0 %v3421
    %3823 = vmatpush.bf16.msra.mxu0 %v3417
    %3824 = vmatpush.bf16.msra.mxu0 %v3413
    %3825 = vmatmul.bf16.gmra.mxu0 %v2185
    %v3826 = vpop.f32.mrf.mxu0
    %v3827 = vadd.f32 %v3813, %v3826
    %v3828 = vpop.f32.mrf.mxu0
    %v3829 = vadd.f32 %v3815, %v3828
    %3830 = vdwg.mxu0
    %3831 = vmatpush.bf16.msra.mxu0 %v3473
    %3832 = vmatpush.bf16.msra.mxu0 %v3469
    %3833 = vmatpush.bf16.msra.mxu0 %v3465
    %3834 = vmatpush.bf16.msra.mxu0 %v3461
    %3835 = vmatpush.bf16.msra.mxu0 %v3457
    %3836 = vmatpush.bf16.msra.mxu0 %v3453
    %3837 = vmatpush.bf16.msra.mxu0 %v3449
    %3838 = vmatpush.bf16.msra.mxu0 %v3445
    %3839 = vmatmul.bf16.gmra.mxu0 %v2186
    %v3840 = vpop.f32.mrf.mxu0
    %v3841 = vadd.f32 %v3827, %v3840
    %v3842 = vpop.f32.mrf.mxu0
    %v3843 = vadd.f32 %v3829, %v3842
    %3844 = vdwg.mxu0
    %3845 = vmatpush.bf16.msra.mxu0 %v3250
    %3846 = vmatpush.bf16.msra.mxu0 %v3246
    %3847 = vmatpush.bf16.msra.mxu0 %v3242
    %3848 = vmatpush.bf16.msra.mxu0 %v3238
    %3849 = vmatpush.bf16.msra.mxu0 %v3234
    %3850 = vmatpush.bf16.msra.mxu0 %v3230
    %3851 = vmatpush.bf16.msra.mxu0 %v3226
    %3852 = vmatpush.bf16.msra.mxu0 %v3222
    %3853 = vmatmul.bf16.gmra.mxu0 %v2179
    %v3854 = vpop.f32.mrf.mxu0
    %v3855 = vadd.f32 %v2446, %v3854
    %v3856 = vpop.f32.mrf.mxu0
    %v3857 = vadd.f32 %v2446, %v3856
    %3858 = vdwg.mxu0
    %3859 = vmatpush.bf16.msra.mxu0 %v3282
    %3860 = vmatpush.bf16.msra.mxu0 %v3278
    %3861 = vmatpush.bf16.msra.mxu0 %v3274
    %3862 = vmatpush.bf16.msra.mxu0 %v3270
    %3863 = vmatpush.bf16.msra.mxu0 %v3266
    %3864 = vmatpush.bf16.msra.mxu0 %v3262
    %3865 = vmatpush.bf16.msra.mxu0 %v3258
    %3866 = vmatpush.bf16.msra.mxu0 %v3254
    %3867 = vmatmul.bf16.gmra.mxu0 %v2180
    %v3868 = vpop.f32.mrf.mxu0
    %v3869 = vadd.f32 %v3855, %v3868
    %v3870 = vpop.f32.mrf.mxu0
    %v3871 = vadd.f32 %v3857, %v3870
    %3872 = vdwg.mxu0
    %3873 = vmatpush.bf16.msra.mxu0 %v3314
    %3874 = vmatpush.bf16.msra.mxu0 %v3310
    %3875 = vmatpush.bf16.msra.mxu0 %v3306
    %3876 = vmatpush.bf16.msra.mxu0 %v3302
    %3877 = vmatpush.bf16.msra.mxu0 %v3298
    %3878 = vmatpush.bf16.msra.mxu0 %v3294
    %3879 = vmatpush.bf16.msra.mxu0 %v3290
    %3880 = vmatpush.bf16.msra.mxu0 %v3286
    %3881 = vmatmul.bf16.gmra.mxu0 %v2181
    %v3882 = vpop.f32.mrf.mxu0
    %v3883 = vadd.f32 %v3869, %v3882
    %v3884 = vpop.f32.mrf.mxu0
    %v3885 = vadd.f32 %v3871, %v3884
    %3886 = vdwg.mxu0
    %3887 = vmatpush.bf16.msra.mxu0 %v3346
    %3888 = vmatpush.bf16.msra.mxu0 %v3342
    %3889 = vmatpush.bf16.msra.mxu0 %v3338
    %3890 = vmatpush.bf16.msra.mxu0 %v3334
    %3891 = vmatpush.bf16.msra.mxu0 %v3330
    %3892 = vmatpush.bf16.msra.mxu0 %v3326
    %3893 = vmatpush.bf16.msra.mxu0 %v3322
    %3894 = vmatpush.bf16.msra.mxu0 %v3318
    %3895 = vmatmul.bf16.gmra.mxu0 %v2182
    %v3896 = vpop.f32.mrf.mxu0
    %v3897 = vadd.f32 %v3883, %v3896
    %v3898 = vpop.f32.mrf.mxu0
    %v3899 = vadd.f32 %v3885, %v3898
    %3900 = vdwg.mxu0
    %3901 = vmatpush.bf16.msra.mxu0 %v3378
    %3902 = vmatpush.bf16.msra.mxu0 %v3374
    %3903 = vmatpush.bf16.msra.mxu0 %v3370
    %3904 = vmatpush.bf16.msra.mxu0 %v3366
    %3905 = vmatpush.bf16.msra.mxu0 %v3362
    %3906 = vmatpush.bf16.msra.mxu0 %v3358
    %3907 = vmatpush.bf16.msra.mxu0 %v3354
    %3908 = vmatpush.bf16.msra.mxu0 %v3350
    %3909 = vmatmul.bf16.gmra.mxu0 %v2183
    %v3910 = vpop.f32.mrf.mxu0
    %v3911 = vadd.f32 %v3897, %v3910
    %v3912 = vpop.f32.mrf.mxu0
    %v3913 = vadd.f32 %v3899, %v3912
    %3914 = vdwg.mxu0
    %3915 = vmatpush.bf16.msra.mxu0 %v3410
    %3916 = vmatpush.bf16.msra.mxu0 %v3406
    %3917 = vmatpush.bf16.msra.mxu0 %v3402
    %3918 = vmatpush.bf16.msra.mxu0 %v3398
    %3919 = vmatpush.bf16.msra.mxu0 %v3394
    %3920 = vmatpush.bf16.msra.mxu0 %v3390
    %3921 = vmatpush.bf16.msra.mxu0 %v3386
    %3922 = vmatpush.bf16.msra.mxu0 %v3382
    %3923 = vmatmul.bf16.gmra.mxu0 %v2184
    %v3924 = vpop.f32.mrf.mxu0
    %v3925 = vadd.f32 %v3911, %v3924
    %v3926 = vpop.f32.mrf.mxu0
    %v3927 = vadd.f32 %v3913, %v3926
    %3928 = vdwg.mxu0
    %3929 = vmatpush.bf16.msra.mxu0 %v3442
    %3930 = vmatpush.bf16.msra.mxu0 %v3438
    %3931 = vmatpush.bf16.msra.mxu0 %v3434
    %3932 = vmatpush.bf16.msra.mxu0 %v3430
    %3933 = vmatpush.bf16.msra.mxu0 %v3426
    %3934 = vmatpush.bf16.msra.mxu0 %v3422
    %3935 = vmatpush.bf16.msra.mxu0 %v3418
    %3936 = vmatpush.bf16.msra.mxu0 %v3414
    %3937 = vmatmul.bf16.gmra.mxu0 %v2185
    %v3938 = vpop.f32.mrf.mxu0
    %v3939 = vadd.f32 %v3925, %v3938
    %v3940 = vpop.f32.mrf.mxu0
    %v3941 = vadd.f32 %v3927, %v3940
    %3942 = vdwg.mxu0
    %3943 = vmatpush.bf16.msra.mxu0 %v3474
    %3944 = vmatpush.bf16.msra.mxu0 %v3470
    %3945 = vmatpush.bf16.msra.mxu0 %v3466
    %3946 = vmatpush.bf16.msra.mxu0 %v3462
    %3947 = vmatpush.bf16.msra.mxu0 %v3458
    %3948 = vmatpush.bf16.msra.mxu0 %v3454
    %3949 = vmatpush.bf16.msra.mxu0 %v3450
    %3950 = vmatpush.bf16.msra.mxu0 %v3446
    %3951 = vmatmul.bf16.gmra.mxu0 %v2186
    %v3952 = vpop.f32.mrf.mxu0
    %v3953 = vadd.f32 %v3939, %v3952
    %v3954 = vpop.f32.mrf.mxu0
    %v3955 = vadd.f32 %v3941, %v3954
    %3956 = vdwg.mxu0
    %3957 = vmatpush.bf16.msra.mxu0 %v3251
    %3958 = vmatpush.bf16.msra.mxu0 %v3247
    %3959 = vmatpush.bf16.msra.mxu0 %v3243
    %3960 = vmatpush.bf16.msra.mxu0 %v3239
    %3961 = vmatpush.bf16.msra.mxu0 %v3235
    %3962 = vmatpush.bf16.msra.mxu0 %v3231
    %3963 = vmatpush.bf16.msra.mxu0 %v3227
    %3964 = vmatpush.bf16.msra.mxu0 %v3223
    %3965 = vmatmul.bf16.gmra.mxu0 %v2179
    %v3966 = vpop.f32.mrf.mxu0
    %v3967 = vadd.f32 %v2447, %v3966
    %v3968 = vpop.f32.mrf.mxu0
    %v3969 = vadd.f32 %v2447, %v3968
    %3970 = vdwg.mxu0
    %3971 = vmatpush.bf16.msra.mxu0 %v3283
    %3972 = vmatpush.bf16.msra.mxu0 %v3279
    %3973 = vmatpush.bf16.msra.mxu0 %v3275
    %3974 = vmatpush.bf16.msra.mxu0 %v3271
    %3975 = vmatpush.bf16.msra.mxu0 %v3267
    %3976 = vmatpush.bf16.msra.mxu0 %v3263
    %3977 = vmatpush.bf16.msra.mxu0 %v3259
    %3978 = vmatpush.bf16.msra.mxu0 %v3255
    %3979 = vmatmul.bf16.gmra.mxu0 %v2180
    %v3980 = vpop.f32.mrf.mxu0
    %v3981 = vadd.f32 %v3967, %v3980
    %v3982 = vpop.f32.mrf.mxu0
    %v3983 = vadd.f32 %v3969, %v3982
    %3984 = vdwg.mxu0
    %3985 = vmatpush.bf16.msra.mxu0 %v3315
    %3986 = vmatpush.bf16.msra.mxu0 %v3311
    %3987 = vmatpush.bf16.msra.mxu0 %v3307
    %3988 = vmatpush.bf16.msra.mxu0 %v3303
    %3989 = vmatpush.bf16.msra.mxu0 %v3299
    %3990 = vmatpush.bf16.msra.mxu0 %v3295
    %3991 = vmatpush.bf16.msra.mxu0 %v3291
    %3992 = vmatpush.bf16.msra.mxu0 %v3287
    %3993 = vmatmul.bf16.gmra.mxu0 %v2181
    %v3994 = vpop.f32.mrf.mxu0
    %v3995 = vadd.f32 %v3981, %v3994
    %v3996 = vpop.f32.mrf.mxu0
    %v3997 = vadd.f32 %v3983, %v3996
    %3998 = vdwg.mxu0
    %3999 = vmatpush.bf16.msra.mxu0 %v3347
    %4000 = vmatpush.bf16.msra.mxu0 %v3343
    %4001 = vmatpush.bf16.msra.mxu0 %v3339
    %4002 = vmatpush.bf16.msra.mxu0 %v3335
    %4003 = vmatpush.bf16.msra.mxu0 %v3331
    %4004 = vmatpush.bf16.msra.mxu0 %v3327
    %4005 = vmatpush.bf16.msra.mxu0 %v3323
    %4006 = vmatpush.bf16.msra.mxu0 %v3319
    %4007 = vmatmul.bf16.gmra.mxu0 %v2182
    %v4008 = vpop.f32.mrf.mxu0
    %v4009 = vadd.f32 %v3995, %v4008
    %v4010 = vpop.f32.mrf.mxu0
    %v4011 = vadd.f32 %v3997, %v4010
    %4012 = vdwg.mxu0
    %4013 = vmatpush.bf16.msra.mxu0 %v3379
    %4014 = vmatpush.bf16.msra.mxu0 %v3375
    %4015 = vmatpush.bf16.msra.mxu0 %v3371
    %4016 = vmatpush.bf16.msra.mxu0 %v3367
    %4017 = vmatpush.bf16.msra.mxu0 %v3363
    %4018 = vmatpush.bf16.msra.mxu0 %v3359
    %4019 = vmatpush.bf16.msra.mxu0 %v3355
    %4020 = vmatpush.bf16.msra.mxu0 %v3351
    %4021 = vmatmul.bf16.gmra.mxu0 %v2183
    %v4022 = vpop.f32.mrf.mxu0
    %v4023 = vadd.f32 %v4009, %v4022
    %v4024 = vpop.f32.mrf.mxu0
    %v4025 = vadd.f32 %v4011, %v4024
    %4026 = vdwg.mxu0
    %4027 = vmatpush.bf16.msra.mxu0 %v3411
    %4028 = vmatpush.bf16.msra.mxu0 %v3407
    %4029 = vmatpush.bf16.msra.mxu0 %v3403
    %4030 = vmatpush.bf16.msra.mxu0 %v3399
    %4031 = vmatpush.bf16.msra.mxu0 %v3395
    %4032 = vmatpush.bf16.msra.mxu0 %v3391
    %4033 = vmatpush.bf16.msra.mxu0 %v3387
    %4034 = vmatpush.bf16.msra.mxu0 %v3383
    %4035 = vmatmul.bf16.gmra.mxu0 %v2184
    %v4036 = vpop.f32.mrf.mxu0
    %v4037 = vadd.f32 %v4023, %v4036
    %v4038 = vpop.f32.mrf.mxu0
    %v4039 = vadd.f32 %v4025, %v4038
    %4040 = vdwg.mxu0
    %4041 = vmatpush.bf16.msra.mxu0 %v3443
    %4042 = vmatpush.bf16.msra.mxu0 %v3439
    %4043 = vmatpush.bf16.msra.mxu0 %v3435
    %4044 = vmatpush.bf16.msra.mxu0 %v3431
    %4045 = vmatpush.bf16.msra.mxu0 %v3427
    %4046 = vmatpush.bf16.msra.mxu0 %v3423
    %4047 = vmatpush.bf16.msra.mxu0 %v3419
    %4048 = vmatpush.bf16.msra.mxu0 %v3415
    %4049 = vmatmul.bf16.gmra.mxu0 %v2185
    %v4050 = vpop.f32.mrf.mxu0
    %v4051 = vadd.f32 %v4037, %v4050
    %v4052 = vpop.f32.mrf.mxu0
    %v4053 = vadd.f32 %v4039, %v4052
    %4054 = vdwg.mxu0
    %4055 = vmatpush.bf16.msra.mxu0 %v3475
    %4056 = vmatpush.bf16.msra.mxu0 %v3471
    %4057 = vmatpush.bf16.msra.mxu0 %v3467
    %4058 = vmatpush.bf16.msra.mxu0 %v3463
    %4059 = vmatpush.bf16.msra.mxu0 %v3459
    %4060 = vmatpush.bf16.msra.mxu0 %v3455
    %4061 = vmatpush.bf16.msra.mxu0 %v3451
    %4062 = vmatpush.bf16.msra.mxu0 %v3447
    %4063 = vmatmul.bf16.gmra.mxu0 %v2186
    %v4064 = vpop.f32.mrf.mxu0
    %v4065 = vadd.f32 %v4051, %v4064
    %v4066 = vpop.f32.mrf.mxu0
    %v4067 = vadd.f32 %v4053, %v4066
    %4068 = vdwg.mxu0
    %4069 = vmatpush.bf16.msra.mxu0 %v3252
    %4070 = vmatpush.bf16.msra.mxu0 %v3248
    %4071 = vmatpush.bf16.msra.mxu0 %v3244
    %4072 = vmatpush.bf16.msra.mxu0 %v3240
    %4073 = vmatpush.bf16.msra.mxu0 %v3236
    %4074 = vmatpush.bf16.msra.mxu0 %v3232
    %4075 = vmatpush.bf16.msra.mxu0 %v3228
    %4076 = vmatpush.bf16.msra.mxu0 %v3224
    %4077 = vmatmul.bf16.gmra.mxu0 %v2179
    %v4078 = vpop.f32.mrf.mxu0
    %v4079 = vadd.f32 %v2448, %v4078
    %v4080 = vpop.f32.mrf.mxu0
    %v4081 = vadd.f32 %v2448, %v4080
    %4082 = vdwg.mxu0
    %4083 = vmatpush.bf16.msra.mxu0 %v3284
    %4084 = vmatpush.bf16.msra.mxu0 %v3280
    %4085 = vmatpush.bf16.msra.mxu0 %v3276
    %4086 = vmatpush.bf16.msra.mxu0 %v3272
    %4087 = vmatpush.bf16.msra.mxu0 %v3268
    %4088 = vmatpush.bf16.msra.mxu0 %v3264
    %4089 = vmatpush.bf16.msra.mxu0 %v3260
    %4090 = vmatpush.bf16.msra.mxu0 %v3256
    %4091 = vmatmul.bf16.gmra.mxu0 %v2180
    %v4092 = vpop.f32.mrf.mxu0
    %v4093 = vadd.f32 %v4079, %v4092
    %v4094 = vpop.f32.mrf.mxu0
    %v4095 = vadd.f32 %v4081, %v4094
    %4096 = vdwg.mxu0
    %4097 = vmatpush.bf16.msra.mxu0 %v3316
    %4098 = vmatpush.bf16.msra.mxu0 %v3312
    %4099 = vmatpush.bf16.msra.mxu0 %v3308
    %4100 = vmatpush.bf16.msra.mxu0 %v3304
    %4101 = vmatpush.bf16.msra.mxu0 %v3300
    %4102 = vmatpush.bf16.msra.mxu0 %v3296
    %4103 = vmatpush.bf16.msra.mxu0 %v3292
    %4104 = vmatpush.bf16.msra.mxu0 %v3288
    %4105 = vmatmul.bf16.gmra.mxu0 %v2181
    %v4106 = vpop.f32.mrf.mxu0
    %v4107 = vadd.f32 %v4093, %v4106
    %v4108 = vpop.f32.mrf.mxu0
    %v4109 = vadd.f32 %v4095, %v4108
    %4110 = vdwg.mxu0
    %4111 = vmatpush.bf16.msra.mxu0 %v3348
    %4112 = vmatpush.bf16.msra.mxu0 %v3344
    %4113 = vmatpush.bf16.msra.mxu0 %v3340
    %4114 = vmatpush.bf16.msra.mxu0 %v3336
    %4115 = vmatpush.bf16.msra.mxu0 %v3332
    %4116 = vmatpush.bf16.msra.mxu0 %v3328
    %4117 = vmatpush.bf16.msra.mxu0 %v3324
    %4118 = vmatpush.bf16.msra.mxu0 %v3320
    %4119 = vmatmul.bf16.gmra.mxu0 %v2182
    %v4120 = vpop.f32.mrf.mxu0
    %v4121 = vadd.f32 %v4107, %v4120
    %v4122 = vpop.f32.mrf.mxu0
    %v4123 = vadd.f32 %v4109, %v4122
    %4124 = vdwg.mxu0
    %4125 = vmatpush.bf16.msra.mxu0 %v3380
    %4126 = vmatpush.bf16.msra.mxu0 %v3376
    %4127 = vmatpush.bf16.msra.mxu0 %v3372
    %4128 = vmatpush.bf16.msra.mxu0 %v3368
    %4129 = vmatpush.bf16.msra.mxu0 %v3364
    %4130 = vmatpush.bf16.msra.mxu0 %v3360
    %4131 = vmatpush.bf16.msra.mxu0 %v3356
    %4132 = vmatpush.bf16.msra.mxu0 %v3352
    %4133 = vmatmul.bf16.gmra.mxu0 %v2183
    %v4134 = vpop.f32.mrf.mxu0
    %v4135 = vadd.f32 %v4121, %v4134
    %v4136 = vpop.f32.mrf.mxu0
    %v4137 = vadd.f32 %v4123, %v4136
    %4138 = vdwg.mxu0
    %4139 = vmatpush.bf16.msra.mxu0 %v3412
    %4140 = vmatpush.bf16.msra.mxu0 %v3408
    %4141 = vmatpush.bf16.msra.mxu0 %v3404
    %4142 = vmatpush.bf16.msra.mxu0 %v3400
    %4143 = vmatpush.bf16.msra.mxu0 %v3396
    %4144 = vmatpush.bf16.msra.mxu0 %v3392
    %4145 = vmatpush.bf16.msra.mxu0 %v3388
    %4146 = vmatpush.bf16.msra.mxu0 %v3384
    %4147 = vmatmul.bf16.gmra.mxu0 %v2184
    %v4148 = vpop.f32.mrf.mxu0
    %v4149 = vadd.f32 %v4135, %v4148
    %v4150 = vpop.f32.mrf.mxu0
    %v4151 = vadd.f32 %v4137, %v4150
    %4152 = vdwg.mxu0
    %4153 = vmatpush.bf16.msra.mxu0 %v3444
    %4154 = vmatpush.bf16.msra.mxu0 %v3440
    %4155 = vmatpush.bf16.msra.mxu0 %v3436
    %4156 = vmatpush.bf16.msra.mxu0 %v3432
    %4157 = vmatpush.bf16.msra.mxu0 %v3428
    %4158 = vmatpush.bf16.msra.mxu0 %v3424
    %4159 = vmatpush.bf16.msra.mxu0 %v3420
    %4160 = vmatpush.bf16.msra.mxu0 %v3416
    %4161 = vmatmul.bf16.gmra.mxu0 %v2185
    %v4162 = vpop.f32.mrf.mxu0
    %v4163 = vadd.f32 %v4149, %v4162
    %v4164 = vpop.f32.mrf.mxu0
    %v4165 = vadd.f32 %v4151, %v4164
    %4166 = vdwg.mxu0
    %4167 = vmatpush.bf16.msra.mxu0 %v3476
    %4168 = vmatpush.bf16.msra.mxu0 %v3472
    %4169 = vmatpush.bf16.msra.mxu0 %v3468
    %4170 = vmatpush.bf16.msra.mxu0 %v3464
    %4171 = vmatpush.bf16.msra.mxu0 %v3460
    %4172 = vmatpush.bf16.msra.mxu0 %v3456
    %4173 = vmatpush.bf16.msra.mxu0 %v3452
    %4174 = vmatpush.bf16.msra.mxu0 %v3448
    %4175 = vmatmul.bf16.gmra.mxu0 %v2186
    %v4176 = vpop.f32.mrf.mxu0
    %v4177 = vadd.f32 %v4163, %v4176
    %v4178 = vpop.f32.mrf.mxu0
    %v4179 = vadd.f32 %v4165, %v4178
    %4180 = vdwg.mxu0
    %vm4181 = vcmp.gt.f32.partialorder %v3841, 0.0
    %vm4182 = vcmp.gt.f32.partialorder %v3953, 0.0
    %vm4183 = vcmp.gt.f32.partialorder %v4065, 0.0
    %vm4184 = vcmp.gt.f32.partialorder %v4177, 0.0
    %vm4185 = vcmp.gt.f32.partialorder %v3843, 0.0
    %vm4186 = vcmp.gt.f32.partialorder %v3955, 0.0
    %vm4187 = vcmp.gt.f32.partialorder %v4067, 0.0
    %vm4188 = vcmp.gt.f32.partialorder %v4179, 0.0
    %v4189 = vmul.f32 %v3841, 0.2
    %v4190 = vmul.f32 %v3953, 0.2
    %v4191 = vmul.f32 %v4065, 0.2
    %v4192 = vmul.f32 %v4177, 0.2
    %v4193 = vmul.f32 %v3843, 0.2
    %v4194 = vmul.f32 %v3955, 0.2
    %v4195 = vmul.f32 %v4067, 0.2
    %v4196 = vmul.f32 %v4179, 0.2
    %v4197 = vsel %vm4181, %v3841, %v4189
    %v4198 = vsel %vm4182, %v3953, %v4190
    %v4199 = vsel %vm4183, %v4065, %v4191
    %v4200 = vsel %vm4184, %v4177, %v4192
    %v4201 = vsel %vm4185, %v3843, %v4193
    %v4202 = vsel %vm4186, %v3955, %v4194
    %v4203 = vsel %vm4187, %v4067, %v4195
    %v4204 = vsel %vm4188, %v4179, %v4196
    %v4205 = vpack.c.bf16 %v4201, %v4197
    %v4206 = vpack.c.bf16 %v4202, %v4198
    %v4207 = vpack.c.bf16 %v4203, %v4199
    %v4208 = vpack.c.bf16 %v4204, %v4200
    %v4209 = vld [vmem:[#allocation11] sm:$0xff]
    %v4210 = vld [vmem:[#allocation11 + $0x8] sm:$0xff]
    %v4211 = vld [vmem:[#allocation11 + $0x10] sm:$0xff]
    %v4212 = vld [vmem:[#allocation11 + $0x18] sm:$0xff]
    %v4213 = vld [vmem:[#allocation11 + $0x20] sm:$0xff]
    %v4214 = vld [vmem:[#allocation11 + $0x28] sm:$0xff]
    %v4215 = vld [vmem:[#allocation11 + $0x30] sm:$0xff]
    %v4216 = vld [vmem:[#allocation11 + $0x38] sm:$0xff]
    %v4217 = vld [vmem:[#allocation11 + $0x40] sm:$0xff]
    %v4218 = vld [vmem:[#allocation11 + $0x48] sm:$0xff]
    %v4219 = vld [vmem:[#allocation11 + $0x50] sm:$0xff]
    %v4220 = vld [vmem:[#allocation11 + $0x58] sm:$0xff]
    %v4221 = vld [vmem:[#allocation11 + $0x60] sm:$0xff]
    %v4222 = vld [vmem:[#allocation11 + $0x68] sm:$0xff]
    %v4223 = vld [vmem:[#allocation11 + $0x70] sm:$0xff]
    %v4224 = vld [vmem:[#allocation11 + $0x78] sm:$0xff]
    %v4225 = vld [vmem:[#allocation11 + $0x80] sm:$0xff]
    %v4226 = vld [vmem:[#allocation11 + $0x88] sm:$0xff]
    %v4227 = vld [vmem:[#allocation11 + $0x90] sm:$0xff]
    %v4228 = vld [vmem:[#allocation11 + $0x98] sm:$0xff]
    %v4229 = vld [vmem:[#allocation11 + $0xa0] sm:$0xff]
    %v4230 = vld [vmem:[#allocation11 + $0xa8] sm:$0xff]
    %v4231 = vld [vmem:[#allocation11 + $0xb0] sm:$0xff]
    %v4232 = vld [vmem:[#allocation11 + $0xb8] sm:$0xff]
    %v4233 = vld [vmem:[#allocation11 + $0xc0] sm:$0xff]
    %v4234 = vld [vmem:[#allocation11 + $0xc8] sm:$0xff]
    %v4235 = vld [vmem:[#allocation11 + $0xd0] sm:$0xff]
    %v4236 = vld [vmem:[#allocation11 + $0xd8] sm:$0xff]
    %v4237 = vld [vmem:[#allocation11 + $0xe0] sm:$0xff]
    %v4238 = vld [vmem:[#allocation11 + $0xe8] sm:$0xff]
    %v4239 = vld [vmem:[#allocation11 + $0xf0] sm:$0xff]
    %v4240 = vld [vmem:[#allocation11 + $0xf8] sm:$0xff]
    %v4241 = vld [vmem:[#allocation11 + $0x100] sm:$0xff]
    %v4242 = vld [vmem:[#allocation11 + $0x108] sm:$0xff]
    %v4243 = vld [vmem:[#allocation11 + $0x110] sm:$0xff]
    %v4244 = vld [vmem:[#allocation11 + $0x118] sm:$0xff]
    %v4245 = vld [vmem:[#allocation11 + $0x120] sm:$0xff]
    %v4246 = vld [vmem:[#allocation11 + $0x128] sm:$0xff]
    %v4247 = vld [vmem:[#allocation11 + $0x130] sm:$0xff]
    %v4248 = vld [vmem:[#allocation11 + $0x138] sm:$0xff]
    %v4249 = vld [vmem:[#allocation11 + $0x140] sm:$0xff]
    %v4250 = vld [vmem:[#allocation11 + $0x148] sm:$0xff]
    %v4251 = vld [vmem:[#allocation11 + $0x150] sm:$0xff]
    %v4252 = vld [vmem:[#allocation11 + $0x158] sm:$0xff]
    %v4253 = vld [vmem:[#allocation11 + $0x160] sm:$0xff]
    %v4254 = vld [vmem:[#allocation11 + $0x168] sm:$0xff]
    %v4255 = vld [vmem:[#allocation11 + $0x170] sm:$0xff]
    %v4256 = vld [vmem:[#allocation11 + $0x178] sm:$0xff]
    %v4257 = vld [vmem:[#allocation11 + $0x180] sm:$0xff]
    %v4258 = vld [vmem:[#allocation11 + $0x188] sm:$0xff]
    %v4259 = vld [vmem:[#allocation11 + $0x190] sm:$0xff]
    %v4260 = vld [vmem:[#allocation11 + $0x198] sm:$0xff]
    %v4261 = vld [vmem:[#allocation11 + $0x1a0] sm:$0xff]
    %v4262 = vld [vmem:[#allocation11 + $0x1a8] sm:$0xff]
    %v4263 = vld [vmem:[#allocation11 + $0x1b0] sm:$0xff]
    %v4264 = vld [vmem:[#allocation11 + $0x1b8] sm:$0xff]
    %v4265 = vld [vmem:[#allocation11 + $0x1c0] sm:$0xff]
    %v4266 = vld [vmem:[#allocation11 + $0x1c8] sm:$0xff]
    %v4267 = vld [vmem:[#allocation11 + $0x1d0] sm:$0xff]
    %v4268 = vld [vmem:[#allocation11 + $0x1d8] sm:$0xff]
    %v4269 = vld [vmem:[#allocation11 + $0x1e0] sm:$0xff]
    %v4270 = vld [vmem:[#allocation11 + $0x1e8] sm:$0xff]
    %v4271 = vld [vmem:[#allocation11 + $0x1f0] sm:$0xff]
    %v4272 = vld [vmem:[#allocation11 + $0x1f8] sm:$0xff]
    %v4273 = vld [vmem:[%s6] sm:$0x3]
    %v4275 = vperm.slane %v4273, 0
    %v4276 = vperm.slane %v4273, 1
    %v4343 = vunpack.c.l.b16 %v4209
    %v4344 = vunpack.c.h.b16 %v4209
    %v4345 = vunpack.c.l.b16 %v4210
    %v4346 = vunpack.c.h.b16 %v4210
    %v4347 = vunpack.c.l.b16 %v4211
    %v4348 = vunpack.c.h.b16 %v4211
    %v4349 = vunpack.c.l.b16 %v4212
    %v4350 = vunpack.c.h.b16 %v4212
    %v4351 = vunpack.c.l.b16 %v4213
    %v4352 = vunpack.c.h.b16 %v4213
    %v4353 = vunpack.c.l.b16 %v4214
    %v4354 = vunpack.c.h.b16 %v4214
    %v4355 = vunpack.c.l.b16 %v4215
    %v4356 = vunpack.c.h.b16 %v4215
    %v4357 = vunpack.c.l.b16 %v4216
    %v4358 = vunpack.c.h.b16 %v4216
    %v4359 = vunpack.c.l.b16 %v4217
    %v4360 = vunpack.c.h.b16 %v4217
    %v4361 = vunpack.c.l.b16 %v4218
    %v4362 = vunpack.c.h.b16 %v4218
    %v4363 = vunpack.c.l.b16 %v4219
    %v4364 = vunpack.c.h.b16 %v4219
    %v4365 = vunpack.c.l.b16 %v4220
    %v4366 = vunpack.c.h.b16 %v4220
    %v4367 = vunpack.c.l.b16 %v4221
    %v4368 = vunpack.c.h.b16 %v4221
    %v4369 = vunpack.c.l.b16 %v4222
    %v4370 = vunpack.c.h.b16 %v4222
    %v4371 = vunpack.c.l.b16 %v4223
    %v4372 = vunpack.c.h.b16 %v4223
    %v4373 = vunpack.c.l.b16 %v4224
    %v4374 = vunpack.c.h.b16 %v4224
    %v4375 = vunpack.c.l.b16 %v4225
    %v4376 = vunpack.c.h.b16 %v4225
    %v4377 = vunpack.c.l.b16 %v4226
    %v4378 = vunpack.c.h.b16 %v4226
    %v4379 = vunpack.c.l.b16 %v4227
    %v4380 = vunpack.c.h.b16 %v4227
    %v4381 = vunpack.c.l.b16 %v4228
    %v4382 = vunpack.c.h.b16 %v4228
    %v4383 = vunpack.c.l.b16 %v4229
    %v4384 = vunpack.c.h.b16 %v4229
    %v4385 = vunpack.c.l.b16 %v4230
    %v4386 = vunpack.c.h.b16 %v4230
    %v4387 = vunpack.c.l.b16 %v4231
    %v4388 = vunpack.c.h.b16 %v4231
    %v4389 = vunpack.c.l.b16 %v4232
    %v4390 = vunpack.c.h.b16 %v4232
    %v4391 = vunpack.c.l.b16 %v4233
    %v4392 = vunpack.c.h.b16 %v4233
    %v4393 = vunpack.c.l.b16 %v4234
    %v4394 = vunpack.c.h.b16 %v4234
    %v4395 = vunpack.c.l.b16 %v4235
    %v4396 = vunpack.c.h.b16 %v4235
    %v4397 = vunpack.c.l.b16 %v4236
    %v4398 = vunpack.c.h.b16 %v4236
    %v4399 = vunpack.c.l.b16 %v4237
    %v4400 = vunpack.c.h.b16 %v4237
    %v4401 = vunpack.c.l.b16 %v4238
    %v4402 = vunpack.c.h.b16 %v4238
    %v4403 = vunpack.c.l.b16 %v4239
    %v4404 = vunpack.c.h.b16 %v4239
    %v4405 = vunpack.c.l.b16 %v4240
    %v4406 = vunpack.c.h.b16 %v4240
    %v4407 = vunpack.c.l.b16 %v4241
    %v4408 = vunpack.c.h.b16 %v4241
    %v4409 = vunpack.c.l.b16 %v4242
    %v4410 = vunpack.c.h.b16 %v4242
    %v4411 = vunpack.c.l.b16 %v4243
    %v4412 = vunpack.c.h.b16 %v4243
    %v4413 = vunpack.c.l.b16 %v4244
    %v4414 = vunpack.c.h.b16 %v4244
    %v4415 = vunpack.c.l.b16 %v4245
    %v4416 = vunpack.c.h.b16 %v4245
    %v4417 = vunpack.c.l.b16 %v4246
    %v4418 = vunpack.c.h.b16 %v4246
    %v4419 = vunpack.c.l.b16 %v4247
    %v4420 = vunpack.c.h.b16 %v4247
    %v4421 = vunpack.c.l.b16 %v4248
    %v4422 = vunpack.c.h.b16 %v4248
    %v4423 = vunpack.c.l.b16 %v4249
    %v4424 = vunpack.c.h.b16 %v4249
    %v4425 = vunpack.c.l.b16 %v4250
    %v4426 = vunpack.c.h.b16 %v4250
    %v4427 = vunpack.c.l.b16 %v4251
    %v4428 = vunpack.c.h.b16 %v4251
    %v4429 = vunpack.c.l.b16 %v4252
    %v4430 = vunpack.c.h.b16 %v4252
    %v4431 = vunpack.c.l.b16 %v4253
    %v4432 = vunpack.c.h.b16 %v4253
    %v4433 = vunpack.c.l.b16 %v4254
    %v4434 = vunpack.c.h.b16 %v4254
    %v4435 = vunpack.c.l.b16 %v4255
    %v4436 = vunpack.c.h.b16 %v4255
    %v4437 = vunpack.c.l.b16 %v4256
    %v4438 = vunpack.c.h.b16 %v4256
    %v4439 = vunpack.c.l.b16 %v4257
    %v4440 = vunpack.c.h.b16 %v4257
    %v4441 = vunpack.c.l.b16 %v4258
    %v4442 = vunpack.c.h.b16 %v4258
    %v4443 = vunpack.c.l.b16 %v4259
    %v4444 = vunpack.c.h.b16 %v4259
    %v4445 = vunpack.c.l.b16 %v4260
    %v4446 = vunpack.c.h.b16 %v4260
    %v4447 = vunpack.c.l.b16 %v4261
    %v4448 = vunpack.c.h.b16 %v4261
    %v4449 = vunpack.c.l.b16 %v4262
    %v4450 = vunpack.c.h.b16 %v4262
    %v4451 = vunpack.c.l.b16 %v4263
    %v4452 = vunpack.c.h.b16 %v4263
    %v4453 = vunpack.c.l.b16 %v4264
    %v4454 = vunpack.c.h.b16 %v4264
    %v4455 = vunpack.c.l.b16 %v4265
    %v4456 = vunpack.c.h.b16 %v4265
    %v4457 = vunpack.c.l.b16 %v4266
    %v4458 = vunpack.c.h.b16 %v4266
    %v4459 = vunpack.c.l.b16 %v4267
    %v4460 = vunpack.c.h.b16 %v4267
    %v4461 = vunpack.c.l.b16 %v4268
    %v4462 = vunpack.c.h.b16 %v4268
    %v4463 = vunpack.c.l.b16 %v4269
    %v4464 = vunpack.c.h.b16 %v4269
    %v4465 = vunpack.c.l.b16 %v4270
    %v4466 = vunpack.c.h.b16 %v4270
    %v4467 = vunpack.c.l.b16 %v4271
    %v4468 = vunpack.c.h.b16 %v4271
    %v4469 = vunpack.c.l.b16 %v4272
    %v4470 = vunpack.c.h.b16 %v4272
    %v4471 = vpack.c.b16 %v4345, %v4343
    %v4472 = vpack.c.b16 %v4346, %v4344
    %v4473 = vpack.c.b16 %v4349, %v4347
    %v4474 = vpack.c.b16 %v4350, %v4348
    %v4475 = vpack.c.b16 %v4353, %v4351
    %v4476 = vpack.c.b16 %v4354, %v4352
    %v4477 = vpack.c.b16 %v4357, %v4355
    %v4478 = vpack.c.b16 %v4358, %v4356
    %v4479 = vpack.c.b16 %v4361, %v4359
    %v4480 = vpack.c.b16 %v4362, %v4360
    %v4481 = vpack.c.b16 %v4365, %v4363
    %v4482 = vpack.c.b16 %v4366, %v4364
    %v4483 = vpack.c.b16 %v4369, %v4367
    %v4484 = vpack.c.b16 %v4370, %v4368
    %v4485 = vpack.c.b16 %v4373, %v4371
    %v4486 = vpack.c.b16 %v4374, %v4372
    %v4487 = vpack.c.b16 %v4377, %v4375
    %v4488 = vpack.c.b16 %v4378, %v4376
    %v4489 = vpack.c.b16 %v4381, %v4379
    %v4490 = vpack.c.b16 %v4382, %v4380
    %v4491 = vpack.c.b16 %v4385, %v4383
    %v4492 = vpack.c.b16 %v4386, %v4384
    %v4493 = vpack.c.b16 %v4389, %v4387
    %v4494 = vpack.c.b16 %v4390, %v4388
    %v4495 = vpack.c.b16 %v4393, %v4391
    %v4496 = vpack.c.b16 %v4394, %v4392
    %v4497 = vpack.c.b16 %v4397, %v4395
    %v4498 = vpack.c.b16 %v4398, %v4396
    %v4499 = vpack.c.b16 %v4401, %v4399
    %v4500 = vpack.c.b16 %v4402, %v4400
    %v4501 = vpack.c.b16 %v4405, %v4403
    %v4502 = vpack.c.b16 %v4406, %v4404
    %v4503 = vpack.c.b16 %v4409, %v4407
    %v4504 = vpack.c.b16 %v4410, %v4408
    %v4505 = vpack.c.b16 %v4413, %v4411
    %v4506 = vpack.c.b16 %v4414, %v4412
    %v4507 = vpack.c.b16 %v4417, %v4415
    %v4508 = vpack.c.b16 %v4418, %v4416
    %v4509 = vpack.c.b16 %v4421, %v4419
    %v4510 = vpack.c.b16 %v4422, %v4420
    %v4511 = vpack.c.b16 %v4425, %v4423
    %v4512 = vpack.c.b16 %v4426, %v4424
    %v4513 = vpack.c.b16 %v4429, %v4427
    %v4514 = vpack.c.b16 %v4430, %v4428
    %v4515 = vpack.c.b16 %v4433, %v4431
    %v4516 = vpack.c.b16 %v4434, %v4432
    %v4517 = vpack.c.b16 %v4437, %v4435
    %v4518 = vpack.c.b16 %v4438, %v4436
    %v4519 = vpack.c.b16 %v4441, %v4439
    %v4520 = vpack.c.b16 %v4442, %v4440
    %v4521 = vpack.c.b16 %v4445, %v4443
    %v4522 = vpack.c.b16 %v4446, %v4444
    %v4523 = vpack.c.b16 %v4449, %v4447
    %v4524 = vpack.c.b16 %v4450, %v4448
    %v4525 = vpack.c.b16 %v4453, %v4451
    %v4526 = vpack.c.b16 %v4454, %v4452
    %v4527 = vpack.c.b16 %v4457, %v4455
    %v4528 = vpack.c.b16 %v4458, %v4456
    %v4529 = vpack.c.b16 %v4461, %v4459
    %v4530 = vpack.c.b16 %v4462, %v4460
    %v4531 = vpack.c.b16 %v4465, %v4463
    %v4532 = vpack.c.b16 %v4466, %v4464
    %v4533 = vpack.c.b16 %v4469, %v4467
    %v4534 = vpack.c.b16 %v4470, %v4468
    %4599 = vmatpush.bf16.msra.mxu0 %v4485
    %4600 = vmatpush.bf16.msra.mxu0 %v4483
    %4601 = vmatpush.bf16.msra.mxu0 %v4481
    %4602 = vmatpush.bf16.msra.mxu0 %v4479
    %4603 = vmatpush.bf16.msra.mxu0 %v4477
    %4604 = vmatpush.bf16.msra.mxu0 %v4475
    %4605 = vmatpush.bf16.msra.mxu0 %v4473
    %4606 = vmatpush.bf16.msra.mxu0 %v4471
    %4607 = vmatmul.bf16.gmra.mxu0 %v4205
    %v4608 = vpop.f32.mrf.mxu0
    %v4609 = vadd.f32 %v4275, %v4608
    %v4610 = vpop.f32.mrf.mxu0
    %v4611 = vadd.f32 %v4275, %v4610
    %4612 = vdwg.mxu0
    %4613 = vmatpush.bf16.msra.mxu0 %v4501
    %4614 = vmatpush.bf16.msra.mxu0 %v4499
    %4615 = vmatpush.bf16.msra.mxu0 %v4497
    %4616 = vmatpush.bf16.msra.mxu0 %v4495
    %4617 = vmatpush.bf16.msra.mxu0 %v4493
    %4618 = vmatpush.bf16.msra.mxu0 %v4491
    %4619 = vmatpush.bf16.msra.mxu0 %v4489
    %4620 = vmatpush.bf16.msra.mxu0 %v4487
    %4621 = vmatmul.bf16.gmra.mxu0 %v4206
    %v4622 = vpop.f32.mrf.mxu0
    %v4623 = vadd.f32 %v4609, %v4622
    %v4624 = vpop.f32.mrf.mxu0
    %v4625 = vadd.f32 %v4611, %v4624
    %4626 = vdwg.mxu0
    %4627 = vmatpush.bf16.msra.mxu0 %v4517
    %4628 = vmatpush.bf16.msra.mxu0 %v4515
    %4629 = vmatpush.bf16.msra.mxu0 %v4513
    %4630 = vmatpush.bf16.msra.mxu0 %v4511
    %4631 = vmatpush.bf16.msra.mxu0 %v4509
    %4632 = vmatpush.bf16.msra.mxu0 %v4507
    %4633 = vmatpush.bf16.msra.mxu0 %v4505
    %4634 = vmatpush.bf16.msra.mxu0 %v4503
    %4635 = vmatmul.bf16.gmra.mxu0 %v4207
    %v4636 = vpop.f32.mrf.mxu0
    %v4637 = vadd.f32 %v4623, %v4636
    %v4638 = vpop.f32.mrf.mxu0
    %v4639 = vadd.f32 %v4625, %v4638
    %4640 = vdwg.mxu0
    %4641 = vmatpush.bf16.msra.mxu0 %v4533
    %4642 = vmatpush.bf16.msra.mxu0 %v4531
    %4643 = vmatpush.bf16.msra.mxu0 %v4529
    %4644 = vmatpush.bf16.msra.mxu0 %v4527
    %4645 = vmatpush.bf16.msra.mxu0 %v4525
    %4646 = vmatpush.bf16.msra.mxu0 %v4523
    %4647 = vmatpush.bf16.msra.mxu0 %v4521
    %4648 = vmatpush.bf16.msra.mxu0 %v4519
    %4649 = vmatmul.bf16.gmra.mxu0 %v4208
    %v4650 = vpop.f32.mrf.mxu0
    %v4651 = vadd.f32 %v4637, %v4650
    %v4652 = vpop.f32.mrf.mxu0
    %v4653 = vadd.f32 %v4639, %v4652
    %4654 = vdwg.mxu0
    %4655 = vmatpush.bf16.msra.mxu0 %v4486
    %4656 = vmatpush.bf16.msra.mxu0 %v4484
    %4657 = vmatpush.bf16.msra.mxu0 %v4482
    %4658 = vmatpush.bf16.msra.mxu0 %v4480
    %4659 = vmatpush.bf16.msra.mxu0 %v4478
    %4660 = vmatpush.bf16.msra.mxu0 %v4476
    %4661 = vmatpush.bf16.msra.mxu0 %v4474
    %4662 = vmatpush.bf16.msra.mxu0 %v4472
    %4663 = vmatmul.bf16.gmra.mxu0 %v4205
    %v4664 = vpop.f32.mrf.mxu0
    %v4665 = vadd.f32 %v4276, %v4664
    %v4666 = vpop.f32.mrf.mxu0
    %v4667 = vadd.f32 %v4276, %v4666
    %4668 = vdwg.mxu0
    %4669 = vmatpush.bf16.msra.mxu0 %v4502
    %4670 = vmatpush.bf16.msra.mxu0 %v4500
    %4671 = vmatpush.bf16.msra.mxu0 %v4498
    %4672 = vmatpush.bf16.msra.mxu0 %v4496
    %4673 = vmatpush.bf16.msra.mxu0 %v4494
    %4674 = vmatpush.bf16.msra.mxu0 %v4492
    %4675 = vmatpush.bf16.msra.mxu0 %v4490
    %4676 = vmatpush.bf16.msra.mxu0 %v4488
    %4677 = vmatmul.bf16.gmra.mxu0 %v4206
    %v4678 = vpop.f32.mrf.mxu0
    %v4679 = vadd.f32 %v4665, %v4678
    %v4680 = vpop.f32.mrf.mxu0
    %v4681 = vadd.f32 %v4667, %v4680
    %4682 = vdwg.mxu0
    %4683 = vmatpush.bf16.msra.mxu0 %v4518
    %4684 = vmatpush.bf16.msra.mxu0 %v4516
    %4685 = vmatpush.bf16.msra.mxu0 %v4514
    %4686 = vmatpush.bf16.msra.mxu0 %v4512
    %4687 = vmatpush.bf16.msra.mxu0 %v4510
    %4688 = vmatpush.bf16.msra.mxu0 %v4508
    %4689 = vmatpush.bf16.msra.mxu0 %v4506
    %4690 = vmatpush.bf16.msra.mxu0 %v4504
    %4691 = vmatmul.bf16.gmra.mxu0 %v4207
    %v4692 = vpop.f32.mrf.mxu0
    %v4693 = vadd.f32 %v4679, %v4692
    %v4694 = vpop.f32.mrf.mxu0
    %v4695 = vadd.f32 %v4681, %v4694
    %4696 = vdwg.mxu0
    %4697 = vmatpush.bf16.msra.mxu0 %v4534
    %4698 = vmatpush.bf16.msra.mxu0 %v4532
    %4699 = vmatpush.bf16.msra.mxu0 %v4530
    %4700 = vmatpush.bf16.msra.mxu0 %v4528
    %4701 = vmatpush.bf16.msra.mxu0 %v4526
    %4702 = vmatpush.bf16.msra.mxu0 %v4524
    %4703 = vmatpush.bf16.msra.mxu0 %v4522
    %4704 = vmatpush.bf16.msra.mxu0 %v4520
    %4705 = vmatmul.bf16.gmra.mxu0 %v4208
    %v4706 = vpop.f32.mrf.mxu0
    %v4707 = vadd.f32 %v4693, %v4706
    %v4708 = vpop.f32.mrf.mxu0
    %v4709 = vadd.f32 %v4695, %v4708
    %4710 = vdwg.mxu0
    %vm4711 = vcmp.gt.f32.partialorder %v4651, 0.0
    %vm4712 = vcmp.gt.f32.partialorder %v4707, 0.0
    %vm4713 = vcmp.gt.f32.partialorder %v4653, 0.0
    %vm4714 = vcmp.gt.f32.partialorder %v4709, 0.0
    %v4715 = vmul.f32 %v4651, 0.2
    %v4716 = vmul.f32 %v4707, 0.2
    %v4717 = vmul.f32 %v4653, 0.2
    %v4718 = vmul.f32 %v4709, 0.2
    %v4719 = vsel %vm4711, %v4651, %v4715
    %v4720 = vsel %vm4712, %v4707, %v4716
    %v4721 = vsel %vm4713, %v4653, %v4717
    %v4722 = vsel %vm4714, %v4709, %v4718
    %4723 = vst [vmem:[#allocation13] sm:$0xff] %v4719
    %4724 = vst [vmem:[#allocation13 + $0x8] sm:$0xff] %v4720
    %4725 = vst [vmem:[#allocation13 + $0x10] sm:$0xff] %v4721
    %4726 = vst [vmem:[#allocation13 + $0x18] sm:$0xff] %v4722
    // Predicated region
    $region54: #{tpu_custom_call.1} parent=1 // pred_check
      _
    $region55: #{tpu_custom_call.1} parent=1 // pred_check_branch
      %4728 = sbr.rel (0) target = $region57
    $region56: #{tpu_custom_call.1} parent=1 // pred_region
      %4730 = vsyncadd [#allocation4], 0
      %s4731 = sshll.u32 [#allocation13], 4
      %s4732 = int_to_ptr.vmem [resolvable:$true] %s4731
      %s4733 = sshll.u32 %s7, 4
      %s4734 = int_to_ptr.hbm [resolvable:$true] %s4733
      %4739 = dma.vmem_to_hbm [thread:$0]  %s4732, 512, %s4734, [#allocation4], 256, 256, 16
    $region57: #{tpu_custom_call.1} parent=1 // pred_fallthru
      _
    // Predicated region
    $region58: #{tpu_custom_call.1} parent=1 // pred_check
      _
    $region59: #{tpu_custom_call.1} parent=1 // pred_check_branch
      %4741 = sbr.rel (0) target = $region61
    $region60: #{tpu_custom_call.1} parent=1 // pred_region
      %4743 = dma.done [#allocation4], 512
    $region61: #{tpu_custom_call.1} parent=1 // pred_fallthru
      _
    %4744 = vsyncpa [#allocation3], 1
    %4745 = vsyncpa [#allocation6], 1
    %4746 = vsyncpa [#allocation9], 1
    %4747 = vsyncpa [#allocation12], 1
    %4748 = vsyncpa [#allocation4], 1

// kernel: tpu_custom_call.1
$region0: #{tpu_custom_call.1}
  #allocation0 [shape = 'u32[]', space=smem, size = 0x4, offset = 0x4, fixed_abs, tag = 'smem constant byte address 0x4 - core index']
  #allocation1 [shape = 'u32[72,128]{1,0:T(1,128)}', space=vmem, size = 0x9000, scoped, tag = 'internal scratch']
  %s0 = inlined_call_operand.hbm [shape: f32[10,512], index: 0, kind: input, shape index: {}]
  %s1 = inlined_call_operand.hbm [shape: bf16[512,1024], index: 1, kind: input, shape index: {}]
  %s2 = inlined_call_operand.hbm [shape: f32[1,1024], index: 2, kind: input, shape index: {}]
  %s3 = inlined_call_operand.hbm [shape: bf16[1024,512], index: 3, kind: input, shape index: {}]
  %s4 = inlined_call_operand.hbm [shape: f32[1,512], index: 4, kind: input, shape index: {}]
  %s5 = inlined_call_operand.hbm [shape: bf16[512,256], index: 5, kind: input, shape index: {}]
  %s6 = inlined_call_operand.vmem [shape: f32[1,256], index: 6, kind: input, shape index: {}]
  %s7 = inlined_call_operand.hbm [shape: f32[10,256], index: 7, kind: output, shape index: {}]
  %s8 = sld [smem:[#allocation0]]
  $region62: #{tpu_custom_call.1} parent=0
    _
  %s10 = ssub.s32 1, %s8
  %s11 = scalar_select 0, %s10, %s8
  $region1: #{tpu_custom_call.1} parent=0
    #allocation2 [shape = 'u8[32768]{0}', space=vmem, size = 0x8000, scoped, tag = 'input window, operand 0, single buffered']
    #allocation3 [shape = 's32[1]{0}', space=sflag, size = 0x4, scoped, tag = 'scoped memory for tpu_custom_call.1']
    #allocation4 [shape = 's32[1]{0}', space=sflag, size = 0x4, scoped, tag = 'scoped memory for tpu_custom_call.1']
    #allocation5 [shape = 'u8[1048576]{0}', space=vmem, size = 0x100000, scoped, tag = 'input window, operand 1, single buffered']
    #allocation6 [shape = 's32[1]{0}', space=sflag, size = 0x4, scoped, tag = 'scoped memory for tpu_custom_call.1']
    #allocation7 [shape = 'u8[4096]{0}', space=vmem, size = 0x1000, scoped, tag = 'input window, operand 2, single buffered']
    #allocation8 [shape = 'u8[1048576]{0}', space=vmem, size = 0x100000, scoped, tag = 'input window, operand 3, single buffered']
    #allocation9 [shape = 's32[1]{0}', space=sflag, size = 0x4, scoped, tag = 'scoped memory for tpu_custom_call.1']
    #allocation10 [shape = 'u8[2048]{0}', space=vmem, size = 0x800, scoped, tag = 'input window, operand 4, single buffered']
    #allocation11 [shape = 'u8[262144]{0}', space=vmem, size = 0x40000, scoped, tag = 'input window, operand 5, single buffered']
    #allocation12 [shape = 's32[1]{0}', space=sflag, size = 0x4, scoped, tag = 'scoped memory for tpu_custom_call.1']
    #allocation13 [shape = 'u8[16384]{0}', space=vmem, size = 0x4000, scoped, tag = 'output window, operand 0, single buffered']
    %12 = vsyncpa [#allocation3], 0
    %13 = vsyncpa [#allocation6], 0
    %14 = vsyncpa [#allocation9], 0
    %15 = vsyncpa [#allocation12], 0
    %16 = vsyncpa [#allocation4], 0
    // Predicated region
    $region2: #{tpu_custom_call.1} parent=1 // pred_check
      _
    $region3: #{tpu_custom_call.1} parent=1 // pred_check_branch
      %18 = sbr.rel (0) target = $region5
    $region4: #{tpu_custom_call.1} parent=1 // pred_region
      %20 = vsyncadd [#allocation3], 0
      %s21 = sshll.u32 %s0, 4
      %s22 = int_to_ptr.hbm [resolvable:$true] %s21
      %s23 = sshll.u32 [#allocation2], 4
      %s24 = int_to_ptr.vmem [resolvable:$true] %s23
      %29 = dma.hbm_to_vmem [thread:$0]  %s22, 1024, %s24, [#allocation3], 512, 512, 32
    $region5: #{tpu_custom_call.1} parent=1 // pred_fallthru
      _
    // Predicated region
    $region6: #{tpu_custom_call.1} parent=1 // pred_check
      _
    $region7: #{tpu_custom_call.1} parent=1 // pred_check_branch
      %31 = sbr.rel (0) target = $region9
    $region8: #{tpu_custom_call.1} parent=1 // pred_region
      %33 = vsyncadd [#allocation6], 0
      %s34 = sshll.u32 %s1, 4
      %s35 = int_to_ptr.hbm [resolvable:$true] %s34
      %s36 = sshll.u32 [#allocation5], 4
      %s37 = int_to_ptr.vmem [resolvable:$true] %s36
      %42 = dma.hbm_to_vmem [thread:$0]  %s35, 32768, %s37, [#allocation6], 512, 512, 32
    $region9: #{tpu_custom_call.1} parent=1 // pred_fallthru
      _
    // Predicated region
    $region10: #{tpu_custom_call.1} parent=1 // pred_check
      _
    $region11: #{tpu_custom_call.1} parent=1 // pred_check_branch
      %44 = sbr.rel (0) target = $region13
    $region12: #{tpu_custom_call.1} parent=1 // pred_region
      %46 = vsyncadd [#allocation6], 0
      %s48 = sshll.u32 %s2, 4
      %s49 = int_to_ptr.hbm [resolvable:$true] %s48
      %s50 = sshll.u32 [#allocation7], 4
      %s51 = int_to_ptr.vmem [resolvable:$true] %s50
      %53 = dma.hbm_to_vmem [thread:$0]  %s49, 128, %s51, [#allocation6]
    $region13: #{tpu_custom_call.1} parent=1 // pred_fallthru
      _
    // Predicated region
    $region14: #{tpu_custom_call.1} parent=1 // pred_check
      _
    $region15: #{tpu_custom_call.1} parent=1 // pred_check_branch
      %55 = sbr.rel (0) target = $region17
    $region16: #{tpu_custom_call.1} parent=1 // pred_region
      %57 = vsyncadd [#allocation9], 0
      %s58 = sshll.u32 %s3, 4
      %s59 = int_to_ptr.hbm [resolvable:$true] %s58
      %s60 = sshll.u32 [#allocation8], 4
      %s61 = int_to_ptr.vmem [resolvable:$true] %s60
      %66 = dma.hbm_to_vmem [thread:$0]  %s59, 32768, %s61, [#allocation9], 256, 256, 16
    $region17: #{tpu_custom_call.1} parent=1 // pred_fallthru
      _
    // Predicated region
    $region18: #{tpu_custom_call.1} parent=1 // pred_check
      _
    $region19: #{tpu_custom_call.1} parent=1 // pred_check_branch
      %68 = sbr.rel (0) target = $region21
    $region20: #{tpu_custom_call.1} parent=1 // pred_region
      %70 = vsyncadd [#allocation9], 0
      %s72 = sshll.u32 %s4, 4
      %s73 = int_to_ptr.hbm [resolvable:$true] %s72
      %s74 = sshll.u32 [#allocation10], 4
      %s75 = int_to_ptr.vmem [resolvable:$true] %s74
      %77 = dma.hbm_to_vmem [thread:$0]  %s73, 64, %s75, [#allocation9]
    $region21: #{tpu_custom_call.1} parent=1 // pred_fallthru
      _
    // Predicated region
    $region22: #{tpu_custom_call.1} parent=1 // pred_check
      _
    $region23: #{tpu_custom_call.1} parent=1 // pred_check_branch
      %79 = sbr.rel (0) target = $region25
    $region24: #{tpu_custom_call.1} parent=1 // pred_region
      %81 = vsyncadd [#allocation12], 0
      %s82 = sshll.u32 %s5, 4
      %s83 = int_to_ptr.hbm [resolvable:$true] %s82
      %s84 = sshll.u32 [#allocation11], 4
      %s85 = int_to_ptr.vmem [resolvable:$true] %s84
      %90 = dma.hbm_to_vmem [thread:$0]  %s83, 8192, %s85, [#allocation12], 128, 128, 8
    $region25: #{tpu_custom_call.1} parent=1 // pred_fallthru
      _
    // Predicated region
    $region26: #{tpu_custom_call.1} parent=1 // pred_check
      _
    $region27: #{tpu_custom_call.1} parent=1 // pred_check_branch
      %92 = sbr.rel (0) target = $region29
    $region28: #{tpu_custom_call.1} parent=1 // pred_region
      _
    $region29: #{tpu_custom_call.1} parent=1 // pred_fallthru
      _
    // Predicated region
    $region30: #{tpu_custom_call.1} parent=1 // pred_check
      _
    $region31: #{tpu_custom_call.1} parent=1 // pred_check_branch
      %94 = sbr.rel (0) target = $region33
    $region32: #{tpu_custom_call.1} parent=1 // pred_region
      %96 = dma.done [#allocation3], 1024
    $region33: #{tpu_custom_call.1} parent=1 // pred_fallthru
      _
    // Predicated region
    $region34: #{tpu_custom_call.1} parent=1 // pred_check
      _
    $region35: #{tpu_custom_call.1} parent=1 // pred_check_branch
      %98 = sbr.rel (0) target = $region37
    $region36: #{tpu_custom_call.1} parent=1 // pred_region
      %100 = dma.done [#allocation6], 32768
    $region37: #{tpu_custom_call.1} parent=1 // pred_fallthru
      _
    // Predicated region
    $region38: #{tpu_custom_call.1} parent=1 // pred_check
      _
    $region39: #{tpu_custom_call.1} parent=1 // pred_check_branch
      %102 = sbr.rel (0) target = $region41
    $region40: #{tpu_custom_call.1} parent=1 // pred_region
      %104 = dma.done [#allocation6], 128
    $region41: #{tpu_custom_call.1} parent=1 // pred_fallthru
      _
    // Predicated region
    $region42: #{tpu_custom_call.1} parent=1 // pred_check
      _
    $region43: #{tpu_custom_call.1} parent=1 // pred_check_branch
      %106 = sbr.rel (0) target = $region45
    $region44: #{tpu_custom_call.1} parent=1 // pred_region
      %108 = dma.done [#allocation9], 32768
    $region45: #{tpu_custom_call.1} parent=1 // pred_fallthru
      _
    // Predicated region
    $region46: #{tpu_custom_call.1} parent=1 // pred_check
      _
    $region47: #{tpu_custom_call.1} parent=1 // pred_check_branch
      %110 = sbr.rel (0) target = $region49
    $region48: #{tpu_custom_call.1} parent=1 // pred_region
      %112 = dma.done [#allocation9], 64
    $region49: #{tpu_custom_call.1} parent=1 // pred_fallthru
      _
    // Predicated region
    $region50: #{tpu_custom_call.1} parent=1 // pred_check
      _
    $region51: #{tpu_custom_call.1} parent=1 // pred_check_branch
      %114 = sbr.rel (0) target = $region53
    $region52: #{tpu_custom_call.1} parent=1 // pred_region
      %116 = dma.done [#allocation12], 8192
    $region53: #{tpu_custom_call.1} parent=1 // pred_fallthru
      _
    %v117 = vld [vmem:[#allocation2] sm:$0xff]
    %v118 = vld [vmem:[#allocation2 + $0x8] sm:$0xff]
    %v119 = vld [vmem:[#allocation2 + $0x10] sm:$0xff]
    %v120 = vld [vmem:[#allocation2 + $0x18] sm:$0xff]
    %v121 = vld [vmem:[#allocation2 + $0x20] sm:$0xff]
    %v122 = vld [vmem:[#allocation2 + $0x28] sm:$0xff]
    %v123 = vld [vmem:[#allocation2 + $0x30] sm:$0xff]
    %v124 = vld [vmem:[#allocation2 + $0x38] sm:$0xff]
    %v125 = vpack.c.bf16 %v121, %v117
    %v126 = vpack.c.bf16 %v122, %v118
    %v127 = vpack.c.bf16 %v123, %v119
    %v128 = vpack.c.bf16 %v124, %v120
    %v129 = vld [vmem:[#allocation5] sm:$0xff]
    %v130 = vld [vmem:[#allocation5 + $0x8] sm:$0xff]
    %v131 = vld [vmem:[#allocation5 + $0x10] sm:$0xff]
    %v132 = vld [vmem:[#allocation5 + $0x18] sm:$0xff]
    %v133 = vld [vmem:[#allocation5 + $0x20] sm:$0xff]
    %v134 = vld [vmem:[#allocation5 + $0x28] sm:$0xff]
    %v135 = vld [vmem:[#allocation5 + $0x30] sm:$0xff]
    %v136 = vld [vmem:[#allocation5 + $0x38] sm:$0xff]
    %v137 = vld [vmem:[#allocation5 + $0x40] sm:$0xff]
    %v138 = vld [vmem:[#allocation5 + $0x48] sm:$0xff]
    %v139 = vld [vmem:[#allocation5 + $0x50] sm:$0xff]
    %v140 = vld [vmem:[#allocation5 + $0x58] sm:$0xff]
    %v141 = vld [vmem:[#allocation5 + $0x60] sm:$0xff]
    %v142 = vld [vmem:[#allocation5 + $0x68] sm:$0xff]
    %v143 = vld [vmem:[#allocation5 + $0x70] sm:$0xff]
    %v144 = vld [vmem:[#allocation5 + $0x78] sm:$0xff]
    %v145 = vld [vmem:[#allocation5 + $0x80] sm:$0xff]
    %v146 = vld [vmem:[#allocation5 + $0x88] sm:$0xff]
    %v147 = vld [vmem:[#allocation5 + $0x90] sm:$0xff]
    %v148 = vld [vmem:[#allocation5 + $0x98] sm:$0xff]
    %v149 = vld [vmem:[#allocation5 + $0xa0] sm:$0xff]
    %v150 = vld [vmem:[#allocation5 + $0xa8] sm:$0xff]
    %v151 = vld [vmem:[#allocation5 + $0xb0] sm:$0xff]
    %v152 = vld [vmem:[#allocation5 + $0xb8] sm:$0xff]
    %v153 = vld [vmem:[#allocation5 + $0xc0] sm:$0xff]
    %v154 = vld [vmem:[#allocation5 + $0xc8] sm:$0xff]
    %v155 = vld [vmem:[#allocation5 + $0xd0] sm:$0xff]
    %v156 = vld [vmem:[#allocation5 + $0xd8] sm:$0xff]
    %v157 = vld [vmem:[#allocation5 + $0xe0] sm:$0xff]
    %v158 = vld [vmem:[#allocation5 + $0xe8] sm:$0xff]
    %v159 = vld [vmem:[#allocation5 + $0xf0] sm:$0xff]
    %v160 = vld [vmem:[#allocation5 + $0xf8] sm:$0xff]
    %v161 = vld [vmem:[#allocation5 + $0x100] sm:$0xff]
    %v162 = vld [vmem:[#allocation5 + $0x108] sm:$0xff]
    %v163 = vld [vmem:[#allocation5 + $0x110] sm:$0xff]
    %v164 = vld [vmem:[#allocation5 + $0x118] sm:$0xff]
    %v165 = vld [vmem:[#allocation5 + $0x120] sm:$0xff]
    %v166 = vld [vmem:[#allocation5 + $0x128] sm:$0xff]
    %v167 = vld [vmem:[#allocation5 + $0x130] sm:$0xff]
    %v168 = vld [vmem:[#allocation5 + $0x138] sm:$0xff]
    %v169 = vld [vmem:[#allocation5 + $0x140] sm:$0xff]
    %v170 = vld [vmem:[#allocation5 + $0x148] sm:$0xff]
    %v171 = vld [vmem:[#allocation5 + $0x150] sm:$0xff]
    %v172 = vld [vmem:[#allocation5 + $0x158] sm:$0xff]
    %v173 = vld [vmem:[#allocation5 + $0x160] sm:$0xff]
    %v174 = vld [vmem:[#allocation5 + $0x168] sm:$0xff]
    %v175 = vld [vmem:[#allocation5 + $0x170] sm:$0xff]
    %v176 = vld [vmem:[#allocation5 + $0x178] sm:$0xff]
    %v177 = vld [vmem:[#allocation5 + $0x180] sm:$0xff]
    %v178 = vld [vmem:[#allocation5 + $0x188] sm:$0xff]
    %v179 = vld [vmem:[#allocation5 + $0x190] sm:$0xff]
    %v180 = vld [vmem:[#allocation5 + $0x198] sm:$0xff]
    %v181 = vld [vmem:[#allocation5 + $0x1a0] sm:$0xff]
    %v182 = vld [vmem:[#allocation5 + $0x1a8] sm:$0xff]
    %v183 = vld [vmem:[#allocation5 + $0x1b0] sm:$0xff]
    %v184 = vld [vmem:[#allocation5 + $0x1b8] sm:$0xff]
    %v185 = vld [vmem:[#allocation5 + $0x1c0] sm:$0xff]
    %v186 = vld [vmem:[#allocation5 + $0x1c8] sm:$0xff]
    %v187 = vld [vmem:[#allocation5 + $0x1d0] sm:$0xff]
    %v188 = vld [vmem:[#allocation5 + $0x1d8] sm:$0xff]
    %v189 = vld [vmem:[#allocation5 + $0x1e0] sm:$0xff]
    %v190 = vld [vmem:[#allocation5 + $0x1e8] sm:$0xff]
    %v191 = vld [vmem:[#allocation5 + $0x1f0] sm:$0xff]
    %v192 = vld [vmem:[#allocation5 + $0x1f8] sm:$0xff]
    %v193 = vld [vmem:[#allocation5 + $0x200] sm:$0xff]
    %v194 = vld [vmem:[#allocation5 + $0x208] sm:$0xff]
    %v195 = vld [vmem:[#allocation5 + $0x210] sm:$0xff]
    %v196 = vld [vmem:[#allocation5 + $0x218] sm:$0xff]
    %v197 = vld [vmem:[#allocation5 + $0x220] sm:$0xff]
    %v198 = vld [vmem:[#allocation5 + $0x228] sm:$0xff]
    %v199 = vld [vmem:[#allocation5 + $0x230] sm:$0xff]
    %v200 = vld [vmem:[#allocation5 + $0x238] sm:$0xff]
    %v201 = vld [vmem:[#allocation5 + $0x240] sm:$0xff]
    %v202 = vld [vmem:[#allocation5 + $0x248] sm:$0xff]
    %v203 = vld [vmem:[#allocation5 + $0x250] sm:$0xff]
    %v204 = vld [vmem:[#allocation5 + $0x258] sm:$0xff]
    %v205 = vld [vmem:[#allocation5 + $0x260] sm:$0xff]
    %v206 = vld [vmem:[#allocation5 + $0x268] sm:$0xff]
    %v207 = vld [vmem:[#allocation5 + $0x270] sm:$0xff]
    %v208 = vld [vmem:[#allocation5 + $0x278] sm:$0xff]
    %v209 = vld [vmem:[#allocation5 + $0x280] sm:$0xff]
    %v210 = vld [vmem:[#allocation5 + $0x288] sm:$0xff]
    %v211 = vld [vmem:[#allocation5 + $0x290] sm:$0xff]
    %v212 = vld [vmem:[#allocation5 + $0x298] sm:$0xff]
    %v213 = vld [vmem:[#allocation5 + $0x2a0] sm:$0xff]
    %v214 = vld [vmem:[#allocation5 + $0x2a8] sm:$0xff]
    %v215 = vld [vmem:[#allocation5 + $0x2b0] sm:$0xff]
    %v216 = vld [vmem:[#allocation5 + $0x2b8] sm:$0xff]
    %v217 = vld [vmem:[#allocation5 + $0x2c0] sm:$0xff]
    %v218 = vld [vmem:[#allocation5 + $0x2c8] sm:$0xff]
    %v219 = vld [vmem:[#allocation5 + $0x2d0] sm:$0xff]
    %v220 = vld [vmem:[#allocation5 + $0x2d8] sm:$0xff]
    %v221 = vld [vmem:[#allocation5 + $0x2e0] sm:$0xff]
    %v222 = vld [vmem:[#allocation5 + $0x2e8] sm:$0xff]
    %v223 = vld [vmem:[#allocation5 + $0x2f0] sm:$0xff]
    %v224 = vld [vmem:[#allocation5 + $0x2f8] sm:$0xff]
    %v225 = vld [vmem:[#allocation5 + $0x300] sm:$0xff]
    %v226 = vld [vmem:[#allocation5 + $0x308] sm:$0xff]
    %v227 = vld [vmem:[#allocation5 + $0x310] sm:$0xff]
    %v228 = vld [vmem:[#allocation5 + $0x318] sm:$0xff]
    %v229 = vld [vmem:[#allocation5 + $0x320] sm:$0xff]
    %v230 = vld [vmem:[#allocation5 + $0x328] sm:$0xff]
    %v231 = vld [vmem:[#allocation5 + $0x330] sm:$0xff]
    %v232 = vld [vmem:[#allocation5 + $0x338] sm:$0xff]
    %v233 = vld [vmem:[#allocation5 + $0x340] sm:$0xff]
    %v234 = vld [vmem:[#allocation5 + $0x348] sm:$0xff]
    %v235 = vld [vmem:[#allocation5 + $0x350] sm:$0xff]
    %v236 = vld [vmem:[#allocation5 + $0x358] sm:$0xff]
    %v237 = vld [vmem:[#allocation5 + $0x360] sm:$0xff]
    %v238 = vld [vmem:[#allocation5 + $0x368] sm:$0xff]
    %v239 = vld [vmem:[#allocation5 + $0x370] sm:$0xff]
    %v240 = vld [vmem:[#allocation5 + $0x378] sm:$0xff]
    %v241 = vld [vmem:[#allocation5 + $0x380] sm:$0xff]
    %v242 = vld [vmem:[#allocation5 + $0x388] sm:$0xff]
    %v243 = vld [vmem:[#allocation5 + $0x390] sm:$0xff]
    %v244 = vld [vmem:[#allocation5 + $0x398] sm:$0xff]
    %v245 = vld [vmem:[#allocation5 + $0x3a0] sm:$0xff]
    %v246 = vld [vmem:[#allocation5 + $0x3a8] sm:$0xff]
    %v247 = vld [vmem:[#allocation5 + $0x3b0] sm:$0xff]
    %v248 = vld [vmem:[#allocation5 + $0x3b8] sm:$0xff]
    %v249 = vld [vmem:[#allocation5 + $0x3c0] sm:$0xff]
    %v250 = vld [vmem:[#allocation5 + $0x3c8] sm:$0xff]
    %v251 = vld [vmem:[#allocation5 + $0x3d0] sm:$0xff]
    %v252 = vld [vmem:[#allocation5 + $0x3d8] sm:$0xff]
    %v253 = vld [vmem:[#allocation5 + $0x3e0] sm:$0xff]
    %v254 = vld [vmem:[#allocation5 + $0x3e8] sm:$0xff]
    %v255 = vld [vmem:[#allocation5 + $0x3f0] sm:$0xff]
    %v256 = vld [vmem:[#allocation5 + $0x3f8] sm:$0xff]
    %v257 = vld [vmem:[#allocation5 + $0x400] sm:$0xff]
    %v258 = vld [vmem:[#allocation5 + $0x408] sm:$0xff]
    %v259 = vld [vmem:[#allocation5 + $0x410] sm:$0xff]
    %v260 = vld [vmem:[#allocation5 + $0x418] sm:$0xff]
    %v261 = vld [vmem:[#allocation5 + $0x420] sm:$0xff]
    %v262 = vld [vmem:[#allocation5 + $0x428] sm:$0xff]
    %v263 = vld [vmem:[#allocation5 + $0x430] sm:$0xff]
    %v264 = vld [vmem:[#allocation5 + $0x438] sm:$0xff]
    %v265 = vld [vmem:[#allocation5 + $0x440] sm:$0xff]
    %v266 = vld [vmem:[#allocation5 + $0x448] sm:$0xff]
    %v267 = vld [vmem:[#allocation5 + $0x450] sm:$0xff]
    %v268 = vld [vmem:[#allocation5 + $0x458] sm:$0xff]
    %v269 = vld [vmem:[#allocation5 + $0x460] sm:$0xff]
    %v270 = vld [vmem:[#allocation5 + $0x468] sm:$0xff]
    %v271 = vld [vmem:[#allocation5 + $0x470] sm:$0xff]
    %v272 = vld [vmem:[#allocation5 + $0x478] sm:$0xff]
    %v273 = vld [vmem:[#allocation5 + $0x480] sm:$0xff]
    %v274 = vld [vmem:[#allocation5 + $0x488] sm:$0xff]
    %v275 = vld [vmem:[#allocation5 + $0x490] sm:$0xff]
    %v276 = vld [vmem:[#allocation5 + $0x498] sm:$0xff]
    %v277 = vld [vmem:[#allocation5 + $0x4a0] sm:$0xff]
    %v278 = vld [vmem:[#allocation5 + $0x4a8] sm:$0xff]
    %v279 = vld [vmem:[#allocation5 + $0x4b0] sm:$0xff]
    %v280 = vld [vmem:[#allocation5 + $0x4b8] sm:$0xff]
    %v281 = vld [vmem:[#allocation5 + $0x4c0] sm:$0xff]
    %v282 = vld [vmem:[#allocation5 + $0x4c8] sm:$0xff]
    %v283 = vld [vmem:[#allocation5 + $0x4d0] sm:$0xff]
    %v284 = vld [vmem:[#allocation5 + $0x4d8] sm:$0xff]
    %v285 = vld [vmem:[#allocation5 + $0x4e0] sm:$0xff]
    %v286 = vld [vmem:[#allocation5 + $0x4e8] sm:$0xff]
    %v287 = vld [vmem:[#allocation5 + $0x4f0] sm:$0xff]
    %v288 = vld [vmem:[#allocation5 + $0x4f8] sm:$0xff]
    %v289 = vld [vmem:[#allocation5 + $0x500] sm:$0xff]
    %v290 = vld [vmem:[#allocation5 + $0x508] sm:$0xff]
    %v291 = vld [vmem:[#allocation5 + $0x510] sm:$0xff]
    %v292 = vld [vmem:[#allocation5 + $0x518] sm:$0xff]
    %v293 = vld [vmem:[#allocation5 + $0x520] sm:$0xff]
    %v294 = vld [vmem:[#allocation5 + $0x528] sm:$0xff]
    %v295 = vld [vmem:[#allocation5 + $0x530] sm:$0xff]
    %v296 = vld [vmem:[#allocation5 + $0x538] sm:$0xff]
    %v297 = vld [vmem:[#allocation5 + $0x540] sm:$0xff]
    %v298 = vld [vmem:[#allocation5 + $0x548] sm:$0xff]
    %v299 = vld [vmem:[#allocation5 + $0x550] sm:$0xff]
    %v300 = vld [vmem:[#allocation5 + $0x558] sm:$0xff]
    %v301 = vld [vmem:[#allocation5 + $0x560] sm:$0xff]
    %v302 = vld [vmem:[#allocation5 + $0x568] sm:$0xff]
    %v303 = vld [vmem:[#allocation5 + $0x570] sm:$0xff]
    %v304 = vld [vmem:[#allocation5 + $0x578] sm:$0xff]
    %v305 = vld [vmem:[#allocation5 + $0x580] sm:$0xff]
    %v306 = vld [vmem:[#allocation5 + $0x588] sm:$0xff]
    %v307 = vld [vmem:[#allocation5 + $0x590] sm:$0xff]
    %v308 = vld [vmem:[#allocation5 + $0x598] sm:$0xff]
    %v309 = vld [vmem:[#allocation5 + $0x5a0] sm:$0xff]
    %v310 = vld [vmem:[#allocation5 + $0x5a8] sm:$0xff]
    %v311 = vld [vmem:[#allocation5 + $0x5b0] sm:$0xff]
    %v312 = vld [vmem:[#allocation5 + $0x5b8] sm:$0xff]
    %v313 = vld [vmem:[#allocation5 + $0x5c0] sm:$0xff]
    %v314 = vld [vmem:[#allocation5 + $0x5c8] sm:$0xff]
    %v315 = vld [vmem:[#allocation5 + $0x5d0] sm:$0xff]
    %v316 = vld [vmem:[#allocation5 + $0x5d8] sm:$0xff]
    %v317 = vld [vmem:[#allocation5 + $0x5e0] sm:$0xff]
    %v318 = vld [vmem:[#allocation5 + $0x5e8] sm:$0xff]
    %v319 = vld [vmem:[#allocation5 + $0x5f0] sm:$0xff]
    %v320 = vld [vmem:[#allocation5 + $0x5f8] sm:$0xff]
    %v321 = vld [vmem:[#allocation5 + $0x600] sm:$0xff]
    %v322 = vld [vmem:[#allocation5 + $0x608] sm:$0xff]
    %v323 = vld [vmem:[#allocation5 + $0x610] sm:$0xff]
    %v324 = vld [vmem:[#allocation5 + $0x618] sm:$0xff]
    %v325 = vld [vmem:[#allocation5 + $0x620] sm:$0xff]
    %v326 = vld [vmem:[#allocation5 + $0x628] sm:$0xff]
    %v327 = vld [vmem:[#allocation5 + $0x630] sm:$0xff]
    %v328 = vld [vmem:[#allocation5 + $0x638] sm:$0xff]
    %v329 = vld [vmem:[#allocation5 + $0x640] sm:$0xff]
    %v330 = vld [vmem:[#allocation5 + $0x648] sm:$0xff]
    %v331 = vld [vmem:[#allocation5 + $0x650] sm:$0xff]
    %v332 = vld [vmem:[#allocation5 + $0x658] sm:$0xff]
    %v333 = vld [vmem:[#allocation5 + $0x660] sm:$0xff]
    %v334 = vld [vmem:[#allocation5 + $0x668] sm:$0xff]
    %v335 = vld [vmem:[#allocation5 + $0x670] sm:$0xff]
    %v336 = vld [vmem:[#allocation5 + $0x678] sm:$0xff]
    %v337 = vld [vmem:[#allocation5 + $0x680] sm:$0xff]
    %v338 = vld [vmem:[#allocation5 + $0x688] sm:$0xff]
    %v339 = vld [vmem:[#allocation5 + $0x690] sm:$0xff]
    %v340 = vld [vmem:[#allocation5 + $0x698] sm:$0xff]
    %v341 = vld [vmem:[#allocation5 + $0x6a0] sm:$0xff]
    %v342 = vld [vmem:[#allocation5 + $0x6a8] sm:$0xff]
    %v343 = vld [vmem:[#allocation5 + $0x6b0] sm:$0xff]
    %v344 = vld [vmem:[#allocation5 + $0x6b8] sm:$0xff]
    %v345 = vld [vmem:[#allocation5 + $0x6c0] sm:$0xff]
    %v346 = vld [vmem:[#allocation5 + $0x6c8] sm:$0xff]
    %v347 = vld [vmem:[#allocation5 + $0x6d0] sm:$0xff]
    %v348 = vld [vmem:[#allocation5 + $0x6d8] sm:$0xff]
    %v349 = vld [vmem:[#allocation5 + $0x6e0] sm:$0xff]
    %v350 = vld [vmem:[#allocation5 + $0x6e8] sm:$0xff]
    %v351 = vld [vmem:[#allocation5 + $0x6f0] sm:$0xff]
    %v352 = vld [vmem:[#allocation5 + $0x6f8] sm:$0xff]
    %v353 = vld [vmem:[#allocation5 + $0x700] sm:$0xff]
    %v354 = vld [vmem:[#allocation5 + $0x708] sm:$0xff]
    %v355 = vld [vmem:[#allocation5 + $0x710] sm:$0xff]
    %v356 = vld [vmem:[#allocation5 + $0x718] sm:$0xff]
    %v357 = vld [vmem:[#allocation5 + $0x720] sm:$0xff]
    %v358 = vld [vmem:[#allocation5 + $0x728] sm:$0xff]
    %v359 = vld [vmem:[#allocation5 + $0x730] sm:$0xff]
    %v360 = vld [vmem:[#allocation5 + $0x738] sm:$0xff]
    %v361 = vld [vmem:[#allocation5 + $0x740] sm:$0xff]
    %v362 = vld [vmem:[#allocation5 + $0x748] sm:$0xff]
    %v363 = vld [vmem:[#allocation5 + $0x750] sm:$0xff]
    %v364 = vld [vmem:[#allocation5 + $0x758] sm:$0xff]
    %v365 = vld [vmem:[#allocation5 + $0x760] sm:$0xff]
    %v366 = vld [vmem:[#allocation5 + $0x768] sm:$0xff]
    %v367 = vld [vmem:[#allocation5 + $0x770] sm:$0xff]
    %v368 = vld [vmem:[#allocation5 + $0x778] sm:$0xff]
    %v369 = vld [vmem:[#allocation5 + $0x780] sm:$0xff]
    %v370 = vld [vmem:[#allocation5 + $0x788] sm:$0xff]
    %v371 = vld [vmem:[#allocation5 + $0x790] sm:$0xff]
    %v372 = vld [vmem:[#allocation5 + $0x798] sm:$0xff]
    %v373 = vld [vmem:[#allocation5 + $0x7a0] sm:$0xff]
    %v374 = vld [vmem:[#allocation5 + $0x7a8] sm:$0xff]
    %v375 = vld [vmem:[#allocation5 + $0x7b0] sm:$0xff]
    %v376 = vld [vmem:[#allocation5 + $0x7b8] sm:$0xff]
    %v377 = vld [vmem:[#allocation5 + $0x7c0] sm:$0xff]
    %v378 = vld [vmem:[#allocation5 + $0x7c8] sm:$0xff]
    %v379 = vld [vmem:[#allocation5 + $0x7d0] sm:$0xff]
    %v380 = vld [vmem:[#allocation5 + $0x7d8] sm:$0xff]
    %v381 = vld [vmem:[#allocation5 + $0x7e0] sm:$0xff]
    %v382 = vld [vmem:[#allocation5 + $0x7e8] sm:$0xff]
    %v383 = vld [vmem:[#allocation5 + $0x7f0] sm:$0xff]
    %v384 = vld [vmem:[#allocation5 + $0x7f8] sm:$0xff]
    %v385 = vld [vmem:[#allocation7] sm:$0xff]
    %v387 = vperm.slane %v385, 0
    %v388 = vperm.slane %v385, 1
    %v389 = vperm.slane %v385, 2
    %v390 = vperm.slane %v385, 3
    %v391 = vperm.slane %v385, 4
    %v392 = vperm.slane %v385, 5
    %v393 = vperm.slane %v385, 6
    %v394 = vperm.slane %v385, 7
    %v659 = vunpack.c.l.b16 %v129
    %v660 = vunpack.c.h.b16 %v129
    %v661 = vunpack.c.l.b16 %v130
    %v662 = vunpack.c.h.b16 %v130
    %v663 = vunpack.c.l.b16 %v131
    %v664 = vunpack.c.h.b16 %v131
    %v665 = vunpack.c.l.b16 %v132
    %v666 = vunpack.c.h.b16 %v132
    %v667 = vunpack.c.l.b16 %v133
    %v668 = vunpack.c.h.b16 %v133
    %v669 = vunpack.c.l.b16 %v134
    %v670 = vunpack.c.h.b16 %v134
    %v671 = vunpack.c.l.b16 %v135
    %v672 = vunpack.c.h.b16 %v135
    %v673 = vunpack.c.l.b16 %v136
    %v674 = vunpack.c.h.b16 %v136
    %v675 = vunpack.c.l.b16 %v137
    %v676 = vunpack.c.h.b16 %v137
    %v677 = vunpack.c.l.b16 %v138
    %v678 = vunpack.c.h.b16 %v138
    %v679 = vunpack.c.l.b16 %v139
    %v680 = vunpack.c.h.b16 %v139
    %v681 = vunpack.c.l.b16 %v140
    %v682 = vunpack.c.h.b16 %v140
    %v683 = vunpack.c.l.b16 %v141
    %v684 = vunpack.c.h.b16 %v141
    %v685 = vunpack.c.l.b16 %v142
    %v686 = vunpack.c.h.b16 %v142
    %v687 = vunpack.c.l.b16 %v143
    %v688 = vunpack.c.h.b16 %v143
    %v689 = vunpack.c.l.b16 %v144
    %v690 = vunpack.c.h.b16 %v144
    %v691 = vunpack.c.l.b16 %v145
    %v692 = vunpack.c.h.b16 %v145
    %v693 = vunpack.c.l.b16 %v146
    %v694 = vunpack.c.h.b16 %v146
    %v695 = vunpack.c.l.b16 %v147
    %v696 = vunpack.c.h.b16 %v147
    %v697 = vunpack.c.l.b16 %v148
    %v698 = vunpack.c.h.b16 %v148
    %v699 = vunpack.c.l.b16 %v149
    %v700 = vunpack.c.h.b16 %v149
    %v701 = vunpack.c.l.b16 %v150
    %v702 = vunpack.c.h.b16 %v150
    %v703 = vunpack.c.l.b16 %v151
    %v704 = vunpack.c.h.b16 %v151
    %v705 = vunpack.c.l.b16 %v152
    %v706 = vunpack.c.h.b16 %v152
    %v707 = vunpack.c.l.b16 %v153
    %v708 = vunpack.c.h.b16 %v153
    %v709 = vunpack.c.l.b16 %v154
    %v710 = vunpack.c.h.b16 %v154
    %v711 = vunpack.c.l.b16 %v155
    %v712 = vunpack.c.h.b16 %v155
    %v713 = vunpack.c.l.b16 %v156
    %v714 = vunpack.c.h.b16 %v156
    %v715 = vunpack.c.l.b16 %v157
    %v716 = vunpack.c.h.b16 %v157
    %v717 = vunpack.c.l.b16 %v158
    %v718 = vunpack.c.h.b16 %v158
    %v719 = vunpack.c.l.b16 %v159
    %v720 = vunpack.c.h.b16 %v159
    %v721 = vunpack.c.l.b16 %v160
    %v722 = vunpack.c.h.b16 %v160
    %v723 = vunpack.c.l.b16 %v161
    %v724 = vunpack.c.h.b16 %v161
    %v725 = vunpack.c.l.b16 %v162
    %v726 = vunpack.c.h.b16 %v162
    %v727 = vunpack.c.l.b16 %v163
    %v728 = vunpack.c.h.b16 %v163
    %v729 = vunpack.c.l.b16 %v164
    %v730 = vunpack.c.h.b16 %v164
    %v731 = vunpack.c.l.b16 %v165
    %v732 = vunpack.c.h.b16 %v165
    %v733 = vunpack.c.l.b16 %v166
    %v734 = vunpack.c.h.b16 %v166
    %v735 = vunpack.c.l.b16 %v167
    %v736 = vunpack.c.h.b16 %v167
    %v737 = vunpack.c.l.b16 %v168
    %v738 = vunpack.c.h.b16 %v168
    %v739 = vunpack.c.l.b16 %v169
    %v740 = vunpack.c.h.b16 %v169
    %v741 = vunpack.c.l.b16 %v170
    %v742 = vunpack.c.h.b16 %v170
    %v743 = vunpack.c.l.b16 %v171
    %v744 = vunpack.c.h.b16 %v171
    %v745 = vunpack.c.l.b16 %v172
    %v746 = vunpack.c.h.b16 %v172
    %v747 = vunpack.c.l.b16 %v173
    %v748 = vunpack.c.h.b16 %v173
    %v749 = vunpack.c.l.b16 %v174
    %v750 = vunpack.c.h.b16 %v174
    %v751 = vunpack.c.l.b16 %v175
    %v752 = vunpack.c.h.b16 %v175
    %v753 = vunpack.c.l.b16 %v176
    %v754 = vunpack.c.h.b16 %v176
    %v755 = vunpack.c.l.b16 %v177
    %v756 = vunpack.c.h.b16 %v177
    %v757 = vunpack.c.l.b16 %v178
    %v758 = vunpack.c.h.b16 %v178
    %v759 = vunpack.c.l.b16 %v179
    %v760 = vunpack.c.h.b16 %v179
    %v761 = vunpack.c.l.b16 %v180
    %v762 = vunpack.c.h.b16 %v180
    %v763 = vunpack.c.l.b16 %v181
    %v764 = vunpack.c.h.b16 %v181
    %v765 = vunpack.c.l.b16 %v182
    %v766 = vunpack.c.h.b16 %v182
    %v767 = vunpack.c.l.b16 %v183
    %v768 = vunpack.c.h.b16 %v183
    %v769 = vunpack.c.l.b16 %v184
    %v770 = vunpack.c.h.b16 %v184
    %v771 = vunpack.c.l.b16 %v185
    %v772 = vunpack.c.h.b16 %v185
    %v773 = vunpack.c.l.b16 %v186
    %v774 = vunpack.c.h.b16 %v186
    %v775 = vunpack.c.l.b16 %v187
    %v776 = vunpack.c.h.b16 %v187
    %v777 = vunpack.c.l.b16 %v188
    %v778 = vunpack.c.h.b16 %v188
    %v779 = vunpack.c.l.b16 %v189
    %v780 = vunpack.c.h.b16 %v189
    %v781 = vunpack.c.l.b16 %v190
    %v782 = vunpack.c.h.b16 %v190
    %v783 = vunpack.c.l.b16 %v191
    %v784 = vunpack.c.h.b16 %v191
    %v785 = vunpack.c.l.b16 %v192
    %v786 = vunpack.c.h.b16 %v192
    %v787 = vunpack.c.l.b16 %v193
    %v788 = vunpack.c.h.b16 %v193
    %v789 = vunpack.c.l.b16 %v194
    %v790 = vunpack.c.h.b16 %v194
    %v791 = vunpack.c.l.b16 %v195
    %v792 = vunpack.c.h.b16 %v195
    %v793 = vunpack.c.l.b16 %v196
    %v794 = vunpack.c.h.b16 %v196
    %v795 = vunpack.c.l.b16 %v197
    %v796 = vunpack.c.h.b16 %v197
    %v797 = vunpack.c.l.b16 %v198
    %v798 = vunpack.c.h.b16 %v198
    %v799 = vunpack.c.l.b16 %v199
    %v800 = vunpack.c.h.b16 %v199
    %v801 = vunpack.c.l.b16 %v200
    %v802 = vunpack.c.h.b16 %v200
    %v803 = vunpack.c.l.b16 %v201
    %v804 = vunpack.c.h.b16 %v201
    %v805 = vunpack.c.l.b16 %v202
    %v806 = vunpack.c.h.b16 %v202
    %v807 = vunpack.c.l.b16 %v203
    %v808 = vunpack.c.h.b16 %v203
    %v809 = vunpack.c.l.b16 %v204
    %v810 = vunpack.c.h.b16 %v204
    %v811 = vunpack.c.l.b16 %v205
    %v812 = vunpack.c.h.b16 %v205
    %v813 = vunpack.c.l.b16 %v206
    %v814 = vunpack.c.h.b16 %v206
    %v815 = vunpack.c.l.b16 %v207
    %v816 = vunpack.c.h.b16 %v207
    %v817 = vunpack.c.l.b16 %v208
    %v818 = vunpack.c.h.b16 %v208
    %v819 = vunpack.c.l.b16 %v209
    %v820 = vunpack.c.h.b16 %v209
    %v821 = vunpack.c.l.b16 %v210
    %v822 = vunpack.c.h.b16 %v210
    %v823 = vunpack.c.l.b16 %v211
    %v824 = vunpack.c.h.b16 %v211
    %v825 = vunpack.c.l.b16 %v212
    %v826 = vunpack.c.h.b16 %v212
    %v827 = vunpack.c.l.b16 %v213
    %v828 = vunpack.c.h.b16 %v213
    %v829 = vunpack.c.l.b16 %v214
    %v830 = vunpack.c.h.b16 %v214
    %v831 = vunpack.c.l.b16 %v215
    %v832 = vunpack.c.h.b16 %v215
    %v833 = vunpack.c.l.b16 %v216
    %v834 = vunpack.c.h.b16 %v216
    %v835 = vunpack.c.l.b16 %v217
    %v836 = vunpack.c.h.b16 %v217
    %v837 = vunpack.c.l.b16 %v218
    %v838 = vunpack.c.h.b16 %v218
    %v839 = vunpack.c.l.b16 %v219
    %v840 = vunpack.c.h.b16 %v219
    %v841 = vunpack.c.l.b16 %v220
    %v842 = vunpack.c.h.b16 %v220
    %v843 = vunpack.c.l.b16 %v221
    %v844 = vunpack.c.h.b16 %v221
    %v845 = vunpack.c.l.b16 %v222
    %v846 = vunpack.c.h.b16 %v222
    %v847 = vunpack.c.l.b16 %v223
    %v848 = vunpack.c.h.b16 %v223
    %v849 = vunpack.c.l.b16 %v224
    %v850 = vunpack.c.h.b16 %v224
    %v851 = vunpack.c.l.b16 %v225
    %v852 = vunpack.c.h.b16 %v225
    %v853 = vunpack.c.l.b16 %v226
    %v854 = vunpack.c.h.b16 %v226
    %v855 = vunpack.c.l.b16 %v227
    %v856 = vunpack.c.h.b16 %v227
    %v857 = vunpack.c.l.b16 %v228
    %v858 = vunpack.c.h.b16 %v228
    %v859 = vunpack.c.l.b16 %v229
    %v860 = vunpack.c.h.b16 %v229
    %v861 = vunpack.c.l.b16 %v230
    %v862 = vunpack.c.h.b16 %v230
    %v863 = vunpack.c.l.b16 %v231
    %v864 = vunpack.c.h.b16 %v231
    %v865 = vunpack.c.l.b16 %v232
    %v866 = vunpack.c.h.b16 %v232
    %v867 = vunpack.c.l.b16 %v233
    %v868 = vunpack.c.h.b16 %v233
    %v869 = vunpack.c.l.b16 %v234
    %v870 = vunpack.c.h.b16 %v234
    %v871 = vunpack.c.l.b16 %v235
    %v872 = vunpack.c.h.b16 %v235
    %v873 = vunpack.c.l.b16 %v236
    %v874 = vunpack.c.h.b16 %v236
    %v875 = vunpack.c.l.b16 %v237
    %v876 = vunpack.c.h.b16 %v237
    %v877 = vunpack.c.l.b16 %v238
    %v878 = vunpack.c.h.b16 %v238
    %v879 = vunpack.c.l.b16 %v239
    %v880 = vunpack.c.h.b16 %v239
    %v881 = vunpack.c.l.b16 %v240
    %v882 = vunpack.c.h.b16 %v240
    %v883 = vunpack.c.l.b16 %v241
    %v884 = vunpack.c.h.b16 %v241
    %v885 = vunpack.c.l.b16 %v242
    %v886 = vunpack.c.h.b16 %v242
    %v887 = vunpack.c.l.b16 %v243
    %v888 = vunpack.c.h.b16 %v243
    %v889 = vunpack.c.l.b16 %v244
    %v890 = vunpack.c.h.b16 %v244
    %v891 = vunpack.c.l.b16 %v245
    %v892 = vunpack.c.h.b16 %v245
    %v893 = vunpack.c.l.b16 %v246
    %v894 = vunpack.c.h.b16 %v246
    %v895 = vunpack.c.l.b16 %v247
    %v896 = vunpack.c.h.b16 %v247
    %v897 = vunpack.c.l.b16 %v248
    %v898 = vunpack.c.h.b16 %v248
    %v899 = vunpack.c.l.b16 %v249
    %v900 = vunpack.c.h.b16 %v249
    %v901 = vunpack.c.l.b16 %v250
    %v902 = vunpack.c.h.b16 %v250
    %v903 = vunpack.c.l.b16 %v251
    %v904 = vunpack.c.h.b16 %v251
    %v905 = vunpack.c.l.b16 %v252
    %v906 = vunpack.c.h.b16 %v252
    %v907 = vunpack.c.l.b16 %v253
    %v908 = vunpack.c.h.b16 %v253
    %v909 = vunpack.c.l.b16 %v254
    %v910 = vunpack.c.h.b16 %v254
    %v911 = vunpack.c.l.b16 %v255
    %v912 = vunpack.c.h.b16 %v255
    %v913 = vunpack.c.l.b16 %v256
    %v914 = vunpack.c.h.b16 %v256
    %v915 = vunpack.c.l.b16 %v257
    %v916 = vunpack.c.h.b16 %v257
    %v917 = vunpack.c.l.b16 %v258
    %v918 = vunpack.c.h.b16 %v258
    %v919 = vunpack.c.l.b16 %v259
    %v920 = vunpack.c.h.b16 %v259
    %v921 = vunpack.c.l.b16 %v260
    %v922 = vunpack.c.h.b16 %v260
    %v923 = vunpack.c.l.b16 %v261
    %v924 = vunpack.c.h.b16 %v261
    %v925 = vunpack.c.l.b16 %v262
    %v926 = vunpack.c.h.b16 %v262
    %v927 = vunpack.c.l.b16 %v263
    %v928 = vunpack.c.h.b16 %v263
    %v929 = vunpack.c.l.b16 %v264
    %v930 = vunpack.c.h.b16 %v264
    %v931 = vunpack.c.l.b16 %v265
    %v932 = vunpack.c.h.b16 %v265
    %v933 = vunpack.c.l.b16 %v266
    %v934 = vunpack.c.h.b16 %v266
    %v935 = vunpack.c.l.b16 %v267
    %v936 = vunpack.c.h.b16 %v267
    %v937 = vunpack.c.l.b16 %v268
    %v938 = vunpack.c.h.b16 %v268
    %v939 = vunpack.c.l.b16 %v269
    %v940 = vunpack.c.h.b16 %v269
    %v941 = vunpack.c.l.b16 %v270
    %v942 = vunpack.c.h.b16 %v270
    %v943 = vunpack.c.l.b16 %v271
    %v944 = vunpack.c.h.b16 %v271
    %v945 = vunpack.c.l.b16 %v272
    %v946 = vunpack.c.h.b16 %v272
    %v947 = vunpack.c.l.b16 %v273
    %v948 = vunpack.c.h.b16 %v273
    %v949 = vunpack.c.l.b16 %v274
    %v950 = vunpack.c.h.b16 %v274
    %v951 = vunpack.c.l.b16 %v275
    %v952 = vunpack.c.h.b16 %v275
    %v953 = vunpack.c.l.b16 %v276
    %v954 = vunpack.c.h.b16 %v276
    %v955 = vunpack.c.l.b16 %v277
    %v956 = vunpack.c.h.b16 %v277
    %v957 = vunpack.c.l.b16 %v278
    %v958 = vunpack.c.h.b16 %v278
    %v959 = vunpack.c.l.b16 %v279
    %v960 = vunpack.c.h.b16 %v279
    %v961 = vunpack.c.l.b16 %v280
    %v962 = vunpack.c.h.b16 %v280
    %v963 = vunpack.c.l.b16 %v281
    %v964 = vunpack.c.h.b16 %v281
    %v965 = vunpack.c.l.b16 %v282
    %v966 = vunpack.c.h.b16 %v282
    %v967 = vunpack.c.l.b16 %v283
    %v968 = vunpack.c.h.b16 %v283
    %v969 = vunpack.c.l.b16 %v284
    %v970 = vunpack.c.h.b16 %v284
    %v971 = vunpack.c.l.b16 %v285
    %v972 = vunpack.c.h.b16 %v285
    %v973 = vunpack.c.l.b16 %v286
    %v974 = vunpack.c.h.b16 %v286
    %v975 = vunpack.c.l.b16 %v287
    %v976 = vunpack.c.h.b16 %v287
    %v977 = vunpack.c.l.b16 %v288
    %v978 = vunpack.c.h.b16 %v288
    %v979 = vunpack.c.l.b16 %v289
    %v980 = vunpack.c.h.b16 %v289
    %v981 = vunpack.c.l.b16 %v290
    %v982 = vunpack.c.h.b16 %v290
    %v983 = vunpack.c.l.b16 %v291
    %v984 = vunpack.c.h.b16 %v291
    %v985 = vunpack.c.l.b16 %v292
    %v986 = vunpack.c.h.b16 %v292
    %v987 = vunpack.c.l.b16 %v293
    %v988 = vunpack.c.h.b16 %v293
    %v989 = vunpack.c.l.b16 %v294
    %v990 = vunpack.c.h.b16 %v294
    %v991 = vunpack.c.l.b16 %v295
    %v992 = vunpack.c.h.b16 %v295
    %v993 = vunpack.c.l.b16 %v296
    %v994 = vunpack.c.h.b16 %v296
    %v995 = vunpack.c.l.b16 %v297
    %v996 = vunpack.c.h.b16 %v297
    %v997 = vunpack.c.l.b16 %v298
    %v998 = vunpack.c.h.b16 %v298
    %v999 = vunpack.c.l.b16 %v299
    %v1000 = vunpack.c.h.b16 %v299
    %v1001 = vunpack.c.l.b16 %v300
    %v1002 = vunpack.c.h.b16 %v300
    %v1003 = vunpack.c.l.b16 %v301
    %v1004 = vunpack.c.h.b16 %v301
    %v1005 = vunpack.c.l.b16 %v302
    %v1006 = vunpack.c.h.b16 %v302
    %v1007 = vunpack.c.l.b16 %v303
    %v1008 = vunpack.c.h.b16 %v303
    %v1009 = vunpack.c.l.b16 %v304
    %v1010 = vunpack.c.h.b16 %v304
    %v1011 = vunpack.c.l.b16 %v305
    %v1012 = vunpack.c.h.b16 %v305
    %v1013 = vunpack.c.l.b16 %v306
    %v1014 = vunpack.c.h.b16 %v306
    %v1015 = vunpack.c.l.b16 %v307
    %v1016 = vunpack.c.h.b16 %v307
    %v1017 = vunpack.c.l.b16 %v308
    %v1018 = vunpack.c.h.b16 %v308
    %v1019 = vunpack.c.l.b16 %v309
    %v1020 = vunpack.c.h.b16 %v309
    %v1021 = vunpack.c.l.b16 %v310
    %v1022 = vunpack.c.h.b16 %v310
    %v1023 = vunpack.c.l.b16 %v311
    %v1024 = vunpack.c.h.b16 %v311
    %v1025 = vunpack.c.l.b16 %v312
    %v1026 = vunpack.c.h.b16 %v312
    %v1027 = vunpack.c.l.b16 %v313
    %v1028 = vunpack.c.h.b16 %v313
    %v1029 = vunpack.c.l.b16 %v314
    %v1030 = vunpack.c.h.b16 %v314
    %v1031 = vunpack.c.l.b16 %v315
    %v1032 = vunpack.c.h.b16 %v315
    %v1033 = vunpack.c.l.b16 %v316
    %v1034 = vunpack.c.h.b16 %v316
    %v1035 = vunpack.c.l.b16 %v317
    %v1036 = vunpack.c.h.b16 %v317
    %v1037 = vunpack.c.l.b16 %v318
    %v1038 = vunpack.c.h.b16 %v318
    %v1039 = vunpack.c.l.b16 %v319
    %v1040 = vunpack.c.h.b16 %v319
    %v1041 = vunpack.c.l.b16 %v320
    %v1042 = vunpack.c.h.b16 %v320
    %v1043 = vunpack.c.l.b16 %v321
    %v1044 = vunpack.c.h.b16 %v321
    %v1045 = vunpack.c.l.b16 %v322
    %v1046 = vunpack.c.h.b16 %v322
    %v1047 = vunpack.c.l.b16 %v323
    %v1048 = vunpack.c.h.b16 %v323
    %v1049 = vunpack.c.l.b16 %v324
    %v1050 = vunpack.c.h.b16 %v324
    %v1051 = vunpack.c.l.b16 %v325
    %v1052 = vunpack.c.h.b16 %v325
    %v1053 = vunpack.c.l.b16 %v326
    %v1054 = vunpack.c.h.b16 %v326
    %v1055 = vunpack.c.l.b16 %v327
    %v1056 = vunpack.c.h.b16 %v327
    %v1057 = vunpack.c.l.b16 %v328
    %v1058 = vunpack.c.h.b16 %v328
    %v1059 = vunpack.c.l.b16 %v329
    %v1060 = vunpack.c.h.b16 %v329
    %v1061 = vunpack.c.l.b16 %v330
    %v1062 = vunpack.c.h.b16 %v330
    %v1063 = vunpack.c.l.b16 %v331
    %v1064 = vunpack.c.h.b16 %v331
    %v1065 = vunpack.c.l.b16 %v332
    %v1066 = vunpack.c.h.b16 %v332
    %v1067 = vunpack.c.l.b16 %v333
    %v1068 = vunpack.c.h.b16 %v333
    %v1069 = vunpack.c.l.b16 %v334
    %v1070 = vunpack.c.h.b16 %v334
    %v1071 = vunpack.c.l.b16 %v335
    %v1072 = vunpack.c.h.b16 %v335
    %v1073 = vunpack.c.l.b16 %v336
    %v1074 = vunpack.c.h.b16 %v336
    %v1075 = vunpack.c.l.b16 %v337
    %v1076 = vunpack.c.h.b16 %v337
    %v1077 = vunpack.c.l.b16 %v338
    %v1078 = vunpack.c.h.b16 %v338
    %v1079 = vunpack.c.l.b16 %v339
    %v1080 = vunpack.c.h.b16 %v339
    %v1081 = vunpack.c.l.b16 %v340
    %v1082 = vunpack.c.h.b16 %v340
    %v1083 = vunpack.c.l.b16 %v341
    %v1084 = vunpack.c.h.b16 %v341
    %v1085 = vunpack.c.l.b16 %v342
    %v1086 = vunpack.c.h.b16 %v342
    %v1087 = vunpack.c.l.b16 %v343
    %v1088 = vunpack.c.h.b16 %v343
    %v1089 = vunpack.c.l.b16 %v344
    %v1090 = vunpack.c.h.b16 %v344
    %v1091 = vunpack.c.l.b16 %v345
    %v1092 = vunpack.c.h.b16 %v345
    %v1093 = vunpack.c.l.b16 %v346
    %v1094 = vunpack.c.h.b16 %v346
    %v1095 = vunpack.c.l.b16 %v347
    %v1096 = vunpack.c.h.b16 %v347
    %v1097 = vunpack.c.l.b16 %v348
    %v1098 = vunpack.c.h.b16 %v348
    %v1099 = vunpack.c.l.b16 %v349
    %v1100 = vunpack.c.h.b16 %v349
    %v1101 = vunpack.c.l.b16 %v350
    %v1102 = vunpack.c.h.b16 %v350
    %v1103 = vunpack.c.l.b16 %v351
    %v1104 = vunpack.c.h.b16 %v351
    %v1105 = vunpack.c.l.b16 %v352
    %v1106 = vunpack.c.h.b16 %v352
    %v1107 = vunpack.c.l.b16 %v353
    %v1108 = vunpack.c.h.b16 %v353
    %v1109 = vunpack.c.l.b16 %v354
    %v1110 = vunpack.c.h.b16 %v354
    %v1111 = vunpack.c.l.b16 %v355
    %v1112 = vunpack.c.h.b16 %v355
    %v1113 = vunpack.c.l.b16 %v356
    %v1114 = vunpack.c.h.b16 %v356
    %v1115 = vunpack.c.l.b16 %v357
    %v1116 = vunpack.c.h.b16 %v357
    %v1117 = vunpack.c.l.b16 %v358
    %v1118 = vunpack.c.h.b16 %v358
    %v1119 = vunpack.c.l.b16 %v359
    %v1120 = vunpack.c.h.b16 %v359
    %v1121 = vunpack.c.l.b16 %v360
    %v1122 = vunpack.c.h.b16 %v360
    %v1123 = vunpack.c.l.b16 %v361
    %v1124 = vunpack.c.h.b16 %v361
    %v1125 = vunpack.c.l.b16 %v362
    %v1126 = vunpack.c.h.b16 %v362
    %v1127 = vunpack.c.l.b16 %v363
    %v1128 = vunpack.c.h.b16 %v363
    %v1129 = vunpack.c.l.b16 %v364
    %v1130 = vunpack.c.h.b16 %v364
    %v1131 = vunpack.c.l.b16 %v365
    %v1132 = vunpack.c.h.b16 %v365
    %v1133 = vunpack.c.l.b16 %v366
    %v1134 = vunpack.c.h.b16 %v366
    %v1135 = vunpack.c.l.b16 %v367
    %v1136 = vunpack.c.h.b16 %v367
    %v1137 = vunpack.c.l.b16 %v368
    %v1138 = vunpack.c.h.b16 %v368
    %v1139 = vunpack.c.l.b16 %v369
    %v1140 = vunpack.c.h.b16 %v369
    %v1141 = vunpack.c.l.b16 %v370
    %v1142 = vunpack.c.h.b16 %v370
    %v1143 = vunpack.c.l.b16 %v371
    %v1144 = vunpack.c.h.b16 %v371
    %v1145 = vunpack.c.l.b16 %v372
    %v1146 = vunpack.c.h.b16 %v372
    %v1147 = vunpack.c.l.b16 %v373
    %v1148 = vunpack.c.h.b16 %v373
    %v1149 = vunpack.c.l.b16 %v374
    %v1150 = vunpack.c.h.b16 %v374
    %v1151 = vunpack.c.l.b16 %v375
    %v1152 = vunpack.c.h.b16 %v375
    %v1153 = vunpack.c.l.b16 %v376
    %v1154 = vunpack.c.h.b16 %v376
    %v1155 = vunpack.c.l.b16 %v377
    %v1156 = vunpack.c.h.b16 %v377
    %v1157 = vunpack.c.l.b16 %v378
    %v1158 = vunpack.c.h.b16 %v378
    %v1159 = vunpack.c.l.b16 %v379
    %v1160 = vunpack.c.h.b16 %v379
    %v1161 = vunpack.c.l.b16 %v380
    %v1162 = vunpack.c.h.b16 %v380
    %v1163 = vunpack.c.l.b16 %v381
    %v1164 = vunpack.c.h.b16 %v381
    %v1165 = vunpack.c.l.b16 %v382
    %v1166 = vunpack.c.h.b16 %v382
    %v1167 = vunpack.c.l.b16 %v383
    %v1168 = vunpack.c.h.b16 %v383
    %v1169 = vunpack.c.l.b16 %v384
    %v1170 = vunpack.c.h.b16 %v384
    %v1171 = vpack.c.b16 %v667, %v659
    %v1172 = vpack.c.b16 %v668, %v660
    %v1173 = vpack.c.b16 %v669, %v661
    %v1174 = vpack.c.b16 %v670, %v662
    %v1175 = vpack.c.b16 %v671, %v663
    %v1176 = vpack.c.b16 %v672, %v664
    %v1177 = vpack.c.b16 %v673, %v665
    %v1178 = vpack.c.b16 %v674, %v666
    %v1179 = vpack.c.b16 %v683, %v675
    %v1180 = vpack.c.b16 %v684, %v676
    %v1181 = vpack.c.b16 %v685, %v677
    %v1182 = vpack.c.b16 %v686, %v678
    %v1183 = vpack.c.b16 %v687, %v679
    %v1184 = vpack.c.b16 %v688, %v680
    %v1185 = vpack.c.b16 %v689, %v681
    %v1186 = vpack.c.b16 %v690, %v682
    %v1187 = vpack.c.b16 %v699, %v691
    %v1188 = vpack.c.b16 %v700, %v692
    %v1189 = vpack.c.b16 %v701, %v693
    %v1190 = vpack.c.b16 %v702, %v694
    %v1191 = vpack.c.b16 %v703, %v695
    %v1192 = vpack.c.b16 %v704, %v696
    %v1193 = vpack.c.b16 %v705, %v697
    %v1194 = vpack.c.b16 %v706, %v698
    %v1195 = vpack.c.b16 %v715, %v707
    %v1196 = vpack.c.b16 %v716, %v708
    %v1197 = vpack.c.b16 %v717, %v709
    %v1198 = vpack.c.b16 %v718, %v710
    %v1199 = vpack.c.b16 %v719, %v711
    %v1200 = vpack.c.b16 %v720, %v712
    %v1201 = vpack.c.b16 %v721, %v713
    %v1202 = vpack.c.b16 %v722, %v714
    %v1203 = vpack.c.b16 %v731, %v723
    %v1204 = vpack.c.b16 %v732, %v724
    %v1205 = vpack.c.b16 %v733, %v725
    %v1206 = vpack.c.b16 %v734, %v726
    %v1207 = vpack.c.b16 %v735, %v727
    %v1208 = vpack.c.b16 %v736, %v728
    %v1209 = vpack.c.b16 %v737, %v729
    %v1210 = vpack.c.b16 %v738, %v730
    %v1211 = vpack.c.b16 %v747, %v739
    %v1212 = vpack.c.b16 %v748, %v740
    %v1213 = vpack.c.b16 %v749, %v741
    %v1214 = vpack.c.b16 %v750, %v742
    %v1215 = vpack.c.b16 %v751, %v743
    %v1216 = vpack.c.b16 %v752, %v744
    %v1217 = vpack.c.b16 %v753, %v745
    %v1218 = vpack.c.b16 %v754, %v746
    %v1219 = vpack.c.b16 %v763, %v755
    %v1220 = vpack.c.b16 %v764, %v756
    %v1221 = vpack.c.b16 %v765, %v757
    %v1222 = vpack.c.b16 %v766, %v758
    %v1223 = vpack.c.b16 %v767, %v759
    %v1224 = vpack.c.b16 %v768, %v760
    %v1225 = vpack.c.b16 %v769, %v761
    %v1226 = vpack.c.b16 %v770, %v762
    %v1227 = vpack.c.b16 %v779, %v771
    %v1228 = vpack.c.b16 %v780, %v772
    %v1229 = vpack.c.b16 %v781, %v773
    %v1230 = vpack.c.b16 %v782, %v774
    %v1231 = vpack.c.b16 %v783, %v775
    %v1232 = vpack.c.b16 %v784, %v776
    %v1233 = vpack.c.b16 %v785, %v777
    %v1234 = vpack.c.b16 %v786, %v778
    %v1235 = vpack.c.b16 %v795, %v787
    %v1236 = vpack.c.b16 %v796, %v788
    %v1237 = vpack.c.b16 %v797, %v789
    %v1238 = vpack.c.b16 %v798, %v790
    %v1239 = vpack.c.b16 %v799, %v791
    %v1240 = vpack.c.b16 %v800, %v792
    %v1241 = vpack.c.b16 %v801, %v793
    %v1242 = vpack.c.b16 %v802, %v794
    %v1243 = vpack.c.b16 %v811, %v803
    %v1244 = vpack.c.b16 %v812, %v804
    %v1245 = vpack.c.b16 %v813, %v805
    %v1246 = vpack.c.b16 %v814, %v806
    %v1247 = vpack.c.b16 %v815, %v807
    %v1248 = vpack.c.b16 %v816, %v808
    %v1249 = vpack.c.b16 %v817, %v809
    %v1250 = vpack.c.b16 %v818, %v810
    %v1251 = vpack.c.b16 %v827, %v819
    %v1252 = vpack.c.b16 %v828, %v820
    %v1253 = vpack.c.b16 %v829, %v821
    %v1254 = vpack.c.b16 %v830, %v822
    %v1255 = vpack.c.b16 %v831, %v823
    %v1256 = vpack.c.b16 %v832, %v824
    %v1257 = vpack.c.b16 %v833, %v825
    %v1258 = vpack.c.b16 %v834, %v826
    %v1259 = vpack.c.b16 %v843, %v835
    %v1260 = vpack.c.b16 %v844, %v836
    %v1261 = vpack.c.b16 %v845, %v837
    %v1262 = vpack.c.b16 %v846, %v838
    %v1263 = vpack.c.b16 %v847, %v839
    %v1264 = vpack.c.b16 %v848, %v840
    %v1265 = vpack.c.b16 %v849, %v841
    %v1266 = vpack.c.b16 %v850, %v842
    %v1267 = vpack.c.b16 %v859, %v851
    %v1268 = vpack.c.b16 %v860, %v852
    %v1269 = vpack.c.b16 %v861, %v853
    %v1270 = vpack.c.b16 %v862, %v854
    %v1271 = vpack.c.b16 %v863, %v855
    %v1272 = vpack.c.b16 %v864, %v856
    %v1273 = vpack.c.b16 %v865, %v857
    %v1274 = vpack.c.b16 %v866, %v858
    %v1275 = vpack.c.b16 %v875, %v867
    %v1276 = vpack.c.b16 %v876, %v868
    %v1277 = vpack.c.b16 %v877, %v869
    %v1278 = vpack.c.b16 %v878, %v870
    %v1279 = vpack.c.b16 %v879, %v871
    %v1280 = vpack.c.b16 %v880, %v872
    %v1281 = vpack.c.b16 %v881, %v873
    %v1282 = vpack.c.b16 %v882, %v874
    %v1283 = vpack.c.b16 %v891, %v883
    %v1284 = vpack.c.b16 %v892, %v884
    %v1285 = vpack.c.b16 %v893, %v885
    %v1286 = vpack.c.b16 %v894, %v886
    %v1287 = vpack.c.b16 %v895, %v887
    %v1288 = vpack.c.b16 %v896, %v888
    %v1289 = vpack.c.b16 %v897, %v889
    %v1290 = vpack.c.b16 %v898, %v890
    %v1291 = vpack.c.b16 %v907, %v899
    %v1292 = vpack.c.b16 %v908, %v900
    %v1293 = vpack.c.b16 %v909, %v901
    %v1294 = vpack.c.b16 %v910, %v902
    %v1295 = vpack.c.b16 %v911, %v903
    %v1296 = vpack.c.b16 %v912, %v904
    %v1297 = vpack.c.b16 %v913, %v905
    %v1298 = vpack.c.b16 %v914, %v906
    %v1299 = vpack.c.b16 %v923, %v915
    %v1300 = vpack.c.b16 %v924, %v916
    %v1301 = vpack.c.b16 %v925, %v917
    %v1302 = vpack.c.b16 %v926, %v918
    %v1303 = vpack.c.b16 %v927, %v919
    %v1304 = vpack.c.b16 %v928, %v920
    %v1305 = vpack.c.b16 %v929, %v921
    %v1306 = vpack.c.b16 %v930, %v922
    %v1307 = vpack.c.b16 %v939, %v931
    %v1308 = vpack.c.b16 %v940, %v932
    %v1309 = vpack.c.b16 %v941, %v933
    %v1310 = vpack.c.b16 %v942, %v934
    %v1311 = vpack.c.b16 %v943, %v935
    %v1312 = vpack.c.b16 %v944, %v936
    %v1313 = vpack.c.b16 %v945, %v937
    %v1314 = vpack.c.b16 %v946, %v938
    %v1315 = vpack.c.b16 %v955, %v947
    %v1316 = vpack.c.b16 %v956, %v948
    %v1317 = vpack.c.b16 %v957, %v949
    %v1318 = vpack.c.b16 %v958, %v950
    %v1319 = vpack.c.b16 %v959, %v951
    %v1320 = vpack.c.b16 %v960, %v952
    %v1321 = vpack.c.b16 %v961, %v953
    %v1322 = vpack.c.b16 %v962, %v954
    %v1323 = vpack.c.b16 %v971, %v963
    %v1324 = vpack.c.b16 %v972, %v964
    %v1325 = vpack.c.b16 %v973, %v965
    %v1326 = vpack.c.b16 %v974, %v966
    %v1327 = vpack.c.b16 %v975, %v967
    %v1328 = vpack.c.b16 %v976, %v968
    %v1329 = vpack.c.b16 %v977, %v969
    %v1330 = vpack.c.b16 %v978, %v970
    %v1331 = vpack.c.b16 %v987, %v979
    %v1332 = vpack.c.b16 %v988, %v980
    %v1333 = vpack.c.b16 %v989, %v981
    %v1334 = vpack.c.b16 %v990, %v982
    %v1335 = vpack.c.b16 %v991, %v983
    %v1336 = vpack.c.b16 %v992, %v984
    %v1337 = vpack.c.b16 %v993, %v985
    %v1338 = vpack.c.b16 %v994, %v986
    %v1339 = vpack.c.b16 %v1003, %v995
    %v1340 = vpack.c.b16 %v1004, %v996
    %v1341 = vpack.c.b16 %v1005, %v997
    %v1342 = vpack.c.b16 %v1006, %v998
    %v1343 = vpack.c.b16 %v1007, %v999
    %v1344 = vpack.c.b16 %v1008, %v1000
    %v1345 = vpack.c.b16 %v1009, %v1001
    %v1346 = vpack.c.b16 %v1010, %v1002
    %v1347 = vpack.c.b16 %v1019, %v1011
    %v1348 = vpack.c.b16 %v1020, %v1012
    %v1349 = vpack.c.b16 %v1021, %v1013
    %v1350 = vpack.c.b16 %v1022, %v1014
    %v1351 = vpack.c.b16 %v1023, %v1015
    %v1352 = vpack.c.b16 %v1024, %v1016
    %v1353 = vpack.c.b16 %v1025, %v1017
    %v1354 = vpack.c.b16 %v1026, %v1018
    %v1355 = vpack.c.b16 %v1035, %v1027
    %v1356 = vpack.c.b16 %v1036, %v1028
    %v1357 = vpack.c.b16 %v1037, %v1029
    %v1358 = vpack.c.b16 %v1038, %v1030
    %v1359 = vpack.c.b16 %v1039, %v1031
    %v1360 = vpack.c.b16 %v1040, %v1032
    %v1361 = vpack.c.b16 %v1041, %v1033
    %v1362 = vpack.c.b16 %v1042, %v1034
    %v1363 = vpack.c.b16 %v1051, %v1043
    %v1364 = vpack.c.b16 %v1052, %v1044
    %v1365 = vpack.c.b16 %v1053, %v1045
    %v1366 = vpack.c.b16 %v1054, %v1046
    %v1367 = vpack.c.b16 %v1055, %v1047
    %v1368 = vpack.c.b16 %v1056, %v1048
    %v1369 = vpack.c.b16 %v1057, %v1049
    %v1370 = vpack.c.b16 %v1058, %v1050
    %v1371 = vpack.c.b16 %v1067, %v1059
    %v1372 = vpack.c.b16 %v1068, %v1060
    %v1373 = vpack.c.b16 %v1069, %v1061
    %v1374 = vpack.c.b16 %v1070, %v1062
    %v1375 = vpack.c.b16 %v1071, %v1063
    %v1376 = vpack.c.b16 %v1072, %v1064
    %v1377 = vpack.c.b16 %v1073, %v1065
    %v1378 = vpack.c.b16 %v1074, %v1066
    %v1379 = vpack.c.b16 %v1083, %v1075
    %v1380 = vpack.c.b16 %v1084, %v1076
    %v1381 = vpack.c.b16 %v1085, %v1077
    %v1382 = vpack.c.b16 %v1086, %v1078
    %v1383 = vpack.c.b16 %v1087, %v1079
    %v1384 = vpack.c.b16 %v1088, %v1080
    %v1385 = vpack.c.b16 %v1089, %v1081
    %v1386 = vpack.c.b16 %v1090, %v1082
    %v1387 = vpack.c.b16 %v1099, %v1091
    %v1388 = vpack.c.b16 %v1100, %v1092
    %v1389 = vpack.c.b16 %v1101, %v1093
    %v1390 = vpack.c.b16 %v1102, %v1094
    %v1391 = vpack.c.b16 %v1103, %v1095
    %v1392 = vpack.c.b16 %v1104, %v1096
    %v1393 = vpack.c.b16 %v1105, %v1097
    %v1394 = vpack.c.b16 %v1106, %v1098
    %v1395 = vpack.c.b16 %v1115, %v1107
    %v1396 = vpack.c.b16 %v1116, %v1108
    %v1397 = vpack.c.b16 %v1117, %v1109
    %v1398 = vpack.c.b16 %v1118, %v1110
    %v1399 = vpack.c.b16 %v1119, %v1111
    %v1400 = vpack.c.b16 %v1120, %v1112
    %v1401 = vpack.c.b16 %v1121, %v1113
    %v1402 = vpack.c.b16 %v1122, %v1114
    %v1403 = vpack.c.b16 %v1131, %v1123
    %v1404 = vpack.c.b16 %v1132, %v1124
    %v1405 = vpack.c.b16 %v1133, %v1125
    %v1406 = vpack.c.b16 %v1134, %v1126
    %v1407 = vpack.c.b16 %v1135, %v1127
    %v1408 = vpack.c.b16 %v1136, %v1128
    %v1409 = vpack.c.b16 %v1137, %v1129
    %v1410 = vpack.c.b16 %v1138, %v1130
    %v1411 = vpack.c.b16 %v1147, %v1139
    %v1412 = vpack.c.b16 %v1148, %v1140
    %v1413 = vpack.c.b16 %v1149, %v1141
    %v1414 = vpack.c.b16 %v1150, %v1142
    %v1415 = vpack.c.b16 %v1151, %v1143
    %v1416 = vpack.c.b16 %v1152, %v1144
    %v1417 = vpack.c.b16 %v1153, %v1145
    %v1418 = vpack.c.b16 %v1154, %v1146
    %v1419 = vpack.c.b16 %v1163, %v1155
    %v1420 = vpack.c.b16 %v1164, %v1156
    %v1421 = vpack.c.b16 %v1165, %v1157
    %v1422 = vpack.c.b16 %v1166, %v1158
    %v1423 = vpack.c.b16 %v1167, %v1159
    %v1424 = vpack.c.b16 %v1168, %v1160
    %v1425 = vpack.c.b16 %v1169, %v1161
    %v1426 = vpack.c.b16 %v1170, %v1162
    %1683 = vmatpush.bf16.msra.mxu0 %v1227
    %1684 = vmatpush.bf16.msra.mxu0 %v1219
    %1685 = vmatpush.bf16.msra.mxu0 %v1211
    %1686 = vmatpush.bf16.msra.mxu0 %v1203
    %1687 = vmatpush.bf16.msra.mxu0 %v1195
    %1688 = vmatpush.bf16.msra.mxu0 %v1187
    %1689 = vmatpush.bf16.msra.mxu0 %v1179
    %1690 = vmatpush.bf16.msra.mxu0 %v1171
    %1691 = vmatmul.bf16.gmra.mxu0 %v125
    %v1692 = vpop.f32.mrf.mxu0
    %v1693 = vadd.f32 %v387, %v1692
    %v1694 = vpop.f32.mrf.mxu0
    %v1695 = vadd.f32 %v387, %v1694
    %1696 = vdwg.mxu0
    %1697 = vmatpush.bf16.msra.mxu0 %v1291
    %1698 = vmatpush.bf16.msra.mxu0 %v1283
    %1699 = vmatpush.bf16.msra.mxu0 %v1275
    %1700 = vmatpush.bf16.msra.mxu0 %v1267
    %1701 = vmatpush.bf16.msra.mxu0 %v1259
    %1702 = vmatpush.bf16.msra.mxu0 %v1251
    %1703 = vmatpush.bf16.msra.mxu0 %v1243
    %1704 = vmatpush.bf16.msra.mxu0 %v1235
    %1705 = vmatmul.bf16.gmra.mxu0 %v126
    %v1706 = vpop.f32.mrf.mxu0
    %v1707 = vadd.f32 %v1693, %v1706
    %v1708 = vpop.f32.mrf.mxu0
    %v1709 = vadd.f32 %v1695, %v1708
    %1710 = vdwg.mxu0
    %1711 = vmatpush.bf16.msra.mxu0 %v1355
    %1712 = vmatpush.bf16.msra.mxu0 %v1347
    %1713 = vmatpush.bf16.msra.mxu0 %v1339
    %1714 = vmatpush.bf16.msra.mxu0 %v1331
    %1715 = vmatpush.bf16.msra.mxu0 %v1323
    %1716 = vmatpush.bf16.msra.mxu0 %v1315
    %1717 = vmatpush.bf16.msra.mxu0 %v1307
    %1718 = vmatpush.bf16.msra.mxu0 %v1299
    %1719 = vmatmul.bf16.gmra.mxu0 %v127
    %v1720 = vpop.f32.mrf.mxu0
    %v1721 = vadd.f32 %v1707, %v1720
    %v1722 = vpop.f32.mrf.mxu0
    %v1723 = vadd.f32 %v1709, %v1722
    %1724 = vdwg.mxu0
    %1725 = vmatpush.bf16.msra.mxu0 %v1419
    %1726 = vmatpush.bf16.msra.mxu0 %v1411
    %1727 = vmatpush.bf16.msra.mxu0 %v1403
    %1728 = vmatpush.bf16.msra.mxu0 %v1395
    %1729 = vmatpush.bf16.msra.mxu0 %v1387
    %1730 = vmatpush.bf16.msra.mxu0 %v1379
    %1731 = vmatpush.bf16.msra.mxu0 %v1371
    %1732 = vmatpush.bf16.msra.mxu0 %v1363
    %1733 = vmatmul.bf16.gmra.mxu0 %v128
    %v1734 = vpop.f32.mrf.mxu0
    %v1735 = vadd.f32 %v1721, %v1734
    %v1736 = vpop.f32.mrf.mxu0
    %v1737 = vadd.f32 %v1723, %v1736
    %1738 = vdwg.mxu0
    %1739 = vmatpush.bf16.msra.mxu0 %v1228
    %1740 = vmatpush.bf16.msra.mxu0 %v1220
    %1741 = vmatpush.bf16.msra.mxu0 %v1212
    %1742 = vmatpush.bf16.msra.mxu0 %v1204
    %1743 = vmatpush.bf16.msra.mxu0 %v1196
    %1744 = vmatpush.bf16.msra.mxu0 %v1188
    %1745 = vmatpush.bf16.msra.mxu0 %v1180
    %1746 = vmatpush.bf16.msra.mxu0 %v1172
    %1747 = vmatmul.bf16.gmra.mxu0 %v125
    %v1748 = vpop.f32.mrf.mxu0
    %v1749 = vadd.f32 %v388, %v1748
    %v1750 = vpop.f32.mrf.mxu0
    %v1751 = vadd.f32 %v388, %v1750
    %1752 = vdwg.mxu0
    %1753 = vmatpush.bf16.msra.mxu0 %v1292
    %1754 = vmatpush.bf16.msra.mxu0 %v1284
    %1755 = vmatpush.bf16.msra.mxu0 %v1276
    %1756 = vmatpush.bf16.msra.mxu0 %v1268
    %1757 = vmatpush.bf16.msra.mxu0 %v1260
    %1758 = vmatpush.bf16.msra.mxu0 %v1252
    %1759 = vmatpush.bf16.msra.mxu0 %v1244
    %1760 = vmatpush.bf16.msra.mxu0 %v1236
    %1761 = vmatmul.bf16.gmra.mxu0 %v126
    %v1762 = vpop.f32.mrf.mxu0
    %v1763 = vadd.f32 %v1749, %v1762
    %v1764 = vpop.f32.mrf.mxu0
    %v1765 = vadd.f32 %v1751, %v1764
    %1766 = vdwg.mxu0
    %1767 = vmatpush.bf16.msra.mxu0 %v1356
    %1768 = vmatpush.bf16.msra.mxu0 %v1348
    %1769 = vmatpush.bf16.msra.mxu0 %v1340
    %1770 = vmatpush.bf16.msra.mxu0 %v1332
    %1771 = vmatpush.bf16.msra.mxu0 %v1324
    %1772 = vmatpush.bf16.msra.mxu0 %v1316
    %1773 = vmatpush.bf16.msra.mxu0 %v1308
    %1774 = vmatpush.bf16.msra.mxu0 %v1300
    %1775 = vmatmul.bf16.gmra.mxu0 %v127
    %v1776 = vpop.f32.mrf.mxu0
    %v1777 = vadd.f32 %v1763, %v1776
    %v1778 = vpop.f32.mrf.mxu0
    %v1779 = vadd.f32 %v1765, %v1778
    %1780 = vdwg.mxu0
    %1781 = vmatpush.bf16.msra.mxu0 %v1420
    %1782 = vmatpush.bf16.msra.mxu0 %v1412
    %1783 = vmatpush.bf16.msra.mxu0 %v1404
    %1784 = vmatpush.bf16.msra.mxu0 %v1396
    %1785 = vmatpush.bf16.msra.mxu0 %v1388
    %1786 = vmatpush.bf16.msra.mxu0 %v1380
    %1787 = vmatpush.bf16.msra.mxu0 %v1372
    %1788 = vmatpush.bf16.msra.mxu0 %v1364
    %1789 = vmatmul.bf16.gmra.mxu0 %v128
    %v1790 = vpop.f32.mrf.mxu0
    %v1791 = vadd.f32 %v1777, %v1790
    %v1792 = vpop.f32.mrf.mxu0
    %v1793 = vadd.f32 %v1779, %v1792
    %1794 = vdwg.mxu0
    %1795 = vmatpush.bf16.msra.mxu0 %v1229
    %1796 = vmatpush.bf16.msra.mxu0 %v1221
    %1797 = vmatpush.bf16.msra.mxu0 %v1213
    %1798 = vmatpush.bf16.msra.mxu0 %v1205
    %1799 = vmatpush.bf16.msra.mxu0 %v1197
    %1800 = vmatpush.bf16.msra.mxu0 %v1189
    %1801 = vmatpush.bf16.msra.mxu0 %v1181
    %1802 = vmatpush.bf16.msra.mxu0 %v1173
    %1803 = vmatmul.bf16.gmra.mxu0 %v125
    %v1804 = vpop.f32.mrf.mxu0
    %v1805 = vadd.f32 %v389, %v1804
    %v1806 = vpop.f32.mrf.mxu0
    %v1807 = vadd.f32 %v389, %v1806
    %1808 = vdwg.mxu0
    %1809 = vmatpush.bf16.msra.mxu0 %v1293
    %1810 = vmatpush.bf16.msra.mxu0 %v1285
    %1811 = vmatpush.bf16.msra.mxu0 %v1277
    %1812 = vmatpush.bf16.msra.mxu0 %v1269
    %1813 = vmatpush.bf16.msra.mxu0 %v1261
    %1814 = vmatpush.bf16.msra.mxu0 %v1253
    %1815 = vmatpush.bf16.msra.mxu0 %v1245
    %1816 = vmatpush.bf16.msra.mxu0 %v1237
    %1817 = vmatmul.bf16.gmra.mxu0 %v126
    %v1818 = vpop.f32.mrf.mxu0
    %v1819 = vadd.f32 %v1805, %v1818
    %v1820 = vpop.f32.mrf.mxu0
    %v1821 = vadd.f32 %v1807, %v1820
    %1822 = vdwg.mxu0
    %1823 = vmatpush.bf16.msra.mxu0 %v1357
    %1824 = vmatpush.bf16.msra.mxu0 %v1349
    %1825 = vmatpush.bf16.msra.mxu0 %v1341
    %1826 = vmatpush.bf16.msra.mxu0 %v1333
    %1827 = vmatpush.bf16.msra.mxu0 %v1325
    %1828 = vmatpush.bf16.msra.mxu0 %v1317
    %1829 = vmatpush.bf16.msra.mxu0 %v1309
    %1830 = vmatpush.bf16.msra.mxu0 %v1301
    %1831 = vmatmul.bf16.gmra.mxu0 %v127
    %v1832 = vpop.f32.mrf.mxu0
    %v1833 = vadd.f32 %v1819, %v1832
    %v1834 = vpop.f32.mrf.mxu0
    %v1835 = vadd.f32 %v1821, %v1834
    %1836 = vdwg.mxu0
    %1837 = vmatpush.bf16.msra.mxu0 %v1421
    %1838 = vmatpush.bf16.msra.mxu0 %v1413
    %1839 = vmatpush.bf16.msra.mxu0 %v1405
    %1840 = vmatpush.bf16.msra.mxu0 %v1397
    %1841 = vmatpush.bf16.msra.mxu0 %v1389
    %1842 = vmatpush.bf16.msra.mxu0 %v1381
    %1843 = vmatpush.bf16.msra.mxu0 %v1373
    %1844 = vmatpush.bf16.msra.mxu0 %v1365
    %1845 = vmatmul.bf16.gmra.mxu0 %v128
    %v1846 = vpop.f32.mrf.mxu0
    %v1847 = vadd.f32 %v1833, %v1846
    %v1848 = vpop.f32.mrf.mxu0
    %v1849 = vadd.f32 %v1835, %v1848
    %1850 = vdwg.mxu0
    %1851 = vmatpush.bf16.msra.mxu0 %v1230
    %1852 = vmatpush.bf16.msra.mxu0 %v1222
    %1853 = vmatpush.bf16.msra.mxu0 %v1214
    %1854 = vmatpush.bf16.msra.mxu0 %v1206
    %1855 = vmatpush.bf16.msra.mxu0 %v1198
    %1856 = vmatpush.bf16.msra.mxu0 %v1190
    %1857 = vmatpush.bf16.msra.mxu0 %v1182
    %1858 = vmatpush.bf16.msra.mxu0 %v1174
    %1859 = vmatmul.bf16.gmra.mxu0 %v125
    %v1860 = vpop.f32.mrf.mxu0
    %v1861 = vadd.f32 %v390, %v1860
    %v1862 = vpop.f32.mrf.mxu0
    %v1863 = vadd.f32 %v390, %v1862
    %1864 = vdwg.mxu0
    %1865 = vmatpush.bf16.msra.mxu0 %v1294
    %1866 = vmatpush.bf16.msra.mxu0 %v1286
    %1867 = vmatpush.bf16.msra.mxu0 %v1278
    %1868 = vmatpush.bf16.msra.mxu0 %v1270
    %1869 = vmatpush.bf16.msra.mxu0 %v1262
    %1870 = vmatpush.bf16.msra.mxu0 %v1254
    %1871 = vmatpush.bf16.msra.mxu0 %v1246
    %1872 = vmatpush.bf16.msra.mxu0 %v1238
    %1873 = vmatmul.bf16.gmra.mxu0 %v126
    %v1874 = vpop.f32.mrf.mxu0
    %v1875 = vadd.f32 %v1861, %v1874
    %v1876 = vpop.f32.mrf.mxu0
    %v1877 = vadd.f32 %v1863, %v1876
    %1878 = vdwg.mxu0
    %1879 = vmatpush.bf16.msra.mxu0 %v1358
    %1880 = vmatpush.bf16.msra.mxu0 %v1350
    %1881 = vmatpush.bf16.msra.mxu0 %v1342
    %1882 = vmatpush.bf16.msra.mxu0 %v1334
    %1883 = vmatpush.bf16.msra.mxu0 %v1326
    %1884 = vmatpush.bf16.msra.mxu0 %v1318
    %1885 = vmatpush.bf16.msra.mxu0 %v1310
    %1886 = vmatpush.bf16.msra.mxu0 %v1302
    %1887 = vmatmul.bf16.gmra.mxu0 %v127
    %v1888 = vpop.f32.mrf.mxu0
    %v1889 = vadd.f32 %v1875, %v1888
    %v1890 = vpop.f32.mrf.mxu0
    %v1891 = vadd.f32 %v1877, %v1890
    %1892 = vdwg.mxu0
    %1893 = vmatpush.bf16.msra.mxu0 %v1422
    %1894 = vmatpush.bf16.msra.mxu0 %v1414
    %1895 = vmatpush.bf16.msra.mxu0 %v1406
    %1896 = vmatpush.bf16.msra.mxu0 %v1398
    %1897 = vmatpush.bf16.msra.mxu0 %v1390
    %1898 = vmatpush.bf16.msra.mxu0 %v1382
    %1899 = vmatpush.bf16.msra.mxu0 %v1374
    %1900 = vmatpush.bf16.msra.mxu0 %v1366
    %1901 = vmatmul.bf16.gmra.mxu0 %v128
    %v1902 = vpop.f32.mrf.mxu0
    %v1903 = vadd.f32 %v1889, %v1902
    %v1904 = vpop.f32.mrf.mxu0
    %v1905 = vadd.f32 %v1891, %v1904
    %1906 = vdwg.mxu0
    %1907 = vmatpush.bf16.msra.mxu0 %v1231
    %1908 = vmatpush.bf16.msra.mxu0 %v1223
    %1909 = vmatpush.bf16.msra.mxu0 %v1215
    %1910 = vmatpush.bf16.msra.mxu0 %v1207
    %1911 = vmatpush.bf16.msra.mxu0 %v1199
    %1912 = vmatpush.bf16.msra.mxu0 %v1191
    %1913 = vmatpush.bf16.msra.mxu0 %v1183
    %1914 = vmatpush.bf16.msra.mxu0 %v1175
    %1915 = vmatmul.bf16.gmra.mxu0 %v125
    %v1916 = vpop.f32.mrf.mxu0
    %v1917 = vadd.f32 %v391, %v1916
    %v1918 = vpop.f32.mrf.mxu0
    %v1919 = vadd.f32 %v391, %v1918
    %1920 = vdwg.mxu0
    %1921 = vmatpush.bf16.msra.mxu0 %v1295
    %1922 = vmatpush.bf16.msra.mxu0 %v1287
    %1923 = vmatpush.bf16.msra.mxu0 %v1279
    %1924 = vmatpush.bf16.msra.mxu0 %v1271
    %1925 = vmatpush.bf16.msra.mxu0 %v1263
    %1926 = vmatpush.bf16.msra.mxu0 %v1255
    %1927 = vmatpush.bf16.msra.mxu0 %v1247
    %1928 = vmatpush.bf16.msra.mxu0 %v1239
    %1929 = vmatmul.bf16.gmra.mxu0 %v126
    %v1930 = vpop.f32.mrf.mxu0
    %v1931 = vadd.f32 %v1917, %v1930
    %v1932 = vpop.f32.mrf.mxu0
    %v1933 = vadd.f32 %v1919, %v1932
    %1934 = vdwg.mxu0
    %1935 = vmatpush.bf16.msra.mxu0 %v1359
    %1936 = vmatpush.bf16.msra.mxu0 %v1351
    %1937 = vmatpush.bf16.msra.mxu0 %v1343
    %1938 = vmatpush.bf16.msra.mxu0 %v1335
    %1939 = vmatpush.bf16.msra.mxu0 %v1327
    %1940 = vmatpush.bf16.msra.mxu0 %v1319
    %1941 = vmatpush.bf16.msra.mxu0 %v1311
    %1942 = vmatpush.bf16.msra.mxu0 %v1303
    %1943 = vmatmul.bf16.gmra.mxu0 %v127
    %v1944 = vpop.f32.mrf.mxu0
    %v1945 = vadd.f32 %v1931, %v1944
    %v1946 = vpop.f32.mrf.mxu0
    %v1947 = vadd.f32 %v1933, %v1946
    %1948 = vdwg.mxu0
    %1949 = vmatpush.bf16.msra.mxu0 %v1423
    %1950 = vmatpush.bf16.msra.mxu0 %v1415
    %1951 = vmatpush.bf16.msra.mxu0 %v1407
    %1952 = vmatpush.bf16.msra.mxu0 %v1399
    %1953 = vmatpush.bf16.msra.mxu0 %v1391
    %1954 = vmatpush.bf16.msra.mxu0 %v1383
    %1955 = vmatpush.bf16.msra.mxu0 %v1375
    %1956 = vmatpush.bf16.msra.mxu0 %v1367
    %1957 = vmatmul.bf16.gmra.mxu0 %v128
    %v1958 = vpop.f32.mrf.mxu0
    %v1959 = vadd.f32 %v1945, %v1958
    %v1960 = vpop.f32.mrf.mxu0
    %v1961 = vadd.f32 %v1947, %v1960
    %1962 = vdwg.mxu0
    %1963 = vmatpush.bf16.msra.mxu0 %v1232
    %1964 = vmatpush.bf16.msra.mxu0 %v1224
    %1965 = vmatpush.bf16.msra.mxu0 %v1216
    %1966 = vmatpush.bf16.msra.mxu0 %v1208
    %1967 = vmatpush.bf16.msra.mxu0 %v1200
    %1968 = vmatpush.bf16.msra.mxu0 %v1192
    %1969 = vmatpush.bf16.msra.mxu0 %v1184
    %1970 = vmatpush.bf16.msra.mxu0 %v1176
    %1971 = vmatmul.bf16.gmra.mxu0 %v125
    %v1972 = vpop.f32.mrf.mxu0
    %v1973 = vadd.f32 %v392, %v1972
    %v1974 = vpop.f32.mrf.mxu0
    %v1975 = vadd.f32 %v392, %v1974
    %1976 = vdwg.mxu0
    %1977 = vmatpush.bf16.msra.mxu0 %v1296
    %1978 = vmatpush.bf16.msra.mxu0 %v1288
    %1979 = vmatpush.bf16.msra.mxu0 %v1280
    %1980 = vmatpush.bf16.msra.mxu0 %v1272
    %1981 = vmatpush.bf16.msra.mxu0 %v1264
    %1982 = vmatpush.bf16.msra.mxu0 %v1256
    %1983 = vmatpush.bf16.msra.mxu0 %v1248
    %1984 = vmatpush.bf16.msra.mxu0 %v1240
    %1985 = vmatmul.bf16.gmra.mxu0 %v126
    %v1986 = vpop.f32.mrf.mxu0
    %v1987 = vadd.f32 %v1973, %v1986
    %v1988 = vpop.f32.mrf.mxu0
    %v1989 = vadd.f32 %v1975, %v1988
    %1990 = vdwg.mxu0
    %1991 = vmatpush.bf16.msra.mxu0 %v1360
    %1992 = vmatpush.bf16.msra.mxu0 %v1352
    %1993 = vmatpush.bf16.msra.mxu0 %v1344
    %1994 = vmatpush.bf16.msra.mxu0 %v1336
    %1995 = vmatpush.bf16.msra.mxu0 %v1328
    %1996 = vmatpush.bf16.msra.mxu0 %v1320
    %1997 = vmatpush.bf16.msra.mxu0 %v1312
    %1998 = vmatpush.bf16.msra.mxu0 %v1304
    %1999 = vmatmul.bf16.gmra.mxu0 %v127
    %v2000 = vpop.f32.mrf.mxu0
    %v2001 = vadd.f32 %v1987, %v2000
    %v2002 = vpop.f32.mrf.mxu0
    %v2003 = vadd.f32 %v1989, %v2002
    %2004 = vdwg.mxu0
    %2005 = vmatpush.bf16.msra.mxu0 %v1424
    %2006 = vmatpush.bf16.msra.mxu0 %v1416
    %2007 = vmatpush.bf16.msra.mxu0 %v1408
    %2008 = vmatpush.bf16.msra.mxu0 %v1400
    %2009 = vmatpush.bf16.msra.mxu0 %v1392
    %2010 = vmatpush.bf16.msra.mxu0 %v1384
    %2011 = vmatpush.bf16.msra.mxu0 %v1376
    %2012 = vmatpush.bf16.msra.mxu0 %v1368
    %2013 = vmatmul.bf16.gmra.mxu0 %v128
    %v2014 = vpop.f32.mrf.mxu0
    %v2015 = vadd.f32 %v2001, %v2014
    %v2016 = vpop.f32.mrf.mxu0
    %v2017 = vadd.f32 %v2003, %v2016
    %2018 = vdwg.mxu0
    %2019 = vmatpush.bf16.msra.mxu0 %v1233
    %2020 = vmatpush.bf16.msra.mxu0 %v1225
    %2021 = vmatpush.bf16.msra.mxu0 %v1217
    %2022 = vmatpush.bf16.msra.mxu0 %v1209
    %2023 = vmatpush.bf16.msra.mxu0 %v1201
    %2024 = vmatpush.bf16.msra.mxu0 %v1193
    %2025 = vmatpush.bf16.msra.mxu0 %v1185
    %2026 = vmatpush.bf16.msra.mxu0 %v1177
    %2027 = vmatmul.bf16.gmra.mxu0 %v125
    %v2028 = vpop.f32.mrf.mxu0
    %v2029 = vadd.f32 %v393, %v2028
    %v2030 = vpop.f32.mrf.mxu0
    %v2031 = vadd.f32 %v393, %v2030
    %2032 = vdwg.mxu0
    %2033 = vmatpush.bf16.msra.mxu0 %v1297
    %2034 = vmatpush.bf16.msra.mxu0 %v1289
    %2035 = vmatpush.bf16.msra.mxu0 %v1281
    %2036 = vmatpush.bf16.msra.mxu0 %v1273
    %2037 = vmatpush.bf16.msra.mxu0 %v1265
    %2038 = vmatpush.bf16.msra.mxu0 %v1257
    %2039 = vmatpush.bf16.msra.mxu0 %v1249
    %2040 = vmatpush.bf16.msra.mxu0 %v1241
    %2041 = vmatmul.bf16.gmra.mxu0 %v126
    %v2042 = vpop.f32.mrf.mxu0
    %v2043 = vadd.f32 %v2029, %v2042
    %v2044 = vpop.f32.mrf.mxu0
    %v2045 = vadd.f32 %v2031, %v2044
    %2046 = vdwg.mxu0
    %2047 = vmatpush.bf16.msra.mxu0 %v1361
    %2048 = vmatpush.bf16.msra.mxu0 %v1353
    %2049 = vmatpush.bf16.msra.mxu0 %v1345
    %2050 = vmatpush.bf16.msra.mxu0 %v1337
    %2051 = vmatpush.bf16.msra.mxu0 %v1329
    %2052 = vmatpush.bf16.msra.mxu0 %v1321
    %2053 = vmatpush.bf16.msra.mxu0 %v1313
    %2054 = vmatpush.bf16.msra.mxu0 %v1305
    %2055 = vmatmul.bf16.gmra.mxu0 %v127
    %v2056 = vpop.f32.mrf.mxu0
    %v2057 = vadd.f32 %v2043, %v2056
    %v2058 = vpop.f32.mrf.mxu0
    %v2059 = vadd.f32 %v2045, %v2058
    %2060 = vdwg.mxu0
    %2061 = vmatpush.bf16.msra.mxu0 %v1425
    %2062 = vmatpush.bf16.msra.mxu0 %v1417
    %2063 = vmatpush.bf16.msra.mxu0 %v1409
    %2064 = vmatpush.bf16.msra.mxu0 %v1401
    %2065 = vmatpush.bf16.msra.mxu0 %v1393
    %2066 = vmatpush.bf16.msra.mxu0 %v1385
    %2067 = vmatpush.bf16.msra.mxu0 %v1377
    %2068 = vmatpush.bf16.msra.mxu0 %v1369
    %2069 = vmatmul.bf16.gmra.mxu0 %v128
    %v2070 = vpop.f32.mrf.mxu0
    %v2071 = vadd.f32 %v2057, %v2070
    %v2072 = vpop.f32.mrf.mxu0
    %v2073 = vadd.f32 %v2059, %v2072
    %2074 = vdwg.mxu0
    %2075 = vmatpush.bf16.msra.mxu0 %v1234
    %2076 = vmatpush.bf16.msra.mxu0 %v1226
    %2077 = vmatpush.bf16.msra.mxu0 %v1218
    %2078 = vmatpush.bf16.msra.mxu0 %v1210
    %2079 = vmatpush.bf16.msra.mxu0 %v1202
    %2080 = vmatpush.bf16.msra.mxu0 %v1194
    %2081 = vmatpush.bf16.msra.mxu0 %v1186
    %2082 = vmatpush.bf16.msra.mxu0 %v1178
    %2083 = vmatmul.bf16.gmra.mxu0 %v125
    %v2084 = vpop.f32.mrf.mxu0
    %v2085 = vadd.f32 %v394, %v2084
    %v2086 = vpop.f32.mrf.mxu0
    %v2087 = vadd.f32 %v394, %v2086
    %2088 = vdwg.mxu0
    %2089 = vmatpush.bf16.msra.mxu0 %v1298
    %2090 = vmatpush.bf16.msra.mxu0 %v1290
    %2091 = vmatpush.bf16.msra.mxu0 %v1282
    %2092 = vmatpush.bf16.msra.mxu0 %v1274
    %2093 = vmatpush.bf16.msra.mxu0 %v1266
    %2094 = vmatpush.bf16.msra.mxu0 %v1258
    %2095 = vmatpush.bf16.msra.mxu0 %v1250
    %2096 = vmatpush.bf16.msra.mxu0 %v1242
    %2097 = vmatmul.bf16.gmra.mxu0 %v126
    %v2098 = vpop.f32.mrf.mxu0
    %v2099 = vadd.f32 %v2085, %v2098
    %v2100 = vpop.f32.mrf.mxu0
    %v2101 = vadd.f32 %v2087, %v2100
    %2102 = vdwg.mxu0
    %2103 = vmatpush.bf16.msra.mxu0 %v1362
    %2104 = vmatpush.bf16.msra.mxu0 %v1354
    %2105 = vmatpush.bf16.msra.mxu0 %v1346
    %2106 = vmatpush.bf16.msra.mxu0 %v1338
    %2107 = vmatpush.bf16.msra.mxu0 %v1330
    %2108 = vmatpush.bf16.msra.mxu0 %v1322
    %2109 = vmatpush.bf16.msra.mxu0 %v1314
    %2110 = vmatpush.bf16.msra.mxu0 %v1306
    %2111 = vmatmul.bf16.gmra.mxu0 %v127
    %v2112 = vpop.f32.mrf.mxu0
    %v2113 = vadd.f32 %v2099, %v2112
    %v2114 = vpop.f32.mrf.mxu0
    %v2115 = vadd.f32 %v2101, %v2114
    %2116 = vdwg.mxu0
    %2117 = vmatpush.bf16.msra.mxu0 %v1426
    %2118 = vmatpush.bf16.msra.mxu0 %v1418
    %2119 = vmatpush.bf16.msra.mxu0 %v1410
    %2120 = vmatpush.bf16.msra.mxu0 %v1402
    %2121 = vmatpush.bf16.msra.mxu0 %v1394
    %2122 = vmatpush.bf16.msra.mxu0 %v1386
    %2123 = vmatpush.bf16.msra.mxu0 %v1378
    %2124 = vmatpush.bf16.msra.mxu0 %v1370
    %2125 = vmatmul.bf16.gmra.mxu0 %v128
    %v2126 = vpop.f32.mrf.mxu0
    %v2127 = vadd.f32 %v2113, %v2126
    %v2128 = vpop.f32.mrf.mxu0
    %v2129 = vadd.f32 %v2115, %v2128
    %2130 = vdwg.mxu0
    %vm2131 = vcmp.gt.f32.partialorder %v1735, 0.0
    %vm2132 = vcmp.gt.f32.partialorder %v1791, 0.0
    %vm2133 = vcmp.gt.f32.partialorder %v1847, 0.0
    %vm2134 = vcmp.gt.f32.partialorder %v1903, 0.0
    %vm2135 = vcmp.gt.f32.partialorder %v1959, 0.0
    %vm2136 = vcmp.gt.f32.partialorder %v2015, 0.0
    %vm2137 = vcmp.gt.f32.partialorder %v2071, 0.0
    %vm2138 = vcmp.gt.f32.partialorder %v2127, 0.0
    %vm2139 = vcmp.gt.f32.partialorder %v1737, 0.0
    %vm2140 = vcmp.gt.f32.partialorder %v1793, 0.0
    %vm2141 = vcmp.gt.f32.partialorder %v1849, 0.0
    %vm2142 = vcmp.gt.f32.partialorder %v1905, 0.0
    %vm2143 = vcmp.gt.f32.partialorder %v1961, 0.0
    %vm2144 = vcmp.gt.f32.partialorder %v2017, 0.0
    %vm2145 = vcmp.gt.f32.partialorder %v2073, 0.0
    %vm2146 = vcmp.gt.f32.partialorder %v2129, 0.0
    %v2147 = vmul.f32 %v1735, 0.2
    %v2148 = vmul.f32 %v1791, 0.2
    %v2149 = vmul.f32 %v1847, 0.2
    %v2150 = vmul.f32 %v1903, 0.2
    %v2151 = vmul.f32 %v1959, 0.2
    %v2152 = vmul.f32 %v2015, 0.2
    %v2153 = vmul.f32 %v2071, 0.2
    %v2154 = vmul.f32 %v2127, 0.2
    %v2155 = vmul.f32 %v1737, 0.2
    %v2156 = vmul.f32 %v1793, 0.2
    %v2157 = vmul.f32 %v1849, 0.2
    %v2158 = vmul.f32 %v1905, 0.2
    %v2159 = vmul.f32 %v1961, 0.2
    %v2160 = vmul.f32 %v2017, 0.2
    %v2161 = vmul.f32 %v2073, 0.2
    %v2162 = vmul.f32 %v2129, 0.2
    %v2163 = vsel %vm2131, %v1735, %v2147
    %v2164 = vsel %vm2132, %v1791, %v2148
    %v2165 = vsel %vm2133, %v1847, %v2149
    %v2166 = vsel %vm2134, %v1903, %v2150
    %v2167 = vsel %vm2135, %v1959, %v2151
    %v2168 = vsel %vm2136, %v2015, %v2152
    %v2169 = vsel %vm2137, %v2071, %v2153
    %v2170 = vsel %vm2138, %v2127, %v2154
    %v2171 = vsel %vm2139, %v1737, %v2155
    %v2172 = vsel %vm2140, %v1793, %v2156
    %v2173 = vsel %vm2141, %v1849, %v2157
    %v2174 = vsel %vm2142, %v1905, %v2158
    %v2175 = vsel %vm2143, %v1961, %v2159
    %v2176 = vsel %vm2144, %v2017, %v2160
    %v2177 = vsel %vm2145, %v2073, %v2161
    %v2178 = vsel %vm2146, %v2129, %v2162
    %v2179 = vpack.c.bf16 %v2171, %v2163
    %v2180 = vpack.c.bf16 %v2172, %v2164
    %v2181 = vpack.c.bf16 %v2173, %v2165
    %v2182 = vpack.c.bf16 %v2174, %v2166
    %v2183 = vpack.c.bf16 %v2175, %v2167
    %v2184 = vpack.c.bf16 %v2176, %v2168
    %v2185 = vpack.c.bf16 %v2177, %v2169
    %v2186 = vpack.c.bf16 %v2178, %v2170
    %v2187 = vld [vmem:[#allocation8] sm:$0xff]
    %v2188 = vld [vmem:[#allocation8 + $0x8] sm:$0xff]
    %v2189 = vld [vmem:[#allocation8 + $0x10] sm:$0xff]
    %v2190 = vld [vmem:[#allocation8 + $0x18] sm:$0xff]
    %v2191 = vld [vmem:[#allocation8 + $0x20] sm:$0xff]
    %v2192 = vld [vmem:[#allocation8 + $0x28] sm:$0xff]
    %v2193 = vld [vmem:[#allocation8 + $0x30] sm:$0xff]
    %v2194 = vld [vmem:[#allocation8 + $0x38] sm:$0xff]
    %v2195 = vld [vmem:[#allocation8 + $0x40] sm:$0xff]
    %v2196 = vld [vmem:[#allocation8 + $0x48] sm:$0xff]
    %v2197 = vld [vmem:[#allocation8 + $0x50] sm:$0xff]
    %v2198 = vld [vmem:[#allocation8 + $0x58] sm:$0xff]
    %v2199 = vld [vmem:[#allocation8 + $0x60] sm:$0xff]
    %v2200 = vld [vmem:[#allocation8 + $0x68] sm:$0xff]
    %v2201 = vld [vmem:[#allocation8 + $0x70] sm:$0xff]
    %v2202 = vld [vmem:[#allocation8 + $0x78] sm:$0xff]
    %v2203 = vld [vmem:[#allocation8 + $0x80] sm:$0xff]
    %v2204 = vld [vmem:[#allocation8 + $0x88] sm:$0xff]
    %v2205 = vld [vmem:[#allocation8 + $0x90] sm:$0xff]
    %v2206 = vld [vmem:[#allocation8 + $0x98] sm:$0xff]
    %v2207 = vld [vmem:[#allocation8 + $0xa0] sm:$0xff]
    %v2208 = vld [vmem:[#allocation8 + $0xa8] sm:$0xff]
    %v2209 = vld [vmem:[#allocation8 + $0xb0] sm:$0xff]
    %v2210 = vld [vmem:[#allocation8 + $0xb8] sm:$0xff]
    %v2211 = vld [vmem:[#allocation8 + $0xc0] sm:$0xff]
    %v2212 = vld [vmem:[#allocation8 + $0xc8] sm:$0xff]
    %v2213 = vld [vmem:[#allocation8 + $0xd0] sm:$0xff]
    %v2214 = vld [vmem:[#allocation8 + $0xd8] sm:$0xff]
    %v2215 = vld [vmem:[#allocation8 + $0xe0] sm:$0xff]
    %v2216 = vld [vmem:[#allocation8 + $0xe8] sm:$0xff]
    %v2217 = vld [vmem:[#allocation8 + $0xf0] sm:$0xff]
    %v2218 = vld [vmem:[#allocation8 + $0xf8] sm:$0xff]
    %v2219 = vld [vmem:[#allocation8 + $0x100] sm:$0xff]
    %v2220 = vld [vmem:[#allocation8 + $0x108] sm:$0xff]
    %v2221 = vld [vmem:[#allocation8 + $0x110] sm:$0xff]
    %v2222 = vld [vmem:[#allocation8 + $0x118] sm:$0xff]
    %v2223 = vld [vmem:[#allocation8 + $0x120] sm:$0xff]
    %v2224 = vld [vmem:[#allocation8 + $0x128] sm:$0xff]
    %v2225 = vld [vmem:[#allocation8 + $0x130] sm:$0xff]
    %v2226 = vld [vmem:[#allocation8 + $0x138] sm:$0xff]
    %v2227 = vld [vmem:[#allocation8 + $0x140] sm:$0xff]
    %v2228 = vld [vmem:[#allocation8 + $0x148] sm:$0xff]
    %v2229 = vld [vmem:[#allocation8 + $0x150] sm:$0xff]
    %v2230 = vld [vmem:[#allocation8 + $0x158] sm:$0xff]
    %v2231 = vld [vmem:[#allocation8 + $0x160] sm:$0xff]
    %v2232 = vld [vmem:[#allocation8 + $0x168] sm:$0xff]
    %v2233 = vld [vmem:[#allocation8 + $0x170] sm:$0xff]
    %v2234 = vld [vmem:[#allocation8 + $0x178] sm:$0xff]
    %v2235 = vld [vmem:[#allocation8 + $0x180] sm:$0xff]
    %v2236 = vld [vmem:[#allocation8 + $0x188] sm:$0xff]
    %v2237 = vld [vmem:[#allocation8 + $0x190] sm:$0xff]
    %v2238 = vld [vmem:[#allocation8 + $0x198] sm:$0xff]
    %v2239 = vld [vmem:[#allocation8 + $0x1a0] sm:$0xff]
    %v2240 = vld [vmem:[#allocation8 + $0x1a8] sm:$0xff]
    %v2241 = vld [vmem:[#allocation8 + $0x1b0] sm:$0xff]
    %v2242 = vld [vmem:[#allocation8 + $0x1b8] sm:$0xff]
    %v2243 = vld [vmem:[#allocation8 + $0x1c0] sm:$0xff]
    %v2244 = vld [vmem:[#allocation8 + $0x1c8] sm:$0xff]
    %v2245 = vld [vmem:[#allocation8 + $0x1d0] sm:$0xff]
    %v2246 = vld [vmem:[#allocation8 + $0x1d8] sm:$0xff]
    %v2247 = vld [vmem:[#allocation8 + $0x1e0] sm:$0xff]
    %v2248 = vld [vmem:[#allocation8 + $0x1e8] sm:$0xff]
    %v2249 = vld [vmem:[#allocation8 + $0x1f0] sm:$0xff]
    %v2250 = vld [vmem:[#allocation8 + $0x1f8] sm:$0xff]
    %v2251 = vld [vmem:[#allocation8 + $0x200] sm:$0xff]
    %v2252 = vld [vmem:[#allocation8 + $0x208] sm:$0xff]
    %v2253 = vld [vmem:[#allocation8 + $0x210] sm:$0xff]
    %v2254 = vld [vmem:[#allocation8 + $0x218] sm:$0xff]
    %v2255 = vld [vmem:[#allocation8 + $0x220] sm:$0xff]
    %v2256 = vld [vmem:[#allocation8 + $0x228] sm:$0xff]
    %v2257 = vld [vmem:[#allocation8 + $0x230] sm:$0xff]
    %v2258 = vld [vmem:[#allocation8 + $0x238] sm:$0xff]
    %v2259 = vld [vmem:[#allocation8 + $0x240] sm:$0xff]
    %v2260 = vld [vmem:[#allocation8 + $0x248] sm:$0xff]
    %v2261 = vld [vmem:[#allocation8 + $0x250] sm:$0xff]
    %v2262 = vld [vmem:[#allocation8 + $0x258] sm:$0xff]
    %v2263 = vld [vmem:[#allocation8 + $0x260] sm:$0xff]
    %v2264 = vld [vmem:[#allocation8 + $0x268] sm:$0xff]
    %v2265 = vld [vmem:[#allocation8 + $0x270] sm:$0xff]
    %v2266 = vld [vmem:[#allocation8 + $0x278] sm:$0xff]
    %v2267 = vld [vmem:[#allocation8 + $0x280] sm:$0xff]
    %v2268 = vld [vmem:[#allocation8 + $0x288] sm:$0xff]
    %v2269 = vld [vmem:[#allocation8 + $0x290] sm:$0xff]
    %v2270 = vld [vmem:[#allocation8 + $0x298] sm:$0xff]
    %v2271 = vld [vmem:[#allocation8 + $0x2a0] sm:$0xff]
    %v2272 = vld [vmem:[#allocation8 + $0x2a8] sm:$0xff]
    %v2273 = vld [vmem:[#allocation8 + $0x2b0] sm:$0xff]
    %v2274 = vld [vmem:[#allocation8 + $0x2b8] sm:$0xff]
    %v2275 = vld [vmem:[#allocation8 + $0x2c0] sm:$0xff]
    %v2276 = vld [vmem:[#allocation8 + $0x2c8] sm:$0xff]
    %v2277 = vld [vmem:[#allocation8 + $0x2d0] sm:$0xff]
    %v2278 = vld [vmem:[#allocation8 + $0x2d8] sm:$0xff]
    %v2279 = vld [vmem:[#allocation8 + $0x2e0] sm:$0xff]
    %v2280 = vld [vmem:[#allocation8 + $0x2e8] sm:$0xff]
    %v2281 = vld [vmem:[#allocation8 + $0x2f0] sm:$0xff]
    %v2282 = vld [vmem:[#allocation8 + $0x2f8] sm:$0xff]
    %v2283 = vld [vmem:[#allocation8 + $0x300] sm:$0xff]
    %v2284 = vld [vmem:[#allocation8 + $0x308] sm:$0xff]
    %v2285 = vld [vmem:[#allocation8 + $0x310] sm:$0xff]
    %v2286 = vld [vmem:[#allocation8 + $0x318] sm:$0xff]
    %v2287 = vld [vmem:[#allocation8 + $0x320] sm:$0xff]
    %v2288 = vld [vmem:[#allocation8 + $0x328] sm:$0xff]
    %v2289 = vld [vmem:[#allocation8 + $0x330] sm:$0xff]
    %v2290 = vld [vmem:[#allocation8 + $0x338] sm:$0xff]
    %v2291 = vld [vmem:[#allocation8 + $0x340] sm:$0xff]
    %v2292 = vld [vmem:[#allocation8 + $0x348] sm:$0xff]
    %v2293 = vld [vmem:[#allocation8 + $0x350] sm:$0xff]
    %v2294 = vld [vmem:[#allocation8 + $0x358] sm:$0xff]
    %v2295 = vld [vmem:[#allocation8 + $0x360] sm:$0xff]
    %v2296 = vld [vmem:[#allocation8 + $0x368] sm:$0xff]
    %v2297 = vld [vmem:[#allocation8 + $0x370] sm:$0xff]
    %v2298 = vld [vmem:[#allocation8 + $0x378] sm:$0xff]
    %v2299 = vld [vmem:[#allocation8 + $0x380] sm:$0xff]
    %v2300 = vld [vmem:[#allocation8 + $0x388] sm:$0xff]
    %v2301 = vld [vmem:[#allocation8 + $0x390] sm:$0xff]
    %v2302 = vld [vmem:[#allocation8 + $0x398] sm:$0xff]
    %v2303 = vld [vmem:[#allocation8 + $0x3a0] sm:$0xff]
    %v2304 = vld [vmem:[#allocation8 + $0x3a8] sm:$0xff]
    %v2305 = vld [vmem:[#allocation8 + $0x3b0] sm:$0xff]
    %v2306 = vld [vmem:[#allocation8 + $0x3b8] sm:$0xff]
    %v2307 = vld [vmem:[#allocation8 + $0x3c0] sm:$0xff]
    %v2308 = vld [vmem:[#allocation8 + $0x3c8] sm:$0xff]
    %v2309 = vld [vmem:[#allocation8 + $0x3d0] sm:$0xff]
    %v2310 = vld [vmem:[#allocation8 + $0x3d8] sm:$0xff]
    %v2311 = vld [vmem:[#allocation8 + $0x3e0] sm:$0xff]
    %v2312 = vld [vmem:[#allocation8 + $0x3e8] sm:$0xff]
    %v2313 = vld [vmem:[#allocation8 + $0x3f0] sm:$0xff]
    %v2314 = vld [vmem:[#allocation8 + $0x3f8] sm:$0xff]
    %v2315 = vld [vmem:[#allocation8 + $0x400] sm:$0xff]
    %v2316 = vld [vmem:[#allocation8 + $0x408] sm:$0xff]
    %v2317 = vld [vmem:[#allocation8 + $0x410] sm:$0xff]
    %v2318 = vld [vmem:[#allocation8 + $0x418] sm:$0xff]
    %v2319 = vld [vmem:[#allocation8 + $0x420] sm:$0xff]
    %v2320 = vld [vmem:[#allocation8 + $0x428] sm:$0xff]
    %v2321 = vld [vmem:[#allocation8 + $0x430] sm:$0xff]
    %v2322 = vld [vmem:[#allocation8 + $0x438] sm:$0xff]
    %v2323 = vld [vmem:[#allocation8 + $0x440] sm:$0xff]
    %v2324 = vld [vmem:[#allocation8 + $0x448] sm:$0xff]
    %v2325 = vld [vmem:[#allocation8 + $0x450] sm:$0xff]
    %v2326 = vld [vmem:[#allocation8 + $0x458] sm:$0xff]
    %v2327 = vld [vmem:[#allocation8 + $0x460] sm:$0xff]
    %v2328 = vld [vmem:[#allocation8 + $0x468] sm:$0xff]
    %v2329 = vld [vmem:[#allocation8 + $0x470] sm:$0xff]
    %v2330 = vld [vmem:[#allocation8 + $0x478] sm:$0xff]
    %v2331 = vld [vmem:[#allocation8 + $0x480] sm:$0xff]
    %v2332 = vld [vmem:[#allocation8 + $0x488] sm:$0xff]
    %v2333 = vld [vmem:[#allocation8 + $0x490] sm:$0xff]
    %v2334 = vld [vmem:[#allocation8 + $0x498] sm:$0xff]
    %v2335 = vld [vmem:[#allocation8 + $0x4a0] sm:$0xff]
    %v2336 = vld [vmem:[#allocation8 + $0x4a8] sm:$0xff]
    %v2337 = vld [vmem:[#allocation8 + $0x4b0] sm:$0xff]
    %v2338 = vld [vmem:[#allocation8 + $0x4b8] sm:$0xff]
    %v2339 = vld [vmem:[#allocation8 + $0x4c0] sm:$0xff]
    %v2340 = vld [vmem:[#allocation8 + $0x4c8] sm:$0xff]
    %v2341 = vld [vmem:[#allocation8 + $0x4d0] sm:$0xff]
    %v2342 = vld [vmem:[#allocation8 + $0x4d8] sm:$0xff]
    %v2343 = vld [vmem:[#allocation8 + $0x4e0] sm:$0xff]
    %v2344 = vld [vmem:[#allocation8 + $0x4e8] sm:$0xff]
    %v2345 = vld [vmem:[#allocation8 + $0x4f0] sm:$0xff]
    %v2346 = vld [vmem:[#allocation8 + $0x4f8] sm:$0xff]
    %v2347 = vld [vmem:[#allocation8 + $0x500] sm:$0xff]
    %v2348 = vld [vmem:[#allocation8 + $0x508] sm:$0xff]
    %v2349 = vld [vmem:[#allocation8 + $0x510] sm:$0xff]
    %v2350 = vld [vmem:[#allocation8 + $0x518] sm:$0xff]
    %v2351 = vld [vmem:[#allocation8 + $0x520] sm:$0xff]
    %v2352 = vld [vmem:[#allocation8 + $0x528] sm:$0xff]
    %v2353 = vld [vmem:[#allocation8 + $0x530] sm:$0xff]
    %v2354 = vld [vmem:[#allocation8 + $0x538] sm:$0xff]
    %v2355 = vld [vmem:[#allocation8 + $0x540] sm:$0xff]
    %v2356 = vld [vmem:[#allocation8 + $0x548] sm:$0xff]
    %v2357 = vld [vmem:[#allocation8 + $0x550] sm:$0xff]
    %v2358 = vld [vmem:[#allocation8 + $0x558] sm:$0xff]
    %v2359 = vld [vmem:[#allocation8 + $0x560] sm:$0xff]
    %v2360 = vld [vmem:[#allocation8 + $0x568] sm:$0xff]
    %v2361 = vld [vmem:[#allocation8 + $0x570] sm:$0xff]
    %v2362 = vld [vmem:[#allocation8 + $0x578] sm:$0xff]
    %v2363 = vld [vmem:[#allocation8 + $0x580] sm:$0xff]
    %v2364 = vld [vmem:[#allocation8 + $0x588] sm:$0xff]
    %v2365 = vld [vmem:[#allocation8 + $0x590] sm:$0xff]
    %v2366 = vld [vmem:[#allocation8 + $0x598] sm:$0xff]
    %v2367 = vld [vmem:[#allocation8 + $0x5a0] sm:$0xff]
    %v2368 = vld [vmem:[#allocation8 + $0x5a8] sm:$0xff]
    %v2369 = vld [vmem:[#allocation8 + $0x5b0] sm:$0xff]
    %v2370 = vld [vmem:[#allocation8 + $0x5b8] sm:$0xff]
    %v2371 = vld [vmem:[#allocation8 + $0x5c0] sm:$0xff]
    %v2372 = vld [vmem:[#allocation8 + $0x5c8] sm:$0xff]
    %v2373 = vld [vmem:[#allocation8 + $0x5d0] sm:$0xff]
    %v2374 = vld [vmem:[#allocation8 + $0x5d8] sm:$0xff]
    %v2375 = vld [vmem:[#allocation8 + $0x5e0] sm:$0xff]
    %v2376 = vld [vmem:[#allocation8 + $0x5e8] sm:$0xff]
    %v2377 = vld [vmem:[#allocation8 + $0x5f0] sm:$0xff]
    %v2378 = vld [vmem:[#allocation8 + $0x5f8] sm:$0xff]
    %v2379 = vld [vmem:[#allocation8 + $0x600] sm:$0xff]
    %v2380 = vld [vmem:[#allocation8 + $0x608] sm:$0xff]
    %v2381 = vld [vmem:[#allocation8 + $0x610] sm:$0xff]
    %v2382 = vld [vmem:[#allocation8 + $0x618] sm:$0xff]
    %v2383 = vld [vmem:[#allocation8 + $0x620] sm:$0xff]
    %v2384 = vld [vmem:[#allocation8 + $0x628] sm:$0xff]
    %v2385 = vld [vmem:[#allocation8 + $0x630] sm:$0xff]
    %v2386 = vld [vmem:[#allocation8 + $0x638] sm:$0xff]
    %v2387 = vld [vmem:[#allocation8 + $0x640] sm:$0xff]
    %v2388 = vld [vmem:[#allocation8 + $0x648] sm:$0xff]
    %v2389 = vld [vmem:[#allocation8 + $0x650] sm:$0xff]
    %v2390 = vld [vmem:[#allocation8 + $0x658] sm:$0xff]
    %v2391 = vld [vmem:[#allocation8 + $0x660] sm:$0xff]
    %v2392 = vld [vmem:[#allocation8 + $0x668] sm:$0xff]
    %v2393 = vld [vmem:[#allocation8 + $0x670] sm:$0xff]
    %v2394 = vld [vmem:[#allocation8 + $0x678] sm:$0xff]
    %v2395 = vld [vmem:[#allocation8 + $0x680] sm:$0xff]
    %v2396 = vld [vmem:[#allocation8 + $0x688] sm:$0xff]
    %v2397 = vld [vmem:[#allocation8 + $0x690] sm:$0xff]
    %v2398 = vld [vmem:[#allocation8 + $0x698] sm:$0xff]
    %v2399 = vld [vmem:[#allocation8 + $0x6a0] sm:$0xff]
    %v2400 = vld [vmem:[#allocation8 + $0x6a8] sm:$0xff]
    %v2401 = vld [vmem:[#allocation8 + $0x6b0] sm:$0xff]
    %v2402 = vld [vmem:[#allocation8 + $0x6b8] sm:$0xff]
    %v2403 = vld [vmem:[#allocation8 + $0x6c0] sm:$0xff]
    %v2404 = vld [vmem:[#allocation8 + $0x6c8] sm:$0xff]
    %v2405 = vld [vmem:[#allocation8 + $0x6d0] sm:$0xff]
    %v2406 = vld [vmem:[#allocation8 + $0x6d8] sm:$0xff]
    %v2407 = vld [vmem:[#allocation8 + $0x6e0] sm:$0xff]
    %v2408 = vld [vmem:[#allocation8 + $0x6e8] sm:$0xff]
    %v2409 = vld [vmem:[#allocation8 + $0x6f0] sm:$0xff]
    %v2410 = vld [vmem:[#allocation8 + $0x6f8] sm:$0xff]
    %v2411 = vld [vmem:[#allocation8 + $0x700] sm:$0xff]
    %v2412 = vld [vmem:[#allocation8 + $0x708] sm:$0xff]
    %v2413 = vld [vmem:[#allocation8 + $0x710] sm:$0xff]
    %v2414 = vld [vmem:[#allocation8 + $0x718] sm:$0xff]
    %v2415 = vld [vmem:[#allocation8 + $0x720] sm:$0xff]
    %v2416 = vld [vmem:[#allocation8 + $0x728] sm:$0xff]
    %v2417 = vld [vmem:[#allocation8 + $0x730] sm:$0xff]
    %v2418 = vld [vmem:[#allocation8 + $0x738] sm:$0xff]
    %v2419 = vld [vmem:[#allocation8 + $0x740] sm:$0xff]
    %v2420 = vld [vmem:[#allocation8 + $0x748] sm:$0xff]
    %v2421 = vld [vmem:[#allocation8 + $0x750] sm:$0xff]
    %v2422 = vld [vmem:[#allocation8 + $0x758] sm:$0xff]
    %v2423 = vld [vmem:[#allocation8 + $0x760] sm:$0xff]
    %v2424 = vld [vmem:[#allocation8 + $0x768] sm:$0xff]
    %v2425 = vld [vmem:[#allocation8 + $0x770] sm:$0xff]
    %v2426 = vld [vmem:[#allocation8 + $0x778] sm:$0xff]
    %v2427 = vld [vmem:[#allocation8 + $0x780] sm:$0xff]
    %v2428 = vld [vmem:[#allocation8 + $0x788] sm:$0xff]
    %v2429 = vld [vmem:[#allocation8 + $0x790] sm:$0xff]
    %v2430 = vld [vmem:[#allocation8 + $0x798] sm:$0xff]
    %v2431 = vld [vmem:[#allocation8 + $0x7a0] sm:$0xff]
    %v2432 = vld [vmem:[#allocation8 + $0x7a8] sm:$0xff]
    %v2433 = vld [vmem:[#allocation8 + $0x7b0] sm:$0xff]
    %v2434 = vld [vmem:[#allocation8 + $0x7b8] sm:$0xff]
    %v2435 = vld [vmem:[#allocation8 + $0x7c0] sm:$0xff]
    %v2436 = vld [vmem:[#allocation8 + $0x7c8] sm:$0xff]
    %v2437 = vld [vmem:[#allocation8 + $0x7d0] sm:$0xff]
    %v2438 = vld [vmem:[#allocation8 + $0x7d8] sm:$0xff]
    %v2439 = vld [vmem:[#allocation8 + $0x7e0] sm:$0xff]
    %v2440 = vld [vmem:[#allocation8 + $0x7e8] sm:$0xff]
    %v2441 = vld [vmem:[#allocation8 + $0x7f0] sm:$0xff]
    %v2442 = vld [vmem:[#allocation8 + $0x7f8] sm:$0xff]
    %v2443 = vld [vmem:[#allocation10] sm:$0xf]
    %v2445 = vperm.slane %v2443, 0
    %v2446 = vperm.slane %v2443, 1
    %v2447 = vperm.slane %v2443, 2
    %v2448 = vperm.slane %v2443, 3
    %v2709 = vunpack.c.l.b16 %v2187
    %v2710 = vunpack.c.h.b16 %v2187
    %v2711 = vunpack.c.l.b16 %v2188
    %v2712 = vunpack.c.h.b16 %v2188
    %v2713 = vunpack.c.l.b16 %v2189
    %v2714 = vunpack.c.h.b16 %v2189
    %v2715 = vunpack.c.l.b16 %v2190
    %v2716 = vunpack.c.h.b16 %v2190
    %v2717 = vunpack.c.l.b16 %v2191
    %v2718 = vunpack.c.h.b16 %v2191
    %v2719 = vunpack.c.l.b16 %v2192
    %v2720 = vunpack.c.h.b16 %v2192
    %v2721 = vunpack.c.l.b16 %v2193
    %v2722 = vunpack.c.h.b16 %v2193
    %v2723 = vunpack.c.l.b16 %v2194
    %v2724 = vunpack.c.h.b16 %v2194
    %v2725 = vunpack.c.l.b16 %v2195
    %v2726 = vunpack.c.h.b16 %v2195
    %v2727 = vunpack.c.l.b16 %v2196
    %v2728 = vunpack.c.h.b16 %v2196
    %v2729 = vunpack.c.l.b16 %v2197
    %v2730 = vunpack.c.h.b16 %v2197
    %v2731 = vunpack.c.l.b16 %v2198
    %v2732 = vunpack.c.h.b16 %v2198
    %v2733 = vunpack.c.l.b16 %v2199
    %v2734 = vunpack.c.h.b16 %v2199
    %v2735 = vunpack.c.l.b16 %v2200
    %v2736 = vunpack.c.h.b16 %v2200
    %v2737 = vunpack.c.l.b16 %v2201
    %v2738 = vunpack.c.h.b16 %v2201
    %v2739 = vunpack.c.l.b16 %v2202
    %v2740 = vunpack.c.h.b16 %v2202
    %v2741 = vunpack.c.l.b16 %v2203
    %v2742 = vunpack.c.h.b16 %v2203
    %v2743 = vunpack.c.l.b16 %v2204
    %v2744 = vunpack.c.h.b16 %v2204
    %v2745 = vunpack.c.l.b16 %v2205
    %v2746 = vunpack.c.h.b16 %v2205
    %v2747 = vunpack.c.l.b16 %v2206
    %v2748 = vunpack.c.h.b16 %v2206
    %v2749 = vunpack.c.l.b16 %v2207
    %v2750 = vunpack.c.h.b16 %v2207
    %v2751 = vunpack.c.l.b16 %v2208
    %v2752 = vunpack.c.h.b16 %v2208
    %v2753 = vunpack.c.l.b16 %v2209
    %v2754 = vunpack.c.h.b16 %v2209
    %v2755 = vunpack.c.l.b16 %v2210
    %v2756 = vunpack.c.h.b16 %v2210
    %v2757 = vunpack.c.l.b16 %v2211
    %v2758 = vunpack.c.h.b16 %v2211
    %v2759 = vunpack.c.l.b16 %v2212
    %v2760 = vunpack.c.h.b16 %v2212
    %v2761 = vunpack.c.l.b16 %v2213
    %v2762 = vunpack.c.h.b16 %v2213
    %v2763 = vunpack.c.l.b16 %v2214
    %v2764 = vunpack.c.h.b16 %v2214
    %v2765 = vunpack.c.l.b16 %v2215
    %v2766 = vunpack.c.h.b16 %v2215
    %v2767 = vunpack.c.l.b16 %v2216
    %v2768 = vunpack.c.h.b16 %v2216
    %v2769 = vunpack.c.l.b16 %v2217
    %v2770 = vunpack.c.h.b16 %v2217
    %v2771 = vunpack.c.l.b16 %v2218
    %v2772 = vunpack.c.h.b16 %v2218
    %v2773 = vunpack.c.l.b16 %v2219
    %v2774 = vunpack.c.h.b16 %v2219
    %v2775 = vunpack.c.l.b16 %v2220
    %v2776 = vunpack.c.h.b16 %v2220
    %v2777 = vunpack.c.l.b16 %v2221
    %v2778 = vunpack.c.h.b16 %v2221
    %v2779 = vunpack.c.l.b16 %v2222
    %v2780 = vunpack.c.h.b16 %v2222
    %v2781 = vunpack.c.l.b16 %v2223
    %v2782 = vunpack.c.h.b16 %v2223
    %v2783 = vunpack.c.l.b16 %v2224
    %v2784 = vunpack.c.h.b16 %v2224
    %v2785 = vunpack.c.l.b16 %v2225
    %v2786 = vunpack.c.h.b16 %v2225
    %v2787 = vunpack.c.l.b16 %v2226
    %v2788 = vunpack.c.h.b16 %v2226
    %v2789 = vunpack.c.l.b16 %v2227
    %v2790 = vunpack.c.h.b16 %v2227
    %v2791 = vunpack.c.l.b16 %v2228
    %v2792 = vunpack.c.h.b16 %v2228
    %v2793 = vunpack.c.l.b16 %v2229
    %v2794 = vunpack.c.h.b16 %v2229
    %v2795 = vunpack.c.l.b16 %v2230
    %v2796 = vunpack.c.h.b16 %v2230
    %v2797 = vunpack.c.l.b16 %v2231
    %v2798 = vunpack.c.h.b16 %v2231
    %v2799 = vunpack.c.l.b16 %v2232
    %v2800 = vunpack.c.h.b16 %v2232
    %v2801 = vunpack.c.l.b16 %v2233
    %v2802 = vunpack.c.h.b16 %v2233
    %v2803 = vunpack.c.l.b16 %v2234
    %v2804 = vunpack.c.h.b16 %v2234
    %v2805 = vunpack.c.l.b16 %v2235
    %v2806 = vunpack.c.h.b16 %v2235
    %v2807 = vunpack.c.l.b16 %v2236
    %v2808 = vunpack.c.h.b16 %v2236
    %v2809 = vunpack.c.l.b16 %v2237
    %v2810 = vunpack.c.h.b16 %v2237
    %v2811 = vunpack.c.l.b16 %v2238
    %v2812 = vunpack.c.h.b16 %v2238
    %v2813 = vunpack.c.l.b16 %v2239
    %v2814 = vunpack.c.h.b16 %v2239
    %v2815 = vunpack.c.l.b16 %v2240
    %v2816 = vunpack.c.h.b16 %v2240
    %v2817 = vunpack.c.l.b16 %v2241
    %v2818 = vunpack.c.h.b16 %v2241
    %v2819 = vunpack.c.l.b16 %v2242
    %v2820 = vunpack.c.h.b16 %v2242
    %v2821 = vunpack.c.l.b16 %v2243
    %v2822 = vunpack.c.h.b16 %v2243
    %v2823 = vunpack.c.l.b16 %v2244
    %v2824 = vunpack.c.h.b16 %v2244
    %v2825 = vunpack.c.l.b16 %v2245
    %v2826 = vunpack.c.h.b16 %v2245
    %v2827 = vunpack.c.l.b16 %v2246
    %v2828 = vunpack.c.h.b16 %v2246
    %v2829 = vunpack.c.l.b16 %v2247
    %v2830 = vunpack.c.h.b16 %v2247
    %v2831 = vunpack.c.l.b16 %v2248
    %v2832 = vunpack.c.h.b16 %v2248
    %v2833 = vunpack.c.l.b16 %v2249
    %v2834 = vunpack.c.h.b16 %v2249
    %v2835 = vunpack.c.l.b16 %v2250
    %v2836 = vunpack.c.h.b16 %v2250
    %v2837 = vunpack.c.l.b16 %v2251
    %v2838 = vunpack.c.h.b16 %v2251
    %v2839 = vunpack.c.l.b16 %v2252
    %v2840 = vunpack.c.h.b16 %v2252
    %v2841 = vunpack.c.l.b16 %v2253
    %v2842 = vunpack.c.h.b16 %v2253
    %v2843 = vunpack.c.l.b16 %v2254
    %v2844 = vunpack.c.h.b16 %v2254
    %v2845 = vunpack.c.l.b16 %v2255
    %v2846 = vunpack.c.h.b16 %v2255
    %v2847 = vunpack.c.l.b16 %v2256
    %v2848 = vunpack.c.h.b16 %v2256
    %v2849 = vunpack.c.l.b16 %v2257
    %v2850 = vunpack.c.h.b16 %v2257
    %v2851 = vunpack.c.l.b16 %v2258
    %v2852 = vunpack.c.h.b16 %v2258
    %v2853 = vunpack.c.l.b16 %v2259
    %v2854 = vunpack.c.h.b16 %v2259
    %v2855 = vunpack.c.l.b16 %v2260
    %v2856 = vunpack.c.h.b16 %v2260
    %v2857 = vunpack.c.l.b16 %v2261
    %v2858 = vunpack.c.h.b16 %v2261
    %v2859 = vunpack.c.l.b16 %v2262
    %v2860 = vunpack.c.h.b16 %v2262
    %v2861 = vunpack.c.l.b16 %v2263
    %v2862 = vunpack.c.h.b16 %v2263
    %v2863 = vunpack.c.l.b16 %v2264
    %v2864 = vunpack.c.h.b16 %v2264
    %v2865 = vunpack.c.l.b16 %v2265
    %v2866 = vunpack.c.h.b16 %v2265
    %v2867 = vunpack.c.l.b16 %v2266
    %v2868 = vunpack.c.h.b16 %v2266
    %v2869 = vunpack.c.l.b16 %v2267
    %v2870 = vunpack.c.h.b16 %v2267
    %v2871 = vunpack.c.l.b16 %v2268
    %v2872 = vunpack.c.h.b16 %v2268
    %v2873 = vunpack.c.l.b16 %v2269
    %v2874 = vunpack.c.h.b16 %v2269
    %v2875 = vunpack.c.l.b16 %v2270
    %v2876 = vunpack.c.h.b16 %v2270
    %v2877 = vunpack.c.l.b16 %v2271
    %v2878 = vunpack.c.h.b16 %v2271
    %v2879 = vunpack.c.l.b16 %v2272
    %v2880 = vunpack.c.h.b16 %v2272
    %v2881 = vunpack.c.l.b16 %v2273
    %v2882 = vunpack.c.h.b16 %v2273
    %v2883 = vunpack.c.l.b16 %v2274
    %v2884 = vunpack.c.h.b16 %v2274
    %v2885 = vunpack.c.l.b16 %v2275
    %v2886 = vunpack.c.h.b16 %v2275
    %v2887 = vunpack.c.l.b16 %v2276
    %v2888 = vunpack.c.h.b16 %v2276
    %v2889 = vunpack.c.l.b16 %v2277
    %v2890 = vunpack.c.h.b16 %v2277
    %v2891 = vunpack.c.l.b16 %v2278
    %v2892 = vunpack.c.h.b16 %v2278
    %v2893 = vunpack.c.l.b16 %v2279
    %v2894 = vunpack.c.h.b16 %v2279
    %v2895 = vunpack.c.l.b16 %v2280
    %v2896 = vunpack.c.h.b16 %v2280
    %v2897 = vunpack.c.l.b16 %v2281
    %v2898 = vunpack.c.h.b16 %v2281
    %v2899 = vunpack.c.l.b16 %v2282
    %v2900 = vunpack.c.h.b16 %v2282
    %v2901 = vunpack.c.l.b16 %v2283
    %v2902 = vunpack.c.h.b16 %v2283
    %v2903 = vunpack.c.l.b16 %v2284
    %v2904 = vunpack.c.h.b16 %v2284
    %v2905 = vunpack.c.l.b16 %v2285
    %v2906 = vunpack.c.h.b16 %v2285
    %v2907 = vunpack.c.l.b16 %v2286
    %v2908 = vunpack.c.h.b16 %v2286
    %v2909 = vunpack.c.l.b16 %v2287
    %v2910 = vunpack.c.h.b16 %v2287
    %v2911 = vunpack.c.l.b16 %v2288
    %v2912 = vunpack.c.h.b16 %v2288
    %v2913 = vunpack.c.l.b16 %v2289
    %v2914 = vunpack.c.h.b16 %v2289
    %v2915 = vunpack.c.l.b16 %v2290
    %v2916 = vunpack.c.h.b16 %v2290
    %v2917 = vunpack.c.l.b16 %v2291
    %v2918 = vunpack.c.h.b16 %v2291
    %v2919 = vunpack.c.l.b16 %v2292
    %v2920 = vunpack.c.h.b16 %v2292
    %v2921 = vunpack.c.l.b16 %v2293
    %v2922 = vunpack.c.h.b16 %v2293
    %v2923 = vunpack.c.l.b16 %v2294
    %v2924 = vunpack.c.h.b16 %v2294
    %v2925 = vunpack.c.l.b16 %v2295
    %v2926 = vunpack.c.h.b16 %v2295
    %v2927 = vunpack.c.l.b16 %v2296
    %v2928 = vunpack.c.h.b16 %v2296
    %v2929 = vunpack.c.l.b16 %v2297
    %v2930 = vunpack.c.h.b16 %v2297
    %v2931 = vunpack.c.l.b16 %v2298
    %v2932 = vunpack.c.h.b16 %v2298
    %v2933 = vunpack.c.l.b16 %v2299
    %v2934 = vunpack.c.h.b16 %v2299
    %v2935 = vunpack.c.l.b16 %v2300
    %v2936 = vunpack.c.h.b16 %v2300
    %v2937 = vunpack.c.l.b16 %v2301
    %v2938 = vunpack.c.h.b16 %v2301
    %v2939 = vunpack.c.l.b16 %v2302
    %v2940 = vunpack.c.h.b16 %v2302
    %v2941 = vunpack.c.l.b16 %v2303
    %v2942 = vunpack.c.h.b16 %v2303
    %v2943 = vunpack.c.l.b16 %v2304
    %v2944 = vunpack.c.h.b16 %v2304
    %v2945 = vunpack.c.l.b16 %v2305
    %v2946 = vunpack.c.h.b16 %v2305
    %v2947 = vunpack.c.l.b16 %v2306
    %v2948 = vunpack.c.h.b16 %v2306
    %v2949 = vunpack.c.l.b16 %v2307
    %v2950 = vunpack.c.h.b16 %v2307
    %v2951 = vunpack.c.l.b16 %v2308
    %v2952 = vunpack.c.h.b16 %v2308
    %v2953 = vunpack.c.l.b16 %v2309
    %v2954 = vunpack.c.h.b16 %v2309
    %v2955 = vunpack.c.l.b16 %v2310
    %v2956 = vunpack.c.h.b16 %v2310
    %v2957 = vunpack.c.l.b16 %v2311
    %v2958 = vunpack.c.h.b16 %v2311
    %v2959 = vunpack.c.l.b16 %v2312
    %v2960 = vunpack.c.h.b16 %v2312
    %v2961 = vunpack.c.l.b16 %v2313
    %v2962 = vunpack.c.h.b16 %v2313
    %v2963 = vunpack.c.l.b16 %v2314
    %v2964 = vunpack.c.h.b16 %v2314
    %v2965 = vunpack.c.l.b16 %v2315
    %v2966 = vunpack.c.h.b16 %v2315
    %v2967 = vunpack.c.l.b16 %v2316
    %v2968 = vunpack.c.h.b16 %v2316
    %v2969 = vunpack.c.l.b16 %v2317
    %v2970 = vunpack.c.h.b16 %v2317
    %v2971 = vunpack.c.l.b16 %v2318
    %v2972 = vunpack.c.h.b16 %v2318
    %v2973 = vunpack.c.l.b16 %v2319
    %v2974 = vunpack.c.h.b16 %v2319
    %v2975 = vunpack.c.l.b16 %v2320
    %v2976 = vunpack.c.h.b16 %v2320
    %v2977 = vunpack.c.l.b16 %v2321
    %v2978 = vunpack.c.h.b16 %v2321
    %v2979 = vunpack.c.l.b16 %v2322
    %v2980 = vunpack.c.h.b16 %v2322
    %v2981 = vunpack.c.l.b16 %v2323
    %v2982 = vunpack.c.h.b16 %v2323
    %v2983 = vunpack.c.l.b16 %v2324
    %v2984 = vunpack.c.h.b16 %v2324
    %v2985 = vunpack.c.l.b16 %v2325
    %v2986 = vunpack.c.h.b16 %v2325
    %v2987 = vunpack.c.l.b16 %v2326
    %v2988 = vunpack.c.h.b16 %v2326
    %v2989 = vunpack.c.l.b16 %v2327
    %v2990 = vunpack.c.h.b16 %v2327
    %v2991 = vunpack.c.l.b16 %v2328
    %v2992 = vunpack.c.h.b16 %v2328
    %v2993 = vunpack.c.l.b16 %v2329
    %v2994 = vunpack.c.h.b16 %v2329
    %v2995 = vunpack.c.l.b16 %v2330
    %v2996 = vunpack.c.h.b16 %v2330
    %v2997 = vunpack.c.l.b16 %v2331
    %v2998 = vunpack.c.h.b16 %v2331
    %v2999 = vunpack.c.l.b16 %v2332
    %v3000 = vunpack.c.h.b16 %v2332
    %v3001 = vunpack.c.l.b16 %v2333
    %v3002 = vunpack.c.h.b16 %v2333
    %v3003 = vunpack.c.l.b16 %v2334
    %v3004 = vunpack.c.h.b16 %v2334
    %v3005 = vunpack.c.l.b16 %v2335
    %v3006 = vunpack.c.h.b16 %v2335
    %v3007 = vunpack.c.l.b16 %v2336
    %v3008 = vunpack.c.h.b16 %v2336
    %v3009 = vunpack.c.l.b16 %v2337
    %v3010 = vunpack.c.h.b16 %v2337
    %v3011 = vunpack.c.l.b16 %v2338
    %v3012 = vunpack.c.h.b16 %v2338
    %v3013 = vunpack.c.l.b16 %v2339
    %v3014 = vunpack.c.h.b16 %v2339
    %v3015 = vunpack.c.l.b16 %v2340
    %v3016 = vunpack.c.h.b16 %v2340
    %v3017 = vunpack.c.l.b16 %v2341
    %v3018 = vunpack.c.h.b16 %v2341
    %v3019 = vunpack.c.l.b16 %v2342
    %v3020 = vunpack.c.h.b16 %v2342
    %v3021 = vunpack.c.l.b16 %v2343
    %v3022 = vunpack.c.h.b16 %v2343
    %v3023 = vunpack.c.l.b16 %v2344
    %v3024 = vunpack.c.h.b16 %v2344
    %v3025 = vunpack.c.l.b16 %v2345
    %v3026 = vunpack.c.h.b16 %v2345
    %v3027 = vunpack.c.l.b16 %v2346
    %v3028 = vunpack.c.h.b16 %v2346
    %v3029 = vunpack.c.l.b16 %v2347
    %v3030 = vunpack.c.h.b16 %v2347
    %v3031 = vunpack.c.l.b16 %v2348
    %v3032 = vunpack.c.h.b16 %v2348
    %v3033 = vunpack.c.l.b16 %v2349
    %v3034 = vunpack.c.h.b16 %v2349
    %v3035 = vunpack.c.l.b16 %v2350
    %v3036 = vunpack.c.h.b16 %v2350
    %v3037 = vunpack.c.l.b16 %v2351
    %v3038 = vunpack.c.h.b16 %v2351
    %v3039 = vunpack.c.l.b16 %v2352
    %v3040 = vunpack.c.h.b16 %v2352
    %v3041 = vunpack.c.l.b16 %v2353
    %v3042 = vunpack.c.h.b16 %v2353
    %v3043 = vunpack.c.l.b16 %v2354
    %v3044 = vunpack.c.h.b16 %v2354
    %v3045 = vunpack.c.l.b16 %v2355
    %v3046 = vunpack.c.h.b16 %v2355
    %v3047 = vunpack.c.l.b16 %v2356
    %v3048 = vunpack.c.h.b16 %v2356
    %v3049 = vunpack.c.l.b16 %v2357
    %v3050 = vunpack.c.h.b16 %v2357
    %v3051 = vunpack.c.l.b16 %v2358
    %v3052 = vunpack.c.h.b16 %v2358
    %v3053 = vunpack.c.l.b16 %v2359
    %v3054 = vunpack.c.h.b16 %v2359
    %v3055 = vunpack.c.l.b16 %v2360
    %v3056 = vunpack.c.h.b16 %v2360
    %v3057 = vunpack.c.l.b16 %v2361
    %v3058 = vunpack.c.h.b16 %v2361
    %v3059 = vunpack.c.l.b16 %v2362
    %v3060 = vunpack.c.h.b16 %v2362
    %v3061 = vunpack.c.l.b16 %v2363
    %v3062 = vunpack.c.h.b16 %v2363
    %v3063 = vunpack.c.l.b16 %v2364
    %v3064 = vunpack.c.h.b16 %v2364
    %v3065 = vunpack.c.l.b16 %v2365
    %v3066 = vunpack.c.h.b16 %v2365
    %v3067 = vunpack.c.l.b16 %v2366
    %v3068 = vunpack.c.h.b16 %v2366
    %v3069 = vunpack.c.l.b16 %v2367
    %v3070 = vunpack.c.h.b16 %v2367
    %v3071 = vunpack.c.l.b16 %v2368
    %v3072 = vunpack.c.h.b16 %v2368
    %v3073 = vunpack.c.l.b16 %v2369
    %v3074 = vunpack.c.h.b16 %v2369
    %v3075 = vunpack.c.l.b16 %v2370
    %v3076 = vunpack.c.h.b16 %v2370
    %v3077 = vunpack.c.l.b16 %v2371
    %v3078 = vunpack.c.h.b16 %v2371
    %v3079 = vunpack.c.l.b16 %v2372
    %v3080 = vunpack.c.h.b16 %v2372
    %v3081 = vunpack.c.l.b16 %v2373
    %v3082 = vunpack.c.h.b16 %v2373
    %v3083 = vunpack.c.l.b16 %v2374
    %v3084 = vunpack.c.h.b16 %v2374
    %v3085 = vunpack.c.l.b16 %v2375
    %v3086 = vunpack.c.h.b16 %v2375
    %v3087 = vunpack.c.l.b16 %v2376
    %v3088 = vunpack.c.h.b16 %v2376
    %v3089 = vunpack.c.l.b16 %v2377
    %v3090 = vunpack.c.h.b16 %v2377
    %v3091 = vunpack.c.l.b16 %v2378
    %v3092 = vunpack.c.h.b16 %v2378
    %v3093 = vunpack.c.l.b16 %v2379
    %v3094 = vunpack.c.h.b16 %v2379
    %v3095 = vunpack.c.l.b16 %v2380
    %v3096 = vunpack.c.h.b16 %v2380
    %v3097 = vunpack.c.l.b16 %v2381
    %v3098 = vunpack.c.h.b16 %v2381
    %v3099 = vunpack.c.l.b16 %v2382
    %v3100 = vunpack.c.h.b16 %v2382
    %v3101 = vunpack.c.l.b16 %v2383
    %v3102 = vunpack.c.h.b16 %v2383
    %v3103 = vunpack.c.l.b16 %v2384
    %v3104 = vunpack.c.h.b16 %v2384
    %v3105 = vunpack.c.l.b16 %v2385
    %v3106 = vunpack.c.h.b16 %v2385
    %v3107 = vunpack.c.l.b16 %v2386
    %v3108 = vunpack.c.h.b16 %v2386
    %v3109 = vunpack.c.l.b16 %v2387
    %v3110 = vunpack.c.h.b16 %v2387
    %v3111 = vunpack.c.l.b16 %v2388
    %v3112 = vunpack.c.h.b16 %v2388
    %v3113 = vunpack.c.l.b16 %v2389
    %v3114 = vunpack.c.h.b16 %v2389
    %v3115 = vunpack.c.l.b16 %v2390
    %v3116 = vunpack.c.h.b16 %v2390
    %v3117 = vunpack.c.l.b16 %v2391
    %v3118 = vunpack.c.h.b16 %v2391
    %v3119 = vunpack.c.l.b16 %v2392
    %v3120 = vunpack.c.h.b16 %v2392
    %v3121 = vunpack.c.l.b16 %v2393
    %v3122 = vunpack.c.h.b16 %v2393
    %v3123 = vunpack.c.l.b16 %v2394
    %v3124 = vunpack.c.h.b16 %v2394
    %v3125 = vunpack.c.l.b16 %v2395
    %v3126 = vunpack.c.h.b16 %v2395
    %v3127 = vunpack.c.l.b16 %v2396
    %v3128 = vunpack.c.h.b16 %v2396
    %v3129 = vunpack.c.l.b16 %v2397
    %v3130 = vunpack.c.h.b16 %v2397
    %v3131 = vunpack.c.l.b16 %v2398
    %v3132 = vunpack.c.h.b16 %v2398
    %v3133 = vunpack.c.l.b16 %v2399
    %v3134 = vunpack.c.h.b16 %v2399
    %v3135 = vunpack.c.l.b16 %v2400
    %v3136 = vunpack.c.h.b16 %v2400
    %v3137 = vunpack.c.l.b16 %v2401
    %v3138 = vunpack.c.h.b16 %v2401
    %v3139 = vunpack.c.l.b16 %v2402
    %v3140 = vunpack.c.h.b16 %v2402
    %v3141 = vunpack.c.l.b16 %v2403
    %v3142 = vunpack.c.h.b16 %v2403
    %v3143 = vunpack.c.l.b16 %v2404
    %v3144 = vunpack.c.h.b16 %v2404
    %v3145 = vunpack.c.l.b16 %v2405
    %v3146 = vunpack.c.h.b16 %v2405
    %v3147 = vunpack.c.l.b16 %v2406
    %v3148 = vunpack.c.h.b16 %v2406
    %v3149 = vunpack.c.l.b16 %v2407
    %v3150 = vunpack.c.h.b16 %v2407
    %v3151 = vunpack.c.l.b16 %v2408
    %v3152 = vunpack.c.h.b16 %v2408
    %v3153 = vunpack.c.l.b16 %v2409
    %v3154 = vunpack.c.h.b16 %v2409
    %v3155 = vunpack.c.l.b16 %v2410
    %v3156 = vunpack.c.h.b16 %v2410
    %v3157 = vunpack.c.l.b16 %v2411
    %v3158 = vunpack.c.h.b16 %v2411
    %v3159 = vunpack.c.l.b16 %v2412
    %v3160 = vunpack.c.h.b16 %v2412
    %v3161 = vunpack.c.l.b16 %v2413
    %v3162 = vunpack.c.h.b16 %v2413
    %v3163 = vunpack.c.l.b16 %v2414
    %v3164 = vunpack.c.h.b16 %v2414
    %v3165 = vunpack.c.l.b16 %v2415
    %v3166 = vunpack.c.h.b16 %v2415
    %v3167 = vunpack.c.l.b16 %v2416
    %v3168 = vunpack.c.h.b16 %v2416
    %v3169 = vunpack.c.l.b16 %v2417
    %v3170 = vunpack.c.h.b16 %v2417
    %v3171 = vunpack.c.l.b16 %v2418
    %v3172 = vunpack.c.h.b16 %v2418
    %v3173 = vunpack.c.l.b16 %v2419
    %v3174 = vunpack.c.h.b16 %v2419
    %v3175 = vunpack.c.l.b16 %v2420
    %v3176 = vunpack.c.h.b16 %v2420
    %v3177 = vunpack.c.l.b16 %v2421
    %v3178 = vunpack.c.h.b16 %v2421
    %v3179 = vunpack.c.l.b16 %v2422
    %v3180 = vunpack.c.h.b16 %v2422
    %v3181 = vunpack.c.l.b16 %v2423
    %v3182 = vunpack.c.h.b16 %v2423
    %v3183 = vunpack.c.l.b16 %v2424
    %v3184 = vunpack.c.h.b16 %v2424
    %v3185 = vunpack.c.l.b16 %v2425
    %v3186 = vunpack.c.h.b16 %v2425
    %v3187 = vunpack.c.l.b16 %v2426
    %v3188 = vunpack.c.h.b16 %v2426
    %v3189 = vunpack.c.l.b16 %v2427
    %v3190 = vunpack.c.h.b16 %v2427
    %v3191 = vunpack.c.l.b16 %v2428
    %v3192 = vunpack.c.h.b16 %v2428
    %v3193 = vunpack.c.l.b16 %v2429
    %v3194 = vunpack.c.h.b16 %v2429
    %v3195 = vunpack.c.l.b16 %v2430
    %v3196 = vunpack.c.h.b16 %v2430
    %v3197 = vunpack.c.l.b16 %v2431
    %v3198 = vunpack.c.h.b16 %v2431
    %v3199 = vunpack.c.l.b16 %v2432
    %v3200 = vunpack.c.h.b16 %v2432
    %v3201 = vunpack.c.l.b16 %v2433
    %v3202 = vunpack.c.h.b16 %v2433
    %v3203 = vunpack.c.l.b16 %v2434
    %v3204 = vunpack.c.h.b16 %v2434
    %v3205 = vunpack.c.l.b16 %v2435
    %v3206 = vunpack.c.h.b16 %v2435
    %v3207 = vunpack.c.l.b16 %v2436
    %v3208 = vunpack.c.h.b16 %v2436
    %v3209 = vunpack.c.l.b16 %v2437
    %v3210 = vunpack.c.h.b16 %v2437
    %v3211 = vunpack.c.l.b16 %v2438
    %v3212 = vunpack.c.h.b16 %v2438
    %v3213 = vunpack.c.l.b16 %v2439
    %v3214 = vunpack.c.h.b16 %v2439
    %v3215 = vunpack.c.l.b16 %v2440
    %v3216 = vunpack.c.h.b16 %v2440
    %v3217 = vunpack.c.l.b16 %v2441
    %v3218 = vunpack.c.h.b16 %v2441
    %v3219 = vunpack.c.l.b16 %v2442
    %v3220 = vunpack.c.h.b16 %v2442
    %v3221 = vpack.c.b16 %v2713, %v2709
    %v3222 = vpack.c.b16 %v2714, %v2710
    %v3223 = vpack.c.b16 %v2715, %v2711
    %v3224 = vpack.c.b16 %v2716, %v2712
    %v3225 = vpack.c.b16 %v2721, %v2717
    %v3226 = vpack.c.b16 %v2722, %v2718
    %v3227 = vpack.c.b16 %v2723, %v2719
    %v3228 = vpack.c.b16 %v2724, %v2720
    %v3229 = vpack.c.b16 %v2729, %v2725
    %v3230 = vpack.c.b16 %v2730, %v2726
    %v3231 = vpack.c.b16 %v2731, %v2727
    %v3232 = vpack.c.b16 %v2732, %v2728
    %v3233 = vpack.c.b16 %v2737, %v2733
    %v3234 = vpack.c.b16 %v2738, %v2734
    %v3235 = vpack.c.b16 %v2739, %v2735
    %v3236 = vpack.c.b16 %v2740, %v2736
    %v3237 = vpack.c.b16 %v2745, %v2741
    %v3238 = vpack.c.b16 %v2746, %v2742
    %v3239 = vpack.c.b16 %v2747, %v2743
    %v3240 = vpack.c.b16 %v2748, %v2744
    %v3241 = vpack.c.b16 %v2753, %v2749
    %v3242 = vpack.c.b16 %v2754, %v2750
    %v3243 = vpack.c.b16 %v2755, %v2751
    %v3244 = vpack.c.b16 %v2756, %v2752
    %v3245 = vpack.c.b16 %v2761, %v2757
    %v3246 = vpack.c.b16 %v2762, %v2758
    %v3247 = vpack.c.b16 %v2763, %v2759
    %v3248 = vpack.c.b16 %v2764, %v2760
    %v3249 = vpack.c.b16 %v2769, %v2765
    %v3250 = vpack.c.b16 %v2770, %v2766
    %v3251 = vpack.c.b16 %v2771, %v2767
    %v3252 = vpack.c.b16 %v2772, %v2768
    %v3253 = vpack.c.b16 %v2777, %v2773
    %v3254 = vpack.c.b16 %v2778, %v2774
    %v3255 = vpack.c.b16 %v2779, %v2775
    %v3256 = vpack.c.b16 %v2780, %v2776
    %v3257 = vpack.c.b16 %v2785, %v2781
    %v3258 = vpack.c.b16 %v2786, %v2782
    %v3259 = vpack.c.b16 %v2787, %v2783
    %v3260 = vpack.c.b16 %v2788, %v2784
    %v3261 = vpack.c.b16 %v2793, %v2789
    %v3262 = vpack.c.b16 %v2794, %v2790
    %v3263 = vpack.c.b16 %v2795, %v2791
    %v3264 = vpack.c.b16 %v2796, %v2792
    %v3265 = vpack.c.b16 %v2801, %v2797
    %v3266 = vpack.c.b16 %v2802, %v2798
    %v3267 = vpack.c.b16 %v2803, %v2799
    %v3268 = vpack.c.b16 %v2804, %v2800
    %v3269 = vpack.c.b16 %v2809, %v2805
    %v3270 = vpack.c.b16 %v2810, %v2806
    %v3271 = vpack.c.b16 %v2811, %v2807
    %v3272 = vpack.c.b16 %v2812, %v2808
    %v3273 = vpack.c.b16 %v2817, %v2813
    %v3274 = vpack.c.b16 %v2818, %v2814
    %v3275 = vpack.c.b16 %v2819, %v2815
    %v3276 = vpack.c.b16 %v2820, %v2816
    %v3277 = vpack.c.b16 %v2825, %v2821
    %v3278 = vpack.c.b16 %v2826, %v2822
    %v3279 = vpack.c.b16 %v2827, %v2823
    %v3280 = vpack.c.b16 %v2828, %v2824
    %v3281 = vpack.c.b16 %v2833, %v2829
    %v3282 = vpack.c.b16 %v2834, %v2830
    %v3283 = vpack.c.b16 %v2835, %v2831
    %v3284 = vpack.c.b16 %v2836, %v2832
    %v3285 = vpack.c.b16 %v2841, %v2837
    %v3286 = vpack.c.b16 %v2842, %v2838
    %v3287 = vpack.c.b16 %v2843, %v2839
    %v3288 = vpack.c.b16 %v2844, %v2840
    %v3289 = vpack.c.b16 %v2849, %v2845
    %v3290 = vpack.c.b16 %v2850, %v2846
    %v3291 = vpack.c.b16 %v2851, %v2847
    %v3292 = vpack.c.b16 %v2852, %v2848
    %v3293 = vpack.c.b16 %v2857, %v2853
    %v3294 = vpack.c.b16 %v2858, %v2854
    %v3295 = vpack.c.b16 %v2859, %v2855
    %v3296 = vpack.c.b16 %v2860, %v2856
    %v3297 = vpack.c.b16 %v2865, %v2861
    %v3298 = vpack.c.b16 %v2866, %v2862
    %v3299 = vpack.c.b16 %v2867, %v2863
    %v3300 = vpack.c.b16 %v2868, %v2864
    %v3301 = vpack.c.b16 %v2873, %v2869
    %v3302 = vpack.c.b16 %v2874, %v2870
    %v3303 = vpack.c.b16 %v2875, %v2871
    %v3304 = vpack.c.b16 %v2876, %v2872
    %v3305 = vpack.c.b16 %v2881, %v2877
    %v3306 = vpack.c.b16 %v2882, %v2878
    %v3307 = vpack.c.b16 %v2883, %v2879
    %v3308 = vpack.c.b16 %v2884, %v2880
    %v3309 = vpack.c.b16 %v2889, %v2885
    %v3310 = vpack.c.b16 %v2890, %v2886
    %v3311 = vpack.c.b16 %v2891, %v2887
    %v3312 = vpack.c.b16 %v2892, %v2888
    %v3313 = vpack.c.b16 %v2897, %v2893
    %v3314 = vpack.c.b16 %v2898, %v2894
    %v3315 = vpack.c.b16 %v2899, %v2895
    %v3316 = vpack.c.b16 %v2900, %v2896
    %v3317 = vpack.c.b16 %v2905, %v2901
    %v3318 = vpack.c.b16 %v2906, %v2902
    %v3319 = vpack.c.b16 %v2907, %v2903
    %v3320 = vpack.c.b16 %v2908, %v2904
    %v3321 = vpack.c.b16 %v2913, %v2909
    %v3322 = vpack.c.b16 %v2914, %v2910
    %v3323 = vpack.c.b16 %v2915, %v2911
    %v3324 = vpack.c.b16 %v2916, %v2912
    %v3325 = vpack.c.b16 %v2921, %v2917
    %v3326 = vpack.c.b16 %v2922, %v2918
    %v3327 = vpack.c.b16 %v2923, %v2919
    %v3328 = vpack.c.b16 %v2924, %v2920
    %v3329 = vpack.c.b16 %v2929, %v2925
    %v3330 = vpack.c.b16 %v2930, %v2926
    %v3331 = vpack.c.b16 %v2931, %v2927
    %v3332 = vpack.c.b16 %v2932, %v2928
    %v3333 = vpack.c.b16 %v2937, %v2933
    %v3334 = vpack.c.b16 %v2938, %v2934
    %v3335 = vpack.c.b16 %v2939, %v2935
    %v3336 = vpack.c.b16 %v2940, %v2936
    %v3337 = vpack.c.b16 %v2945, %v2941
    %v3338 = vpack.c.b16 %v2946, %v2942
    %v3339 = vpack.c.b16 %v2947, %v2943
    %v3340 = vpack.c.b16 %v2948, %v2944
    %v3341 = vpack.c.b16 %v2953, %v2949
    %v3342 = vpack.c.b16 %v2954, %v2950
    %v3343 = vpack.c.b16 %v2955, %v2951
    %v3344 = vpack.c.b16 %v2956, %v2952
    %v3345 = vpack.c.b16 %v2961, %v2957
    %v3346 = vpack.c.b16 %v2962, %v2958
    %v3347 = vpack.c.b16 %v2963, %v2959
    %v3348 = vpack.c.b16 %v2964, %v2960
    %v3349 = vpack.c.b16 %v2969, %v2965
    %v3350 = vpack.c.b16 %v2970, %v2966
    %v3351 = vpack.c.b16 %v2971, %v2967
    %v3352 = vpack.c.b16 %v2972, %v2968
    %v3353 = vpack.c.b16 %v2977, %v2973
    %v3354 = vpack.c.b16 %v2978, %v2974
    %v3355 = vpack.c.b16 %v2979, %v2975
    %v3356 = vpack.c.b16 %v2980, %v2976
    %v3357 = vpack.c.b16 %v2985, %v2981
    %v3358 = vpack.c.b16 %v2986, %v2982
    %v3359 = vpack.c.b16 %v2987, %v2983
    %v3360 = vpack.c.b16 %v2988, %v2984
    %v3361 = vpack.c.b16 %v2993, %v2989
    %v3362 = vpack.c.b16 %v2994, %v2990
    %v3363 = vpack.c.b16 %v2995, %v2991
    %v3364 = vpack.c.b16 %v2996, %v2992
    %v3365 = vpack.c.b16 %v3001, %v2997
    %v3366 = vpack.c.b16 %v3002, %v2998
    %v3367 = vpack.c.b16 %v3003, %v2999
    %v3368 = vpack.c.b16 %v3004, %v3000
    %v3369 = vpack.c.b16 %v3009, %v3005
    %v3370 = vpack.c.b16 %v3010, %v3006
    %v3371 = vpack.c.b16 %v3011, %v3007
    %v3372 = vpack.c.b16 %v3012, %v3008
    %v3373 = vpack.c.b16 %v3017, %v3013
    %v3374 = vpack.c.b16 %v3018, %v3014
    %v3375 = vpack.c.b16 %v3019, %v3015
    %v3376 = vpack.c.b16 %v3020, %v3016
    %v3377 = vpack.c.b16 %v3025, %v3021
    %v3378 = vpack.c.b16 %v3026, %v3022
    %v3379 = vpack.c.b16 %v3027, %v3023
    %v3380 = vpack.c.b16 %v3028, %v3024
    %v3381 = vpack.c.b16 %v3033, %v3029
    %v3382 = vpack.c.b16 %v3034, %v3030
    %v3383 = vpack.c.b16 %v3035, %v3031
    %v3384 = vpack.c.b16 %v3036, %v3032
    %v3385 = vpack.c.b16 %v3041, %v3037
    %v3386 = vpack.c.b16 %v3042, %v3038
    %v3387 = vpack.c.b16 %v3043, %v3039
    %v3388 = vpack.c.b16 %v3044, %v3040
    %v3389 = vpack.c.b16 %v3049, %v3045
    %v3390 = vpack.c.b16 %v3050, %v3046
    %v3391 = vpack.c.b16 %v3051, %v3047
    %v3392 = vpack.c.b16 %v3052, %v3048
    %v3393 = vpack.c.b16 %v3057, %v3053
    %v3394 = vpack.c.b16 %v3058, %v3054
    %v3395 = vpack.c.b16 %v3059, %v3055
    %v3396 = vpack.c.b16 %v3060, %v3056
    %v3397 = vpack.c.b16 %v3065, %v3061
    %v3398 = vpack.c.b16 %v3066, %v3062
    %v3399 = vpack.c.b16 %v3067, %v3063
    %v3400 = vpack.c.b16 %v3068, %v3064
    %v3401 = vpack.c.b16 %v3073, %v3069
    %v3402 = vpack.c.b16 %v3074, %v3070
    %v3403 = vpack.c.b16 %v3075, %v3071
    %v3404 = vpack.c.b16 %v3076, %v3072
    %v3405 = vpack.c.b16 %v3081, %v3077
    %v3406 = vpack.c.b16 %v3082, %v3078
    %v3407 = vpack.c.b16 %v3083, %v3079
    %v3408 = vpack.c.b16 %v3084, %v3080
    %v3409 = vpack.c.b16 %v3089, %v3085
    %v3410 = vpack.c.b16 %v3090, %v3086
    %v3411 = vpack.c.b16 %v3091, %v3087
    %v3412 = vpack.c.b16 %v3092, %v3088
    %v3413 = vpack.c.b16 %v3097, %v3093
    %v3414 = vpack.c.b16 %v3098, %v3094
    %v3415 = vpack.c.b16 %v3099, %v3095
    %v3416 = vpack.c.b16 %v3100, %v3096
    %v3417 = vpack.c.b16 %v3105, %v3101
    %v3418 = vpack.c.b16 %v3106, %v3102
    %v3419 = vpack.c.b16 %v3107, %v3103
    %v3420 = vpack.c.b16 %v3108, %v3104
    %v3421 = vpack.c.b16 %v3113, %v3109
    %v3422 = vpack.c.b16 %v3114, %v3110
    %v3423 = vpack.c.b16 %v3115, %v3111
    %v3424 = vpack.c.b16 %v3116, %v3112
    %v3425 = vpack.c.b16 %v3121, %v3117
    %v3426 = vpack.c.b16 %v3122, %v3118
    %v3427 = vpack.c.b16 %v3123, %v3119
    %v3428 = vpack.c.b16 %v3124, %v3120
    %v3429 = vpack.c.b16 %v3129, %v3125
    %v3430 = vpack.c.b16 %v3130, %v3126
    %v3431 = vpack.c.b16 %v3131, %v3127
    %v3432 = vpack.c.b16 %v3132, %v3128
    %v3433 = vpack.c.b16 %v3137, %v3133
    %v3434 = vpack.c.b16 %v3138, %v3134
    %v3435 = vpack.c.b16 %v3139, %v3135
    %v3436 = vpack.c.b16 %v3140, %v3136
    %v3437 = vpack.c.b16 %v3145, %v3141
    %v3438 = vpack.c.b16 %v3146, %v3142
    %v3439 = vpack.c.b16 %v3147, %v3143
    %v3440 = vpack.c.b16 %v3148, %v3144
    %v3441 = vpack.c.b16 %v3153, %v3149
    %v3442 = vpack.c.b16 %v3154, %v3150
    %v3443 = vpack.c.b16 %v3155, %v3151
    %v3444 = vpack.c.b16 %v3156, %v3152
    %v3445 = vpack.c.b16 %v3161, %v3157
    %v3446 = vpack.c.b16 %v3162, %v3158
    %v3447 = vpack.c.b16 %v3163, %v3159
    %v3448 = vpack.c.b16 %v3164, %v3160
    %v3449 = vpack.c.b16 %v3169, %v3165
    %v3450 = vpack.c.b16 %v3170, %v3166
    %v3451 = vpack.c.b16 %v3171, %v3167
    %v3452 = vpack.c.b16 %v3172, %v3168
    %v3453 = vpack.c.b16 %v3177, %v3173
    %v3454 = vpack.c.b16 %v3178, %v3174
    %v3455 = vpack.c.b16 %v3179, %v3175
    %v3456 = vpack.c.b16 %v3180, %v3176
    %v3457 = vpack.c.b16 %v3185, %v3181
    %v3458 = vpack.c.b16 %v3186, %v3182
    %v3459 = vpack.c.b16 %v3187, %v3183
    %v3460 = vpack.c.b16 %v3188, %v3184
    %v3461 = vpack.c.b16 %v3193, %v3189
    %v3462 = vpack.c.b16 %v3194, %v3190
    %v3463 = vpack.c.b16 %v3195, %v3191
    %v3464 = vpack.c.b16 %v3196, %v3192
    %v3465 = vpack.c.b16 %v3201, %v3197
    %v3466 = vpack.c.b16 %v3202, %v3198
    %v3467 = vpack.c.b16 %v3203, %v3199
    %v3468 = vpack.c.b16 %v3204, %v3200
    %v3469 = vpack.c.b16 %v3209, %v3205
    %v3470 = vpack.c.b16 %v3210, %v3206
    %v3471 = vpack.c.b16 %v3211, %v3207
    %v3472 = vpack.c.b16 %v3212, %v3208
    %v3473 = vpack.c.b16 %v3217, %v3213
    %v3474 = vpack.c.b16 %v3218, %v3214
    %v3475 = vpack.c.b16 %v3219, %v3215
    %v3476 = vpack.c.b16 %v3220, %v3216
    %3733 = vmatpush.bf16.msra.mxu0 %v3249
    %3734 = vmatpush.bf16.msra.mxu0 %v3245
    %3735 = vmatpush.bf16.msra.mxu0 %v3241
    %3736 = vmatpush.bf16.msra.mxu0 %v3237
    %3737 = vmatpush.bf16.msra.mxu0 %v3233
    %3738 = vmatpush.bf16.msra.mxu0 %v3229
    %3739 = vmatpush.bf16.msra.mxu0 %v3225
    %3740 = vmatpush.bf16.msra.mxu0 %v3221
    %3741 = vmatmul.bf16.gmra.mxu0 %v2179
    %v3742 = vpop.f32.mrf.mxu0
    %v3743 = vadd.f32 %v2445, %v3742
    %v3744 = vpop.f32.mrf.mxu0
    %v3745 = vadd.f32 %v2445, %v3744
    %3746 = vdwg.mxu0
    %3747 = vmatpush.bf16.msra.mxu0 %v3281
    %3748 = vmatpush.bf16.msra.mxu0 %v3277
    %3749 = vmatpush.bf16.msra.mxu0 %v3273
    %3750 = vmatpush.bf16.msra.mxu0 %v3269
    %3751 = vmatpush.bf16.msra.mxu0 %v3265
    %3752 = vmatpush.bf16.msra.mxu0 %v3261
    %3753 = vmatpush.bf16.msra.mxu0 %v3257
    %3754 = vmatpush.bf16.msra.mxu0 %v3253
    %3755 = vmatmul.bf16.gmra.mxu0 %v2180
    %v3756 = vpop.f32.mrf.mxu0
    %v3757 = vadd.f32 %v3743, %v3756
    %v3758 = vpop.f32.mrf.mxu0
    %v3759 = vadd.f32 %v3745, %v3758
    %3760 = vdwg.mxu0
    %3761 = vmatpush.bf16.msra.mxu0 %v3313
    %3762 = vmatpush.bf16.msra.mxu0 %v3309
    %3763 = vmatpush.bf16.msra.mxu0 %v3305
    %3764 = vmatpush.bf16.msra.mxu0 %v3301
    %3765 = vmatpush.bf16.msra.mxu0 %v3297
    %3766 = vmatpush.bf16.msra.mxu0 %v3293
    %3767 = vmatpush.bf16.msra.mxu0 %v3289
    %3768 = vmatpush.bf16.msra.mxu0 %v3285
    %3769 = vmatmul.bf16.gmra.mxu0 %v2181
    %v3770 = vpop.f32.mrf.mxu0
    %v3771 = vadd.f32 %v3757, %v3770
    %v3772 = vpop.f32.mrf.mxu0
    %v3773 = vadd.f32 %v3759, %v3772
    %3774 = vdwg.mxu0
    %3775 = vmatpush.bf16.msra.mxu0 %v3345
    %3776 = vmatpush.bf16.msra.mxu0 %v3341
    %3777 = vmatpush.bf16.msra.mxu0 %v3337
    %3778 = vmatpush.bf16.msra.mxu0 %v3333
    %3779 = vmatpush.bf16.msra.mxu0 %v3329
    %3780 = vmatpush.bf16.msra.mxu0 %v3325
    %3781 = vmatpush.bf16.msra.mxu0 %v3321
    %3782 = vmatpush.bf16.msra.mxu0 %v3317
    %3783 = vmatmul.bf16.gmra.mxu0 %v2182
    %v3784 = vpop.f32.mrf.mxu0
    %v3785 = vadd.f32 %v3771, %v3784
    %v3786 = vpop.f32.mrf.mxu0
    %v3787 = vadd.f32 %v3773, %v3786
    %3788 = vdwg.mxu0
    %3789 = vmatpush.bf16.msra.mxu0 %v3377
    %3790 = vmatpush.bf16.msra.mxu0 %v3373
    %3791 = vmatpush.bf16.msra.mxu0 %v3369
    %3792 = vmatpush.bf16.msra.mxu0 %v3365
    %3793 = vmatpush.bf16.msra.mxu0 %v3361
    %3794 = vmatpush.bf16.msra.mxu0 %v3357
    %3795 = vmatpush.bf16.msra.mxu0 %v3353
    %3796 = vmatpush.bf16.msra.mxu0 %v3349
    %3797 = vmatmul.bf16.gmra.mxu0 %v2183
    %v3798 = vpop.f32.mrf.mxu0
    %v3799 = vadd.f32 %v3785, %v3798
    %v3800 = vpop.f32.mrf.mxu0
    %v3801 = vadd.f32 %v3787, %v3800
    %3802 = vdwg.mxu0
    %3803 = vmatpush.bf16.msra.mxu0 %v3409
    %3804 = vmatpush.bf16.msra.mxu0 %v3405
    %3805 = vmatpush.bf16.msra.mxu0 %v3401
    %3806 = vmatpush.bf16.msra.mxu0 %v3397
    %3807 = vmatpush.bf16.msra.mxu0 %v3393
    %3808 = vmatpush.bf16.msra.mxu0 %v3389
    %3809 = vmatpush.bf16.msra.mxu0 %v3385
    %3810 = vmatpush.bf16.msra.mxu0 %v3381
    %3811 = vmatmul.bf16.gmra.mxu0 %v2184
    %v3812 = vpop.f32.mrf.mxu0
    %v3813 = vadd.f32 %v3799, %v3812
    %v3814 = vpop.f32.mrf.mxu0
    %v3815 = vadd.f32 %v3801, %v3814
    %3816 = vdwg.mxu0
    %3817 = vmatpush.bf16.msra.mxu0 %v3441
    %3818 = vmatpush.bf16.msra.mxu0 %v3437
    %3819 = vmatpush.bf16.msra.mxu0 %v3433
    %3820 = vmatpush.bf16.msra.mxu0 %v3429
    %3821 = vmatpush.bf16.msra.mxu0 %v3425
    %3822 = vmatpush.bf16.msra.mxu0 %v3421
    %3823 = vmatpush.bf16.msra.mxu0 %v3417
    %3824 = vmatpush.bf16.msra.mxu0 %v3413
    %3825 = vmatmul.bf16.gmra.mxu0 %v2185
    %v3826 = vpop.f32.mrf.mxu0
    %v3827 = vadd.f32 %v3813, %v3826
    %v3828 = vpop.f32.mrf.mxu0
    %v3829 = vadd.f32 %v3815, %v3828
    %3830 = vdwg.mxu0
    %3831 = vmatpush.bf16.msra.mxu0 %v3473
    %3832 = vmatpush.bf16.msra.mxu0 %v3469
    %3833 = vmatpush.bf16.msra.mxu0 %v3465
    %3834 = vmatpush.bf16.msra.mxu0 %v3461
    %3835 = vmatpush.bf16.msra.mxu0 %v3457
    %3836 = vmatpush.bf16.msra.mxu0 %v3453
    %3837 = vmatpush.bf16.msra.mxu0 %v3449
    %3838 = vmatpush.bf16.msra.mxu0 %v3445
    %3839 = vmatmul.bf16.gmra.mxu0 %v2186
    %v3840 = vpop.f32.mrf.mxu0
    %v3841 = vadd.f32 %v3827, %v3840
    %v3842 = vpop.f32.mrf.mxu0
    %v3843 = vadd.f32 %v3829, %v3842
    %3844 = vdwg.mxu0
    %3845 = vmatpush.bf16.msra.mxu0 %v3250
    %3846 = vmatpush.bf16.msra.mxu0 %v3246
    %3847 = vmatpush.bf16.msra.mxu0 %v3242
    %3848 = vmatpush.bf16.msra.mxu0 %v3238
    %3849 = vmatpush.bf16.msra.mxu0 %v3234
    %3850 = vmatpush.bf16.msra.mxu0 %v3230
    %3851 = vmatpush.bf16.msra.mxu0 %v3226
    %3852 = vmatpush.bf16.msra.mxu0 %v3222
    %3853 = vmatmul.bf16.gmra.mxu0 %v2179
    %v3854 = vpop.f32.mrf.mxu0
    %v3855 = vadd.f32 %v2446, %v3854
    %v3856 = vpop.f32.mrf.mxu0
    %v3857 = vadd.f32 %v2446, %v3856
    %3858 = vdwg.mxu0
    %3859 = vmatpush.bf16.msra.mxu0 %v3282
    %3860 = vmatpush.bf16.msra.mxu0 %v3278
    %3861 = vmatpush.bf16.msra.mxu0 %v3274
    %3862 = vmatpush.bf16.msra.mxu0 %v3270
    %3863 = vmatpush.bf16.msra.mxu0 %v3266
    %3864 = vmatpush.bf16.msra.mxu0 %v3262
    %3865 = vmatpush.bf16.msra.mxu0 %v3258
    %3866 = vmatpush.bf16.msra.mxu0 %v3254
    %3867 = vmatmul.bf16.gmra.mxu0 %v2180
    %v3868 = vpop.f32.mrf.mxu0
    %v3869 = vadd.f32 %v3855, %v3868
    %v3870 = vpop.f32.mrf.mxu0
    %v3871 = vadd.f32 %v3857, %v3870
    %3872 = vdwg.mxu0
    %3873 = vmatpush.bf16.msra.mxu0 %v3314
    %3874 = vmatpush.bf16.msra.mxu0 %v3310
    %3875 = vmatpush.bf16.msra.mxu0 %v3306
    %3876 = vmatpush.bf16.msra.mxu0 %v3302
    %3877 = vmatpush.bf16.msra.mxu0 %v3298
    %3878 = vmatpush.bf16.msra.mxu0 %v3294
    %3879 = vmatpush.bf16.msra.mxu0 %v3290
    %3880 = vmatpush.bf16.msra.mxu0 %v3286
    %3881 = vmatmul.bf16.gmra.mxu0 %v2181
    %v3882 = vpop.f32.mrf.mxu0
    %v3883 = vadd.f32 %v3869, %v3882
    %v3884 = vpop.f32.mrf.mxu0
    %v3885 = vadd.f32 %v3871, %v3884
    %3886 = vdwg.mxu0
    %3887 = vmatpush.bf16.msra.mxu0 %v3346
    %3888 = vmatpush.bf16.msra.mxu0 %v3342
    %3889 = vmatpush.bf16.msra.mxu0 %v3338
    %3890 = vmatpush.bf16.msra.mxu0 %v3334
    %3891 = vmatpush.bf16.msra.mxu0 %v3330
    %3892 = vmatpush.bf16.msra.mxu0 %v3326
    %3893 = vmatpush.bf16.msra.mxu0 %v3322
    %3894 = vmatpush.bf16.msra.mxu0 %v3318
    %3895 = vmatmul.bf16.gmra.mxu0 %v2182
    %v3896 = vpop.f32.mrf.mxu0
    %v3897 = vadd.f32 %v3883, %v3896
    %v3898 = vpop.f32.mrf.mxu0
    %v3899 = vadd.f32 %v3885, %v3898
    %3900 = vdwg.mxu0
    %3901 = vmatpush.bf16.msra.mxu0 %v3378
    %3902 = vmatpush.bf16.msra.mxu0 %v3374
    %3903 = vmatpush.bf16.msra.mxu0 %v3370
    %3904 = vmatpush.bf16.msra.mxu0 %v3366
    %3905 = vmatpush.bf16.msra.mxu0 %v3362
    %3906 = vmatpush.bf16.msra.mxu0 %v3358
    %3907 = vmatpush.bf16.msra.mxu0 %v3354
    %3908 = vmatpush.bf16.msra.mxu0 %v3350
    %3909 = vmatmul.bf16.gmra.mxu0 %v2183
    %v3910 = vpop.f32.mrf.mxu0
    %v3911 = vadd.f32 %v3897, %v3910
    %v3912 = vpop.f32.mrf.mxu0
    %v3913 = vadd.f32 %v3899, %v3912
    %3914 = vdwg.mxu0
    %3915 = vmatpush.bf16.msra.mxu0 %v3410
    %3916 = vmatpush.bf16.msra.mxu0 %v3406
    %3917 = vmatpush.bf16.msra.mxu0 %v3402
    %3918 = vmatpush.bf16.msra.mxu0 %v3398
    %3919 = vmatpush.bf16.msra.mxu0 %v3394
    %3920 = vmatpush.bf16.msra.mxu0 %v3390
    %3921 = vmatpush.bf16.msra.mxu0 %v3386
    %3922 = vmatpush.bf16.msra.mxu0 %v3382
    %3923 = vmatmul.bf16.gmra.mxu0 %v2184
    %v3924 = vpop.f32.mrf.mxu0
    %v3925 = vadd.f32 %v3911, %v3924
    %v3926 = vpop.f32.mrf.mxu0
    %v3927 = vadd.f32 %v3913, %v3926
    %3928 = vdwg.mxu0
    %3929 = vmatpush.bf16.msra.mxu0 %v3442
    %3930 = vmatpush.bf16.msra.mxu0 %v3438
    %3931 = vmatpush.bf16.msra.mxu0 %v3434
    %3932 = vmatpush.bf16.msra.mxu0 %v3430
    %3933 = vmatpush.bf16.msra.mxu0 %v3426
    %3934 = vmatpush.bf16.msra.mxu0 %v3422
    %3935 = vmatpush.bf16.msra.mxu0 %v3418
    %3936 = vmatpush.bf16.msra.mxu0 %v3414
    %3937 = vmatmul.bf16.gmra.mxu0 %v2185
    %v3938 = vpop.f32.mrf.mxu0
    %v3939 = vadd.f32 %v3925, %v3938
    %v3940 = vpop.f32.mrf.mxu0
    %v3941 = vadd.f32 %v3927, %v3940
    %3942 = vdwg.mxu0
    %3943 = vmatpush.bf16.msra.mxu0 %v3474
    %3944 = vmatpush.bf16.msra.mxu0 %v3470
    %3945 = vmatpush.bf16.msra.mxu0 %v3466
    %3946 = vmatpush.bf16.msra.mxu0 %v3462
    %3947 = vmatpush.bf16.msra.mxu0 %v3458
    %3948 = vmatpush.bf16.msra.mxu0 %v3454
    %3949 = vmatpush.bf16.msra.mxu0 %v3450
    %3950 = vmatpush.bf16.msra.mxu0 %v3446
    %3951 = vmatmul.bf16.gmra.mxu0 %v2186
    %v3952 = vpop.f32.mrf.mxu0
    %v3953 = vadd.f32 %v3939, %v3952
    %v3954 = vpop.f32.mrf.mxu0
    %v3955 = vadd.f32 %v3941, %v3954
    %3956 = vdwg.mxu0
    %3957 = vmatpush.bf16.msra.mxu0 %v3251
    %3958 = vmatpush.bf16.msra.mxu0 %v3247
    %3959 = vmatpush.bf16.msra.mxu0 %v3243
    %3960 = vmatpush.bf16.msra.mxu0 %v3239
    %3961 = vmatpush.bf16.msra.mxu0 %v3235
    %3962 = vmatpush.bf16.msra.mxu0 %v3231
    %3963 = vmatpush.bf16.msra.mxu0 %v3227
    %3964 = vmatpush.bf16.msra.mxu0 %v3223
    %3965 = vmatmul.bf16.gmra.mxu0 %v2179
    %v3966 = vpop.f32.mrf.mxu0
    %v3967 = vadd.f32 %v2447, %v3966
    %v3968 = vpop.f32.mrf.mxu0
    %v3969 = vadd.f32 %v2447, %v3968
    %3970 = vdwg.mxu0
    %3971 = vmatpush.bf16.msra.mxu0 %v3283
    %3972 = vmatpush.bf16.msra.mxu0 %v3279
    %3973 = vmatpush.bf16.msra.mxu0 %v3275
    %3974 = vmatpush.bf16.msra.mxu0 %v3271
    %3975 = vmatpush.bf16.msra.mxu0 %v3267
    %3976 = vmatpush.bf16.msra.mxu0 %v3263
    %3977 = vmatpush.bf16.msra.mxu0 %v3259
    %3978 = vmatpush.bf16.msra.mxu0 %v3255
    %3979 = vmatmul.bf16.gmra.mxu0 %v2180
    %v3980 = vpop.f32.mrf.mxu0
    %v3981 = vadd.f32 %v3967, %v3980
    %v3982 = vpop.f32.mrf.mxu0
    %v3983 = vadd.f32 %v3969, %v3982
    %3984 = vdwg.mxu0
    %3985 = vmatpush.bf16.msra.mxu0 %v3315
    %3986 = vmatpush.bf16.msra.mxu0 %v3311
    %3987 = vmatpush.bf16.msra.mxu0 %v3307
    %3988 = vmatpush.bf16.msra.mxu0 %v3303
    %3989 = vmatpush.bf16.msra.mxu0 %v3299
    %3990 = vmatpush.bf16.msra.mxu0 %v3295
    %3991 = vmatpush.bf16.msra.mxu0 %v3291
    %3992 = vmatpush.bf16.msra.mxu0 %v3287
    %3993 = vmatmul.bf16.gmra.mxu0 %v2181
    %v3994 = vpop.f32.mrf.mxu0
    %v3995 = vadd.f32 %v3981, %v3994
    %v3996 = vpop.f32.mrf.mxu0
    %v3997 = vadd.f32 %v3983, %v3996
    %3998 = vdwg.mxu0
    %3999 = vmatpush.bf16.msra.mxu0 %v3347
    %4000 = vmatpush.bf16.msra.mxu0 %v3343
    %4001 = vmatpush.bf16.msra.mxu0 %v3339
    %4002 = vmatpush.bf16.msra.mxu0 %v3335
    %4003 = vmatpush.bf16.msra.mxu0 %v3331
    %4004 = vmatpush.bf16.msra.mxu0 %v3327
    %4005 = vmatpush.bf16.msra.mxu0 %v3323
    %4006 = vmatpush.bf16.msra.mxu0 %v3319
    %4007 = vmatmul.bf16.gmra.mxu0 %v2182
    %v4008 = vpop.f32.mrf.mxu0
    %v4009 = vadd.f32 %v3995, %v4008
    %v4010 = vpop.f32.mrf.mxu0
    %v4011 = vadd.f32 %v3997, %v4010
    %4012 = vdwg.mxu0
    %4013 = vmatpush.bf16.msra.mxu0 %v3379
    %4014 = vmatpush.bf16.msra.mxu0 %v3375
    %4015 = vmatpush.bf16.msra.mxu0 %v3371
    %4016 = vmatpush.bf16.msra.mxu0 %v3367
    %4017 = vmatpush.bf16.msra.mxu0 %v3363
    %4018 = vmatpush.bf16.msra.mxu0 %v3359
    %4019 = vmatpush.bf16.msra.mxu0 %v3355
    %4020 = vmatpush.bf16.msra.mxu0 %v3351
    %4021 = vmatmul.bf16.gmra.mxu0 %v2183
    %v4022 = vpop.f32.mrf.mxu0
    %v4023 = vadd.f32 %v4009, %v4022
    %v4024 = vpop.f32.mrf.mxu0
    %v4025 = vadd.f32 %v4011, %v4024
    %4026 = vdwg.mxu0
    %4027 = vmatpush.bf16.msra.mxu0 %v3411
    %4028 = vmatpush.bf16.msra.mxu0 %v3407
    %4029 = vmatpush.bf16.msra.mxu0 %v3403
    %4030 = vmatpush.bf16.msra.mxu0 %v3399
    %4031 = vmatpush.bf16.msra.mxu0 %v3395
    %4032 = vmatpush.bf16.msra.mxu0 %v3391
    %4033 = vmatpush.bf16.msra.mxu0 %v3387
    %4034 = vmatpush.bf16.msra.mxu0 %v3383
    %4035 = vmatmul.bf16.gmra.mxu0 %v2184
    %v4036 = vpop.f32.mrf.mxu0
    %v4037 = vadd.f32 %v4023, %v4036
    %v4038 = vpop.f32.mrf.mxu0
    %v4039 = vadd.f32 %v4025, %v4038
    %4040 = vdwg.mxu0
    %4041 = vmatpush.bf16.msra.mxu0 %v3443
    %4042 = vmatpush.bf16.msra.mxu0 %v3439
    %4043 = vmatpush.bf16.msra.mxu0 %v3435
    %4044 = vmatpush.bf16.msra.mxu0 %v3431
    %4045 = vmatpush.bf16.msra.mxu0 %v3427
    %4046 = vmatpush.bf16.msra.mxu0 %v3423
    %4047 = vmatpush.bf16.msra.mxu0 %v3419
    %4048 = vmatpush.bf16.msra.mxu0 %v3415
    %4049 = vmatmul.bf16.gmra.mxu0 %v2185
    %v4050 = vpop.f32.mrf.mxu0
    %v4051 = vadd.f32 %v4037, %v4050
    %v4052 = vpop.f32.mrf.mxu0
    %v4053 = vadd.f32 %v4039, %v4052
    %4054 = vdwg.mxu0
    %4055 = vmatpush.bf16.msra.mxu0 %v3475
    %4056 = vmatpush.bf16.msra.mxu0 %v3471
    %4057 = vmatpush.bf16.msra.mxu0 %v3467
    %4058 = vmatpush.bf16.msra.mxu0 %v3463
    %4059 = vmatpush.bf16.msra.mxu0 %v3459
    %4060 = vmatpush.bf16.msra.mxu0 %v3455
    %4061 = vmatpush.bf16.msra.mxu0 %v3451
    %4062 = vmatpush.bf16.msra.mxu0 %v3447
    %4063 = vmatmul.bf16.gmra.mxu0 %v2186
    %v4064 = vpop.f32.mrf.mxu0
    %v4065 = vadd.f32 %v4051, %v4064
    %v4066 = vpop.f32.mrf.mxu0
    %v4067 = vadd.f32 %v4053, %v4066
    %4068 = vdwg.mxu0
    %4069 = vmatpush.bf16.msra.mxu0 %v3252
    %4070 = vmatpush.bf16.msra.mxu0 %v3248
    %4071 = vmatpush.bf16.msra.mxu0 %v3244
    %4072 = vmatpush.bf16.msra.mxu0 %v3240
    %4073 = vmatpush.bf16.msra.mxu0 %v3236
    %4074 = vmatpush.bf16.msra.mxu0 %v3232
    %4075 = vmatpush.bf16.msra.mxu0 %v3228
    %4076 = vmatpush.bf16.msra.mxu0 %v3224
    %4077 = vmatmul.bf16.gmra.mxu0 %v2179
    %v4078 = vpop.f32.mrf.mxu0
    %v4079 = vadd.f32 %v2448, %v4078
    %v4080 = vpop.f32.mrf.mxu0
    %v4081 = vadd.f32 %v2448, %v4080
    %4082 = vdwg.mxu0
    %4083 = vmatpush.bf16.msra.mxu0 %v3284
    %4084 = vmatpush.bf16.msra.mxu0 %v3280
    %4085 = vmatpush.bf16.msra.mxu0 %v3276
    %4086 = vmatpush.bf16.msra.mxu0 %v3272
    %4087 = vmatpush.bf16.msra.mxu0 %v3268
    %4088 = vmatpush.bf16.msra.mxu0 %v3264
    %4089 = vmatpush.bf16.msra.mxu0 %v3260
    %4090 = vmatpush.bf16.msra.mxu0 %v3256
    %4091 = vmatmul.bf16.gmra.mxu0 %v2180
    %v4092 = vpop.f32.mrf.mxu0
    %v4093 = vadd.f32 %v4079, %v4092
    %v4094 = vpop.f32.mrf.mxu0
    %v4095 = vadd.f32 %v4081, %v4094
    %4096 = vdwg.mxu0
    %4097 = vmatpush.bf16.msra.mxu0 %v3316
    %4098 = vmatpush.bf16.msra.mxu0 %v3312
    %4099 = vmatpush.bf16.msra.mxu0 %v3308
    %4100 = vmatpush.bf16.msra.mxu0 %v3304
    %4101 = vmatpush.bf16.msra.mxu0 %v3300
    %4102 = vmatpush.bf16.msra.mxu0 %v3296
    %4103 = vmatpush.bf16.msra.mxu0 %v3292
    %4104 = vmatpush.bf16.msra.mxu0 %v3288
    %4105 = vmatmul.bf16.gmra.mxu0 %v2181
    %v4106 = vpop.f32.mrf.mxu0
    %v4107 = vadd.f32 %v4093, %v4106
    %v4108 = vpop.f32.mrf.mxu0
    %v4109 = vadd.f32 %v4095, %v4108
    %4110 = vdwg.mxu0
    %4111 = vmatpush.bf16.msra.mxu0 %v3348
    %4112 = vmatpush.bf16.msra.mxu0 %v3344
    %4113 = vmatpush.bf16.msra.mxu0 %v3340
    %4114 = vmatpush.bf16.msra.mxu0 %v3336
    %4115 = vmatpush.bf16.msra.mxu0 %v3332
    %4116 = vmatpush.bf16.msra.mxu0 %v3328
    %4117 = vmatpush.bf16.msra.mxu0 %v3324
    %4118 = vmatpush.bf16.msra.mxu0 %v3320
    %4119 = vmatmul.bf16.gmra.mxu0 %v2182
    %v4120 = vpop.f32.mrf.mxu0
    %v4121 = vadd.f32 %v4107, %v4120
    %v4122 = vpop.f32.mrf.mxu0
    %v4123 = vadd.f32 %v4109, %v4122
    %4124 = vdwg.mxu0
    %4125 = vmatpush.bf16.msra.mxu0 %v3380
    %4126 = vmatpush.bf16.msra.mxu0 %v3376
    %4127 = vmatpush.bf16.msra.mxu0 %v3372
    %4128 = vmatpush.bf16.msra.mxu0 %v3368
    %4129 = vmatpush.bf16.msra.mxu0 %v3364
    %4130 = vmatpush.bf16.msra.mxu0 %v3360
    %4131 = vmatpush.bf16.msra.mxu0 %v3356
    %4132 = vmatpush.bf16.msra.mxu0 %v3352
    %4133 = vmatmul.bf16.gmra.mxu0 %v2183
    %v4134 = vpop.f32.mrf.mxu0
    %v4135 = vadd.f32 %v4121, %v4134
    %v4136 = vpop.f32.mrf.mxu0
    %v4137 = vadd.f32 %v4123, %v4136
    %4138 = vdwg.mxu0
    %4139 = vmatpush.bf16.msra.mxu0 %v3412
    %4140 = vmatpush.bf16.msra.mxu0 %v3408
    %4141 = vmatpush.bf16.msra.mxu0 %v3404
    %4142 = vmatpush.bf16.msra.mxu0 %v3400
    %4143 = vmatpush.bf16.msra.mxu0 %v3396
    %4144 = vmatpush.bf16.msra.mxu0 %v3392
    %4145 = vmatpush.bf16.msra.mxu0 %v3388
    %4146 = vmatpush.bf16.msra.mxu0 %v3384
    %4147 = vmatmul.bf16.gmra.mxu0 %v2184
    %v4148 = vpop.f32.mrf.mxu0
    %v4149 = vadd.f32 %v4135, %v4148
    %v4150 = vpop.f32.mrf.mxu0
    %v4151 = vadd.f32 %v4137, %v4150
    %4152 = vdwg.mxu0
    %4153 = vmatpush.bf16.msra.mxu0 %v3444
    %4154 = vmatpush.bf16.msra.mxu0 %v3440
    %4155 = vmatpush.bf16.msra.mxu0 %v3436
    %4156 = vmatpush.bf16.msra.mxu0 %v3432
    %4157 = vmatpush.bf16.msra.mxu0 %v3428
    %4158 = vmatpush.bf16.msra.mxu0 %v3424
    %4159 = vmatpush.bf16.msra.mxu0 %v3420
    %4160 = vmatpush.bf16.msra.mxu0 %v3416
    %4161 = vmatmul.bf16.gmra.mxu0 %v2185
    %v4162 = vpop.f32.mrf.mxu0
    %v4163 = vadd.f32 %v4149, %v4162
    %v4164 = vpop.f32.mrf.mxu0
    %v4165 = vadd.f32 %v4151, %v4164
    %4166 = vdwg.mxu0
    %4167 = vmatpush.bf16.msra.mxu0 %v3476
    %4168 = vmatpush.bf16.msra.mxu0 %v3472
    %4169 = vmatpush.bf16.msra.mxu0 %v3468
    %4170 = vmatpush.bf16.msra.mxu0 %v3464
    %4171 = vmatpush.bf16.msra.mxu0 %v3460
    %4172 = vmatpush.bf16.msra.mxu0 %v3456
    %4173 = vmatpush.bf16.msra.mxu0 %v3452
    %4174 = vmatpush.bf16.msra.mxu0 %v3448
    %4175 = vmatmul.bf16.gmra.mxu0 %v2186
    %v4176 = vpop.f32.mrf.mxu0
    %v4177 = vadd.f32 %v4163, %v4176
    %v4178 = vpop.f32.mrf.mxu0
    %v4179 = vadd.f32 %v4165, %v4178
    %4180 = vdwg.mxu0
    %vm4181 = vcmp.gt.f32.partialorder %v3841, 0.0
    %vm4182 = vcmp.gt.f32.partialorder %v3953, 0.0
    %vm4183 = vcmp.gt.f32.partialorder %v4065, 0.0
    %vm4184 = vcmp.gt.f32.partialorder %v4177, 0.0
    %vm4185 = vcmp.gt.f32.partialorder %v3843, 0.0
    %vm4186 = vcmp.gt.f32.partialorder %v3955, 0.0
    %vm4187 = vcmp.gt.f32.partialorder %v4067, 0.0
    %vm4188 = vcmp.gt.f32.partialorder %v4179, 0.0
    %v4189 = vmul.f32 %v3841, 0.2
    %v4190 = vmul.f32 %v3953, 0.2
    %v4191 = vmul.f32 %v4065, 0.2
    %v4192 = vmul.f32 %v4177, 0.2
    %v4193 = vmul.f32 %v3843, 0.2
    %v4194 = vmul.f32 %v3955, 0.2
    %v4195 = vmul.f32 %v4067, 0.2
    %v4196 = vmul.f32 %v4179, 0.2
    %v4197 = vsel %vm4181, %v3841, %v4189
    %v4198 = vsel %vm4182, %v3953, %v4190
    %v4199 = vsel %vm4183, %v4065, %v4191
    %v4200 = vsel %vm4184, %v4177, %v4192
    %v4201 = vsel %vm4185, %v3843, %v4193
    %v4202 = vsel %vm4186, %v3955, %v4194
    %v4203 = vsel %vm4187, %v4067, %v4195
    %v4204 = vsel %vm4188, %v4179, %v4196
    %v4205 = vpack.c.bf16 %v4201, %v4197
    %v4206 = vpack.c.bf16 %v4202, %v4198
    %v4207 = vpack.c.bf16 %v4203, %v4199
    %v4208 = vpack.c.bf16 %v4204, %v4200
    %v4209 = vld [vmem:[#allocation11] sm:$0xff]
    %v4210 = vld [vmem:[#allocation11 + $0x8] sm:$0xff]
    %v4211 = vld [vmem:[#allocation11 + $0x10] sm:$0xff]
    %v4212 = vld [vmem:[#allocation11 + $0x18] sm:$0xff]
    %v4213 = vld [vmem:[#allocation11 + $0x20] sm:$0xff]
    %v4214 = vld [vmem:[#allocation11 + $0x28] sm:$0xff]
    %v4215 = vld [vmem:[#allocation11 + $0x30] sm:$0xff]
    %v4216 = vld [vmem:[#allocation11 + $0x38] sm:$0xff]
    %v4217 = vld [vmem:[#allocation11 + $0x40] sm:$0xff]
    %v4218 = vld [vmem:[#allocation11 + $0x48] sm:$0xff]
    %v4219 = vld [vmem:[#allocation11 + $0x50] sm:$0xff]
    %v4220 = vld [vmem:[#allocation11 + $0x58] sm:$0xff]
    %v4221 = vld [vmem:[#allocation11 + $0x60] sm:$0xff]
    %v4222 = vld [vmem:[#allocation11 + $0x68] sm:$0xff]
    %v4223 = vld [vmem:[#allocation11 + $0x70] sm:$0xff]
    %v4224 = vld [vmem:[#allocation11 + $0x78] sm:$0xff]
    %v4225 = vld [vmem:[#allocation11 + $0x80] sm:$0xff]
    %v4226 = vld [vmem:[#allocation11 + $0x88] sm:$0xff]
    %v4227 = vld [vmem:[#allocation11 + $0x90] sm:$0xff]
    %v4228 = vld [vmem:[#allocation11 + $0x98] sm:$0xff]
    %v4229 = vld [vmem:[#allocation11 + $0xa0] sm:$0xff]
    %v4230 = vld [vmem:[#allocation11 + $0xa8] sm:$0xff]
    %v4231 = vld [vmem:[#allocation11 + $0xb0] sm:$0xff]
    %v4232 = vld [vmem:[#allocation11 + $0xb8] sm:$0xff]
    %v4233 = vld [vmem:[#allocation11 + $0xc0] sm:$0xff]
    %v4234 = vld [vmem:[#allocation11 + $0xc8] sm:$0xff]
    %v4235 = vld [vmem:[#allocation11 + $0xd0] sm:$0xff]
    %v4236 = vld [vmem:[#allocation11 + $0xd8] sm:$0xff]
    %v4237 = vld [vmem:[#allocation11 + $0xe0] sm:$0xff]
    %v4238 = vld [vmem:[#allocation11 + $0xe8] sm:$0xff]
    %v4239 = vld [vmem:[#allocation11 + $0xf0] sm:$0xff]
    %v4240 = vld [vmem:[#allocation11 + $0xf8] sm:$0xff]
    %v4241 = vld [vmem:[#allocation11 + $0x100] sm:$0xff]
    %v4242 = vld [vmem:[#allocation11 + $0x108] sm:$0xff]
    %v4243 = vld [vmem:[#allocation11 + $0x110] sm:$0xff]
    %v4244 = vld [vmem:[#allocation11 + $0x118] sm:$0xff]
    %v4245 = vld [vmem:[#allocation11 + $0x120] sm:$0xff]
    %v4246 = vld [vmem:[#allocation11 + $0x128] sm:$0xff]
    %v4247 = vld [vmem:[#allocation11 + $0x130] sm:$0xff]
    %v4248 = vld [vmem:[#allocation11 + $0x138] sm:$0xff]
    %v4249 = vld [vmem:[#allocation11 + $0x140] sm:$0xff]
    %v4250 = vld [vmem:[#allocation11 + $0x148] sm:$0xff]
    %v4251 = vld [vmem:[#allocation11 + $0x150] sm:$0xff]
    %v4252 = vld [vmem:[#allocation11 + $0x158] sm:$0xff]
    %v4253 = vld [vmem:[#allocation11 + $0x160] sm:$0xff]
    %v4254 = vld [vmem:[#allocation11 + $0x168] sm:$0xff]
    %v4255 = vld [vmem:[#allocation11 + $0x170] sm:$0xff]
    %v4256 = vld [vmem:[#allocation11 + $0x178] sm:$0xff]
    %v4257 = vld [vmem:[#allocation11 + $0x180] sm:$0xff]
    %v4258 = vld [vmem:[#allocation11 + $0x188] sm:$0xff]
    %v4259 = vld [vmem:[#allocation11 + $0x190] sm:$0xff]
    %v4260 = vld [vmem:[#allocation11 + $0x198] sm:$0xff]
    %v4261 = vld [vmem:[#allocation11 + $0x1a0] sm:$0xff]
    %v4262 = vld [vmem:[#allocation11 + $0x1a8] sm:$0xff]
    %v4263 = vld [vmem:[#allocation11 + $0x1b0] sm:$0xff]
    %v4264 = vld [vmem:[#allocation11 + $0x1b8] sm:$0xff]
    %v4265 = vld [vmem:[#allocation11 + $0x1c0] sm:$0xff]
    %v4266 = vld [vmem:[#allocation11 + $0x1c8] sm:$0xff]
    %v4267 = vld [vmem:[#allocation11 + $0x1d0] sm:$0xff]
    %v4268 = vld [vmem:[#allocation11 + $0x1d8] sm:$0xff]
    %v4269 = vld [vmem:[#allocation11 + $0x1e0] sm:$0xff]
    %v4270 = vld [vmem:[#allocation11 + $0x1e8] sm:$0xff]
    %v4271 = vld [vmem:[#allocation11 + $0x1f0] sm:$0xff]
    %v4272 = vld [vmem:[#allocation11 + $0x1f8] sm:$0xff]
    %v4273 = vld [vmem:[%s6] sm:$0x3]
    %v4275 = vperm.slane %v4273, 0
    %v4276 = vperm.slane %v4273, 1
    %v4343 = vunpack.c.l.b16 %v4209
    %v4344 = vunpack.c.h.b16 %v4209
    %v4345 = vunpack.c.l.b16 %v4210
    %v4346 = vunpack.c.h.b16 %v4210
    %v4347 = vunpack.c.l.b16 %v4211
    %v4348 = vunpack.c.h.b16 %v4211
    %v4349 = vunpack.c.l.b16 %v4212
    %v4350 = vunpack.c.h.b16 %v4212
    %v4351 = vunpack.c.l.b16 %v4213
    %v4352 = vunpack.c.h.b16 %v4213
    %v4353 = vunpack.c.l.b16 %v4214
    %v4354 = vunpack.c.h.b16 %v4214
    %v4355 = vunpack.c.l.b16 %v4215
    %v4356 = vunpack.c.h.b16 %v4215
    %v4357 = vunpack.c.l.b16 %v4216
    %v4358 = vunpack.c.h.b16 %v4216
    %v4359 = vunpack.c.l.b16 %v4217
    %v4360 = vunpack.c.h.b16 %v4217
    %v4361 = vunpack.c.l.b16 %v4218
    %v4362 = vunpack.c.h.b16 %v4218
    %v4363 = vunpack.c.l.b16 %v4219
    %v4364 = vunpack.c.h.b16 %v4219
    %v4365 = vunpack.c.l.b16 %v4220
    %v4366 = vunpack.c.h.b16 %v4220
    %v4367 = vunpack.c.l.b16 %v4221
    %v4368 = vunpack.c.h.b16 %v4221
    %v4369 = vunpack.c.l.b16 %v4222
    %v4370 = vunpack.c.h.b16 %v4222
    %v4371 = vunpack.c.l.b16 %v4223
    %v4372 = vunpack.c.h.b16 %v4223
    %v4373 = vunpack.c.l.b16 %v4224
    %v4374 = vunpack.c.h.b16 %v4224
    %v4375 = vunpack.c.l.b16 %v4225
    %v4376 = vunpack.c.h.b16 %v4225
    %v4377 = vunpack.c.l.b16 %v4226
    %v4378 = vunpack.c.h.b16 %v4226
    %v4379 = vunpack.c.l.b16 %v4227
    %v4380 = vunpack.c.h.b16 %v4227
    %v4381 = vunpack.c.l.b16 %v4228
    %v4382 = vunpack.c.h.b16 %v4228
    %v4383 = vunpack.c.l.b16 %v4229
    %v4384 = vunpack.c.h.b16 %v4229
    %v4385 = vunpack.c.l.b16 %v4230
    %v4386 = vunpack.c.h.b16 %v4230
    %v4387 = vunpack.c.l.b16 %v4231
    %v4388 = vunpack.c.h.b16 %v4231
    %v4389 = vunpack.c.l.b16 %v4232
    %v4390 = vunpack.c.h.b16 %v4232
    %v4391 = vunpack.c.l.b16 %v4233
    %v4392 = vunpack.c.h.b16 %v4233
    %v4393 = vunpack.c.l.b16 %v4234
    %v4394 = vunpack.c.h.b16 %v4234
    %v4395 = vunpack.c.l.b16 %v4235
    %v4396 = vunpack.c.h.b16 %v4235
    %v4397 = vunpack.c.l.b16 %v4236
    %v4398 = vunpack.c.h.b16 %v4236
    %v4399 = vunpack.c.l.b16 %v4237
    %v4400 = vunpack.c.h.b16 %v4237
    %v4401 = vunpack.c.l.b16 %v4238
    %v4402 = vunpack.c.h.b16 %v4238
    %v4403 = vunpack.c.l.b16 %v4239
    %v4404 = vunpack.c.h.b16 %v4239
    %v4405 = vunpack.c.l.b16 %v4240
    %v4406 = vunpack.c.h.b16 %v4240
    %v4407 = vunpack.c.l.b16 %v4241
    %v4408 = vunpack.c.h.b16 %v4241
    %v4409 = vunpack.c.l.b16 %v4242
    %v4410 = vunpack.c.h.b16 %v4242
    %v4411 = vunpack.c.l.b16 %v4243
    %v4412 = vunpack.c.h.b16 %v4243
    %v4413 = vunpack.c.l.b16 %v4244
    %v4414 = vunpack.c.h.b16 %v4244
    %v4415 = vunpack.c.l.b16 %v4245
    %v4416 = vunpack.c.h.b16 %v4245
    %v4417 = vunpack.c.l.b16 %v4246
    %v4418 = vunpack.c.h.b16 %v4246
    %v4419 = vunpack.c.l.b16 %v4247
    %v4420 = vunpack.c.h.b16 %v4247
    %v4421 = vunpack.c.l.b16 %v4248
    %v4422 = vunpack.c.h.b16 %v4248
    %v4423 = vunpack.c.l.b16 %v4249
    %v4424 = vunpack.c.h.b16 %v4249
    %v4425 = vunpack.c.l.b16 %v4250
    %v4426 = vunpack.c.h.b16 %v4250
    %v4427 = vunpack.c.l.b16 %v4251
    %v4428 = vunpack.c.h.b16 %v4251
    %v4429 = vunpack.c.l.b16 %v4252
    %v4430 = vunpack.c.h.b16 %v4252
    %v4431 = vunpack.c.l.b16 %v4253
    %v4432 = vunpack.c.h.b16 %v4253
    %v4433 = vunpack.c.l.b16 %v4254
    %v4434 = vunpack.c.h.b16 %v4254
    %v4435 = vunpack.c.l.b16 %v4255
    %v4436 = vunpack.c.h.b16 %v4255
    %v4437 = vunpack.c.l.b16 %v4256
    %v4438 = vunpack.c.h.b16 %v4256
    %v4439 = vunpack.c.l.b16 %v4257
    %v4440 = vunpack.c.h.b16 %v4257
    %v4441 = vunpack.c.l.b16 %v4258
    %v4442 = vunpack.c.h.b16 %v4258
    %v4443 = vunpack.c.l.b16 %v4259
    %v4444 = vunpack.c.h.b16 %v4259
    %v4445 = vunpack.c.l.b16 %v4260
    %v4446 = vunpack.c.h.b16 %v4260
    %v4447 = vunpack.c.l.b16 %v4261
    %v4448 = vunpack.c.h.b16 %v4261
    %v4449 = vunpack.c.l.b16 %v4262
    %v4450 = vunpack.c.h.b16 %v4262
    %v4451 = vunpack.c.l.b16 %v4263
    %v4452 = vunpack.c.h.b16 %v4263
    %v4453 = vunpack.c.l.b16 %v4264
    %v4454 = vunpack.c.h.b16 %v4264
    %v4455 = vunpack.c.l.b16 %v4265
    %v4456 = vunpack.c.h.b16 %v4265
    %v4457 = vunpack.c.l.b16 %v4266
    %v4458 = vunpack.c.h.b16 %v4266
    %v4459 = vunpack.c.l.b16 %v4267
    %v4460 = vunpack.c.h.b16 %v4267
    %v4461 = vunpack.c.l.b16 %v4268
    %v4462 = vunpack.c.h.b16 %v4268
    %v4463 = vunpack.c.l.b16 %v4269
    %v4464 = vunpack.c.h.b16 %v4269
    %v4465 = vunpack.c.l.b16 %v4270
    %v4466 = vunpack.c.h.b16 %v4270
    %v4467 = vunpack.c.l.b16 %v4271
    %v4468 = vunpack.c.h.b16 %v4271
    %v4469 = vunpack.c.l.b16 %v4272
    %v4470 = vunpack.c.h.b16 %v4272
    %v4471 = vpack.c.b16 %v4345, %v4343
    %v4472 = vpack.c.b16 %v4346, %v4344
    %v4473 = vpack.c.b16 %v4349, %v4347
    %v4474 = vpack.c.b16 %v4350, %v4348
    %v4475 = vpack.c.b16 %v4353, %v4351
    %v4476 = vpack.c.b16 %v4354, %v4352
    %v4477 = vpack.c.b16 %v4357, %v4355
    %v4478 = vpack.c.b16 %v4358, %v4356
    %v4479 = vpack.c.b16 %v4361, %v4359
    %v4480 = vpack.c.b16 %v4362, %v4360
    %v4481 = vpack.c.b16 %v4365, %v4363
    %v4482 = vpack.c.b16 %v4366, %v4364
    %v4483 = vpack.c.b16 %v4369, %v4367
    %v4484 = vpack.c.b16 %v4370, %v4368
    %v4485 = vpack.c.b16 %v4373, %v4371
    %v4486 = vpack.c.b16 %v4374, %v4372
    %v4487 = vpack.c.b16 %v4377, %v4375
    %v4488 = vpack.c.b16 %v4378, %v4376
    %v4489 = vpack.c.b16 %v4381, %v4379
    %v4490 = vpack.c.b16 %v4382, %v4380
    %v4491 = vpack.c.b16 %v4385, %v4383
    %v4492 = vpack.c.b16 %v4386, %v4384
    %v4493 = vpack.c.b16 %v4389, %v4387
    %v4494 = vpack.c.b16 %v4390, %v4388
    %v4495 = vpack.c.b16 %v4393, %v4391
    %v4496 = vpack.c.b16 %v4394, %v4392
    %v4497 = vpack.c.b16 %v4397, %v4395
    %v4498 = vpack.c.b16 %v4398, %v4396
    %v4499 = vpack.c.b16 %v4401, %v4399
    %v4500 = vpack.c.b16 %v4402, %v4400
    %v4501 = vpack.c.b16 %v4405, %v4403
    %v4502 = vpack.c.b16 %v4406, %v4404
    %v4503 = vpack.c.b16 %v4409, %v4407
    %v4504 = vpack.c.b16 %v4410, %v4408
    %v4505 = vpack.c.b16 %v4413, %v4411
    %v4506 = vpack.c.b16 %v4414, %v4412
    %v4507 = vpack.c.b16 %v4417, %v4415
    %v4508 = vpack.c.b16 %v4418, %v4416
    %v4509 = vpack.c.b16 %v4421, %v4419
    %v4510 = vpack.c.b16 %v4422, %v4420
    %v4511 = vpack.c.b16 %v4425, %v4423
    %v4512 = vpack.c.b16 %v4426, %v4424
    %v4513 = vpack.c.b16 %v4429, %v4427
    %v4514 = vpack.c.b16 %v4430, %v4428
    %v4515 = vpack.c.b16 %v4433, %v4431
    %v4516 = vpack.c.b16 %v4434, %v4432
    %v4517 = vpack.c.b16 %v4437, %v4435
    %v4518 = vpack.c.b16 %v4438, %v4436
    %v4519 = vpack.c.b16 %v4441, %v4439
    %v4520 = vpack.c.b16 %v4442, %v4440
    %v4521 = vpack.c.b16 %v4445, %v4443
    %v4522 = vpack.c.b16 %v4446, %v4444
    %v4523 = vpack.c.b16 %v4449, %v4447
    %v4524 = vpack.c.b16 %v4450, %v4448
    %v4525 = vpack.c.b16 %v4453, %v4451
    %v4526 = vpack.c.b16 %v4454, %v4452
    %v4527 = vpack.c.b16 %v4457, %v4455
    %v4528 = vpack.c.b16 %v4458, %v4456
    %v4529 = vpack.c.b16 %v4461, %v4459
    %v4530 = vpack.c.b16 %v4462, %v4460
    %v4531 = vpack.c.b16 %v4465, %v4463
    %v4532 = vpack.c.b16 %v4466, %v4464
    %v4533 = vpack.c.b16 %v4469, %v4467
    %v4534 = vpack.c.b16 %v4470, %v4468
    %4599 = vmatpush.bf16.msra.mxu0 %v4485
    %4600 = vmatpush.bf16.msra.mxu0 %v4483
    %4601 = vmatpush.bf16.msra.mxu0 %v4481
    %4602 = vmatpush.bf16.msra.mxu0 %v4479
    %4603 = vmatpush.bf16.msra.mxu0 %v4477
    %4604 = vmatpush.bf16.msra.mxu0 %v4475
    %4605 = vmatpush.bf16.msra.mxu0 %v4473
    %4606 = vmatpush.bf16.msra.mxu0 %v4471
    %4607 = vmatmul.bf16.gmra.mxu0 %v4205
    %v4608 = vpop.f32.mrf.mxu0
    %v4609 = vadd.f32 %v4275, %v4608
    %v4610 = vpop.f32.mrf.mxu0
    %v4611 = vadd.f32 %v4275, %v4610
    %4612 = vdwg.mxu0
    %4613 = vmatpush.bf16.msra.mxu0 %v4501
    %4614 = vmatpush.bf16.msra.mxu0 %v4499
    %4615 = vmatpush.bf16.msra.mxu0 %v4497
    %4616 = vmatpush.bf16.msra.mxu0 %v4495
    %4617 = vmatpush.bf16.msra.mxu0 %v4493
    %4618 = vmatpush.bf16.msra.mxu0 %v4491
    %4619 = vmatpush.bf16.msra.mxu0 %v4489
    %4620 = vmatpush.bf16.msra.mxu0 %v4487
    %4621 = vmatmul.bf16.gmra.mxu0 %v4206
    %v4622 = vpop.f32.mrf.mxu0
    %v4623 = vadd.f32 %v4609, %v4622
    %v4624 = vpop.f32.mrf.mxu0
    %v4625 = vadd.f32 %v4611, %v4624
    %4626 = vdwg.mxu0
    %4627 = vmatpush.bf16.msra.mxu0 %v4517
    %4628 = vmatpush.bf16.msra.mxu0 %v4515
    %4629 = vmatpush.bf16.msra.mxu0 %v4513
    %4630 = vmatpush.bf16.msra.mxu0 %v4511
    %4631 = vmatpush.bf16.msra.mxu0 %v4509
    %4632 = vmatpush.bf16.msra.mxu0 %v4507
    %4633 = vmatpush.bf16.msra.mxu0 %v4505
    %4634 = vmatpush.bf16.msra.mxu0 %v4503
    %4635 = vmatmul.bf16.gmra.mxu0 %v4207
    %v4636 = vpop.f32.mrf.mxu0
    %v4637 = vadd.f32 %v4623, %v4636
    %v4638 = vpop.f32.mrf.mxu0
    %v4639 = vadd.f32 %v4625, %v4638
    %4640 = vdwg.mxu0
    %4641 = vmatpush.bf16.msra.mxu0 %v4533
    %4642 = vmatpush.bf16.msra.mxu0 %v4531
    %4643 = vmatpush.bf16.msra.mxu0 %v4529
    %4644 = vmatpush.bf16.msra.mxu0 %v4527
    %4645 = vmatpush.bf16.msra.mxu0 %v4525
    %4646 = vmatpush.bf16.msra.mxu0 %v4523
    %4647 = vmatpush.bf16.msra.mxu0 %v4521
    %4648 = vmatpush.bf16.msra.mxu0 %v4519
    %4649 = vmatmul.bf16.gmra.mxu0 %v4208
    %v4650 = vpop.f32.mrf.mxu0
    %v4651 = vadd.f32 %v4637, %v4650
    %v4652 = vpop.f32.mrf.mxu0
    %v4653 = vadd.f32 %v4639, %v4652
    %4654 = vdwg.mxu0
    %4655 = vmatpush.bf16.msra.mxu0 %v4486
    %4656 = vmatpush.bf16.msra.mxu0 %v4484
    %4657 = vmatpush.bf16.msra.mxu0 %v4482
    %4658 = vmatpush.bf16.msra.mxu0 %v4480
    %4659 = vmatpush.bf16.msra.mxu0 %v4478
    %4660 = vmatpush.bf16.msra.mxu0 %v4476
    %4661 = vmatpush.bf16.msra.mxu0 %v4474
    %4662 = vmatpush.bf16.msra.mxu0 %v4472
    %4663 = vmatmul.bf16.gmra.mxu0 %v4205
    %v4664 = vpop.f32.mrf.mxu0
    %v4665 = vadd.f32 %v4276, %v4664
    %v4666 = vpop.f32.mrf.mxu0
    %v4667 = vadd.f32 %v4276, %v4666
    %4668 = vdwg.mxu0
    %4669 = vmatpush.bf16.msra.mxu0 %v4502
    %4670 = vmatpush.bf16.msra.mxu0 %v4500
    %4671 = vmatpush.bf16.msra.mxu0 %v4498
    %4672 = vmatpush.bf16.msra.mxu0 %v4496
    %4673 = vmatpush.bf16.msra.mxu0 %v4494
    %4674 = vmatpush.bf16.msra.mxu0 %v4492
    %4675 = vmatpush.bf16.msra.mxu0 %v4490
    %4676 = vmatpush.bf16.msra.mxu0 %v4488
    %4677 = vmatmul.bf16.gmra.mxu0 %v4206
    %v4678 = vpop.f32.mrf.mxu0
    %v4679 = vadd.f32 %v4665, %v4678
    %v4680 = vpop.f32.mrf.mxu0
    %v4681 = vadd.f32 %v4667, %v4680
    %4682 = vdwg.mxu0
    %4683 = vmatpush.bf16.msra.mxu0 %v4518
    %4684 = vmatpush.bf16.msra.mxu0 %v4516
    %4685 = vmatpush.bf16.msra.mxu0 %v4514
    %4686 = vmatpush.bf16.msra.mxu0 %v4512
    %4687 = vmatpush.bf16.msra.mxu0 %v4510
    %4688 = vmatpush.bf16.msra.mxu0 %v4508
    %4689 = vmatpush.bf16.msra.mxu0 %v4506
    %4690 = vmatpush.bf16.msra.mxu0 %v4504
    %4691 = vmatmul.bf16.gmra.mxu0 %v4207
    %v4692 = vpop.f32.mrf.mxu0
    %v4693 = vadd.f32 %v4679, %v4692
    %v4694 = vpop.f32.mrf.mxu0
    %v4695 = vadd.f32 %v4681, %v4694
    %4696 = vdwg.mxu0
    %4697 = vmatpush.bf16.msra.mxu0 %v4534
    %4698 = vmatpush.bf16.msra.mxu0 %v4532
    %4699 = vmatpush.bf16.msra.mxu0 %v4530
    %4700 = vmatpush.bf16.msra.mxu0 %v4528
    %4701 = vmatpush.bf16.msra.mxu0 %v4526
    %4702 = vmatpush.bf16.msra.mxu0 %v4524
    %4703 = vmatpush.bf16.msra.mxu0 %v4522
    %4704 = vmatpush.bf16.msra.mxu0 %v4520
    %4705 = vmatmul.bf16.gmra.mxu0 %v4208
    %v4706 = vpop.f32.mrf.mxu0
    %v4707 = vadd.f32 %v4693, %v4706
    %v4708 = vpop.f32.mrf.mxu0
    %v4709 = vadd.f32 %v4695, %v4708
    %4710 = vdwg.mxu0
    %vm4711 = vcmp.gt.f32.partialorder %v4651, 0.0
    %vm4712 = vcmp.gt.f32.partialorder %v4707, 0.0
    %vm4713 = vcmp.gt.f32.partialorder %v4653, 0.0
    %vm4714 = vcmp.gt.f32.partialorder %v4709, 0.0
    %v4715 = vmul.f32 %v4651, 0.2
    %v4716 = vmul.f32 %v4707, 0.2
    %v4717 = vmul.f32 %v4653, 0.2
    %v4718 = vmul.f32 %v4709, 0.2
    %v4719 = vsel %vm4711, %v4651, %v4715
    %v4720 = vsel %vm4712, %v4707, %v4716
    %v4721 = vsel %vm4713, %v4653, %v4717
    %v4722 = vsel %vm4714, %v4709, %v4718
    %4723 = vst [vmem:[#allocation13] sm:$0xff] %v4719
    %4724 = vst [vmem:[#allocation13 + $0x8] sm:$0xff] %v4720
    %4725 = vst [vmem:[#allocation13 + $0x10] sm:$0xff] %v4721
    %4726 = vst [vmem:[#allocation13 + $0x18] sm:$0xff] %v4722
    // Predicated region
    $region54: #{tpu_custom_call.1} parent=1 // pred_check
      _
    $region55: #{tpu_custom_call.1} parent=1 // pred_check_branch
      %4728 = sbr.rel (0) target = $region57
    $region56: #{tpu_custom_call.1} parent=1 // pred_region
      %4730 = vsyncadd [#allocation4], 0
      %s4731 = sshll.u32 [#allocation13], 4
      %s4732 = int_to_ptr.vmem [resolvable:$true] %s4731
      %s4733 = sshll.u32 %s7, 4
      %s4734 = int_to_ptr.hbm [resolvable:$true] %s4733
      %4739 = dma.vmem_to_hbm [thread:$0]  %s4732, 512, %s4734, [#allocation4], 256, 256, 16
    $region57: #{tpu_custom_call.1} parent=1 // pred_fallthru
      _
    // Predicated region
    $region58: #{tpu_custom_call.1} parent=1 // pred_check
      _
    $region59: #{tpu_custom_call.1} parent=1 // pred_check_branch
      %4741 = sbr.rel (0) target = $region61
    $region60: #{tpu_custom_call.1} parent=1 // pred_region
      %4743 = dma.done [#allocation4], 512
    $region61: #{tpu_custom_call.1} parent=1 // pred_fallthru
      _
    %4744 = vsyncpa [#allocation3], 1
    %4745 = vsyncpa [#allocation6], 1
    %4746 = vsyncpa [#allocation9], 1
    %4747 = vsyncpa [#allocation12], 1
    %4748 = vsyncpa [#allocation4], 1

</llo_original>
